<compile_context>
chip_gen: v7x
topology: tpu7x:2x2x1
jax: 0.10.0
libtpu: 0.0.40
codegen_flags: <defaults>
</compile_context>

<pallas_src>
import functools
import numpy as np

import jax
import jax.numpy as jnp
from jax.experimental import pallas as pl
from jax.experimental.pallas import tpu as pltpu


# ----------------------------------------------------------------------------
# Model hyper-parameters (small synthetic CLIP-like ViT)
# ----------------------------------------------------------------------------
BATCH = 2
IN_CH = 3
IMG = 32
PATCH = 8
N_PATCH = (IMG // PATCH) ** 2          # 16
T = N_PATCH + 1                        # 17 real tokens (CLS + patches)
T_PAD = 24                             # padded to a sublane multiple (was 32)
WIDTH = 64                             # transformer width
HEADS = 4
HEAD_DIM = WIDTH // HEADS              # 16
MLP = 4 * WIDTH                        # 256
LAYERS = 2
EMBED = 32                             # txt_dim (CLIP embed_dim)
NUM_CLASSES = 16
K_PAD = 128                            # lane-dense padded class dim
PDIM = IN_CH * PATCH * PATCH           # 192
TEMPERATURE = 0.07
THRESHOLD = 0.8                        # lvis=False
INS_FIX_NUM = 6                        # lvis=False
EPS = 1e-5
ATT_SCALE = 1.0 / float(np.sqrt(HEAD_DIM))

WEIGHT_ORDER = (
    "wf", "add_const", "ln_pre_g", "ln_pre_b",
    "ln1_g", "ln1_b", "wq", "bq", "wk", "bk", "wv", "bv", "wo", "bo",
    "ln2_g", "ln2_b", "w1", "b1", "w2", "b2",
    "ln_post_g", "ln_post_b", "proj", "clsw_pad",
)


# ----------------------------------------------------------------------------
# In-kernel helpers
# ----------------------------------------------------------------------------
def _ln(x, g, b):
    mu = jnp.mean(x, axis=-1, keepdims=True)
    var = jnp.mean((x - mu) ** 2, axis=-1, keepdims=True)
    return (x - mu) * jax.lax.rsqrt(var + EPS) * g + b


def _erf(x):
    # Abramowitz & Stegun 7.1.26 (|err| <= 1.5e-7): exact-GELU without relying
    # on an erf lowering inside Mosaic (exp-only -> lowers on every generation).
    a1, a2, a3, a4, a5 = 0.254829592, -0.284496736, 1.421413741, -1.453152027, 1.061405429
    p = 0.3275911
    ax = jnp.abs(x)
    t = 1.0 / (1.0 + p * ax)
    poly = ((((a5 * t + a4) * t + a3) * t + a2) * t + a1) * t
    y = 1.0 - poly * jnp.exp(-ax * ax)
    return jnp.where(x >= 0, y, -y)


def _gelu_exact(x):
    # Matches torch.nn.GELU() (erf form) used by open_clip's non-OpenAI ViTs.
    return 0.5 * x * (1.0 + _erf(x * 0.7071067811865475))


# ----------------------------------------------------------------------------
# The fused kernel: one grid step == one image, weights resident in VMEM
# ----------------------------------------------------------------------------
def _fused_vit_kernel(patches_ref, wf_ref, add_ref, lnpre_g, lnpre_b,
                      ln1g, ln1b, wq, bq, wk, bk, wv, bv, wo, bo,
                      ln2g, ln2b, w1, b1, w2, b2,
                      lnpost_g, lnpost_b, proj_ref, clsw_ref, o_ref,
                      *, num_layers, num_heads, valid_tokens):
    # ---- patch embedding (Conv2d with kernel=stride=PATCH as one matmul) ----
    # Row 0 (CLS slot) and pad rows of the patch matrix are zero so they add
    # nothing; cls_token + pos_emb + conv bias live in add_ref.
    pmat = patches_ref[0]                                           # (T_PAD, PDIM)
    x = jnp.dot(pmat, wf_ref[...], preferred_element_type=jnp.float32) + add_ref[...]
    x = _ln(x, lnpre_g[...], lnpre_b[...])                          # ln_pre

    t_pad, d = x.shape

    # Padded token rows must never receive attention weight: additive key mask,
    # built once (only the key index matters -> one (1, T_PAD) row).
    k_idx = jax.lax.broadcasted_iota(jnp.int32, (1, t_pad), 1)
    neg_mask = jnp.where(k_idx < valid_tokens, 0.0, -1e30).astype(jnp.float32)

    for l in range(num_layers):
        # --- multi-head self-attention (heads unrolled over head-major weight
        #     tiles: no lane-slicing of activations, all dots are clean 2D;
        #     the 1/sqrt(dh) scale is pre-folded into wq/bq) ---
        h = _ln(x, ln1g[l], ln1b[l])
        acc = jnp.zeros((t_pad, d), jnp.float32)
        for hh in range(num_heads):
            qh = jnp.dot(h, wq[l, hh], preferred_element_type=jnp.float32) + bq[l, hh]
            kh = jnp.dot(h, wk[l, hh], preferred_element_type=jnp.float32) + bk[l, hh]
            vh = jnp.dot(h, wv[l, hh], preferred_element_type=jnp.float32) + bv[l, hh]
            s = jnp.dot(qh, kh.T, preferred_element_type=jnp.float32) + neg_mask
            s_max = jnp.max(s, axis=-1, keepdims=True)
            e = jnp.exp(s - s_max)
            p = e * pl.reciprocal(jnp.sum(e, axis=-1, keepdims=True), approx=True)
            ctx = jnp.dot(p, vh, preferred_element_type=jnp.float32)
            # concat(heads) @ Wo  ==  sum_h ctx_h @ Wo[h]
            acc = acc + jnp.dot(ctx, wo[l, hh], preferred_element_type=jnp.float32)
        x = x + acc + bo[l]

        # --- MLP ---
        h2 = _ln(x, ln2g[l], ln2b[l])
        m = jnp.dot(h2, w1[l], preferred_element_type=jnp.float32) + b1[l]
        m = _gelu_exact(m)
        x = x + jnp.dot(m, w2[l], preferred_element_type=jnp.float32) + b2[l]

    # ---- head: ln_post -> proj -> L2-normalize -> class similarity -> sigmoid
    # (1/temperature is pre-folded into the class-weight bank)
    cls = x[0:1, :]                                                 # (1, D)
    hc = _ln(cls, lnpost_g[...], lnpost_b[...])
    feat = jnp.dot(hc, proj_ref[...], preferred_element_type=jnp.float32)   # (1, E)
    # image_features /= image_features.norm(dim=-1, keepdim=True)
    feat = feat * jax.lax.rsqrt(jnp.sum(feat * feat, axis=-1, keepdims=True))
    sim = jnp.dot(feat, clsw_ref[...], preferred_element_type=jnp.float32)  # (1, K_PAD)
    o_ref[0] = jax.nn.sigmoid(sim)


def vit_forward(patches_padded, params):
    b = patches_padded.shape[0]
    weights = [params[k] for k in WEIGHT_ORDER]
    in_specs = [pl.BlockSpec((1, T_PAD, PDIM), lambda i: (i, 0, 0))]
    # Full-array, constant-index specs: weight blocks are DMA'd once and reused
    # across grid steps (block index never changes).
    in_specs += [pl.BlockSpec(w.shape, lambda i, _n=w.ndim: (0,) * _n) for w in weights]
    kern = functools.partial(
        _fused_vit_kernel, num_layers=LAYERS, num_heads=HEADS, valid_tokens=T)
    return pl.pallas_call(
        kern,
        out_shape=jax.ShapeDtypeStruct((b, 1, K_PAD), jnp.float32),
        grid=(b,),
        in_specs=in_specs,
        out_specs=pl.BlockSpec((1, 1, K_PAD), lambda i: (i, 0, 0)),
        compiler_params=pltpu.CompilerParams(dimension_semantics=("parallel",)),
    )(patches_padded, *weights)


# ----------------------------------------------------------------------------
# Parameter construction (deterministic synthetic weights, checkpoint-style
# layouts converted once to kernel-friendly head-major / padded layouts)
# ----------------------------------------------------------------------------
def make_params(key):
    keys = iter(jax.random.split(key, 32))
    nrm = lambda shape, s=0.02: s * jax.random.normal(next(keys), shape, jnp.float32)

    conv_w = nrm((WIDTH, IN_CH, PATCH, PATCH))
    conv_b = nrm((WIDTH,))
    cls_token = nrm((WIDTH,))
    pos_emb = nrm((T, WIDTH))

    # Fused-qkv checkpoint layout -> head-major tiles (L, H, D, dh) so the
    # kernel never slices a 192-wide result or 16-wide lane chunks.
    wqkv = nrm((LAYERS, WIDTH, 3 * WIDTH))
    bqkv = nrm((LAYERS, 3 * WIDTH))

    def head_major_w(w):            # (L, D, D) -> (L, H, D, dh)
        return w.reshape(LAYERS, WIDTH, HEADS, HEAD_DIM).transpose(0, 2, 1, 3)

    def head_major_b(v):            # (L, D) -> (L, H, 1, dh)
        return v.reshape(LAYERS, HEADS, 1, HEAD_DIM)

    # 1/sqrt(dh) attention scale folded into Wq and bq (q' = scale * (h Wq + bq)).
    wq = head_major_w(wqkv[:, :, 0:WIDTH]) * ATT_SCALE
    wk = head_major_w(wqkv[:, :, WIDTH:2 * WIDTH])
    wv = head_major_w(wqkv[:, :, 2 * WIDTH:])
    bq = head_major_b(bqkv[:, 0:WIDTH]) * ATT_SCALE
    bk = head_major_b(bqkv[:, WIDTH:2 * WIDTH])
    bv = head_major_b(bqkv[:, 2 * WIDTH:])
    wo = nrm((LAYERS, WIDTH, WIDTH)).reshape(LAYERS, HEADS, HEAD_DIM, WIDTH)
    bo = nrm((LAYERS, 1, WIDTH))

    params = {
        "wf": conv_w.reshape(WIDTH, -1).T,                        # (C*P*P, D)
        "ln_pre_g": jnp.ones((1, WIDTH), jnp.float32),
        "ln_pre_b": jnp.zeros((1, WIDTH), jnp.float32),
        "ln1_g": jnp.ones((LAYERS, 1, WIDTH), jnp.float32),
        "ln1_b": jnp.zeros((LAYERS, 1, WIDTH), jnp.float32),
        "wq": wq, "bq": bq, "wk": wk, "bk": bk, "wv": wv, "bv": bv,
        "wo": wo, "bo": bo,
        "ln2_g": jnp.ones((LAYERS, 1, WIDTH), jnp.float32),
        "ln2_b": jnp.zeros((LAYERS, 1, WIDTH), jnp.float32),
        "w1": nrm((LAYERS, WIDTH, MLP)),
        "b1": nrm((LAYERS, 1, MLP)),
        "w2": nrm((LAYERS, MLP, WIDTH)),
        "b2": nrm((LAYERS, 1, WIDTH)),
        "ln_post_g": jnp.ones((1, WIDTH), jnp.float32),
        "ln_post_b": jnp.zeros((1, WIDTH), jnp.float32),
        "proj": nrm((WIDTH, EMBED), 1.0 / float(np.sqrt(WIDTH))),
    }

    # cls_token + positional embedding + conv bias folded into one additive
    # constant over the padded token buffer (rows >= T stay zero).
    add_const = jnp.zeros((T_PAD, WIDTH), jnp.float32)
    add_const = add_const.at[0].set(cls_token + pos_emb[0])
    add_const = add_const.at[1:T].set(conv_b[None, :] + pos_emb[1:])
    params["add_const"] = add_const

    # Frozen, L2-normalized text/class embedding bank (stands in for the CLIP
    # text encoder output), transposed, scaled by 1/temperature, and lane-padded
    # to 128 classes; padded columns are zero and sliced off outside the kernel.
    cw = jax.random.normal(next(keys), (NUM_CLASSES, EMBED), jnp.float32)
    cw = cw / jnp.linalg.norm(cw, axis=-1, keepdims=True)
    params["cls_weights"] = cw
    params["clsw_pad"] = (jnp.zeros((EMBED, K_PAD), jnp.float32)
                          .at[:, :NUM_CLASSES].set(cw.T / TEMPERATURE))
    return params


# ----------------------------------------------------------------------------
# Forward pass (mirrors TE_IE_Encoder.forward)
# ----------------------------------------------------------------------------
@jax.jit
def encode_image(image_nchw, params):
    b, c, h, w = image_nchw.shape
    hn, wn = h // PATCH, w // PATCH
    # Unfold NCHW -> (B, N_PATCH, C*P*P); equivalent to Conv2d(k=s=PATCH) with
    # flattened weights.  Pure relayout, fused into the same jit as the kernel.
    patches = image_nchw.reshape(b, c, hn, PATCH, wn, PATCH)
    patches = patches.transpose(0, 2, 4, 1, 3, 5).reshape(b, hn * wn, c * PATCH * PATCH)
    # Pad tokens to T_PAD: row 0 is the CLS slot (zeros contribute nothing to
    # the patch matmul; cls/pos/bias terms live in params["add_const"]).
    patches_padded = jnp.zeros((b, T_PAD, PDIM), jnp.float32)
    patches_padded = patches_padded.at[:, 1:1 + hn * wn, :].set(patches)
    probs_pad = vit_forward(patches_padded, params)                 # (B, 1, K_PAD)
    return probs_pad[:, 0, :NUM_CLASSES]                            # (B, NUM_CLASSES)


def te_ie_encoder_forward(image_nchw, params, idx2label):
    probs = encode_image(image_nchw, params)
    probs_np = np.asarray(jax.block_until_ready(probs))

    # --- pseudo-label selection: dynamic-shape host glue, same semantics as
    #     torch nonzero / sort(descending) / dict lookup / truncation ---
    mask = probs_np > THRESHOLD
    rows, cols = np.nonzero(mask)
    high_conf_scores = probs_np[rows, cols]
    order = np.argsort(-high_conf_scores)
    sorted_labels = cols[order]
    pseudo_labels = [idx2label[int(i)] for i in sorted_labels]
    if len(pseudo_labels) == 0:
        # mirrors torch.randint fallback (host-side random draw)
        pseudo_labels = [idx2label[int(np.random.randint(0, len(idx2label)))]]
    if INS_FIX_NUM > 0:
        pseudo_labels = pseudo_labels[:INS_FIX_NUM]
    return pseudo_labels, probs


if __name__ == "__main__":
    key = jax.random.PRNGKey(0)
    pkey, xkey = jax.random.split(key)
    params = make_params(pkey)
    # synthetic class-id label map (stands in for COCO category ids)
    idx2label = {i: i + 1 for i in range(NUM_CLASSES)}

    image = jax.random.normal(xkey, (BATCH, IN_CH, IMG, IMG), jnp.float32)  # NCHW
    pseudo_labels, probs = te_ie_encoder_forward(image, params, idx2label)
    probs = jax.block_until_ready(probs)
    assert probs.shape == (BATCH, NUM_CLASSES)
    assert bool(jnp.all(jnp.isfinite(probs)))
    assert len(pseudo_labels) >= 1
    print("KERNEL_OK")
</pallas_src>

<mosaic_0001>
module attributes {stable_mosaic.version = 11 : i64} {
  func.func @_fused_vit_kernel(%arg0: i32, %arg1: memref<1x24x192xf32, #tpu.memory_space<vmem>>, %arg2: memref<192x64xf32, #tpu.memory_space<vmem>>, %arg3: memref<24x64xf32, #tpu.memory_space<vmem>>, %arg4: memref<1x64xf32, #tpu.memory_space<vmem>>, %arg5: memref<1x64xf32, #tpu.memory_space<vmem>>, %arg6: memref<2x1x64xf32, #tpu.memory_space<vmem>>, %arg7: memref<2x1x64xf32, #tpu.memory_space<vmem>>, %arg8: memref<2x4x64x16xf32, #tpu.memory_space<vmem>>, %arg9: memref<2x4x1x16xf32, #tpu.memory_space<vmem>>, %arg10: memref<2x4x64x16xf32, #tpu.memory_space<vmem>>, %arg11: memref<2x4x1x16xf32, #tpu.memory_space<vmem>>, %arg12: memref<2x4x64x16xf32, #tpu.memory_space<vmem>>, %arg13: memref<2x4x1x16xf32, #tpu.memory_space<vmem>>, %arg14: memref<2x4x16x64xf32, #tpu.memory_space<vmem>>, %arg15: memref<2x1x64xf32, #tpu.memory_space<vmem>>, %arg16: memref<2x1x64xf32, #tpu.memory_space<vmem>>, %arg17: memref<2x1x64xf32, #tpu.memory_space<vmem>>, %arg18: memref<2x64x256xf32, #tpu.memory_space<vmem>>, %arg19: memref<2x1x256xf32, #tpu.memory_space<vmem>>, %arg20: memref<2x256x64xf32, #tpu.memory_space<vmem>>, %arg21: memref<2x1x64xf32, #tpu.memory_space<vmem>>, %arg22: memref<1x64xf32, #tpu.memory_space<vmem>>, %arg23: memref<1x64xf32, #tpu.memory_space<vmem>>, %arg24: memref<64x32xf32, #tpu.memory_space<vmem>>, %arg25: memref<32x128xf32, #tpu.memory_space<vmem>>, %arg26: memref<1x1x128xf32, #tpu.memory_space<vmem>>) attributes {dimension_semantics = [#tpu.dimension_semantics<parallel>], iteration_bounds = array<i64: 2>, scalar_prefetch = 0 : i64, scratch_operands = 0 : i64, tpu.core_type = #tpu.core_type<tc>, window_params = [{transform_indices = @transform_0, window_bounds = array<i64: 1, 24, 192>}, {pipeline_mode = #tpu.pipeline_mode<synchronous>, transform_indices = @transform_1, window_bounds = array<i64: 192, 64>}, {pipeline_mode = #tpu.pipeline_mode<synchronous>, transform_indices = @transform_2, window_bounds = array<i64: 24, 64>}, {pipeline_mode = #tpu.pipeline_mode<synchronous>, transform_indices = @transform_3, window_bounds = array<i64: 1, 64>}, {pipeline_mode = #tpu.pipeline_mode<synchronous>, transform_indices = @transform_4, window_bounds = array<i64: 1, 64>}, {pipeline_mode = #tpu.pipeline_mode<synchronous>, transform_indices = @transform_5, window_bounds = array<i64: 2, 1, 64>}, {pipeline_mode = #tpu.pipeline_mode<synchronous>, transform_indices = @transform_6, window_bounds = array<i64: 2, 1, 64>}, {pipeline_mode = #tpu.pipeline_mode<synchronous>, transform_indices = @transform_7, window_bounds = array<i64: 2, 4, 64, 16>}, {pipeline_mode = #tpu.pipeline_mode<synchronous>, transform_indices = @transform_8, window_bounds = array<i64: 2, 4, 1, 16>}, {pipeline_mode = #tpu.pipeline_mode<synchronous>, transform_indices = @transform_9, window_bounds = array<i64: 2, 4, 64, 16>}, {pipeline_mode = #tpu.pipeline_mode<synchronous>, transform_indices = @transform_10, window_bounds = array<i64: 2, 4, 1, 16>}, {pipeline_mode = #tpu.pipeline_mode<synchronous>, transform_indices = @transform_11, window_bounds = array<i64: 2, 4, 64, 16>}, {pipeline_mode = #tpu.pipeline_mode<synchronous>, transform_indices = @transform_12, window_bounds = array<i64: 2, 4, 1, 16>}, {pipeline_mode = #tpu.pipeline_mode<synchronous>, transform_indices = @transform_13, window_bounds = array<i64: 2, 4, 16, 64>}, {pipeline_mode = #tpu.pipeline_mode<synchronous>, transform_indices = @transform_14, window_bounds = array<i64: 2, 1, 64>}, {pipeline_mode = #tpu.pipeline_mode<synchronous>, transform_indices = @transform_15, window_bounds = array<i64: 2, 1, 64>}, {pipeline_mode = #tpu.pipeline_mode<synchronous>, transform_indices = @transform_16, window_bounds = array<i64: 2, 1, 64>}, {pipeline_mode = #tpu.pipeline_mode<synchronous>, transform_indices = @transform_17, window_bounds = array<i64: 2, 64, 256>}, {pipeline_mode = #tpu.pipeline_mode<synchronous>, transform_indices = @transform_18, window_bounds = array<i64: 2, 1, 256>}, {pipeline_mode = #tpu.pipeline_mode<synchronous>, transform_indices = @transform_19, window_bounds = array<i64: 2, 256, 64>}, {pipeline_mode = #tpu.pipeline_mode<synchronous>, transform_indices = @transform_20, window_bounds = array<i64: 2, 1, 64>}, {pipeline_mode = #tpu.pipeline_mode<synchronous>, transform_indices = @transform_21, window_bounds = array<i64: 1, 64>}, {pipeline_mode = #tpu.pipeline_mode<synchronous>, transform_indices = @transform_22, window_bounds = array<i64: 1, 64>}, {pipeline_mode = #tpu.pipeline_mode<synchronous>, transform_indices = @transform_23, window_bounds = array<i64: 64, 32>}, {pipeline_mode = #tpu.pipeline_mode<synchronous>, transform_indices = @transform_24, window_bounds = array<i64: 32, 128>}, {transform_indices = @transform_25, window_bounds = array<i64: 1, 1, 128>}]} {
    %c0 = arith.constant 0 : index
    %c0_0 = arith.constant 0 : index
    %c0_1 = arith.constant 0 : index
    %0 = vector.load %arg1[%c0, %c0_0, %c0_1] : memref<1x24x192xf32, #tpu.memory_space<vmem>>, vector<1x24x192xf32>
    %1 = vector.shape_cast %0 : vector<1x24x192xf32> to vector<24x192xf32>
    %c0_2 = arith.constant 0 : index
    %c0_3 = arith.constant 0 : index
    %2 = vector.load %arg2[%c0_2, %c0_3] : memref<192x64xf32, #tpu.memory_space<vmem>>, vector<192x64xf32>
    %cst = arith.constant dense<0.000000e+00> : vector<24x64xf32>
    %3 = tpu.matmul %1, %2, %cst {dimension_numbers = #tpu.dot_dimension_numbers<[1], [0], [0], [1], [0, 0, 1, 1], [], []>} : vector<24x192xf32>, vector<192x64xf32>, vector<24x64xf32> -> vector<24x64xf32>
    %c0_4 = arith.constant 0 : index
    %c0_5 = arith.constant 0 : index
    %4 = vector.load %arg3[%c0_4, %c0_5] : memref<24x64xf32, #tpu.memory_space<vmem>>, vector<24x64xf32>
    %5 = arith.addf %3, %4 : vector<24x64xf32>
    %c0_6 = arith.constant 0 : index
    %c0_7 = arith.constant 0 : index
    %6 = vector.load %arg4[%c0_6, %c0_7] : memref<1x64xf32, #tpu.memory_space<vmem>>, vector<1x64xf32>
    %c0_8 = arith.constant 0 : index
    %c0_9 = arith.constant 0 : index
    %7 = vector.load %arg5[%c0_8, %c0_9] : memref<1x64xf32, #tpu.memory_space<vmem>>, vector<1x64xf32>
    %cst_10 = arith.constant dense<0.000000e+00> : vector<24xf32>
    %8 = vector.multi_reduction <add>, %5, %cst_10 [1] : vector<24x64xf32> to vector<24xf32>
    %9 = vector.shape_cast %8 : vector<24xf32> to vector<24x1xf32>
    %cst_11 = arith.constant 6.400000e+01 : f32
    %10 = vector.broadcast %cst_11 : f32 to vector<24x1xf32>
    %11 = arith.divf %9, %10 : vector<24x1xf32>
    %12 = vector.broadcast %11 : vector<24x1xf32> to vector<24x64xf32>
    %13 = arith.subf %5, %12 : vector<24x64xf32>
    %14 = arith.mulf %13, %13 : vector<24x64xf32>
    %cst_12 = arith.constant dense<0.000000e+00> : vector<24xf32>
    %15 = vector.multi_reduction <add>, %14, %cst_12 [1] : vector<24x64xf32> to vector<24xf32>
    %16 = vector.shape_cast %15 : vector<24xf32> to vector<24x1xf32>
    %cst_13 = arith.constant 6.400000e+01 : f32
    %17 = vector.broadcast %cst_13 : f32 to vector<24x1xf32>
    %18 = arith.divf %16, %17 : vector<24x1xf32>
    %19 = vector.broadcast %11 : vector<24x1xf32> to vector<24x64xf32>
    %20 = arith.subf %5, %19 : vector<24x64xf32>
    %cst_14 = arith.constant 9.99999974E-6 : f32
    %21 = vector.broadcast %cst_14 : f32 to vector<24x1xf32>
    %22 = arith.addf %18, %21 : vector<24x1xf32>
    %23 = math.rsqrt %22 : vector<24x1xf32>
    %24 = vector.broadcast %23 : vector<24x1xf32> to vector<24x64xf32>
    %25 = arith.mulf %20, %24 : vector<24x64xf32>
    %26 = vector.broadcast %6 : vector<1x64xf32> to vector<24x64xf32>
    %27 = arith.mulf %25, %26 : vector<24x64xf32>
    %28 = vector.broadcast %7 : vector<1x64xf32> to vector<24x64xf32>
    %29 = arith.addf %27, %28 : vector<24x64xf32>
    %30 = tpu.iota {dimensions = array<i32: 1>} : vector<1x24xi32>
    %c17_i32 = arith.constant 17 : i32
    %31 = vector.broadcast %c17_i32 : i32 to vector<1x24xi32>
    %32 = arith.cmpi slt, %30, %31 : vector<1x24xi32>
    %cst_15 = arith.constant 0.000000e+00 : f32
    %cst_16 = arith.constant -1.000000e+30 : f32
    %33 = vector.broadcast %cst_15 : f32 to vector<1x24xf32>
    %34 = vector.broadcast %cst_16 : f32 to vector<1x24xf32>
    %35 = arith.select %32, %33, %34 : vector<1x24xi1>, vector<1x24xf32>
    %c0_17 = arith.constant 0 : index
    %c0_18 = arith.constant 0 : index
    %c0_19 = arith.constant 0 : index
    %36 = vector.load %arg6[%c0_17, %c0_18, %c0_19] : memref<2x1x64xf32, #tpu.memory_space<vmem>>, vector<1x1x64xf32>
    %37 = vector.shape_cast %36 : vector<1x1x64xf32> to vector<1x64xf32>
    %c0_20 = arith.constant 0 : index
    %c0_21 = arith.constant 0 : index
    %c0_22 = arith.constant 0 : index
    %38 = vector.load %arg7[%c0_20, %c0_21, %c0_22] : memref<2x1x64xf32, #tpu.memory_space<vmem>>, vector<1x1x64xf32>
    %39 = vector.shape_cast %38 : vector<1x1x64xf32> to vector<1x64xf32>
    %cst_23 = arith.constant dense<0.000000e+00> : vector<24xf32>
    %40 = vector.multi_reduction <add>, %29, %cst_23 [1] : vector<24x64xf32> to vector<24xf32>
    %41 = vector.shape_cast %40 : vector<24xf32> to vector<24x1xf32>
    %cst_24 = arith.constant 6.400000e+01 : f32
    %42 = vector.broadcast %cst_24 : f32 to vector<24x1xf32>
    %43 = arith.divf %41, %42 : vector<24x1xf32>
    %44 = vector.broadcast %43 : vector<24x1xf32> to vector<24x64xf32>
    %45 = arith.subf %29, %44 : vector<24x64xf32>
    %46 = arith.mulf %45, %45 : vector<24x64xf32>
    %cst_25 = arith.constant dense<0.000000e+00> : vector<24xf32>
    %47 = vector.multi_reduction <add>, %46, %cst_25 [1] : vector<24x64xf32> to vector<24xf32>
    %48 = vector.shape_cast %47 : vector<24xf32> to vector<24x1xf32>
    %cst_26 = arith.constant 6.400000e+01 : f32
    %49 = vector.broadcast %cst_26 : f32 to vector<24x1xf32>
    %50 = arith.divf %48, %49 : vector<24x1xf32>
    %51 = vector.broadcast %43 : vector<24x1xf32> to vector<24x64xf32>
    %52 = arith.subf %29, %51 : vector<24x64xf32>
    %cst_27 = arith.constant 9.99999974E-6 : f32
    %53 = vector.broadcast %cst_27 : f32 to vector<24x1xf32>
    %54 = arith.addf %50, %53 : vector<24x1xf32>
    %55 = math.rsqrt %54 : vector<24x1xf32>
    %56 = vector.broadcast %55 : vector<24x1xf32> to vector<24x64xf32>
    %57 = arith.mulf %52, %56 : vector<24x64xf32>
    %58 = vector.broadcast %37 : vector<1x64xf32> to vector<24x64xf32>
    %59 = arith.mulf %57, %58 : vector<24x64xf32>
    %60 = vector.broadcast %39 : vector<1x64xf32> to vector<24x64xf32>
    %61 = arith.addf %59, %60 : vector<24x64xf32>
    %cst_28 = arith.constant 0.000000e+00 : f32
    %62 = vector.broadcast %cst_28 : f32 to vector<24x64xf32>
    %c0_29 = arith.constant 0 : index
    %c0_30 = arith.constant 0 : index
    %c0_31 = arith.constant 0 : index
    %c0_32 = arith.constant 0 : index
    %63 = vector.load %arg8[%c0_29, %c0_30, %c0_31, %c0_32] : memref<2x4x64x16xf32, #tpu.memory_space<vmem>>, vector<1x1x64x16xf32>
    %64 = vector.shape_cast %63 : vector<1x1x64x16xf32> to vector<64x16xf32>
    %cst_33 = arith.constant dense<0.000000e+00> : vector<24x16xf32>
    %65 = tpu.matmul %61, %64, %cst_33 {dimension_numbers = #tpu.dot_dimension_numbers<[1], [0], [0], [1], [0, 0, 1, 1], [], []>} : vector<24x64xf32>, vector<64x16xf32>, vector<24x16xf32> -> vector<24x16xf32>
    %c0_34 = arith.constant 0 : index
    %c0_35 = arith.constant 0 : index
    %c0_36 = arith.constant 0 : index
    %c0_37 = arith.constant 0 : index
    %66 = vector.load %arg9[%c0_34, %c0_35, %c0_36, %c0_37] : memref<2x4x1x16xf32, #tpu.memory_space<vmem>>, vector<1x1x1x16xf32>
    %67 = vector.shape_cast %66 : vector<1x1x1x16xf32> to vector<1x16xf32>
    %68 = vector.broadcast %67 : vector<1x16xf32> to vector<24x16xf32>
    %69 = arith.addf %65, %68 : vector<24x16xf32>
    %c0_38 = arith.constant 0 : index
    %c0_39 = arith.constant 0 : index
    %c0_40 = arith.constant 0 : index
    %c0_41 = arith.constant 0 : index
    %70 = vector.load %arg10[%c0_38, %c0_39, %c0_40, %c0_41] : memref<2x4x64x16xf32, #tpu.memory_space<vmem>>, vector<1x1x64x16xf32>
    %71 = vector.shape_cast %70 : vector<1x1x64x16xf32> to vector<64x16xf32>
    %cst_42 = arith.constant dense<0.000000e+00> : vector<24x16xf32>
    %72 = tpu.matmul %61, %71, %cst_42 {dimension_numbers = #tpu.dot_dimension_numbers<[1], [0], [0], [1], [0, 0, 1, 1], [], []>} : vector<24x64xf32>, vector<64x16xf32>, vector<24x16xf32> -> vector<24x16xf32>
    %c0_43 = arith.constant 0 : index
    %c0_44 = arith.constant 0 : index
    %c0_45 = arith.constant 0 : index
    %c0_46 = arith.constant 0 : index
    %73 = vector.load %arg11[%c0_43, %c0_44, %c0_45, %c0_46] : memref<2x4x1x16xf32, #tpu.memory_space<vmem>>, vector<1x1x1x16xf32>
    %74 = vector.shape_cast %73 : vector<1x1x1x16xf32> to vector<1x16xf32>
    %75 = vector.broadcast %74 : vector<1x16xf32> to vector<24x16xf32>
    %76 = arith.addf %72, %75 : vector<24x16xf32>
    %c0_47 = arith.constant 0 : index
    %c0_48 = arith.constant 0 : index
    %c0_49 = arith.constant 0 : index
    %c0_50 = arith.constant 0 : index
    %77 = vector.load %arg12[%c0_47, %c0_48, %c0_49, %c0_50] : memref<2x4x64x16xf32, #tpu.memory_space<vmem>>, vector<1x1x64x16xf32>
    %78 = vector.shape_cast %77 : vector<1x1x64x16xf32> to vector<64x16xf32>
    %cst_51 = arith.constant dense<0.000000e+00> : vector<24x16xf32>
    %79 = tpu.matmul %61, %78, %cst_51 {dimension_numbers = #tpu.dot_dimension_numbers<[1], [0], [0], [1], [0, 0, 1, 1], [], []>} : vector<24x64xf32>, vector<64x16xf32>, vector<24x16xf32> -> vector<24x16xf32>
    %c0_52 = arith.constant 0 : index
    %c0_53 = arith.constant 0 : index
    %c0_54 = arith.constant 0 : index
    %c0_55 = arith.constant 0 : index
    %80 = vector.load %arg13[%c0_52, %c0_53, %c0_54, %c0_55] : memref<2x4x1x16xf32, #tpu.memory_space<vmem>>, vector<1x1x1x16xf32>
    %81 = vector.shape_cast %80 : vector<1x1x1x16xf32> to vector<1x16xf32>
    %82 = vector.broadcast %81 : vector<1x16xf32> to vector<24x16xf32>
    %83 = arith.addf %79, %82 : vector<24x16xf32>
    %84 = tpu.transpose %76, [1, 0] : vector<24x16xf32> -> vector<16x24xf32>
    %cst_56 = arith.constant dense<0.000000e+00> : vector<24x24xf32>
    %85 = tpu.matmul %69, %84, %cst_56 {dimension_numbers = #tpu.dot_dimension_numbers<[1], [0], [0], [1], [0, 0, 1, 1], [], []>} : vector<24x16xf32>, vector<16x24xf32>, vector<24x24xf32> -> vector<24x24xf32>
    %86 = vector.broadcast %35 : vector<1x24xf32> to vector<24x24xf32>
    %87 = arith.addf %85, %86 : vector<24x24xf32>
    %cst_57 = arith.constant dense<0xFF800000> : vector<24xf32>
    %88 = vector.multi_reduction <maximumf>, %87, %cst_57 [1] : vector<24x24xf32> to vector<24xf32>
    %89 = vector.shape_cast %88 : vector<24xf32> to vector<24x1xf32>
    %90 = vector.broadcast %89 : vector<24x1xf32> to vector<24x24xf32>
    %91 = arith.subf %87, %90 : vector<24x24xf32>
    %92 = math.exp %91 : vector<24x24xf32>
    %cst_58 = arith.constant dense<0.000000e+00> : vector<24xf32>
    %93 = vector.multi_reduction <add>, %92, %cst_58 [1] : vector<24x24xf32> to vector<24xf32>
    %94 = vector.shape_cast %93 : vector<24xf32> to vector<24x1xf32>
    %95 = tpu.reciprocal %94 {approx = true} : vector<24x1xf32> -> vector<24x1xf32>
    %96 = vector.broadcast %95 : vector<24x1xf32> to vector<24x24xf32>
    %97 = arith.mulf %92, %96 : vector<24x24xf32>
    %cst_59 = arith.constant dense<0.000000e+00> : vector<24x16xf32>
    %98 = tpu.matmul %97, %83, %cst_59 {dimension_numbers = #tpu.dot_dimension_numbers<[1], [0], [0], [1], [0, 0, 1, 1], [], []>} : vector<24x24xf32>, vector<24x16xf32>, vector<24x16xf32> -> vector<24x16xf32>
    %c0_60 = arith.constant 0 : index
    %c0_61 = arith.constant 0 : index
    %c0_62 = arith.constant 0 : index
    %c0_63 = arith.constant 0 : index
    %99 = vector.load %arg14[%c0_60, %c0_61, %c0_62, %c0_63] : memref<2x4x16x64xf32, #tpu.memory_space<vmem>>, vector<1x1x16x64xf32>
    %100 = vector.shape_cast %99 : vector<1x1x16x64xf32> to vector<16x64xf32>
    %cst_64 = arith.constant dense<0.000000e+00> : vector<24x64xf32>
    %101 = tpu.matmul %98, %100, %cst_64 {dimension_numbers = #tpu.dot_dimension_numbers<[1], [0], [0], [1], [0, 0, 1, 1], [], []>} : vector<24x16xf32>, vector<16x64xf32>, vector<24x64xf32> -> vector<24x64xf32>
    %102 = arith.addf %62, %101 : vector<24x64xf32>
    %c0_65 = arith.constant 0 : index
    %c1 = arith.constant 1 : index
    %c0_66 = arith.constant 0 : index
    %c0_67 = arith.constant 0 : index
    %103 = vector.load %arg8[%c0_65, %c1, %c0_66, %c0_67] : memref<2x4x64x16xf32, #tpu.memory_space<vmem>>, vector<1x1x64x16xf32>
    %104 = vector.shape_cast %103 : vector<1x1x64x16xf32> to vector<64x16xf32>
    %cst_68 = arith.constant dense<0.000000e+00> : vector<24x16xf32>
    %105 = tpu.matmul %61, %104, %cst_68 {dimension_numbers = #tpu.dot_dimension_numbers<[1], [0], [0], [1], [0, 0, 1, 1], [], []>} : vector<24x64xf32>, vector<64x16xf32>, vector<24x16xf32> -> vector<24x16xf32>
    %c0_69 = arith.constant 0 : index
    %c1_70 = arith.constant 1 : index
    %c0_71 = arith.constant 0 : index
    %c0_72 = arith.constant 0 : index
    %106 = vector.load %arg9[%c0_69, %c1_70, %c0_71, %c0_72] : memref<2x4x1x16xf32, #tpu.memory_space<vmem>>, vector<1x1x1x16xf32>
    %107 = vector.shape_cast %106 : vector<1x1x1x16xf32> to vector<1x16xf32>
    %108 = vector.broadcast %107 : vector<1x16xf32> to vector<24x16xf32>
    %109 = arith.addf %105, %108 : vector<24x16xf32>
    %c0_73 = arith.constant 0 : index
    %c1_74 = arith.constant 1 : index
    %c0_75 = arith.constant 0 : index
    %c0_76 = arith.constant 0 : index
    %110 = vector.load %arg10[%c0_73, %c1_74, %c0_75, %c0_76] : memref<2x4x64x16xf32, #tpu.memory_space<vmem>>, vector<1x1x64x16xf32>
    %111 = vector.shape_cast %110 : vector<1x1x64x16xf32> to vector<64x16xf32>
    %cst_77 = arith.constant dense<0.000000e+00> : vector<24x16xf32>
    %112 = tpu.matmul %61, %111, %cst_77 {dimension_numbers = #tpu.dot_dimension_numbers<[1], [0], [0], [1], [0, 0, 1, 1], [], []>} : vector<24x64xf32>, vector<64x16xf32>, vector<24x16xf32> -> vector<24x16xf32>
    %c0_78 = arith.constant 0 : index
    %c1_79 = arith.constant 1 : index
    %c0_80 = arith.constant 0 : index
    %c0_81 = arith.constant 0 : index
    %113 = vector.load %arg11[%c0_78, %c1_79, %c0_80, %c0_81] : memref<2x4x1x16xf32, #tpu.memory_space<vmem>>, vector<1x1x1x16xf32>
    %114 = vector.shape_cast %113 : vector<1x1x1x16xf32> to vector<1x16xf32>
    %115 = vector.broadcast %114 : vector<1x16xf32> to vector<24x16xf32>
    %116 = arith.addf %112, %115 : vector<24x16xf32>
    %c0_82 = arith.constant 0 : index
    %c1_83 = arith.constant 1 : index
    %c0_84 = arith.constant 0 : index
    %c0_85 = arith.constant 0 : index
    %117 = vector.load %arg12[%c0_82, %c1_83, %c0_84, %c0_85] : memref<2x4x64x16xf32, #tpu.memory_space<vmem>>, vector<1x1x64x16xf32>
    %118 = vector.shape_cast %117 : vector<1x1x64x16xf32> to vector<64x16xf32>
    %cst_86 = arith.constant dense<0.000000e+00> : vector<24x16xf32>
    %119 = tpu.matmul %61, %118, %cst_86 {dimension_numbers = #tpu.dot_dimension_numbers<[1], [0], [0], [1], [0, 0, 1, 1], [], []>} : vector<24x64xf32>, vector<64x16xf32>, vector<24x16xf32> -> vector<24x16xf32>
    %c0_87 = arith.constant 0 : index
    %c1_88 = arith.constant 1 : index
    %c0_89 = arith.constant 0 : index
    %c0_90 = arith.constant 0 : index
    %120 = vector.load %arg13[%c0_87, %c1_88, %c0_89, %c0_90] : memref<2x4x1x16xf32, #tpu.memory_space<vmem>>, vector<1x1x1x16xf32>
    %121 = vector.shape_cast %120 : vector<1x1x1x16xf32> to vector<1x16xf32>
    %122 = vector.broadcast %121 : vector<1x16xf32> to vector<24x16xf32>
    %123 = arith.addf %119, %122 : vector<24x16xf32>
    %124 = tpu.transpose %116, [1, 0] : vector<24x16xf32> -> vector<16x24xf32>
    %cst_91 = arith.constant dense<0.000000e+00> : vector<24x24xf32>
    %125 = tpu.matmul %109, %124, %cst_91 {dimension_numbers = #tpu.dot_dimension_numbers<[1], [0], [0], [1], [0, 0, 1, 1], [], []>} : vector<24x16xf32>, vector<16x24xf32>, vector<24x24xf32> -> vector<24x24xf32>
    %126 = vector.broadcast %35 : vector<1x24xf32> to vector<24x24xf32>
    %127 = arith.addf %125, %126 : vector<24x24xf32>
    %cst_92 = arith.constant dense<0xFF800000> : vector<24xf32>
    %128 = vector.multi_reduction <maximumf>, %127, %cst_92 [1] : vector<24x24xf32> to vector<24xf32>
    %129 = vector.shape_cast %128 : vector<24xf32> to vector<24x1xf32>
    %130 = vector.broadcast %129 : vector<24x1xf32> to vector<24x24xf32>
    %131 = arith.subf %127, %130 : vector<24x24xf32>
    %132 = math.exp %131 : vector<24x24xf32>
    %cst_93 = arith.constant dense<0.000000e+00> : vector<24xf32>
    %133 = vector.multi_reduction <add>, %132, %cst_93 [1] : vector<24x24xf32> to vector<24xf32>
    %134 = vector.shape_cast %133 : vector<24xf32> to vector<24x1xf32>
    %135 = tpu.reciprocal %134 {approx = true} : vector<24x1xf32> -> vector<24x1xf32>
    %136 = vector.broadcast %135 : vector<24x1xf32> to vector<24x24xf32>
    %137 = arith.mulf %132, %136 : vector<24x24xf32>
    %cst_94 = arith.constant dense<0.000000e+00> : vector<24x16xf32>
    %138 = tpu.matmul %137, %123, %cst_94 {dimension_numbers = #tpu.dot_dimension_numbers<[1], [0], [0], [1], [0, 0, 1, 1], [], []>} : vector<24x24xf32>, vector<24x16xf32>, vector<24x16xf32> -> vector<24x16xf32>
    %c0_95 = arith.constant 0 : index
    %c1_96 = arith.constant 1 : index
    %c0_97 = arith.constant 0 : index
    %c0_98 = arith.constant 0 : index
    %139 = vector.load %arg14[%c0_95, %c1_96, %c0_97, %c0_98] : memref<2x4x16x64xf32, #tpu.memory_space<vmem>>, vector<1x1x16x64xf32>
    %140 = vector.shape_cast %139 : vector<1x1x16x64xf32> to vector<16x64xf32>
    %cst_99 = arith.constant dense<0.000000e+00> : vector<24x64xf32>
    %141 = tpu.matmul %138, %140, %cst_99 {dimension_numbers = #tpu.dot_dimension_numbers<[1], [0], [0], [1], [0, 0, 1, 1], [], []>} : vector<24x16xf32>, vector<16x64xf32>, vector<24x64xf32> -> vector<24x64xf32>
    %142 = arith.addf %102, %141 : vector<24x64xf32>
    %c0_100 = arith.constant 0 : index
    %c2 = arith.constant 2 : index
    %c0_101 = arith.constant 0 : index
    %c0_102 = arith.constant 0 : index
    %143 = vector.load %arg8[%c0_100, %c2, %c0_101, %c0_102] : memref<2x4x64x16xf32, #tpu.memory_space<vmem>>, vector<1x1x64x16xf32>
    %144 = vector.shape_cast %143 : vector<1x1x64x16xf32> to vector<64x16xf32>
    %cst_103 = arith.constant dense<0.000000e+00> : vector<24x16xf32>
    %145 = tpu.matmul %61, %144, %cst_103 {dimension_numbers = #tpu.dot_dimension_numbers<[1], [0], [0], [1], [0, 0, 1, 1], [], []>} : vector<24x64xf32>, vector<64x16xf32>, vector<24x16xf32> -> vector<24x16xf32>
    %c0_104 = arith.constant 0 : index
    %c2_105 = arith.constant 2 : index
    %c0_106 = arith.constant 0 : index
    %c0_107 = arith.constant 0 : index
    %146 = vector.load %arg9[%c0_104, %c2_105, %c0_106, %c0_107] : memref<2x4x1x16xf32, #tpu.memory_space<vmem>>, vector<1x1x1x16xf32>
    %147 = vector.shape_cast %146 : vector<1x1x1x16xf32> to vector<1x16xf32>
    %148 = vector.broadcast %147 : vector<1x16xf32> to vector<24x16xf32>
    %149 = arith.addf %145, %148 : vector<24x16xf32>
    %c0_108 = arith.constant 0 : index
    %c2_109 = arith.constant 2 : index
    %c0_110 = arith.constant 0 : index
    %c0_111 = arith.constant 0 : index
    %150 = vector.load %arg10[%c0_108, %c2_109, %c0_110, %c0_111] : memref<2x4x64x16xf32, #tpu.memory_space<vmem>>, vector<1x1x64x16xf32>
    %151 = vector.shape_cast %150 : vector<1x1x64x16xf32> to vector<64x16xf32>
    %cst_112 = arith.constant dense<0.000000e+00> : vector<24x16xf32>
    %152 = tpu.matmul %61, %151, %cst_112 {dimension_numbers = #tpu.dot_dimension_numbers<[1], [0], [0], [1], [0, 0, 1, 1], [], []>} : vector<24x64xf32>, vector<64x16xf32>, vector<24x16xf32> -> vector<24x16xf32>
    %c0_113 = arith.constant 0 : index
    %c2_114 = arith.constant 2 : index
    %c0_115 = arith.constant 0 : index
    %c0_116 = arith.constant 0 : index
    %153 = vector.load %arg11[%c0_113, %c2_114, %c0_115, %c0_116] : memref<2x4x1x16xf32, #tpu.memory_space<vmem>>, vector<1x1x1x16xf32>
    %154 = vector.shape_cast %153 : vector<1x1x1x16xf32> to vector<1x16xf32>
    %155 = vector.broadcast %154 : vector<1x16xf32> to vector<24x16xf32>
    %156 = arith.addf %152, %155 : vector<24x16xf32>
    %c0_117 = arith.constant 0 : index
    %c2_118 = arith.constant 2 : index
    %c0_119 = arith.constant 0 : index
    %c0_120 = arith.constant 0 : index
    %157 = vector.load %arg12[%c0_117, %c2_118, %c0_119, %c0_120] : memref<2x4x64x16xf32, #tpu.memory_space<vmem>>, vector<1x1x64x16xf32>
    %158 = vector.shape_cast %157 : vector<1x1x64x16xf32> to vector<64x16xf32>
    %cst_121 = arith.constant dense<0.000000e+00> : vector<24x16xf32>
    %159 = tpu.matmul %61, %158, %cst_121 {dimension_numbers = #tpu.dot_dimension_numbers<[1], [0], [0], [1], [0, 0, 1, 1], [], []>} : vector<24x64xf32>, vector<64x16xf32>, vector<24x16xf32> -> vector<24x16xf32>
    %c0_122 = arith.constant 0 : index
    %c2_123 = arith.constant 2 : index
    %c0_124 = arith.constant 0 : index
    %c0_125 = arith.constant 0 : index
    %160 = vector.load %arg13[%c0_122, %c2_123, %c0_124, %c0_125] : memref<2x4x1x16xf32, #tpu.memory_space<vmem>>, vector<1x1x1x16xf32>
    %161 = vector.shape_cast %160 : vector<1x1x1x16xf32> to vector<1x16xf32>
    %162 = vector.broadcast %161 : vector<1x16xf32> to vector<24x16xf32>
    %163 = arith.addf %159, %162 : vector<24x16xf32>
    %164 = tpu.transpose %156, [1, 0] : vector<24x16xf32> -> vector<16x24xf32>
    %cst_126 = arith.constant dense<0.000000e+00> : vector<24x24xf32>
    %165 = tpu.matmul %149, %164, %cst_126 {dimension_numbers = #tpu.dot_dimension_numbers<[1], [0], [0], [1], [0, 0, 1, 1], [], []>} : vector<24x16xf32>, vector<16x24xf32>, vector<24x24xf32> -> vector<24x24xf32>
    %166 = vector.broadcast %35 : vector<1x24xf32> to vector<24x24xf32>
    %167 = arith.addf %165, %166 : vector<24x24xf32>
    %cst_127 = arith.constant dense<0xFF800000> : vector<24xf32>
    %168 = vector.multi_reduction <maximumf>, %167, %cst_127 [1] : vector<24x24xf32> to vector<24xf32>
    %169 = vector.shape_cast %168 : vector<24xf32> to vector<24x1xf32>
    %170 = vector.broadcast %169 : vector<24x1xf32> to vector<24x24xf32>
    %171 = arith.subf %167, %170 : vector<24x24xf32>
    %172 = math.exp %171 : vector<24x24xf32>
    %cst_128 = arith.constant dense<0.000000e+00> : vector<24xf32>
    %173 = vector.multi_reduction <add>, %172, %cst_128 [1] : vector<24x24xf32> to vector<24xf32>
    %174 = vector.shape_cast %173 : vector<24xf32> to vector<24x1xf32>
    %175 = tpu.reciprocal %174 {approx = true} : vector<24x1xf32> -> vector<24x1xf32>
    %176 = vector.broadcast %175 : vector<24x1xf32> to vector<24x24xf32>
    %177 = arith.mulf %172, %176 : vector<24x24xf32>
    %cst_129 = arith.constant dense<0.000000e+00> : vector<24x16xf32>
    %178 = tpu.matmul %177, %163, %cst_129 {dimension_numbers = #tpu.dot_dimension_numbers<[1], [0], [0], [1], [0, 0, 1, 1], [], []>} : vector<24x24xf32>, vector<24x16xf32>, vector<24x16xf32> -> vector<24x16xf32>
    %c0_130 = arith.constant 0 : index
    %c2_131 = arith.constant 2 : index
    %c0_132 = arith.constant 0 : index
    %c0_133 = arith.constant 0 : index
    %179 = vector.load %arg14[%c0_130, %c2_131, %c0_132, %c0_133] : memref<2x4x16x64xf32, #tpu.memory_space<vmem>>, vector<1x1x16x64xf32>
    %180 = vector.shape_cast %179 : vector<1x1x16x64xf32> to vector<16x64xf32>
    %cst_134 = arith.constant dense<0.000000e+00> : vector<24x64xf32>
    %181 = tpu.matmul %178, %180, %cst_134 {dimension_numbers = #tpu.dot_dimension_numbers<[1], [0], [0], [1], [0, 0, 1, 1], [], []>} : vector<24x16xf32>, vector<16x64xf32>, vector<24x64xf32> -> vector<24x64xf32>
    %182 = arith.addf %142, %181 : vector<24x64xf32>
    %c0_135 = arith.constant 0 : index
    %c3 = arith.constant 3 : index
    %c0_136 = arith.constant 0 : index
    %c0_137 = arith.constant 0 : index
    %183 = vector.load %arg8[%c0_135, %c3, %c0_136, %c0_137] : memref<2x4x64x16xf32, #tpu.memory_space<vmem>>, vector<1x1x64x16xf32>
    %184 = vector.shape_cast %183 : vector<1x1x64x16xf32> to vector<64x16xf32>
    %cst_138 = arith.constant dense<0.000000e+00> : vector<24x16xf32>
    %185 = tpu.matmul %61, %184, %cst_138 {dimension_numbers = #tpu.dot_dimension_numbers<[1], [0], [0], [1], [0, 0, 1, 1], [], []>} : vector<24x64xf32>, vector<64x16xf32>, vector<24x16xf32> -> vector<24x16xf32>
    %c0_139 = arith.constant 0 : index
    %c3_140 = arith.constant 3 : index
    %c0_141 = arith.constant 0 : index
    %c0_142 = arith.constant 0 : index
    %186 = vector.load %arg9[%c0_139, %c3_140, %c0_141, %c0_142] : memref<2x4x1x16xf32, #tpu.memory_space<vmem>>, vector<1x1x1x16xf32>
    %187 = vector.shape_cast %186 : vector<1x1x1x16xf32> to vector<1x16xf32>
    %188 = vector.broadcast %187 : vector<1x16xf32> to vector<24x16xf32>
    %189 = arith.addf %185, %188 : vector<24x16xf32>
    %c0_143 = arith.constant 0 : index
    %c3_144 = arith.constant 3 : index
    %c0_145 = arith.constant 0 : index
    %c0_146 = arith.constant 0 : index
    %190 = vector.load %arg10[%c0_143, %c3_144, %c0_145, %c0_146] : memref<2x4x64x16xf32, #tpu.memory_space<vmem>>, vector<1x1x64x16xf32>
    %191 = vector.shape_cast %190 : vector<1x1x64x16xf32> to vector<64x16xf32>
    %cst_147 = arith.constant dense<0.000000e+00> : vector<24x16xf32>
    %192 = tpu.matmul %61, %191, %cst_147 {dimension_numbers = #tpu.dot_dimension_numbers<[1], [0], [0], [1], [0, 0, 1, 1], [], []>} : vector<24x64xf32>, vector<64x16xf32>, vector<24x16xf32> -> vector<24x16xf32>
    %c0_148 = arith.constant 0 : index
    %c3_149 = arith.constant 3 : index
    %c0_150 = arith.constant 0 : index
    %c0_151 = arith.constant 0 : index
    %193 = vector.load %arg11[%c0_148, %c3_149, %c0_150, %c0_151] : memref<2x4x1x16xf32, #tpu.memory_space<vmem>>, vector<1x1x1x16xf32>
    %194 = vector.shape_cast %193 : vector<1x1x1x16xf32> to vector<1x16xf32>
    %195 = vector.broadcast %194 : vector<1x16xf32> to vector<24x16xf32>
    %196 = arith.addf %192, %195 : vector<24x16xf32>
    %c0_152 = arith.constant 0 : index
    %c3_153 = arith.constant 3 : index
    %c0_154 = arith.constant 0 : index
    %c0_155 = arith.constant 0 : index
    %197 = vector.load %arg12[%c0_152, %c3_153, %c0_154, %c0_155] : memref<2x4x64x16xf32, #tpu.memory_space<vmem>>, vector<1x1x64x16xf32>
    %198 = vector.shape_cast %197 : vector<1x1x64x16xf32> to vector<64x16xf32>
    %cst_156 = arith.constant dense<0.000000e+00> : vector<24x16xf32>
    %199 = tpu.matmul %61, %198, %cst_156 {dimension_numbers = #tpu.dot_dimension_numbers<[1], [0], [0], [1], [0, 0, 1, 1], [], []>} : vector<24x64xf32>, vector<64x16xf32>, vector<24x16xf32> -> vector<24x16xf32>
    %c0_157 = arith.constant 0 : index
    %c3_158 = arith.constant 3 : index
    %c0_159 = arith.constant 0 : index
    %c0_160 = arith.constant 0 : index
    %200 = vector.load %arg13[%c0_157, %c3_158, %c0_159, %c0_160] : memref<2x4x1x16xf32, #tpu.memory_space<vmem>>, vector<1x1x1x16xf32>
    %201 = vector.shape_cast %200 : vector<1x1x1x16xf32> to vector<1x16xf32>
    %202 = vector.broadcast %201 : vector<1x16xf32> to vector<24x16xf32>
    %203 = arith.addf %199, %202 : vector<24x16xf32>
    %204 = tpu.transpose %196, [1, 0] : vector<24x16xf32> -> vector<16x24xf32>
    %cst_161 = arith.constant dense<0.000000e+00> : vector<24x24xf32>
    %205 = tpu.matmul %189, %204, %cst_161 {dimension_numbers = #tpu.dot_dimension_numbers<[1], [0], [0], [1], [0, 0, 1, 1], [], []>} : vector<24x16xf32>, vector<16x24xf32>, vector<24x24xf32> -> vector<24x24xf32>
    %206 = vector.broadcast %35 : vector<1x24xf32> to vector<24x24xf32>
    %207 = arith.addf %205, %206 : vector<24x24xf32>
    %cst_162 = arith.constant dense<0xFF800000> : vector<24xf32>
    %208 = vector.multi_reduction <maximumf>, %207, %cst_162 [1] : vector<24x24xf32> to vector<24xf32>
    %209 = vector.shape_cast %208 : vector<24xf32> to vector<24x1xf32>
    %210 = vector.broadcast %209 : vector<24x1xf32> to vector<24x24xf32>
    %211 = arith.subf %207, %210 : vector<24x24xf32>
    %212 = math.exp %211 : vector<24x24xf32>
    %cst_163 = arith.constant dense<0.000000e+00> : vector<24xf32>
    %213 = vector.multi_reduction <add>, %212, %cst_163 [1] : vector<24x24xf32> to vector<24xf32>
    %214 = vector.shape_cast %213 : vector<24xf32> to vector<24x1xf32>
    %215 = tpu.reciprocal %214 {approx = true} : vector<24x1xf32> -> vector<24x1xf32>
    %216 = vector.broadcast %215 : vector<24x1xf32> to vector<24x24xf32>
    %217 = arith.mulf %212, %216 : vector<24x24xf32>
    %cst_164 = arith.constant dense<0.000000e+00> : vector<24x16xf32>
    %218 = tpu.matmul %217, %203, %cst_164 {dimension_numbers = #tpu.dot_dimension_numbers<[1], [0], [0], [1], [0, 0, 1, 1], [], []>} : vector<24x24xf32>, vector<24x16xf32>, vector<24x16xf32> -> vector<24x16xf32>
    %c0_165 = arith.constant 0 : index
    %c3_166 = arith.constant 3 : index
    %c0_167 = arith.constant 0 : index
    %c0_168 = arith.constant 0 : index
    %219 = vector.load %arg14[%c0_165, %c3_166, %c0_167, %c0_168] : memref<2x4x16x64xf32, #tpu.memory_space<vmem>>, vector<1x1x16x64xf32>
    %220 = vector.shape_cast %219 : vector<1x1x16x64xf32> to vector<16x64xf32>
    %cst_169 = arith.constant dense<0.000000e+00> : vector<24x64xf32>
    %221 = tpu.matmul %218, %220, %cst_169 {dimension_numbers = #tpu.dot_dimension_numbers<[1], [0], [0], [1], [0, 0, 1, 1], [], []>} : vector<24x16xf32>, vector<16x64xf32>, vector<24x64xf32> -> vector<24x64xf32>
    %222 = arith.addf %182, %221 : vector<24x64xf32>
    %223 = arith.addf %29, %222 : vector<24x64xf32>
    %c0_170 = arith.constant 0 : index
    %c0_171 = arith.constant 0 : index
    %c0_172 = arith.constant 0 : index
    %224 = vector.load %arg15[%c0_170, %c0_171, %c0_172] : memref<2x1x64xf32, #tpu.memory_space<vmem>>, vector<1x1x64xf32>
    %225 = vector.shape_cast %224 : vector<1x1x64xf32> to vector<1x64xf32>
    %226 = vector.broadcast %225 : vector<1x64xf32> to vector<24x64xf32>
    %227 = arith.addf %223, %226 : vector<24x64xf32>
    %c0_173 = arith.constant 0 : index
    %c0_174 = arith.constant 0 : index
    %c0_175 = arith.constant 0 : index
    %228 = vector.load %arg16[%c0_173, %c0_174, %c0_175] : memref<2x1x64xf32, #tpu.memory_space<vmem>>, vector<1x1x64xf32>
    %229 = vector.shape_cast %228 : vector<1x1x64xf32> to vector<1x64xf32>
    %c0_176 = arith.constant 0 : index
    %c0_177 = arith.constant 0 : index
    %c0_178 = arith.constant 0 : index
    %230 = vector.load %arg17[%c0_176, %c0_177, %c0_178] : memref<2x1x64xf32, #tpu.memory_space<vmem>>, vector<1x1x64xf32>
    %231 = vector.shape_cast %230 : vector<1x1x64xf32> to vector<1x64xf32>
    %cst_179 = arith.constant dense<0.000000e+00> : vector<24xf32>
    %232 = vector.multi_reduction <add>, %227, %cst_179 [1] : vector<24x64xf32> to vector<24xf32>
    %233 = vector.shape_cast %232 : vector<24xf32> to vector<24x1xf32>
    %cst_180 = arith.constant 6.400000e+01 : f32
    %234 = vector.broadcast %cst_180 : f32 to vector<24x1xf32>
    %235 = arith.divf %233, %234 : vector<24x1xf32>
    %236 = vector.broadcast %235 : vector<24x1xf32> to vector<24x64xf32>
    %237 = arith.subf %227, %236 : vector<24x64xf32>
    %238 = arith.mulf %237, %237 : vector<24x64xf32>
    %cst_181 = arith.constant dense<0.000000e+00> : vector<24xf32>
    %239 = vector.multi_reduction <add>, %238, %cst_181 [1] : vector<24x64xf32> to vector<24xf32>
    %240 = vector.shape_cast %239 : vector<24xf32> to vector<24x1xf32>
    %cst_182 = arith.constant 6.400000e+01 : f32
    %241 = vector.broadcast %cst_182 : f32 to vector<24x1xf32>
    %242 = arith.divf %240, %241 : vector<24x1xf32>
    %243 = vector.broadcast %235 : vector<24x1xf32> to vector<24x64xf32>
    %244 = arith.subf %227, %243 : vector<24x64xf32>
    %cst_183 = arith.constant 9.99999974E-6 : f32
    %245 = vector.broadcast %cst_183 : f32 to vector<24x1xf32>
    %246 = arith.addf %242, %245 : vector<24x1xf32>
    %247 = math.rsqrt %246 : vector<24x1xf32>
    %248 = vector.broadcast %247 : vector<24x1xf32> to vector<24x64xf32>
    %249 = arith.mulf %244, %248 : vector<24x64xf32>
    %250 = vector.broadcast %229 : vector<1x64xf32> to vector<24x64xf32>
    %251 = arith.mulf %249, %250 : vector<24x64xf32>
    %252 = vector.broadcast %231 : vector<1x64xf32> to vector<24x64xf32>
    %253 = arith.addf %251, %252 : vector<24x64xf32>
    %c0_184 = arith.constant 0 : index
    %c0_185 = arith.constant 0 : index
    %c0_186 = arith.constant 0 : index
    %254 = vector.load %arg18[%c0_184, %c0_185, %c0_186] : memref<2x64x256xf32, #tpu.memory_space<vmem>>, vector<1x64x256xf32>
    %255 = vector.shape_cast %254 : vector<1x64x256xf32> to vector<64x256xf32>
    %cst_187 = arith.constant dense<0.000000e+00> : vector<24x256xf32>
    %256 = tpu.matmul %253, %255, %cst_187 {dimension_numbers = #tpu.dot_dimension_numbers<[1], [0], [0], [1], [0, 0, 1, 1], [], []>} : vector<24x64xf32>, vector<64x256xf32>, vector<24x256xf32> -> vector<24x256xf32>
    %c0_188 = arith.constant 0 : index
    %c0_189 = arith.constant 0 : index
    %c0_190 = arith.constant 0 : index
    %257 = vector.load %arg19[%c0_188, %c0_189, %c0_190] : memref<2x1x256xf32, #tpu.memory_space<vmem>>, vector<1x1x256xf32>
    %258 = vector.shape_cast %257 : vector<1x1x256xf32> to vector<1x256xf32>
    %259 = vector.broadcast %258 : vector<1x256xf32> to vector<24x256xf32>
    %260 = arith.addf %256, %259 : vector<24x256xf32>
    %cst_191 = arith.constant 5.000000e-01 : f32
    %261 = vector.broadcast %cst_191 : f32 to vector<24x256xf32>
    %262 = arith.mulf %261, %260 : vector<24x256xf32>
    %cst_192 = arith.constant 0.707106769 : f32
    %263 = vector.broadcast %cst_192 : f32 to vector<24x256xf32>
    %264 = arith.mulf %260, %263 : vector<24x256xf32>
    %265 = math.absf %264 : vector<24x256xf32>
    %cst_193 = arith.constant 0.327591091 : f32
    %266 = vector.broadcast %cst_193 : f32 to vector<24x256xf32>
    %267 = arith.mulf %266, %265 : vector<24x256xf32>
    %cst_194 = arith.constant 1.000000e+00 : f32
    %268 = vector.broadcast %cst_194 : f32 to vector<24x256xf32>
    %269 = arith.addf %268, %267 : vector<24x256xf32>
    %cst_195 = arith.constant 1.000000e+00 : f32
    %270 = vector.broadcast %cst_195 : f32 to vector<24x256xf32>
    %271 = arith.divf %270, %269 : vector<24x256xf32>
    %cst_196 = arith.constant 1.06140542 : f32
    %272 = vector.broadcast %cst_196 : f32 to vector<24x256xf32>
    %273 = arith.mulf %272, %271 : vector<24x256xf32>
    %cst_197 = arith.constant -1.45315206 : f32
    %274 = vector.broadcast %cst_197 : f32 to vector<24x256xf32>
    %275 = arith.addf %273, %274 : vector<24x256xf32>
    %276 = arith.mulf %275, %271 : vector<24x256xf32>
    %cst_198 = arith.constant 1.42141378 : f32
    %277 = vector.broadcast %cst_198 : f32 to vector<24x256xf32>
    %278 = arith.addf %276, %277 : vector<24x256xf32>
    %279 = arith.mulf %278, %271 : vector<24x256xf32>
    %cst_199 = arith.constant -0.284496725 : f32
    %280 = vector.broadcast %cst_199 : f32 to vector<24x256xf32>
    %281 = arith.addf %279, %280 : vector<24x256xf32>
    %282 = arith.mulf %281, %271 : vector<24x256xf32>
    %cst_200 = arith.constant 0.254829586 : f32
    %283 = vector.broadcast %cst_200 : f32 to vector<24x256xf32>
    %284 = arith.addf %282, %283 : vector<24x256xf32>
    %285 = arith.mulf %284, %271 : vector<24x256xf32>
    %cst_201 = arith.constant 0.000000e+00 : f32
    %286 = vector.broadcast %cst_201 : f32 to vector<24x256xf32>
    %287 = arith.subf %286, %265 : vector<24x256xf32>
    %288 = arith.mulf %287, %265 : vector<24x256xf32>
    %289 = math.exp %288 : vector<24x256xf32>
    %290 = arith.mulf %285, %289 : vector<24x256xf32>
    %cst_202 = arith.constant 1.000000e+00 : f32
    %291 = vector.broadcast %cst_202 : f32 to vector<24x256xf32>
    %292 = arith.subf %291, %290 : vector<24x256xf32>
    %cst_203 = arith.constant 0.000000e+00 : f32
    %293 = vector.broadcast %cst_203 : f32 to vector<24x256xf32>
    %294 = arith.cmpf oge, %264, %293 : vector<24x256xf32>
    %cst_204 = arith.constant 0.000000e+00 : f32
    %295 = vector.broadcast %cst_204 : f32 to vector<24x256xf32>
    %296 = arith.subf %295, %292 : vector<24x256xf32>
    %297 = arith.select %294, %292, %296 : vector<24x256xi1>, vector<24x256xf32>
    %cst_205 = arith.constant 1.000000e+00 : f32
    %298 = vector.broadcast %cst_205 : f32 to vector<24x256xf32>
    %299 = arith.addf %298, %297 : vector<24x256xf32>
    %300 = arith.mulf %262, %299 : vector<24x256xf32>
    %c0_206 = arith.constant 0 : index
    %c0_207 = arith.constant 0 : index
    %c0_208 = arith.constant 0 : index
    %301 = vector.load %arg20[%c0_206, %c0_207, %c0_208] : memref<2x256x64xf32, #tpu.memory_space<vmem>>, vector<1x256x64xf32>
    %302 = vector.shape_cast %301 : vector<1x256x64xf32> to vector<256x64xf32>
    %cst_209 = arith.constant dense<0.000000e+00> : vector<24x64xf32>
    %303 = tpu.matmul %300, %302, %cst_209 {dimension_numbers = #tpu.dot_dimension_numbers<[1], [0], [0], [1], [0, 0, 1, 1], [], []>} : vector<24x256xf32>, vector<256x64xf32>, vector<24x64xf32> -> vector<24x64xf32>
    %304 = arith.addf %227, %303 : vector<24x64xf32>
    %c0_210 = arith.constant 0 : index
    %c0_211 = arith.constant 0 : index
    %c0_212 = arith.constant 0 : index
    %305 = vector.load %arg21[%c0_210, %c0_211, %c0_212] : memref<2x1x64xf32, #tpu.memory_space<vmem>>, vector<1x1x64xf32>
    %306 = vector.shape_cast %305 : vector<1x1x64xf32> to vector<1x64xf32>
    %307 = vector.broadcast %306 : vector<1x64xf32> to vector<24x64xf32>
    %308 = arith.addf %304, %307 : vector<24x64xf32>
    %c1_213 = arith.constant 1 : index
    %c0_214 = arith.constant 0 : index
    %c0_215 = arith.constant 0 : index
    %309 = vector.load %arg6[%c1_213, %c0_214, %c0_215] : memref<2x1x64xf32, #tpu.memory_space<vmem>>, vector<1x1x64xf32>
    %310 = vector.shape_cast %309 : vector<1x1x64xf32> to vector<1x64xf32>
    %c1_216 = arith.constant 1 : index
    %c0_217 = arith.constant 0 : index
    %c0_218 = arith.constant 0 : index
    %311 = vector.load %arg7[%c1_216, %c0_217, %c0_218] : memref<2x1x64xf32, #tpu.memory_space<vmem>>, vector<1x1x64xf32>
    %312 = vector.shape_cast %311 : vector<1x1x64xf32> to vector<1x64xf32>
    %cst_219 = arith.constant dense<0.000000e+00> : vector<24xf32>
    %313 = vector.multi_reduction <add>, %308, %cst_219 [1] : vector<24x64xf32> to vector<24xf32>
    %314 = vector.shape_cast %313 : vector<24xf32> to vector<24x1xf32>
    %cst_220 = arith.constant 6.400000e+01 : f32
    %315 = vector.broadcast %cst_220 : f32 to vector<24x1xf32>
    %316 = arith.divf %314, %315 : vector<24x1xf32>
    %317 = vector.broadcast %316 : vector<24x1xf32> to vector<24x64xf32>
    %318 = arith.subf %308, %317 : vector<24x64xf32>
    %319 = arith.mulf %318, %318 : vector<24x64xf32>
    %cst_221 = arith.constant dense<0.000000e+00> : vector<24xf32>
    %320 = vector.multi_reduction <add>, %319, %cst_221 [1] : vector<24x64xf32> to vector<24xf32>
    %321 = vector.shape_cast %320 : vector<24xf32> to vector<24x1xf32>
    %cst_222 = arith.constant 6.400000e+01 : f32
    %322 = vector.broadcast %cst_222 : f32 to vector<24x1xf32>
    %323 = arith.divf %321, %322 : vector<24x1xf32>
    %324 = vector.broadcast %316 : vector<24x1xf32> to vector<24x64xf32>
    %325 = arith.subf %308, %324 : vector<24x64xf32>
    %cst_223 = arith.constant 9.99999974E-6 : f32
    %326 = vector.broadcast %cst_223 : f32 to vector<24x1xf32>
    %327 = arith.addf %323, %326 : vector<24x1xf32>
    %328 = math.rsqrt %327 : vector<24x1xf32>
    %329 = vector.broadcast %328 : vector<24x1xf32> to vector<24x64xf32>
    %330 = arith.mulf %325, %329 : vector<24x64xf32>
    %331 = vector.broadcast %310 : vector<1x64xf32> to vector<24x64xf32>
    %332 = arith.mulf %330, %331 : vector<24x64xf32>
    %333 = vector.broadcast %312 : vector<1x64xf32> to vector<24x64xf32>
    %334 = arith.addf %332, %333 : vector<24x64xf32>
    %cst_224 = arith.constant 0.000000e+00 : f32
    %335 = vector.broadcast %cst_224 : f32 to vector<24x64xf32>
    %c1_225 = arith.constant 1 : index
    %c0_226 = arith.constant 0 : index
    %c0_227 = arith.constant 0 : index
    %c0_228 = arith.constant 0 : index
    %336 = vector.load %arg8[%c1_225, %c0_226, %c0_227, %c0_228] : memref<2x4x64x16xf32, #tpu.memory_space<vmem>>, vector<1x1x64x16xf32>
    %337 = vector.shape_cast %336 : vector<1x1x64x16xf32> to vector<64x16xf32>
    %cst_229 = arith.constant dense<0.000000e+00> : vector<24x16xf32>
    %338 = tpu.matmul %334, %337, %cst_229 {dimension_numbers = #tpu.dot_dimension_numbers<[1], [0], [0], [1], [0, 0, 1, 1], [], []>} : vector<24x64xf32>, vector<64x16xf32>, vector<24x16xf32> -> vector<24x16xf32>
    %c1_230 = arith.constant 1 : index
    %c0_231 = arith.constant 0 : index
    %c0_232 = arith.constant 0 : index
    %c0_233 = arith.constant 0 : index
    %339 = vector.load %arg9[%c1_230, %c0_231, %c0_232, %c0_233] : memref<2x4x1x16xf32, #tpu.memory_space<vmem>>, vector<1x1x1x16xf32>
    %340 = vector.shape_cast %339 : vector<1x1x1x16xf32> to vector<1x16xf32>
    %341 = vector.broadcast %340 : vector<1x16xf32> to vector<24x16xf32>
    %342 = arith.addf %338, %341 : vector<24x16xf32>
    %c1_234 = arith.constant 1 : index
    %c0_235 = arith.constant 0 : index
    %c0_236 = arith.constant 0 : index
    %c0_237 = arith.constant 0 : index
    %343 = vector.load %arg10[%c1_234, %c0_235, %c0_236, %c0_237] : memref<2x4x64x16xf32, #tpu.memory_space<vmem>>, vector<1x1x64x16xf32>
    %344 = vector.shape_cast %343 : vector<1x1x64x16xf32> to vector<64x16xf32>
    %cst_238 = arith.constant dense<0.000000e+00> : vector<24x16xf32>
    %345 = tpu.matmul %334, %344, %cst_238 {dimension_numbers = #tpu.dot_dimension_numbers<[1], [0], [0], [1], [0, 0, 1, 1], [], []>} : vector<24x64xf32>, vector<64x16xf32>, vector<24x16xf32> -> vector<24x16xf32>
    %c1_239 = arith.constant 1 : index
    %c0_240 = arith.constant 0 : index
    %c0_241 = arith.constant 0 : index
    %c0_242 = arith.constant 0 : index
    %346 = vector.load %arg11[%c1_239, %c0_240, %c0_241, %c0_242] : memref<2x4x1x16xf32, #tpu.memory_space<vmem>>, vector<1x1x1x16xf32>
    %347 = vector.shape_cast %346 : vector<1x1x1x16xf32> to vector<1x16xf32>
    %348 = vector.broadcast %347 : vector<1x16xf32> to vector<24x16xf32>
    %349 = arith.addf %345, %348 : vector<24x16xf32>
    %c1_243 = arith.constant 1 : index
    %c0_244 = arith.constant 0 : index
    %c0_245 = arith.constant 0 : index
    %c0_246 = arith.constant 0 : index
    %350 = vector.load %arg12[%c1_243, %c0_244, %c0_245, %c0_246] : memref<2x4x64x16xf32, #tpu.memory_space<vmem>>, vector<1x1x64x16xf32>
    %351 = vector.shape_cast %350 : vector<1x1x64x16xf32> to vector<64x16xf32>
    %cst_247 = arith.constant dense<0.000000e+00> : vector<24x16xf32>
    %352 = tpu.matmul %334, %351, %cst_247 {dimension_numbers = #tpu.dot_dimension_numbers<[1], [0], [0], [1], [0, 0, 1, 1], [], []>} : vector<24x64xf32>, vector<64x16xf32>, vector<24x16xf32> -> vector<24x16xf32>
    %c1_248 = arith.constant 1 : index
    %c0_249 = arith.constant 0 : index
    %c0_250 = arith.constant 0 : index
    %c0_251 = arith.constant 0 : index
    %353 = vector.load %arg13[%c1_248, %c0_249, %c0_250, %c0_251] : memref<2x4x1x16xf32, #tpu.memory_space<vmem>>, vector<1x1x1x16xf32>
    %354 = vector.shape_cast %353 : vector<1x1x1x16xf32> to vector<1x16xf32>
    %355 = vector.broadcast %354 : vector<1x16xf32> to vector<24x16xf32>
    %356 = arith.addf %352, %355 : vector<24x16xf32>
    %357 = tpu.transpose %349, [1, 0] : vector<24x16xf32> -> vector<16x24xf32>
    %cst_252 = arith.constant dense<0.000000e+00> : vector<24x24xf32>
    %358 = tpu.matmul %342, %357, %cst_252 {dimension_numbers = #tpu.dot_dimension_numbers<[1], [0], [0], [1], [0, 0, 1, 1], [], []>} : vector<24x16xf32>, vector<16x24xf32>, vector<24x24xf32> -> vector<24x24xf32>
    %359 = vector.broadcast %35 : vector<1x24xf32> to vector<24x24xf32>
    %360 = arith.addf %358, %359 : vector<24x24xf32>
    %cst_253 = arith.constant dense<0xFF800000> : vector<24xf32>
    %361 = vector.multi_reduction <maximumf>, %360, %cst_253 [1] : vector<24x24xf32> to vector<24xf32>
    %362 = vector.shape_cast %361 : vector<24xf32> to vector<24x1xf32>
    %363 = vector.broadcast %362 : vector<24x1xf32> to vector<24x24xf32>
    %364 = arith.subf %360, %363 : vector<24x24xf32>
    %365 = math.exp %364 : vector<24x24xf32>
    %cst_254 = arith.constant dense<0.000000e+00> : vector<24xf32>
    %366 = vector.multi_reduction <add>, %365, %cst_254 [1] : vector<24x24xf32> to vector<24xf32>
    %367 = vector.shape_cast %366 : vector<24xf32> to vector<24x1xf32>
    %368 = tpu.reciprocal %367 {approx = true} : vector<24x1xf32> -> vector<24x1xf32>
    %369 = vector.broadcast %368 : vector<24x1xf32> to vector<24x24xf32>
    %370 = arith.mulf %365, %369 : vector<24x24xf32>
    %cst_255 = arith.constant dense<0.000000e+00> : vector<24x16xf32>
    %371 = tpu.matmul %370, %356, %cst_255 {dimension_numbers = #tpu.dot_dimension_numbers<[1], [0], [0], [1], [0, 0, 1, 1], [], []>} : vector<24x24xf32>, vector<24x16xf32>, vector<24x16xf32> -> vector<24x16xf32>
    %c1_256 = arith.constant 1 : index
    %c0_257 = arith.constant 0 : index
    %c0_258 = arith.constant 0 : index
    %c0_259 = arith.constant 0 : index
    %372 = vector.load %arg14[%c1_256, %c0_257, %c0_258, %c0_259] : memref<2x4x16x64xf32, #tpu.memory_space<vmem>>, vector<1x1x16x64xf32>
    %373 = vector.shape_cast %372 : vector<1x1x16x64xf32> to vector<16x64xf32>
    %cst_260 = arith.constant dense<0.000000e+00> : vector<24x64xf32>
    %374 = tpu.matmul %371, %373, %cst_260 {dimension_numbers = #tpu.dot_dimension_numbers<[1], [0], [0], [1], [0, 0, 1, 1], [], []>} : vector<24x16xf32>, vector<16x64xf32>, vector<24x64xf32> -> vector<24x64xf32>
    %375 = arith.addf %335, %374 : vector<24x64xf32>
    %c1_261 = arith.constant 1 : index
    %c1_262 = arith.constant 1 : index
    %c0_263 = arith.constant 0 : index
    %c0_264 = arith.constant 0 : index
    %376 = vector.load %arg8[%c1_261, %c1_262, %c0_263, %c0_264] : memref<2x4x64x16xf32, #tpu.memory_space<vmem>>, vector<1x1x64x16xf32>
    %377 = vector.shape_cast %376 : vector<1x1x64x16xf32> to vector<64x16xf32>
    %cst_265 = arith.constant dense<0.000000e+00> : vector<24x16xf32>
    %378 = tpu.matmul %334, %377, %cst_265 {dimension_numbers = #tpu.dot_dimension_numbers<[1], [0], [0], [1], [0, 0, 1, 1], [], []>} : vector<24x64xf32>, vector<64x16xf32>, vector<24x16xf32> -> vector<24x16xf32>
    %c1_266 = arith.constant 1 : index
    %c1_267 = arith.constant 1 : index
    %c0_268 = arith.constant 0 : index
    %c0_269 = arith.constant 0 : index
    %379 = vector.load %arg9[%c1_266, %c1_267, %c0_268, %c0_269] : memref<2x4x1x16xf32, #tpu.memory_space<vmem>>, vector<1x1x1x16xf32>
    %380 = vector.shape_cast %379 : vector<1x1x1x16xf32> to vector<1x16xf32>
    %381 = vector.broadcast %380 : vector<1x16xf32> to vector<24x16xf32>
    %382 = arith.addf %378, %381 : vector<24x16xf32>
    %c1_270 = arith.constant 1 : index
    %c1_271 = arith.constant 1 : index
    %c0_272 = arith.constant 0 : index
    %c0_273 = arith.constant 0 : index
    %383 = vector.load %arg10[%c1_270, %c1_271, %c0_272, %c0_273] : memref<2x4x64x16xf32, #tpu.memory_space<vmem>>, vector<1x1x64x16xf32>
    %384 = vector.shape_cast %383 : vector<1x1x64x16xf32> to vector<64x16xf32>
    %cst_274 = arith.constant dense<0.000000e+00> : vector<24x16xf32>
    %385 = tpu.matmul %334, %384, %cst_274 {dimension_numbers = #tpu.dot_dimension_numbers<[1], [0], [0], [1], [0, 0, 1, 1], [], []>} : vector<24x64xf32>, vector<64x16xf32>, vector<24x16xf32> -> vector<24x16xf32>
    %c1_275 = arith.constant 1 : index
    %c1_276 = arith.constant 1 : index
    %c0_277 = arith.constant 0 : index
    %c0_278 = arith.constant 0 : index
    %386 = vector.load %arg11[%c1_275, %c1_276, %c0_277, %c0_278] : memref<2x4x1x16xf32, #tpu.memory_space<vmem>>, vector<1x1x1x16xf32>
    %387 = vector.shape_cast %386 : vector<1x1x1x16xf32> to vector<1x16xf32>
    %388 = vector.broadcast %387 : vector<1x16xf32> to vector<24x16xf32>
    %389 = arith.addf %385, %388 : vector<24x16xf32>
    %c1_279 = arith.constant 1 : index
    %c1_280 = arith.constant 1 : index
    %c0_281 = arith.constant 0 : index
    %c0_282 = arith.constant 0 : index
    %390 = vector.load %arg12[%c1_279, %c1_280, %c0_281, %c0_282] : memref<2x4x64x16xf32, #tpu.memory_space<vmem>>, vector<1x1x64x16xf32>
    %391 = vector.shape_cast %390 : vector<1x1x64x16xf32> to vector<64x16xf32>
    %cst_283 = arith.constant dense<0.000000e+00> : vector<24x16xf32>
    %392 = tpu.matmul %334, %391, %cst_283 {dimension_numbers = #tpu.dot_dimension_numbers<[1], [0], [0], [1], [0, 0, 1, 1], [], []>} : vector<24x64xf32>, vector<64x16xf32>, vector<24x16xf32> -> vector<24x16xf32>
    %c1_284 = arith.constant 1 : index
    %c1_285 = arith.constant 1 : index
    %c0_286 = arith.constant 0 : index
    %c0_287 = arith.constant 0 : index
    %393 = vector.load %arg13[%c1_284, %c1_285, %c0_286, %c0_287] : memref<2x4x1x16xf32, #tpu.memory_space<vmem>>, vector<1x1x1x16xf32>
    %394 = vector.shape_cast %393 : vector<1x1x1x16xf32> to vector<1x16xf32>
    %395 = vector.broadcast %394 : vector<1x16xf32> to vector<24x16xf32>
    %396 = arith.addf %392, %395 : vector<24x16xf32>
    %397 = tpu.transpose %389, [1, 0] : vector<24x16xf32> -> vector<16x24xf32>
    %cst_288 = arith.constant dense<0.000000e+00> : vector<24x24xf32>
    %398 = tpu.matmul %382, %397, %cst_288 {dimension_numbers = #tpu.dot_dimension_numbers<[1], [0], [0], [1], [0, 0, 1, 1], [], []>} : vector<24x16xf32>, vector<16x24xf32>, vector<24x24xf32> -> vector<24x24xf32>
    %399 = vector.broadcast %35 : vector<1x24xf32> to vector<24x24xf32>
    %400 = arith.addf %398, %399 : vector<24x24xf32>
    %cst_289 = arith.constant dense<0xFF800000> : vector<24xf32>
    %401 = vector.multi_reduction <maximumf>, %400, %cst_289 [1] : vector<24x24xf32> to vector<24xf32>
    %402 = vector.shape_cast %401 : vector<24xf32> to vector<24x1xf32>
    %403 = vector.broadcast %402 : vector<24x1xf32> to vector<24x24xf32>
    %404 = arith.subf %400, %403 : vector<24x24xf32>
    %405 = math.exp %404 : vector<24x24xf32>
    %cst_290 = arith.constant dense<0.000000e+00> : vector<24xf32>
    %406 = vector.multi_reduction <add>, %405, %cst_290 [1] : vector<24x24xf32> to vector<24xf32>
    %407 = vector.shape_cast %406 : vector<24xf32> to vector<24x1xf32>
    %408 = tpu.reciprocal %407 {approx = true} : vector<24x1xf32> -> vector<24x1xf32>
    %409 = vector.broadcast %408 : vector<24x1xf32> to vector<24x24xf32>
    %410 = arith.mulf %405, %409 : vector<24x24xf32>
    %cst_291 = arith.constant dense<0.000000e+00> : vector<24x16xf32>
    %411 = tpu.matmul %410, %396, %cst_291 {dimension_numbers = #tpu.dot_dimension_numbers<[1], [0], [0], [1], [0, 0, 1, 1], [], []>} : vector<24x24xf32>, vector<24x16xf32>, vector<24x16xf32> -> vector<24x16xf32>
    %c1_292 = arith.constant 1 : index
    %c1_293 = arith.constant 1 : index
    %c0_294 = arith.constant 0 : index
    %c0_295 = arith.constant 0 : index
    %412 = vector.load %arg14[%c1_292, %c1_293, %c0_294, %c0_295] : memref<2x4x16x64xf32, #tpu.memory_space<vmem>>, vector<1x1x16x64xf32>
    %413 = vector.shape_cast %412 : vector<1x1x16x64xf32> to vector<16x64xf32>
    %cst_296 = arith.constant dense<0.000000e+00> : vector<24x64xf32>
    %414 = tpu.matmul %411, %413, %cst_296 {dimension_numbers = #tpu.dot_dimension_numbers<[1], [0], [0], [1], [0, 0, 1, 1], [], []>} : vector<24x16xf32>, vector<16x64xf32>, vector<24x64xf32> -> vector<24x64xf32>
    %415 = arith.addf %375, %414 : vector<24x64xf32>
    %c1_297 = arith.constant 1 : index
    %c2_298 = arith.constant 2 : index
    %c0_299 = arith.constant 0 : index
    %c0_300 = arith.constant 0 : index
    %416 = vector.load %arg8[%c1_297, %c2_298, %c0_299, %c0_300] : memref<2x4x64x16xf32, #tpu.memory_space<vmem>>, vector<1x1x64x16xf32>
    %417 = vector.shape_cast %416 : vector<1x1x64x16xf32> to vector<64x16xf32>
    %cst_301 = arith.constant dense<0.000000e+00> : vector<24x16xf32>
    %418 = tpu.matmul %334, %417, %cst_301 {dimension_numbers = #tpu.dot_dimension_numbers<[1], [0], [0], [1], [0, 0, 1, 1], [], []>} : vector<24x64xf32>, vector<64x16xf32>, vector<24x16xf32> -> vector<24x16xf32>
    %c1_302 = arith.constant 1 : index
    %c2_303 = arith.constant 2 : index
    %c0_304 = arith.constant 0 : index
    %c0_305 = arith.constant 0 : index
    %419 = vector.load %arg9[%c1_302, %c2_303, %c0_304, %c0_305] : memref<2x4x1x16xf32, #tpu.memory_space<vmem>>, vector<1x1x1x16xf32>
    %420 = vector.shape_cast %419 : vector<1x1x1x16xf32> to vector<1x16xf32>
    %421 = vector.broadcast %420 : vector<1x16xf32> to vector<24x16xf32>
    %422 = arith.addf %418, %421 : vector<24x16xf32>
    %c1_306 = arith.constant 1 : index
    %c2_307 = arith.constant 2 : index
    %c0_308 = arith.constant 0 : index
    %c0_309 = arith.constant 0 : index
    %423 = vector.load %arg10[%c1_306, %c2_307, %c0_308, %c0_309] : memref<2x4x64x16xf32, #tpu.memory_space<vmem>>, vector<1x1x64x16xf32>
    %424 = vector.shape_cast %423 : vector<1x1x64x16xf32> to vector<64x16xf32>
    %cst_310 = arith.constant dense<0.000000e+00> : vector<24x16xf32>
    %425 = tpu.matmul %334, %424, %cst_310 {dimension_numbers = #tpu.dot_dimension_numbers<[1], [0], [0], [1], [0, 0, 1, 1], [], []>} : vector<24x64xf32>, vector<64x16xf32>, vector<24x16xf32> -> vector<24x16xf32>
    %c1_311 = arith.constant 1 : index
    %c2_312 = arith.constant 2 : index
    %c0_313 = arith.constant 0 : index
    %c0_314 = arith.constant 0 : index
    %426 = vector.load %arg11[%c1_311, %c2_312, %c0_313, %c0_314] : memref<2x4x1x16xf32, #tpu.memory_space<vmem>>, vector<1x1x1x16xf32>
    %427 = vector.shape_cast %426 : vector<1x1x1x16xf32> to vector<1x16xf32>
    %428 = vector.broadcast %427 : vector<1x16xf32> to vector<24x16xf32>
    %429 = arith.addf %425, %428 : vector<24x16xf32>
    %c1_315 = arith.constant 1 : index
    %c2_316 = arith.constant 2 : index
    %c0_317 = arith.constant 0 : index
    %c0_318 = arith.constant 0 : index
    %430 = vector.load %arg12[%c1_315, %c2_316, %c0_317, %c0_318] : memref<2x4x64x16xf32, #tpu.memory_space<vmem>>, vector<1x1x64x16xf32>
    %431 = vector.shape_cast %430 : vector<1x1x64x16xf32> to vector<64x16xf32>
    %cst_319 = arith.constant dense<0.000000e+00> : vector<24x16xf32>
    %432 = tpu.matmul %334, %431, %cst_319 {dimension_numbers = #tpu.dot_dimension_numbers<[1], [0], [0], [1], [0, 0, 1, 1], [], []>} : vector<24x64xf32>, vector<64x16xf32>, vector<24x16xf32> -> vector<24x16xf32>
    %c1_320 = arith.constant 1 : index
    %c2_321 = arith.constant 2 : index
    %c0_322 = arith.constant 0 : index
    %c0_323 = arith.constant 0 : index
    %433 = vector.load %arg13[%c1_320, %c2_321, %c0_322, %c0_323] : memref<2x4x1x16xf32, #tpu.memory_space<vmem>>, vector<1x1x1x16xf32>
    %434 = vector.shape_cast %433 : vector<1x1x1x16xf32> to vector<1x16xf32>
    %435 = vector.broadcast %434 : vector<1x16xf32> to vector<24x16xf32>
    %436 = arith.addf %432, %435 : vector<24x16xf32>
    %437 = tpu.transpose %429, [1, 0] : vector<24x16xf32> -> vector<16x24xf32>
    %cst_324 = arith.constant dense<0.000000e+00> : vector<24x24xf32>
    %438 = tpu.matmul %422, %437, %cst_324 {dimension_numbers = #tpu.dot_dimension_numbers<[1], [0], [0], [1], [0, 0, 1, 1], [], []>} : vector<24x16xf32>, vector<16x24xf32>, vector<24x24xf32> -> vector<24x24xf32>
    %439 = vector.broadcast %35 : vector<1x24xf32> to vector<24x24xf32>
    %440 = arith.addf %438, %439 : vector<24x24xf32>
    %cst_325 = arith.constant dense<0xFF800000> : vector<24xf32>
    %441 = vector.multi_reduction <maximumf>, %440, %cst_325 [1] : vector<24x24xf32> to vector<24xf32>
    %442 = vector.shape_cast %441 : vector<24xf32> to vector<24x1xf32>
    %443 = vector.broadcast %442 : vector<24x1xf32> to vector<24x24xf32>
    %444 = arith.subf %440, %443 : vector<24x24xf32>
    %445 = math.exp %444 : vector<24x24xf32>
    %cst_326 = arith.constant dense<0.000000e+00> : vector<24xf32>
    %446 = vector.multi_reduction <add>, %445, %cst_326 [1] : vector<24x24xf32> to vector<24xf32>
    %447 = vector.shape_cast %446 : vector<24xf32> to vector<24x1xf32>
    %448 = tpu.reciprocal %447 {approx = true} : vector<24x1xf32> -> vector<24x1xf32>
    %449 = vector.broadcast %448 : vector<24x1xf32> to vector<24x24xf32>
    %450 = arith.mulf %445, %449 : vector<24x24xf32>
    %cst_327 = arith.constant dense<0.000000e+00> : vector<24x16xf32>
    %451 = tpu.matmul %450, %436, %cst_327 {dimension_numbers = #tpu.dot_dimension_numbers<[1], [0], [0], [1], [0, 0, 1, 1], [], []>} : vector<24x24xf32>, vector<24x16xf32>, vector<24x16xf32> -> vector<24x16xf32>
    %c1_328 = arith.constant 1 : index
    %c2_329 = arith.constant 2 : index
    %c0_330 = arith.constant 0 : index
    %c0_331 = arith.constant 0 : index
    %452 = vector.load %arg14[%c1_328, %c2_329, %c0_330, %c0_331] : memref<2x4x16x64xf32, #tpu.memory_space<vmem>>, vector<1x1x16x64xf32>
    %453 = vector.shape_cast %452 : vector<1x1x16x64xf32> to vector<16x64xf32>
    %cst_332 = arith.constant dense<0.000000e+00> : vector<24x64xf32>
    %454 = tpu.matmul %451, %453, %cst_332 {dimension_numbers = #tpu.dot_dimension_numbers<[1], [0], [0], [1], [0, 0, 1, 1], [], []>} : vector<24x16xf32>, vector<16x64xf32>, vector<24x64xf32> -> vector<24x64xf32>
    %455 = arith.addf %415, %454 : vector<24x64xf32>
    %c1_333 = arith.constant 1 : index
    %c3_334 = arith.constant 3 : index
    %c0_335 = arith.constant 0 : index
    %c0_336 = arith.constant 0 : index
    %456 = vector.load %arg8[%c1_333, %c3_334, %c0_335, %c0_336] : memref<2x4x64x16xf32, #tpu.memory_space<vmem>>, vector<1x1x64x16xf32>
    %457 = vector.shape_cast %456 : vector<1x1x64x16xf32> to vector<64x16xf32>
    %cst_337 = arith.constant dense<0.000000e+00> : vector<24x16xf32>
    %458 = tpu.matmul %334, %457, %cst_337 {dimension_numbers = #tpu.dot_dimension_numbers<[1], [0], [0], [1], [0, 0, 1, 1], [], []>} : vector<24x64xf32>, vector<64x16xf32>, vector<24x16xf32> -> vector<24x16xf32>
    %c1_338 = arith.constant 1 : index
    %c3_339 = arith.constant 3 : index
    %c0_340 = arith.constant 0 : index
    %c0_341 = arith.constant 0 : index
    %459 = vector.load %arg9[%c1_338, %c3_339, %c0_340, %c0_341] : memref<2x4x1x16xf32, #tpu.memory_space<vmem>>, vector<1x1x1x16xf32>
    %460 = vector.shape_cast %459 : vector<1x1x1x16xf32> to vector<1x16xf32>
    %461 = vector.broadcast %460 : vector<1x16xf32> to vector<24x16xf32>
    %462 = arith.addf %458, %461 : vector<24x16xf32>
    %c1_342 = arith.constant 1 : index
    %c3_343 = arith.constant 3 : index
    %c0_344 = arith.constant 0 : index
    %c0_345 = arith.constant 0 : index
    %463 = vector.load %arg10[%c1_342, %c3_343, %c0_344, %c0_345] : memref<2x4x64x16xf32, #tpu.memory_space<vmem>>, vector<1x1x64x16xf32>
    %464 = vector.shape_cast %463 : vector<1x1x64x16xf32> to vector<64x16xf32>
    %cst_346 = arith.constant dense<0.000000e+00> : vector<24x16xf32>
    %465 = tpu.matmul %334, %464, %cst_346 {dimension_numbers = #tpu.dot_dimension_numbers<[1], [0], [0], [1], [0, 0, 1, 1], [], []>} : vector<24x64xf32>, vector<64x16xf32>, vector<24x16xf32> -> vector<24x16xf32>
    %c1_347 = arith.constant 1 : index
    %c3_348 = arith.constant 3 : index
    %c0_349 = arith.constant 0 : index
    %c0_350 = arith.constant 0 : index
    %466 = vector.load %arg11[%c1_347, %c3_348, %c0_349, %c0_350] : memref<2x4x1x16xf32, #tpu.memory_space<vmem>>, vector<1x1x1x16xf32>
    %467 = vector.shape_cast %466 : vector<1x1x1x16xf32> to vector<1x16xf32>
    %468 = vector.broadcast %467 : vector<1x16xf32> to vector<24x16xf32>
    %469 = arith.addf %465, %468 : vector<24x16xf32>
    %c1_351 = arith.constant 1 : index
    %c3_352 = arith.constant 3 : index
    %c0_353 = arith.constant 0 : index
    %c0_354 = arith.constant 0 : index
    %470 = vector.load %arg12[%c1_351, %c3_352, %c0_353, %c0_354] : memref<2x4x64x16xf32, #tpu.memory_space<vmem>>, vector<1x1x64x16xf32>
    %471 = vector.shape_cast %470 : vector<1x1x64x16xf32> to vector<64x16xf32>
    %cst_355 = arith.constant dense<0.000000e+00> : vector<24x16xf32>
    %472 = tpu.matmul %334, %471, %cst_355 {dimension_numbers = #tpu.dot_dimension_numbers<[1], [0], [0], [1], [0, 0, 1, 1], [], []>} : vector<24x64xf32>, vector<64x16xf32>, vector<24x16xf32> -> vector<24x16xf32>
    %c1_356 = arith.constant 1 : index
    %c3_357 = arith.constant 3 : index
    %c0_358 = arith.constant 0 : index
    %c0_359 = arith.constant 0 : index
    %473 = vector.load %arg13[%c1_356, %c3_357, %c0_358, %c0_359] : memref<2x4x1x16xf32, #tpu.memory_space<vmem>>, vector<1x1x1x16xf32>
    %474 = vector.shape_cast %473 : vector<1x1x1x16xf32> to vector<1x16xf32>
    %475 = vector.broadcast %474 : vector<1x16xf32> to vector<24x16xf32>
    %476 = arith.addf %472, %475 : vector<24x16xf32>
    %477 = tpu.transpose %469, [1, 0] : vector<24x16xf32> -> vector<16x24xf32>
    %cst_360 = arith.constant dense<0.000000e+00> : vector<24x24xf32>
    %478 = tpu.matmul %462, %477, %cst_360 {dimension_numbers = #tpu.dot_dimension_numbers<[1], [0], [0], [1], [0, 0, 1, 1], [], []>} : vector<24x16xf32>, vector<16x24xf32>, vector<24x24xf32> -> vector<24x24xf32>
    %479 = vector.broadcast %35 : vector<1x24xf32> to vector<24x24xf32>
    %480 = arith.addf %478, %479 : vector<24x24xf32>
    %cst_361 = arith.constant dense<0xFF800000> : vector<24xf32>
    %481 = vector.multi_reduction <maximumf>, %480, %cst_361 [1] : vector<24x24xf32> to vector<24xf32>
    %482 = vector.shape_cast %481 : vector<24xf32> to vector<24x1xf32>
    %483 = vector.broadcast %482 : vector<24x1xf32> to vector<24x24xf32>
    %484 = arith.subf %480, %483 : vector<24x24xf32>
    %485 = math.exp %484 : vector<24x24xf32>
    %cst_362 = arith.constant dense<0.000000e+00> : vector<24xf32>
    %486 = vector.multi_reduction <add>, %485, %cst_362 [1] : vector<24x24xf32> to vector<24xf32>
    %487 = vector.shape_cast %486 : vector<24xf32> to vector<24x1xf32>
    %488 = tpu.reciprocal %487 {approx = true} : vector<24x1xf32> -> vector<24x1xf32>
    %489 = vector.broadcast %488 : vector<24x1xf32> to vector<24x24xf32>
    %490 = arith.mulf %485, %489 : vector<24x24xf32>
    %cst_363 = arith.constant dense<0.000000e+00> : vector<24x16xf32>
    %491 = tpu.matmul %490, %476, %cst_363 {dimension_numbers = #tpu.dot_dimension_numbers<[1], [0], [0], [1], [0, 0, 1, 1], [], []>} : vector<24x24xf32>, vector<24x16xf32>, vector<24x16xf32> -> vector<24x16xf32>
    %c1_364 = arith.constant 1 : index
    %c3_365 = arith.constant 3 : index
    %c0_366 = arith.constant 0 : index
    %c0_367 = arith.constant 0 : index
    %492 = vector.load %arg14[%c1_364, %c3_365, %c0_366, %c0_367] : memref<2x4x16x64xf32, #tpu.memory_space<vmem>>, vector<1x1x16x64xf32>
    %493 = vector.shape_cast %492 : vector<1x1x16x64xf32> to vector<16x64xf32>
    %cst_368 = arith.constant dense<0.000000e+00> : vector<24x64xf32>
    %494 = tpu.matmul %491, %493, %cst_368 {dimension_numbers = #tpu.dot_dimension_numbers<[1], [0], [0], [1], [0, 0, 1, 1], [], []>} : vector<24x16xf32>, vector<16x64xf32>, vector<24x64xf32> -> vector<24x64xf32>
    %495 = arith.addf %455, %494 : vector<24x64xf32>
    %496 = arith.addf %308, %495 : vector<24x64xf32>
    %c1_369 = arith.constant 1 : index
    %c0_370 = arith.constant 0 : index
    %c0_371 = arith.constant 0 : index
    %497 = vector.load %arg15[%c1_369, %c0_370, %c0_371] : memref<2x1x64xf32, #tpu.memory_space<vmem>>, vector<1x1x64xf32>
    %498 = vector.shape_cast %497 : vector<1x1x64xf32> to vector<1x64xf32>
    %499 = vector.broadcast %498 : vector<1x64xf32> to vector<24x64xf32>
    %500 = arith.addf %496, %499 : vector<24x64xf32>
    %c1_372 = arith.constant 1 : index
    %c0_373 = arith.constant 0 : index
    %c0_374 = arith.constant 0 : index
    %501 = vector.load %arg16[%c1_372, %c0_373, %c0_374] : memref<2x1x64xf32, #tpu.memory_space<vmem>>, vector<1x1x64xf32>
    %502 = vector.shape_cast %501 : vector<1x1x64xf32> to vector<1x64xf32>
    %c1_375 = arith.constant 1 : index
    %c0_376 = arith.constant 0 : index
    %c0_377 = arith.constant 0 : index
    %503 = vector.load %arg17[%c1_375, %c0_376, %c0_377] : memref<2x1x64xf32, #tpu.memory_space<vmem>>, vector<1x1x64xf32>
    %504 = vector.shape_cast %503 : vector<1x1x64xf32> to vector<1x64xf32>
    %cst_378 = arith.constant dense<0.000000e+00> : vector<24xf32>
    %505 = vector.multi_reduction <add>, %500, %cst_378 [1] : vector<24x64xf32> to vector<24xf32>
    %506 = vector.shape_cast %505 : vector<24xf32> to vector<24x1xf32>
    %cst_379 = arith.constant 6.400000e+01 : f32
    %507 = vector.broadcast %cst_379 : f32 to vector<24x1xf32>
    %508 = arith.divf %506, %507 : vector<24x1xf32>
    %509 = vector.broadcast %508 : vector<24x1xf32> to vector<24x64xf32>
    %510 = arith.subf %500, %509 : vector<24x64xf32>
    %511 = arith.mulf %510, %510 : vector<24x64xf32>
    %cst_380 = arith.constant dense<0.000000e+00> : vector<24xf32>
    %512 = vector.multi_reduction <add>, %511, %cst_380 [1] : vector<24x64xf32> to vector<24xf32>
    %513 = vector.shape_cast %512 : vector<24xf32> to vector<24x1xf32>
    %cst_381 = arith.constant 6.400000e+01 : f32
    %514 = vector.broadcast %cst_381 : f32 to vector<24x1xf32>
    %515 = arith.divf %513, %514 : vector<24x1xf32>
    %516 = vector.broadcast %508 : vector<24x1xf32> to vector<24x64xf32>
    %517 = arith.subf %500, %516 : vector<24x64xf32>
    %cst_382 = arith.constant 9.99999974E-6 : f32
    %518 = vector.broadcast %cst_382 : f32 to vector<24x1xf32>
    %519 = arith.addf %515, %518 : vector<24x1xf32>
    %520 = math.rsqrt %519 : vector<24x1xf32>
    %521 = vector.broadcast %520 : vector<24x1xf32> to vector<24x64xf32>
    %522 = arith.mulf %517, %521 : vector<24x64xf32>
    %523 = vector.broadcast %502 : vector<1x64xf32> to vector<24x64xf32>
    %524 = arith.mulf %522, %523 : vector<24x64xf32>
    %525 = vector.broadcast %504 : vector<1x64xf32> to vector<24x64xf32>
    %526 = arith.addf %524, %525 : vector<24x64xf32>
    %c1_383 = arith.constant 1 : index
    %c0_384 = arith.constant 0 : index
    %c0_385 = arith.constant 0 : index
    %527 = vector.load %arg18[%c1_383, %c0_384, %c0_385] : memref<2x64x256xf32, #tpu.memory_space<vmem>>, vector<1x64x256xf32>
    %528 = vector.shape_cast %527 : vector<1x64x256xf32> to vector<64x256xf32>
    %cst_386 = arith.constant dense<0.000000e+00> : vector<24x256xf32>
    %529 = tpu.matmul %526, %528, %cst_386 {dimension_numbers = #tpu.dot_dimension_numbers<[1], [0], [0], [1], [0, 0, 1, 1], [], []>} : vector<24x64xf32>, vector<64x256xf32>, vector<24x256xf32> -> vector<24x256xf32>
    %c1_387 = arith.constant 1 : index
    %c0_388 = arith.constant 0 : index
    %c0_389 = arith.constant 0 : index
    %530 = vector.load %arg19[%c1_387, %c0_388, %c0_389] : memref<2x1x256xf32, #tpu.memory_space<vmem>>, vector<1x1x256xf32>
    %531 = vector.shape_cast %530 : vector<1x1x256xf32> to vector<1x256xf32>
    %532 = vector.broadcast %531 : vector<1x256xf32> to vector<24x256xf32>
    %533 = arith.addf %529, %532 : vector<24x256xf32>
    %cst_390 = arith.constant 5.000000e-01 : f32
    %534 = vector.broadcast %cst_390 : f32 to vector<24x256xf32>
    %535 = arith.mulf %534, %533 : vector<24x256xf32>
    %cst_391 = arith.constant 0.707106769 : f32
    %536 = vector.broadcast %cst_391 : f32 to vector<24x256xf32>
    %537 = arith.mulf %533, %536 : vector<24x256xf32>
    %538 = math.absf %537 : vector<24x256xf32>
    %cst_392 = arith.constant 0.327591091 : f32
    %539 = vector.broadcast %cst_392 : f32 to vector<24x256xf32>
    %540 = arith.mulf %539, %538 : vector<24x256xf32>
    %cst_393 = arith.constant 1.000000e+00 : f32
    %541 = vector.broadcast %cst_393 : f32 to vector<24x256xf32>
    %542 = arith.addf %541, %540 : vector<24x256xf32>
    %cst_394 = arith.constant 1.000000e+00 : f32
    %543 = vector.broadcast %cst_394 : f32 to vector<24x256xf32>
    %544 = arith.divf %543, %542 : vector<24x256xf32>
    %cst_395 = arith.constant 1.06140542 : f32
    %545 = vector.broadcast %cst_395 : f32 to vector<24x256xf32>
    %546 = arith.mulf %545, %544 : vector<24x256xf32>
    %cst_396 = arith.constant -1.45315206 : f32
    %547 = vector.broadcast %cst_396 : f32 to vector<24x256xf32>
    %548 = arith.addf %546, %547 : vector<24x256xf32>
    %549 = arith.mulf %548, %544 : vector<24x256xf32>
    %cst_397 = arith.constant 1.42141378 : f32
    %550 = vector.broadcast %cst_397 : f32 to vector<24x256xf32>
    %551 = arith.addf %549, %550 : vector<24x256xf32>
    %552 = arith.mulf %551, %544 : vector<24x256xf32>
    %cst_398 = arith.constant -0.284496725 : f32
    %553 = vector.broadcast %cst_398 : f32 to vector<24x256xf32>
    %554 = arith.addf %552, %553 : vector<24x256xf32>
    %555 = arith.mulf %554, %544 : vector<24x256xf32>
    %cst_399 = arith.constant 0.254829586 : f32
    %556 = vector.broadcast %cst_399 : f32 to vector<24x256xf32>
    %557 = arith.addf %555, %556 : vector<24x256xf32>
    %558 = arith.mulf %557, %544 : vector<24x256xf32>
    %cst_400 = arith.constant 0.000000e+00 : f32
    %559 = vector.broadcast %cst_400 : f32 to vector<24x256xf32>
    %560 = arith.subf %559, %538 : vector<24x256xf32>
    %561 = arith.mulf %560, %538 : vector<24x256xf32>
    %562 = math.exp %561 : vector<24x256xf32>
    %563 = arith.mulf %558, %562 : vector<24x256xf32>
    %cst_401 = arith.constant 1.000000e+00 : f32
    %564 = vector.broadcast %cst_401 : f32 to vector<24x256xf32>
    %565 = arith.subf %564, %563 : vector<24x256xf32>
    %cst_402 = arith.constant 0.000000e+00 : f32
    %566 = vector.broadcast %cst_402 : f32 to vector<24x256xf32>
    %567 = arith.cmpf oge, %537, %566 : vector<24x256xf32>
    %cst_403 = arith.constant 0.000000e+00 : f32
    %568 = vector.broadcast %cst_403 : f32 to vector<24x256xf32>
    %569 = arith.subf %568, %565 : vector<24x256xf32>
    %570 = arith.select %567, %565, %569 : vector<24x256xi1>, vector<24x256xf32>
    %cst_404 = arith.constant 1.000000e+00 : f32
    %571 = vector.broadcast %cst_404 : f32 to vector<24x256xf32>
    %572 = arith.addf %571, %570 : vector<24x256xf32>
    %573 = arith.mulf %535, %572 : vector<24x256xf32>
    %c1_405 = arith.constant 1 : index
    %c0_406 = arith.constant 0 : index
    %c0_407 = arith.constant 0 : index
    %574 = vector.load %arg20[%c1_405, %c0_406, %c0_407] : memref<2x256x64xf32, #tpu.memory_space<vmem>>, vector<1x256x64xf32>
    %575 = vector.shape_cast %574 : vector<1x256x64xf32> to vector<256x64xf32>
    %cst_408 = arith.constant dense<0.000000e+00> : vector<24x64xf32>
    %576 = tpu.matmul %573, %575, %cst_408 {dimension_numbers = #tpu.dot_dimension_numbers<[1], [0], [0], [1], [0, 0, 1, 1], [], []>} : vector<24x256xf32>, vector<256x64xf32>, vector<24x64xf32> -> vector<24x64xf32>
    %577 = arith.addf %500, %576 : vector<24x64xf32>
    %c1_409 = arith.constant 1 : index
    %c0_410 = arith.constant 0 : index
    %c0_411 = arith.constant 0 : index
    %578 = vector.load %arg21[%c1_409, %c0_410, %c0_411] : memref<2x1x64xf32, #tpu.memory_space<vmem>>, vector<1x1x64xf32>
    %579 = vector.shape_cast %578 : vector<1x1x64xf32> to vector<1x64xf32>
    %580 = vector.broadcast %579 : vector<1x64xf32> to vector<24x64xf32>
    %581 = arith.addf %577, %580 : vector<24x64xf32>
    %582 = vector.extract_strided_slice %581 {offsets = [0, 0], sizes = [1, 64], strides = [1, 1]} : vector<24x64xf32> to vector<1x64xf32>
    %c0_412 = arith.constant 0 : index
    %c0_413 = arith.constant 0 : index
    %583 = vector.load %arg22[%c0_412, %c0_413] : memref<1x64xf32, #tpu.memory_space<vmem>>, vector<1x64xf32>
    %c0_414 = arith.constant 0 : index
    %c0_415 = arith.constant 0 : index
    %584 = vector.load %arg23[%c0_414, %c0_415] : memref<1x64xf32, #tpu.memory_space<vmem>>, vector<1x64xf32>
    %cst_416 = arith.constant dense<0.000000e+00> : vector<1xf32>
    %585 = vector.multi_reduction <add>, %582, %cst_416 [1] : vector<1x64xf32> to vector<1xf32>
    %586 = vector.shape_cast %585 : vector<1xf32> to vector<1x1xf32>
    %cst_417 = arith.constant 6.400000e+01 : f32
    %587 = vector.broadcast %cst_417 : f32 to vector<1x1xf32>
    %588 = arith.divf %586, %587 : vector<1x1xf32>
    %589 = vector.broadcast %588 : vector<1x1xf32> to vector<1x64xf32>
    %590 = arith.subf %582, %589 : vector<1x64xf32>
    %591 = arith.mulf %590, %590 : vector<1x64xf32>
    %cst_418 = arith.constant dense<0.000000e+00> : vector<1xf32>
    %592 = vector.multi_reduction <add>, %591, %cst_418 [1] : vector<1x64xf32> to vector<1xf32>
    %593 = vector.shape_cast %592 : vector<1xf32> to vector<1x1xf32>
    %cst_419 = arith.constant 6.400000e+01 : f32
    %594 = vector.broadcast %cst_419 : f32 to vector<1x1xf32>
    %595 = arith.divf %593, %594 : vector<1x1xf32>
    %596 = vector.broadcast %588 : vector<1x1xf32> to vector<1x64xf32>
    %597 = arith.subf %582, %596 : vector<1x64xf32>
    %cst_420 = arith.constant 9.99999974E-6 : f32
    %598 = vector.broadcast %cst_420 : f32 to vector<1x1xf32>
    %599 = arith.addf %595, %598 : vector<1x1xf32>
    %600 = math.rsqrt %599 : vector<1x1xf32>
    %601 = vector.broadcast %600 : vector<1x1xf32> to vector<1x64xf32>
    %602 = arith.mulf %597, %601 : vector<1x64xf32>
    %603 = arith.mulf %602, %583 : vector<1x64xf32>
    %604 = arith.addf %603, %584 : vector<1x64xf32>
    %c0_421 = arith.constant 0 : index
    %c0_422 = arith.constant 0 : index
    %605 = vector.load %arg24[%c0_421, %c0_422] : memref<64x32xf32, #tpu.memory_space<vmem>>, vector<64x32xf32>
    %cst_423 = arith.constant dense<0.000000e+00> : vector<1x32xf32>
    %606 = tpu.matmul %604, %605, %cst_423 {dimension_numbers = #tpu.dot_dimension_numbers<[1], [0], [0], [1], [0, 0, 1, 1], [], []>} : vector<1x64xf32>, vector<64x32xf32>, vector<1x32xf32> -> vector<1x32xf32>
    %607 = arith.mulf %606, %606 : vector<1x32xf32>
    %cst_424 = arith.constant dense<0.000000e+00> : vector<1xf32>
    %608 = vector.multi_reduction <add>, %607, %cst_424 [1] : vector<1x32xf32> to vector<1xf32>
    %609 = vector.shape_cast %608 : vector<1xf32> to vector<1x1xf32>
    %610 = math.rsqrt %609 : vector<1x1xf32>
    %611 = vector.broadcast %610 : vector<1x1xf32> to vector<1x32xf32>
    %612 = arith.mulf %606, %611 : vector<1x32xf32>
    %c0_425 = arith.constant 0 : index
    %c0_426 = arith.constant 0 : index
    %613 = vector.load %arg25[%c0_425, %c0_426] : memref<32x128xf32, #tpu.memory_space<vmem>>, vector<32x128xf32>
    %cst_427 = arith.constant dense<0.000000e+00> : vector<1x128xf32>
    %614 = tpu.matmul %612, %613, %cst_427 {dimension_numbers = #tpu.dot_dimension_numbers<[1], [0], [0], [1], [0, 0, 1, 1], [], []>} : vector<1x32xf32>, vector<32x128xf32>, vector<1x128xf32> -> vector<1x128xf32>
    %615 = arith.negf %614 : vector<1x128xf32>
    %616 = math.exp %615 : vector<1x128xf32>
    %cst_428 = arith.constant 1.000000e+00 : f32
    %617 = vector.broadcast %cst_428 : f32 to vector<1x128xf32>
    %618 = arith.addf %617, %616 : vector<1x128xf32>
    %619 = arith.divf %617, %618 : vector<1x128xf32>
    %c0_429 = arith.constant 0 : index
    %c0_430 = arith.constant 0 : index
    %c0_431 = arith.constant 0 : index
    %620 = vector.load %arg26[%c0_429, %c0_430, %c0_431] : memref<1x1x128xf32, #tpu.memory_space<vmem>>, vector<1x1x128xf32>
    %621 = vector.shape_cast %620 : vector<1x1x128xf32> to vector<1x128xf32>
    %622 = vector.shape_cast %619 : vector<1x128xf32> to vector<1x1x128xf32>
    tpu.vector_store %arg26[%c0_429, %c0_430, %c0_431], %622 {strides = array<i32>} : memref<1x1x128xf32, #tpu.memory_space<vmem>>, vector<1x1x128xf32>,
    return
  }
  func.func @transform_0(%arg0: i32) -> (i32, i32, i32) {
    %c0_i32 = arith.constant 0 : i32
    %c0_i32_0 = arith.constant 0 : i32
    %c0_i32_1 = arith.constant 0 : i32
    return %arg0, %c0_i32, %c0_i32_0 : i32, i32, i32
  }
  func.func @transform_1(%arg0: i32) -> (i32, i32) {
    %c0_i32 = arith.constant 0 : i32
    %c0_i32_0 = arith.constant 0 : i32
    %c0_i32_1 = arith.constant 0 : i32
    return %c0_i32, %c0_i32_0 : i32, i32
  }
  func.func @transform_2(%arg0: i32) -> (i32, i32) {
    %c0_i32 = arith.constant 0 : i32
    %c0_i32_0 = arith.constant 0 : i32
    %c0_i32_1 = arith.constant 0 : i32
    return %c0_i32, %c0_i32_0 : i32, i32
  }
  func.func @transform_3(%arg0: i32) -> (i32, i32) {
    %c0_i32 = arith.constant 0 : i32
    %c0_i32_0 = arith.constant 0 : i32
    %c0_i32_1 = arith.constant 0 : i32
    return %c0_i32, %c0_i32_0 : i32, i32
  }
  func.func @transform_4(%arg0: i32) -> (i32, i32) {
    %c0_i32 = arith.constant 0 : i32
    %c0_i32_0 = arith.constant 0 : i32
    %c0_i32_1 = arith.constant 0 : i32
    return %c0_i32, %c0_i32_0 : i32, i32
  }
  func.func @transform_5(%arg0: i32) -> (i32, i32, i32) {
    %c0_i32 = arith.constant 0 : i32
    %c0_i32_0 = arith.constant 0 : i32
    %c0_i32_1 = arith.constant 0 : i32
    %c0_i32_2 = arith.constant 0 : i32
    return %c0_i32, %c0_i32_0, %c0_i32_1 : i32, i32, i32
  }
  func.func @transform_6(%arg0: i32) -> (i32, i32, i32) {
    %c0_i32 = arith.constant 0 : i32
    %c0_i32_0 = arith.constant 0 : i32
    %c0_i32_1 = arith.constant 0 : i32
    %c0_i32_2 = arith.constant 0 : i32
    return %c0_i32, %c0_i32_0, %c0_i32_1 : i32, i32, i32
  }
  func.func @transform_7(%arg0: i32) -> (i32, i32, i32, i32) {
    %c0_i32 = arith.constant 0 : i32
    %c0_i32_0 = arith.constant 0 : i32
    %c0_i32_1 = arith.constant 0 : i32
    %c0_i32_2 = arith.constant 0 : i32
    %c0_i32_3 = arith.constant 0 : i32
    return %c0_i32, %c0_i32_0, %c0_i32_1, %c0_i32_2 : i32, i32, i32, i32
  }
  func.func @transform_8(%arg0: i32) -> (i32, i32, i32, i32) {
    %c0_i32 = arith.constant 0 : i32
    %c0_i32_0 = arith.constant 0 : i32
    %c0_i32_1 = arith.constant 0 : i32
    %c0_i32_2 = arith.constant 0 : i32
    %c0_i32_3 = arith.constant 0 : i32
    return %c0_i32, %c0_i32_0, %c0_i32_1, %c0_i32_2 : i32, i32, i32, i32
  }
  func.func @transform_9(%arg0: i32) -> (i32, i32, i32, i32) {
    %c0_i32 = arith.constant 0 : i32
    %c0_i32_0 = arith.constant 0 : i32
    %c0_i32_1 = arith.constant 0 : i32
    %c0_i32_2 = arith.constant 0 : i32
    %c0_i32_3 = arith.constant 0 : i32
    return %c0_i32, %c0_i32_0, %c0_i32_1, %c0_i32_2 : i32, i32, i32, i32
  }
  func.func @transform_10(%arg0: i32) -> (i32, i32, i32, i32) {
    %c0_i32 = arith.constant 0 : i32
    %c0_i32_0 = arith.constant 0 : i32
    %c0_i32_1 = arith.constant 0 : i32
    %c0_i32_2 = arith.constant 0 : i32
    %c0_i32_3 = arith.constant 0 : i32
    return %c0_i32, %c0_i32_0, %c0_i32_1, %c0_i32_2 : i32, i32, i32, i32
  }
  func.func @transform_11(%arg0: i32) -> (i32, i32, i32, i32) {
    %c0_i32 = arith.constant 0 : i32
    %c0_i32_0 = arith.constant 0 : i32
    %c0_i32_1 = arith.constant 0 : i32
    %c0_i32_2 = arith.constant 0 : i32
    %c0_i32_3 = arith.constant 0 : i32
    return %c0_i32, %c0_i32_0, %c0_i32_1, %c0_i32_2 : i32, i32, i32, i32
  }
  func.func @transform_12(%arg0: i32) -> (i32, i32, i32, i32) {
    %c0_i32 = arith.constant 0 : i32
    %c0_i32_0 = arith.constant 0 : i32
    %c0_i32_1 = arith.constant 0 : i32
    %c0_i32_2 = arith.constant 0 : i32
    %c0_i32_3 = arith.constant 0 : i32
    return %c0_i32, %c0_i32_0, %c0_i32_1, %c0_i32_2 : i32, i32, i32, i32
  }
  func.func @transform_13(%arg0: i32) -> (i32, i32, i32, i32) {
    %c0_i32 = arith.constant 0 : i32
    %c0_i32_0 = arith.constant 0 : i32
    %c0_i32_1 = arith.constant 0 : i32
    %c0_i32_2 = arith.constant 0 : i32
    %c0_i32_3 = arith.constant 0 : i32
    return %c0_i32, %c0_i32_0, %c0_i32_1, %c0_i32_2 : i32, i32, i32, i32
  }
  func.func @transform_14(%arg0: i32) -> (i32, i32, i32) {
    %c0_i32 = arith.constant 0 : i32
    %c0_i32_0 = arith.constant 0 : i32
    %c0_i32_1 = arith.constant 0 : i32
    %c0_i32_2 = arith.constant 0 : i32
    return %c0_i32, %c0_i32_0, %c0_i32_1 : i32, i32, i32
  }
  func.func @transform_15(%arg0: i32) -> (i32, i32, i32) {
    %c0_i32 = arith.constant 0 : i32
    %c0_i32_0 = arith.constant 0 : i32
    %c0_i32_1 = arith.constant 0 : i32
    %c0_i32_2 = arith.constant 0 : i32
    return %c0_i32, %c0_i32_0, %c0_i32_1 : i32, i32, i32
  }
  func.func @transform_16(%arg0: i32) -> (i32, i32, i32) {
    %c0_i32 = arith.constant 0 : i32
    %c0_i32_0 = arith.constant 0 : i32
    %c0_i32_1 = arith.constant 0 : i32
    %c0_i32_2 = arith.constant 0 : i32
    return %c0_i32, %c0_i32_0, %c0_i32_1 : i32, i32, i32
  }
  func.func @transform_17(%arg0: i32) -> (i32, i32, i32) {
    %c0_i32 = arith.constant 0 : i32
    %c0_i32_0 = arith.constant 0 : i32
    %c0_i32_1 = arith.constant 0 : i32
    %c0_i32_2 = arith.constant 0 : i32
    return %c0_i32, %c0_i32_0, %c0_i32_1 : i32, i32, i32
  }
  func.func @transform_18(%arg0: i32) -> (i32, i32, i32) {
    %c0_i32 = arith.constant 0 : i32
    %c0_i32_0 = arith.constant 0 : i32
    %c0_i32_1 = arith.constant 0 : i32
    %c0_i32_2 = arith.constant 0 : i32
    return %c0_i32, %c0_i32_0, %c0_i32_1 : i32, i32, i32
  }
  func.func @transform_19(%arg0: i32) -> (i32, i32, i32) {
    %c0_i32 = arith.constant 0 : i32
    %c0_i32_0 = arith.constant 0 : i32
    %c0_i32_1 = arith.constant 0 : i32
    %c0_i32_2 = arith.constant 0 : i32
    return %c0_i32, %c0_i32_0, %c0_i32_1 : i32, i32, i32
  }
  func.func @transform_20(%arg0: i32) -> (i32, i32, i32) {
    %c0_i32 = arith.constant 0 : i32
    %c0_i32_0 = arith.constant 0 : i32
    %c0_i32_1 = arith.constant 0 : i32
    %c0_i32_2 = arith.constant 0 : i32
    return %c0_i32, %c0_i32_0, %c0_i32_1 : i32, i32, i32
  }
  func.func @transform_21(%arg0: i32) -> (i32, i32) {
    %c0_i32 = arith.constant 0 : i32
    %c0_i32_0 = arith.constant 0 : i32
    %c0_i32_1 = arith.constant 0 : i32
    return %c0_i32, %c0_i32_0 : i32, i32
  }
  func.func @transform_22(%arg0: i32) -> (i32, i32) {
    %c0_i32 = arith.constant 0 : i32
    %c0_i32_0 = arith.constant 0 : i32
    %c0_i32_1 = arith.constant 0 : i32
    return %c0_i32, %c0_i32_0 : i32, i32
  }
  func.func @transform_23(%arg0: i32) -> (i32, i32) {
    %c0_i32 = arith.constant 0 : i32
    %c0_i32_0 = arith.constant 0 : i32
    %c0_i32_1 = arith.constant 0 : i32
    return %c0_i32, %c0_i32_0 : i32, i32
  }
  func.func @transform_24(%arg0: i32) -> (i32, i32) {
    %c0_i32 = arith.constant 0 : i32
    %c0_i32_0 = arith.constant 0 : i32
    %c0_i32_1 = arith.constant 0 : i32
    return %c0_i32, %c0_i32_0 : i32, i32
  }
  func.func @transform_25(%arg0: i32) -> (i32, i32, i32) {
    %c0_i32 = arith.constant 0 : i32
    %c0_i32_0 = arith.constant 0 : i32
    %c0_i32_1 = arith.constant 0 : i32
    return %arg0, %c0_i32, %c0_i32_0 : i32, i32, i32
  }
}

</mosaic_0001>

<llo_original>
// kernel: encode_image.1
$region0: #{encode_image.1}
  #allocation0 [shape = 'u32[]', space=smem, size = 0x4, offset = 0x4, fixed_abs, tag = 'smem constant byte address 0x4 - core index']
  #allocation1 [shape = 'u32[144,128]{1,0:T(1,128)}', space=vmem, size = 0x12000, scoped, tag = 'internal scratch']
  %s0 = inlined_call_operand.vmem [shape: f32[2,24,192], index: 0, kind: input, shape index: {}]
  %s1 = inlined_call_operand.vmem [shape: f32[192,64], index: 1, kind: input, shape index: {}]
  %s2 = inlined_call_operand.vmem [shape: f32[24,64], index: 2, kind: input, shape index: {}]
  %s3 = inlined_call_operand.vmem [shape: f32[1,64], index: 3, kind: input, shape index: {}]
  %s4 = inlined_call_operand.vmem [shape: f32[1,64], index: 4, kind: input, shape index: {}]
  %s5 = inlined_call_operand.vmem [shape: f32[2,1,64], index: 5, kind: input, shape index: {}]
  %s6 = inlined_call_operand.vmem [shape: f32[2,1,64], index: 6, kind: input, shape index: {}]
  %s7 = inlined_call_operand.vmem [shape: f32[2,4,64,16], index: 7, kind: input, shape index: {}]
  %s8 = inlined_call_operand.vmem [shape: f32[2,4,1,16], index: 8, kind: input, shape index: {}]
  %s9 = inlined_call_operand.vmem [shape: f32[2,4,64,16], index: 9, kind: input, shape index: {}]
  %s10 = inlined_call_operand.vmem [shape: f32[2,4,1,16], index: 10, kind: input, shape index: {}]
  %s11 = inlined_call_operand.vmem [shape: f32[2,4,64,16], index: 11, kind: input, shape index: {}]
  %s12 = inlined_call_operand.vmem [shape: f32[2,4,1,16], index: 12, kind: input, shape index: {}]
  %s13 = inlined_call_operand.vmem [shape: f32[2,4,16,64], index: 13, kind: input, shape index: {}]
  %s14 = inlined_call_operand.vmem [shape: f32[2,1,64], index: 14, kind: input, shape index: {}]
  %s15 = inlined_call_operand.vmem [shape: f32[2,1,64], index: 15, kind: input, shape index: {}]
  %s16 = inlined_call_operand.vmem [shape: f32[2,1,64], index: 16, kind: input, shape index: {}]
  %s17 = inlined_call_operand.vmem [shape: f32[2,64,256], index: 17, kind: input, shape index: {}]
  %s18 = inlined_call_operand.vmem [shape: f32[2,1,256], index: 18, kind: input, shape index: {}]
  %s19 = inlined_call_operand.vmem [shape: f32[2,256,64], index: 19, kind: input, shape index: {}]
  %s20 = inlined_call_operand.vmem [shape: f32[2,1,64], index: 20, kind: input, shape index: {}]
  %s21 = inlined_call_operand.vmem [shape: f32[1,64], index: 21, kind: input, shape index: {}]
  %s22 = inlined_call_operand.vmem [shape: f32[1,64], index: 22, kind: input, shape index: {}]
  %s23 = inlined_call_operand.vmem [shape: f32[64,32], index: 23, kind: input, shape index: {}]
  %s24 = inlined_call_operand.vmem [shape: f32[32,128], index: 24, kind: input, shape index: {}]
  %s25 = inlined_call_operand.hbm [shape: f32[2,1,128], index: 25, kind: output, shape index: {}]
  %s26 = sld [smem:[#allocation0]]
  $region133: #{encode_image.1} parent=0
    _
  %s28 = ssub.s32 1, %s26
  %s29 = scalar_select 0, %s28, %s26
  $region1: #{encode_image.1} parent=0
    #allocation2 [shape = 'u8[1024]{0}', space=vmem, size = 0x400, scoped, tag = 'output window, operand 0']
    #allocation3 [shape = 's32[2]{0}', space=sflag, size = 0x8, scoped, tag = 'scoped memory for encode_image.1']
    %30 = vsyncpa [#allocation3], 0
    %s31 = scalar_lea.sflag [#allocation3], 1
    %32 = vsyncpa %s31, 0
    loop: start=0, step=1, limit=4
    $region2: #{encode_image.1} parent=1 // loop_pre_header
      _
    $region3: #{encode_image.1} parent=1 // loop_header
      %s34 = sphi 0, %s38
      %p35 = scmp.ge.s32.totalorder %s34, 4
      %s44 = sphi 0, %s46
      %s47 = sphi 0, %s44
      %s48 = sphi 0, %s47
      %s64 = sphi 0, %s48
      %s68 = sphi 0, %s68
      %s70 = sphi 0, %s68
      %s71 = sphi 0, %s70
      %s85 = sphi 0, %s71
      %s89 = sphi 0, %s89
      %s91 = sphi 0, %s89
      %s92 = sphi 0, %s91
      %s106 = sphi 0, %s92
      %s110 = sphi 0, %s110
      %s112 = sphi 0, %s110
      %s113 = sphi 0, %s112
      %s127 = sphi 0, %s113
      %s131 = sphi 0, %s131
      %s133 = sphi 0, %s131
      %s134 = sphi 0, %s133
      %s148 = sphi 0, %s134
      %s152 = sphi 0, %s152
      %s154 = sphi 0, %s152
      %s155 = sphi 0, %s154
      %s169 = sphi 0, %s155
      %s173 = sphi 0, %s173
      %s175 = sphi 0, %s173
      %s176 = sphi 0, %s175
      %s190 = sphi 0, %s176
      %s194 = sphi 0, %s194
      %s196 = sphi 0, %s194
      %s197 = sphi 0, %s196
      %s211 = sphi 0, %s197
      %s215 = sphi 0, %s215
      %s217 = sphi 0, %s215
      %s218 = sphi 0, %s217
      %s232 = sphi 0, %s218
      %s236 = sphi 0, %s236
      %s238 = sphi 0, %s236
      %s239 = sphi 0, %s238
      %s253 = sphi 0, %s239
      %s257 = sphi 0, %s257
      %s259 = sphi 0, %s257
      %s260 = sphi 0, %s259
      %s274 = sphi 0, %s260
      %s278 = sphi 0, %s278
      %s280 = sphi 0, %s278
      %s281 = sphi 0, %s280
      %s295 = sphi 0, %s281
      %s299 = sphi 0, %s299
      %s301 = sphi 0, %s299
      %s302 = sphi 0, %s301
      %s316 = sphi 0, %s302
      %s320 = sphi 0, %s320
      %s322 = sphi 0, %s320
      %s323 = sphi 0, %s322
      %s337 = sphi 0, %s323
      %s341 = sphi 0, %s341
      %s343 = sphi 0, %s341
      %s344 = sphi 0, %s343
      %s358 = sphi 0, %s344
      %s362 = sphi 0, %s362
      %s364 = sphi 0, %s362
      %s365 = sphi 0, %s364
      %s379 = sphi 0, %s365
      %s383 = sphi 0, %s383
      %s385 = sphi 0, %s383
      %s386 = sphi 0, %s385
      %s400 = sphi 0, %s386
      %s404 = sphi 0, %s404
      %s406 = sphi 0, %s404
      %s407 = sphi 0, %s406
      %s421 = sphi 0, %s407
      %s425 = sphi 0, %s425
      %s427 = sphi 0, %s425
      %s428 = sphi 0, %s427
      %s442 = sphi 0, %s428
      %s446 = sphi 0, %s446
      %s448 = sphi 0, %s446
      %s449 = sphi 0, %s448
      %s463 = sphi 0, %s449
      %s467 = sphi 0, %s467
      %s469 = sphi 0, %s467
      %s470 = sphi 0, %s469
      %s484 = sphi 0, %s470
      %s488 = sphi 0, %s488
      %s490 = sphi 0, %s488
      %s491 = sphi 0, %s490
      %s505 = sphi 0, %s491
      %s509 = sphi 0, %s509
      %s511 = sphi 0, %s509
      %s512 = sphi 0, %s511
      %s526 = sphi 0, %s512
      %s530 = sphi 0, %s530
      %s532 = sphi 0, %s530
      %s533 = sphi 0, %s532
      %s547 = sphi 0, %s533
      %s551 = sphi 0, %s551
      %s553 = sphi 0, %s551
      %s554 = sphi 0, %s553
      %s568 = sphi 0, %s554
      %s574 = sphi 0, %s576
      %s577 = sphi 0, %s574
      %s578 = sphi 0, %s577
      %s594 = sphi 0, %s578
    $region4: #{encode_image.1} parent=1 // loop_header_branch
      %37 = sbr.rel (%p35) target = $region8
    $region5: #{encode_image.1} parent=1 // loop_body
      %s39 = ssub.s32 %s34, 1
      %s40 = ssub.s32 %s34, 2
      %s41 = sadd.s32 %s34, 1
      %s42 = ssub.s32 %s34, %s41
      %p43 = scmp.eq.s32.totalorder %s42, 0
      %s45 = sadd.s32 %s44, 1
      %s46 = scalar_select %p43, %s44, %s45
      %p49 = pneg %p43
      %p50 = scmp.eq.s32.totalorder %s34, 1
      %p51 = por %p49, %p50
      %p52 = scmp.ne.s32.totalorder %s44, %s47
      %p53 = scmp.eq.s32.totalorder %s34, 0
      %p54 = por %p52, %p53
      %p55 = scmp.ne.s32.totalorder %s44, %s47
      %p56 = scmp.eq.s32.totalorder %s39, 1
      %p57 = por %p55, %p56
      %p58 = scmp.ne.s32.totalorder %s47, %s48
      %p59 = scmp.eq.s32.totalorder %s39, 0
      %p60 = por %p58, %p59
      %p61 = scmp.ne.s32.totalorder %s47, %s48
      %p62 = scmp.eq.s32.totalorder %s40, 1
      %p63 = por %p61, %p62
      %p65 = scmp.ne.s32.totalorder %s48, %s64
      %p66 = scmp.eq.s32.totalorder %s40, 0
      %p67 = por %p65, %p66
      %s69 = sadd.s32 %s68, 1
      %p72 = scmp.eq.s32.totalorder %s34, 1
      %p73 = scmp.ne.s32.totalorder %s68, %s70
      %p74 = scmp.eq.s32.totalorder %s34, 0
      %p75 = por %p73, %p74
      %p76 = scmp.ne.s32.totalorder %s68, %s70
      %p77 = scmp.eq.s32.totalorder %s39, 1
      %p78 = por %p76, %p77
      %p79 = scmp.ne.s32.totalorder %s70, %s71
      %p80 = scmp.eq.s32.totalorder %s39, 0
      %p81 = por %p79, %p80
      %p82 = scmp.ne.s32.totalorder %s70, %s71
      %p83 = scmp.eq.s32.totalorder %s40, 1
      %p84 = por %p82, %p83
      %p86 = scmp.ne.s32.totalorder %s71, %s85
      %p87 = scmp.eq.s32.totalorder %s40, 0
      %p88 = por %p86, %p87
      %s90 = sadd.s32 %s89, 1
      %p93 = scmp.eq.s32.totalorder %s34, 1
      %p94 = scmp.ne.s32.totalorder %s89, %s91
      %p95 = scmp.eq.s32.totalorder %s34, 0
      %p96 = por %p94, %p95
      %p97 = scmp.ne.s32.totalorder %s89, %s91
      %p98 = scmp.eq.s32.totalorder %s39, 1
      %p99 = por %p97, %p98
      %p100 = scmp.ne.s32.totalorder %s91, %s92
      %p101 = scmp.eq.s32.totalorder %s39, 0
      %p102 = por %p100, %p101
      %p103 = scmp.ne.s32.totalorder %s91, %s92
      %p104 = scmp.eq.s32.totalorder %s40, 1
      %p105 = por %p103, %p104
      %p107 = scmp.ne.s32.totalorder %s92, %s106
      %p108 = scmp.eq.s32.totalorder %s40, 0
      %p109 = por %p107, %p108
      %s111 = sadd.s32 %s110, 1
      %p114 = scmp.eq.s32.totalorder %s34, 1
      %p115 = scmp.ne.s32.totalorder %s110, %s112
      %p116 = scmp.eq.s32.totalorder %s34, 0
      %p117 = por %p115, %p116
      %p118 = scmp.ne.s32.totalorder %s110, %s112
      %p119 = scmp.eq.s32.totalorder %s39, 1
      %p120 = por %p118, %p119
      %p121 = scmp.ne.s32.totalorder %s112, %s113
      %p122 = scmp.eq.s32.totalorder %s39, 0
      %p123 = por %p121, %p122
      %p124 = scmp.ne.s32.totalorder %s112, %s113
      %p125 = scmp.eq.s32.totalorder %s40, 1
      %p126 = por %p124, %p125
      %p128 = scmp.ne.s32.totalorder %s113, %s127
      %p129 = scmp.eq.s32.totalorder %s40, 0
      %p130 = por %p128, %p129
      %s132 = sadd.s32 %s131, 1
      %p135 = scmp.eq.s32.totalorder %s34, 1
      %p136 = scmp.ne.s32.totalorder %s131, %s133
      %p137 = scmp.eq.s32.totalorder %s34, 0
      %p138 = por %p136, %p137
      %p139 = scmp.ne.s32.totalorder %s131, %s133
      %p140 = scmp.eq.s32.totalorder %s39, 1
      %p141 = por %p139, %p140
      %p142 = scmp.ne.s32.totalorder %s133, %s134
      %p143 = scmp.eq.s32.totalorder %s39, 0
      %p144 = por %p142, %p143
      %p145 = scmp.ne.s32.totalorder %s133, %s134
      %p146 = scmp.eq.s32.totalorder %s40, 1
      %p147 = por %p145, %p146
      %p149 = scmp.ne.s32.totalorder %s134, %s148
      %p150 = scmp.eq.s32.totalorder %s40, 0
      %p151 = por %p149, %p150
      %s153 = sadd.s32 %s152, 1
      %p156 = scmp.eq.s32.totalorder %s34, 1
      %p157 = scmp.ne.s32.totalorder %s152, %s154
      %p158 = scmp.eq.s32.totalorder %s34, 0
      %p159 = por %p157, %p158
      %p160 = scmp.ne.s32.totalorder %s152, %s154
      %p161 = scmp.eq.s32.totalorder %s39, 1
      %p162 = por %p160, %p161
      %p163 = scmp.ne.s32.totalorder %s154, %s155
      %p164 = scmp.eq.s32.totalorder %s39, 0
      %p165 = por %p163, %p164
      %p166 = scmp.ne.s32.totalorder %s154, %s155
      %p167 = scmp.eq.s32.totalorder %s40, 1
      %p168 = por %p166, %p167
      %p170 = scmp.ne.s32.totalorder %s155, %s169
      %p171 = scmp.eq.s32.totalorder %s40, 0
      %p172 = por %p170, %p171
      %s174 = sadd.s32 %s173, 1
      %p177 = scmp.eq.s32.totalorder %s34, 1
      %p178 = scmp.ne.s32.totalorder %s173, %s175
      %p179 = scmp.eq.s32.totalorder %s34, 0
      %p180 = por %p178, %p179
      %p181 = scmp.ne.s32.totalorder %s173, %s175
      %p182 = scmp.eq.s32.totalorder %s39, 1
      %p183 = por %p181, %p182
      %p184 = scmp.ne.s32.totalorder %s175, %s176
      %p185 = scmp.eq.s32.totalorder %s39, 0
      %p186 = por %p184, %p185
      %p187 = scmp.ne.s32.totalorder %s175, %s176
      %p188 = scmp.eq.s32.totalorder %s40, 1
      %p189 = por %p187, %p188
      %p191 = scmp.ne.s32.totalorder %s176, %s190
      %p192 = scmp.eq.s32.totalorder %s40, 0
      %p193 = por %p191, %p192
      %s195 = sadd.s32 %s194, 1
      %p198 = scmp.eq.s32.totalorder %s34, 1
      %p199 = scmp.ne.s32.totalorder %s194, %s196
      %p200 = scmp.eq.s32.totalorder %s34, 0
      %p201 = por %p199, %p200
      %p202 = scmp.ne.s32.totalorder %s194, %s196
      %p203 = scmp.eq.s32.totalorder %s39, 1
      %p204 = por %p202, %p203
      %p205 = scmp.ne.s32.totalorder %s196, %s197
      %p206 = scmp.eq.s32.totalorder %s39, 0
      %p207 = por %p205, %p206
      %p208 = scmp.ne.s32.totalorder %s196, %s197
      %p209 = scmp.eq.s32.totalorder %s40, 1
      %p210 = por %p208, %p209
      %p212 = scmp.ne.s32.totalorder %s197, %s211
      %p213 = scmp.eq.s32.totalorder %s40, 0
      %p214 = por %p212, %p213
      %s216 = sadd.s32 %s215, 1
      %p219 = scmp.eq.s32.totalorder %s34, 1
      %p220 = scmp.ne.s32.totalorder %s215, %s217
      %p221 = scmp.eq.s32.totalorder %s34, 0
      %p222 = por %p220, %p221
      %p223 = scmp.ne.s32.totalorder %s215, %s217
      %p224 = scmp.eq.s32.totalorder %s39, 1
      %p225 = por %p223, %p224
      %p226 = scmp.ne.s32.totalorder %s217, %s218
      %p227 = scmp.eq.s32.totalorder %s39, 0
      %p228 = por %p226, %p227
      %p229 = scmp.ne.s32.totalorder %s217, %s218
      %p230 = scmp.eq.s32.totalorder %s40, 1
      %p231 = por %p229, %p230
      %p233 = scmp.ne.s32.totalorder %s218, %s232
      %p234 = scmp.eq.s32.totalorder %s40, 0
      %p235 = por %p233, %p234
      %s237 = sadd.s32 %s236, 1
      %p240 = scmp.eq.s32.totalorder %s34, 1
      %p241 = scmp.ne.s32.totalorder %s236, %s238
      %p242 = scmp.eq.s32.totalorder %s34, 0
      %p243 = por %p241, %p242
      %p244 = scmp.ne.s32.totalorder %s236, %s238
      %p245 = scmp.eq.s32.totalorder %s39, 1
      %p246 = por %p244, %p245
      %p247 = scmp.ne.s32.totalorder %s238, %s239
      %p248 = scmp.eq.s32.totalorder %s39, 0
      %p249 = por %p247, %p248
      %p250 = scmp.ne.s32.totalorder %s238, %s239
      %p251 = scmp.eq.s32.totalorder %s40, 1
      %p252 = por %p250, %p251
      %p254 = scmp.ne.s32.totalorder %s239, %s253
      %p255 = scmp.eq.s32.totalorder %s40, 0
      %p256 = por %p254, %p255
      %s258 = sadd.s32 %s257, 1
      %p261 = scmp.eq.s32.totalorder %s34, 1
      %p262 = scmp.ne.s32.totalorder %s257, %s259
      %p263 = scmp.eq.s32.totalorder %s34, 0
      %p264 = por %p262, %p263
      %p265 = scmp.ne.s32.totalorder %s257, %s259
      %p266 = scmp.eq.s32.totalorder %s39, 1
      %p267 = por %p265, %p266
      %p268 = scmp.ne.s32.totalorder %s259, %s260
      %p269 = scmp.eq.s32.totalorder %s39, 0
      %p270 = por %p268, %p269
      %p271 = scmp.ne.s32.totalorder %s259, %s260
      %p272 = scmp.eq.s32.totalorder %s40, 1
      %p273 = por %p271, %p272
      %p275 = scmp.ne.s32.totalorder %s260, %s274
      %p276 = scmp.eq.s32.totalorder %s40, 0
      %p277 = por %p275, %p276
      %s279 = sadd.s32 %s278, 1
      %p282 = scmp.eq.s32.totalorder %s34, 1
      %p283 = scmp.ne.s32.totalorder %s278, %s280
      %p284 = scmp.eq.s32.totalorder %s34, 0
      %p285 = por %p283, %p284
      %p286 = scmp.ne.s32.totalorder %s278, %s280
      %p287 = scmp.eq.s32.totalorder %s39, 1
      %p288 = por %p286, %p287
      %p289 = scmp.ne.s32.totalorder %s280, %s281
      %p290 = scmp.eq.s32.totalorder %s39, 0
      %p291 = por %p289, %p290
      %p292 = scmp.ne.s32.totalorder %s280, %s281
      %p293 = scmp.eq.s32.totalorder %s40, 1
      %p294 = por %p292, %p293
      %p296 = scmp.ne.s32.totalorder %s281, %s295
      %p297 = scmp.eq.s32.totalorder %s40, 0
      %p298 = por %p296, %p297
      %s300 = sadd.s32 %s299, 1
      %p303 = scmp.eq.s32.totalorder %s34, 1
      %p304 = scmp.ne.s32.totalorder %s299, %s301
      %p305 = scmp.eq.s32.totalorder %s34, 0
      %p306 = por %p304, %p305
      %p307 = scmp.ne.s32.totalorder %s299, %s301
      %p308 = scmp.eq.s32.totalorder %s39, 1
      %p309 = por %p307, %p308
      %p310 = scmp.ne.s32.totalorder %s301, %s302
      %p311 = scmp.eq.s32.totalorder %s39, 0
      %p312 = por %p310, %p311
      %p313 = scmp.ne.s32.totalorder %s301, %s302
      %p314 = scmp.eq.s32.totalorder %s40, 1
      %p315 = por %p313, %p314
      %p317 = scmp.ne.s32.totalorder %s302, %s316
      %p318 = scmp.eq.s32.totalorder %s40, 0
      %p319 = por %p317, %p318
      %s321 = sadd.s32 %s320, 1
      %p324 = scmp.eq.s32.totalorder %s34, 1
      %p325 = scmp.ne.s32.totalorder %s320, %s322
      %p326 = scmp.eq.s32.totalorder %s34, 0
      %p327 = por %p325, %p326
      %p328 = scmp.ne.s32.totalorder %s320, %s322
      %p329 = scmp.eq.s32.totalorder %s39, 1
      %p330 = por %p328, %p329
      %p331 = scmp.ne.s32.totalorder %s322, %s323
      %p332 = scmp.eq.s32.totalorder %s39, 0
      %p333 = por %p331, %p332
      %p334 = scmp.ne.s32.totalorder %s322, %s323
      %p335 = scmp.eq.s32.totalorder %s40, 1
      %p336 = por %p334, %p335
      %p338 = scmp.ne.s32.totalorder %s323, %s337
      %p339 = scmp.eq.s32.totalorder %s40, 0
      %p340 = por %p338, %p339
      %s342 = sadd.s32 %s341, 1
      %p345 = scmp.eq.s32.totalorder %s34, 1
      %p346 = scmp.ne.s32.totalorder %s341, %s343
      %p347 = scmp.eq.s32.totalorder %s34, 0
      %p348 = por %p346, %p347
      %p349 = scmp.ne.s32.totalorder %s341, %s343
      %p350 = scmp.eq.s32.totalorder %s39, 1
      %p351 = por %p349, %p350
      %p352 = scmp.ne.s32.totalorder %s343, %s344
      %p353 = scmp.eq.s32.totalorder %s39, 0
      %p354 = por %p352, %p353
      %p355 = scmp.ne.s32.totalorder %s343, %s344
      %p356 = scmp.eq.s32.totalorder %s40, 1
      %p357 = por %p355, %p356
      %p359 = scmp.ne.s32.totalorder %s344, %s358
      %p360 = scmp.eq.s32.totalorder %s40, 0
      %p361 = por %p359, %p360
      %s363 = sadd.s32 %s362, 1
      %p366 = scmp.eq.s32.totalorder %s34, 1
      %p367 = scmp.ne.s32.totalorder %s362, %s364
      %p368 = scmp.eq.s32.totalorder %s34, 0
      %p369 = por %p367, %p368
      %p370 = scmp.ne.s32.totalorder %s362, %s364
      %p371 = scmp.eq.s32.totalorder %s39, 1
      %p372 = por %p370, %p371
      %p373 = scmp.ne.s32.totalorder %s364, %s365
      %p374 = scmp.eq.s32.totalorder %s39, 0
      %p375 = por %p373, %p374
      %p376 = scmp.ne.s32.totalorder %s364, %s365
      %p377 = scmp.eq.s32.totalorder %s40, 1
      %p378 = por %p376, %p377
      %p380 = scmp.ne.s32.totalorder %s365, %s379
      %p381 = scmp.eq.s32.totalorder %s40, 0
      %p382 = por %p380, %p381
      %s384 = sadd.s32 %s383, 1
      %p387 = scmp.eq.s32.totalorder %s34, 1
      %p388 = scmp.ne.s32.totalorder %s383, %s385
      %p389 = scmp.eq.s32.totalorder %s34, 0
      %p390 = por %p388, %p389
      %p391 = scmp.ne.s32.totalorder %s383, %s385
      %p392 = scmp.eq.s32.totalorder %s39, 1
      %p393 = por %p391, %p392
      %p394 = scmp.ne.s32.totalorder %s385, %s386
      %p395 = scmp.eq.s32.totalorder %s39, 0
      %p396 = por %p394, %p395
      %p397 = scmp.ne.s32.totalorder %s385, %s386
      %p398 = scmp.eq.s32.totalorder %s40, 1
      %p399 = por %p397, %p398
      %p401 = scmp.ne.s32.totalorder %s386, %s400
      %p402 = scmp.eq.s32.totalorder %s40, 0
      %p403 = por %p401, %p402
      %s405 = sadd.s32 %s404, 1
      %p408 = scmp.eq.s32.totalorder %s34, 1
      %p409 = scmp.ne.s32.totalorder %s404, %s406
      %p410 = scmp.eq.s32.totalorder %s34, 0
      %p411 = por %p409, %p410
      %p412 = scmp.ne.s32.totalorder %s404, %s406
      %p413 = scmp.eq.s32.totalorder %s39, 1
      %p414 = por %p412, %p413
      %p415 = scmp.ne.s32.totalorder %s406, %s407
      %p416 = scmp.eq.s32.totalorder %s39, 0
      %p417 = por %p415, %p416
      %p418 = scmp.ne.s32.totalorder %s406, %s407
      %p419 = scmp.eq.s32.totalorder %s40, 1
      %p420 = por %p418, %p419
      %p422 = scmp.ne.s32.totalorder %s407, %s421
      %p423 = scmp.eq.s32.totalorder %s40, 0
      %p424 = por %p422, %p423
      %s426 = sadd.s32 %s425, 1
      %p429 = scmp.eq.s32.totalorder %s34, 1
      %p430 = scmp.ne.s32.totalorder %s425, %s427
      %p431 = scmp.eq.s32.totalorder %s34, 0
      %p432 = por %p430, %p431
      %p433 = scmp.ne.s32.totalorder %s425, %s427
      %p434 = scmp.eq.s32.totalorder %s39, 1
      %p435 = por %p433, %p434
      %p436 = scmp.ne.s32.totalorder %s427, %s428
      %p437 = scmp.eq.s32.totalorder %s39, 0
      %p438 = por %p436, %p437
      %p439 = scmp.ne.s32.totalorder %s427, %s428
      %p440 = scmp.eq.s32.totalorder %s40, 1
      %p441 = por %p439, %p440
      %p443 = scmp.ne.s32.totalorder %s428, %s442
      %p444 = scmp.eq.s32.totalorder %s40, 0
      %p445 = por %p443, %p444
      %s447 = sadd.s32 %s446, 1
      %p450 = scmp.eq.s32.totalorder %s34, 1
      %p451 = scmp.ne.s32.totalorder %s446, %s448
      %p452 = scmp.eq.s32.totalorder %s34, 0
      %p453 = por %p451, %p452
      %p454 = scmp.ne.s32.totalorder %s446, %s448
      %p455 = scmp.eq.s32.totalorder %s39, 1
      %p456 = por %p454, %p455
      %p457 = scmp.ne.s32.totalorder %s448, %s449
      %p458 = scmp.eq.s32.totalorder %s39, 0
      %p459 = por %p457, %p458
      %p460 = scmp.ne.s32.totalorder %s448, %s449
      %p461 = scmp.eq.s32.totalorder %s40, 1
      %p462 = por %p460, %p461
      %p464 = scmp.ne.s32.totalorder %s449, %s463
      %p465 = scmp.eq.s32.totalorder %s40, 0
      %p466 = por %p464, %p465
      %s468 = sadd.s32 %s467, 1
      %p471 = scmp.eq.s32.totalorder %s34, 1
      %p472 = scmp.ne.s32.totalorder %s467, %s469
      %p473 = scmp.eq.s32.totalorder %s34, 0
      %p474 = por %p472, %p473
      %p475 = scmp.ne.s32.totalorder %s467, %s469
      %p476 = scmp.eq.s32.totalorder %s39, 1
      %p477 = por %p475, %p476
      %p478 = scmp.ne.s32.totalorder %s469, %s470
      %p479 = scmp.eq.s32.totalorder %s39, 0
      %p480 = por %p478, %p479
      %p481 = scmp.ne.s32.totalorder %s469, %s470
      %p482 = scmp.eq.s32.totalorder %s40, 1
      %p483 = por %p481, %p482
      %p485 = scmp.ne.s32.totalorder %s470, %s484
      %p486 = scmp.eq.s32.totalorder %s40, 0
      %p487 = por %p485, %p486
      %s489 = sadd.s32 %s488, 1
      %p492 = scmp.eq.s32.totalorder %s34, 1
      %p493 = scmp.ne.s32.totalorder %s488, %s490
      %p494 = scmp.eq.s32.totalorder %s34, 0
      %p495 = por %p493, %p494
      %p496 = scmp.ne.s32.totalorder %s488, %s490
      %p497 = scmp.eq.s32.totalorder %s39, 1
      %p498 = por %p496, %p497
      %p499 = scmp.ne.s32.totalorder %s490, %s491
      %p500 = scmp.eq.s32.totalorder %s39, 0
      %p501 = por %p499, %p500
      %p502 = scmp.ne.s32.totalorder %s490, %s491
      %p503 = scmp.eq.s32.totalorder %s40, 1
      %p504 = por %p502, %p503
      %p506 = scmp.ne.s32.totalorder %s491, %s505
      %p507 = scmp.eq.s32.totalorder %s40, 0
      %p508 = por %p506, %p507
      %s510 = sadd.s32 %s509, 1
      %p513 = scmp.eq.s32.totalorder %s34, 1
      %p514 = scmp.ne.s32.totalorder %s509, %s511
      %p515 = scmp.eq.s32.totalorder %s34, 0
      %p516 = por %p514, %p515
      %p517 = scmp.ne.s32.totalorder %s509, %s511
      %p518 = scmp.eq.s32.totalorder %s39, 1
      %p519 = por %p517, %p518
      %p520 = scmp.ne.s32.totalorder %s511, %s512
      %p521 = scmp.eq.s32.totalorder %s39, 0
      %p522 = por %p520, %p521
      %p523 = scmp.ne.s32.totalorder %s511, %s512
      %p524 = scmp.eq.s32.totalorder %s40, 1
      %p525 = por %p523, %p524
      %p527 = scmp.ne.s32.totalorder %s512, %s526
      %p528 = scmp.eq.s32.totalorder %s40, 0
      %p529 = por %p527, %p528
      %s531 = sadd.s32 %s530, 1
      %p534 = scmp.eq.s32.totalorder %s34, 1
      %p535 = scmp.ne.s32.totalorder %s530, %s532
      %p536 = scmp.eq.s32.totalorder %s34, 0
      %p537 = por %p535, %p536
      %p538 = scmp.ne.s32.totalorder %s530, %s532
      %p539 = scmp.eq.s32.totalorder %s39, 1
      %p540 = por %p538, %p539
      %p541 = scmp.ne.s32.totalorder %s532, %s533
      %p542 = scmp.eq.s32.totalorder %s39, 0
      %p543 = por %p541, %p542
      %p544 = scmp.ne.s32.totalorder %s532, %s533
      %p545 = scmp.eq.s32.totalorder %s40, 1
      %p546 = por %p544, %p545
      %p548 = scmp.ne.s32.totalorder %s533, %s547
      %p549 = scmp.eq.s32.totalorder %s40, 0
      %p550 = por %p548, %p549
      %s552 = sadd.s32 %s551, 1
      %p555 = scmp.eq.s32.totalorder %s34, 1
      %p556 = scmp.ne.s32.totalorder %s551, %s553
      %p557 = scmp.eq.s32.totalorder %s34, 0
      %p558 = por %p556, %p557
      %p559 = scmp.ne.s32.totalorder %s551, %s553
      %p560 = scmp.eq.s32.totalorder %s39, 1
      %p561 = por %p559, %p560
      %p562 = scmp.ne.s32.totalorder %s553, %s554
      %p563 = scmp.eq.s32.totalorder %s39, 0
      %p564 = por %p562, %p563
      %p565 = scmp.ne.s32.totalorder %s553, %s554
      %p566 = scmp.eq.s32.totalorder %s40, 1
      %p567 = por %p565, %p566
      %p569 = scmp.ne.s32.totalorder %s554, %s568
      %p570 = scmp.eq.s32.totalorder %s40, 0
      %p571 = por %p569, %p570
      %s572 = ssub.s32 %s34, %s41
      %p573 = scmp.eq.s32.totalorder %s572, 0
      %s575 = sadd.s32 %s574, 1
      %s576 = scalar_select %p573, %s574, %s575
      %p579 = pneg %p573
      %p580 = scmp.eq.s32.totalorder %s34, 1
      %p581 = por %p579, %p580
      %p582 = scmp.ne.s32.totalorder %s574, %s577
      %p583 = scmp.eq.s32.totalorder %s34, 0
      %p584 = por %p582, %p583
      %p585 = scmp.ne.s32.totalorder %s574, %s577
      %p586 = scmp.eq.s32.totalorder %s39, 1
      %p587 = por %p585, %p586
      %p588 = scmp.ne.s32.totalorder %s577, %s578
      %p589 = scmp.eq.s32.totalorder %s39, 0
      %p590 = por %p588, %p589
      %p591 = scmp.ne.s32.totalorder %s577, %s578
      %p592 = scmp.eq.s32.totalorder %s40, 1
      %p593 = por %p591, %p592
      %p595 = scmp.ne.s32.totalorder %s578, %s594
      %p596 = scmp.eq.s32.totalorder %s40, 0
      %p597 = por %p595, %p596
      %p598 = scmp.le.s32.totalorder 1, %s34
      %p599 = scmp.lt.s32.totalorder %s34, 3
      %p600 = pnand %p598, %p599
      %p601 = pneg %p600
      // Predicated region
      $region9: #{encode_image.1} parent=5 // pred_check
        _
      $region10: #{encode_image.1} parent=5 // pred_check_branch
        %603 = sbr.rel (%p600) target = $region12
      $region11: #{encode_image.1} parent=5 // pred_region
        %s604 = ssub.s32 %s34, 1
        // Predicated region
        $region13: #{encode_image.1} parent=11 // pred_check
          %p605 = pneg %p81
        $region14: #{encode_image.1} parent=11 // pred_check_branch
          %607 = sbr.rel (%p605) target = $region16
        $region15: #{encode_image.1} parent=11 // pred_region
          _
        $region16: #{encode_image.1} parent=11 // pred_fallthru
          _
        // Predicated region
        $region17: #{encode_image.1} parent=11 // pred_check
          %p608 = pneg %p102
        $region18: #{encode_image.1} parent=11 // pred_check_branch
          %610 = sbr.rel (%p608) target = $region20
        $region19: #{encode_image.1} parent=11 // pred_region
          _
        $region20: #{encode_image.1} parent=11 // pred_fallthru
          _
        // Predicated region
        $region21: #{encode_image.1} parent=11 // pred_check
          %p611 = pneg %p123
        $region22: #{encode_image.1} parent=11 // pred_check_branch
          %613 = sbr.rel (%p611) target = $region24
        $region23: #{encode_image.1} parent=11 // pred_region
          _
        $region24: #{encode_image.1} parent=11 // pred_fallthru
          _
        // Predicated region
        $region25: #{encode_image.1} parent=11 // pred_check
          %p614 = pneg %p144
        $region26: #{encode_image.1} parent=11 // pred_check_branch
          %616 = sbr.rel (%p614) target = $region28
        $region27: #{encode_image.1} parent=11 // pred_region
          _
        $region28: #{encode_image.1} parent=11 // pred_fallthru
          _
        // Predicated region
        $region29: #{encode_image.1} parent=11 // pred_check
          %p617 = pneg %p165
        $region30: #{encode_image.1} parent=11 // pred_check_branch
          %619 = sbr.rel (%p617) target = $region32
        $region31: #{encode_image.1} parent=11 // pred_region
          _
        $region32: #{encode_image.1} parent=11 // pred_fallthru
          _
        // Predicated region
        $region33: #{encode_image.1} parent=11 // pred_check
          %p620 = pneg %p186
        $region34: #{encode_image.1} parent=11 // pred_check_branch
          %622 = sbr.rel (%p620) target = $region36
        $region35: #{encode_image.1} parent=11 // pred_region
          _
        $region36: #{encode_image.1} parent=11 // pred_fallthru
          _
        // Predicated region
        $region37: #{encode_image.1} parent=11 // pred_check
          %p623 = pneg %p207
        $region38: #{encode_image.1} parent=11 // pred_check_branch
          %625 = sbr.rel (%p623) target = $region40
        $region39: #{encode_image.1} parent=11 // pred_region
          _
        $region40: #{encode_image.1} parent=11 // pred_fallthru
          _
        // Predicated region
        $region41: #{encode_image.1} parent=11 // pred_check
          %p626 = pneg %p228
        $region42: #{encode_image.1} parent=11 // pred_check_branch
          %628 = sbr.rel (%p626) target = $region44
        $region43: #{encode_image.1} parent=11 // pred_region
          _
        $region44: #{encode_image.1} parent=11 // pred_fallthru
          _
        // Predicated region
        $region45: #{encode_image.1} parent=11 // pred_check
          %p629 = pneg %p249
        $region46: #{encode_image.1} parent=11 // pred_check_branch
          %631 = sbr.rel (%p629) target = $region48
        $region47: #{encode_image.1} parent=11 // pred_region
          _
        $region48: #{encode_image.1} parent=11 // pred_fallthru
          _
        // Predicated region
        $region49: #{encode_image.1} parent=11 // pred_check
          %p632 = pneg %p270
        $region50: #{encode_image.1} parent=11 // pred_check_branch
          %634 = sbr.rel (%p632) target = $region52
        $region51: #{encode_image.1} parent=11 // pred_region
          _
        $region52: #{encode_image.1} parent=11 // pred_fallthru
          _
        // Predicated region
        $region53: #{encode_image.1} parent=11 // pred_check
          %p635 = pneg %p291
        $region54: #{encode_image.1} parent=11 // pred_check_branch
          %637 = sbr.rel (%p635) target = $region56
        $region55: #{encode_image.1} parent=11 // pred_region
          _
        $region56: #{encode_image.1} parent=11 // pred_fallthru
          _
        // Predicated region
        $region57: #{encode_image.1} parent=11 // pred_check
          %p638 = pneg %p312
        $region58: #{encode_image.1} parent=11 // pred_check_branch
          %640 = sbr.rel (%p638) target = $region60
        $region59: #{encode_image.1} parent=11 // pred_region
          _
        $region60: #{encode_image.1} parent=11 // pred_fallthru
          _
        // Predicated region
        $region61: #{encode_image.1} parent=11 // pred_check
          %p641 = pneg %p333
        $region62: #{encode_image.1} parent=11 // pred_check_branch
          %643 = sbr.rel (%p641) target = $region64
        $region63: #{encode_image.1} parent=11 // pred_region
          _
        $region64: #{encode_image.1} parent=11 // pred_fallthru
          _
        // Predicated region
        $region65: #{encode_image.1} parent=11 // pred_check
          %p644 = pneg %p354
        $region66: #{encode_image.1} parent=11 // pred_check_branch
          %646 = sbr.rel (%p644) target = $region68
        $region67: #{encode_image.1} parent=11 // pred_region
          _
        $region68: #{encode_image.1} parent=11 // pred_fallthru
          _
        // Predicated region
        $region69: #{encode_image.1} parent=11 // pred_check
          %p647 = pneg %p375
        $region70: #{encode_image.1} parent=11 // pred_check_branch
          %649 = sbr.rel (%p647) target = $region72
        $region71: #{encode_image.1} parent=11 // pred_region
          _
        $region72: #{encode_image.1} parent=11 // pred_fallthru
          _
        // Predicated region
        $region73: #{encode_image.1} parent=11 // pred_check
          %p650 = pneg %p396
        $region74: #{encode_image.1} parent=11 // pred_check_branch
          %652 = sbr.rel (%p650) target = $region76
        $region75: #{encode_image.1} parent=11 // pred_region
          _
        $region76: #{encode_image.1} parent=11 // pred_fallthru
          _
        // Predicated region
        $region77: #{encode_image.1} parent=11 // pred_check
          %p653 = pneg %p417
        $region78: #{encode_image.1} parent=11 // pred_check_branch
          %655 = sbr.rel (%p653) target = $region80
        $region79: #{encode_image.1} parent=11 // pred_region
          _
        $region80: #{encode_image.1} parent=11 // pred_fallthru
          _
        // Predicated region
        $region81: #{encode_image.1} parent=11 // pred_check
          %p656 = pneg %p438
        $region82: #{encode_image.1} parent=11 // pred_check_branch
          %658 = sbr.rel (%p656) target = $region84
        $region83: #{encode_image.1} parent=11 // pred_region
          _
        $region84: #{encode_image.1} parent=11 // pred_fallthru
          _
        // Predicated region
        $region85: #{encode_image.1} parent=11 // pred_check
          %p659 = pneg %p459
        $region86: #{encode_image.1} parent=11 // pred_check_branch
          %661 = sbr.rel (%p659) target = $region88
        $region87: #{encode_image.1} parent=11 // pred_region
          _
        $region88: #{encode_image.1} parent=11 // pred_fallthru
          _
        // Predicated region
        $region89: #{encode_image.1} parent=11 // pred_check
          %p662 = pneg %p480
        $region90: #{encode_image.1} parent=11 // pred_check_branch
          %664 = sbr.rel (%p662) target = $region92
        $region91: #{encode_image.1} parent=11 // pred_region
          _
        $region92: #{encode_image.1} parent=11 // pred_fallthru
          _
        // Predicated region
        $region93: #{encode_image.1} parent=11 // pred_check
          %p665 = pneg %p501
        $region94: #{encode_image.1} parent=11 // pred_check_branch
          %667 = sbr.rel (%p665) target = $region96
        $region95: #{encode_image.1} parent=11 // pred_region
          _
        $region96: #{encode_image.1} parent=11 // pred_fallthru
          _
        // Predicated region
        $region97: #{encode_image.1} parent=11 // pred_check
          %p668 = pneg %p522
        $region98: #{encode_image.1} parent=11 // pred_check_branch
          %670 = sbr.rel (%p668) target = $region100
        $region99: #{encode_image.1} parent=11 // pred_region
          _
        $region100: #{encode_image.1} parent=11 // pred_fallthru
          _
        // Predicated region
        $region101: #{encode_image.1} parent=11 // pred_check
          %p671 = pneg %p543
        $region102: #{encode_image.1} parent=11 // pred_check_branch
          %673 = sbr.rel (%p671) target = $region104
        $region103: #{encode_image.1} parent=11 // pred_region
          _
        $region104: #{encode_image.1} parent=11 // pred_fallthru
          _
        // Predicated region
        $region105: #{encode_image.1} parent=11 // pred_check
          %p674 = pneg %p564
        $region106: #{encode_image.1} parent=11 // pred_check_branch
          %676 = sbr.rel (%p674) target = $region108
        $region107: #{encode_image.1} parent=11 // pred_region
          _
        $region108: #{encode_image.1} parent=11 // pred_fallthru
          _
      $region12: #{encode_image.1} parent=5 // pred_fallthru
        _
      %p677 = scmp.lt.s32.totalorder %s34, 2
      // Predicated region
      $region109: #{encode_image.1} parent=5 // pred_check
        %p678 = pneg %p677
      $region110: #{encode_image.1} parent=5 // pred_check_branch
        %680 = sbr.rel (%p678) target = $region112
      $region111: #{encode_image.1} parent=5 // pred_region
        // Predicated region
        $region113: #{encode_image.1} parent=111 // pred_check
          %p681 = pneg %p54
        $region114: #{encode_image.1} parent=111 // pred_check_branch
          %683 = sbr.rel (%p681) target = $region116
        $region115: #{encode_image.1} parent=111 // pred_region
          %p684 = scmp.lt.s32.totalorder %s34, 1
          %s685 = scalar_select %p684, %s34, 1
          %s686 = smul.addr %s685, 6
          %s687 = smul.addr %s686, 8
          %s688 = scalar_lea.vmem %s0, %s687
        $region116: #{encode_image.1} parent=111 // pred_fallthru
          _
      $region112: #{encode_image.1} parent=5 // pred_fallthru
        _
      %p689 = scmp.le.s32.totalorder 1, %s34
      %p690 = scmp.lt.s32.totalorder %s34, 3
      %p691 = pnand %p689, %p690
      %p692 = pneg %p691
      // Predicated region
      $region117: #{encode_image.1} parent=5 // pred_check
        _
      $region118: #{encode_image.1} parent=5 // pred_check_branch
        %694 = sbr.rel (%p691) target = $region120
      $region119: #{encode_image.1} parent=5 // pred_region
        %s695 = ssub.s32 %s34, 1
        %p696 = scmp.lt.s32.totalorder %s39, 1
        %s697 = scalar_select %p696, %s39, 1
        %s698 = smul.addr %s697, 6
        %s699 = smul.addr %s698, 8
        %s700 = scalar_lea.vmem %s0, %s699
        %p701 = pneg %p60
        %p702 = pneg %p57
        %p703 = pneg %p81
        %p704 = pneg %p78
        %p705 = pneg %p102
        %p706 = pneg %p99
        %p707 = pneg %p123
        %p708 = pneg %p120
        %p709 = pneg %p144
        %p710 = pneg %p141
        %p711 = pneg %p165
        %p712 = pneg %p162
        %p713 = pneg %p186
        %p714 = pneg %p183
        %p715 = pneg %p207
        %p716 = pneg %p204
        %p717 = pneg %p228
        %p718 = pneg %p225
        %p719 = pneg %p249
        %p720 = pneg %p246
        %p721 = pneg %p270
        %p722 = pneg %p267
        %p723 = pneg %p291
        %p724 = pneg %p288
        %p725 = pneg %p312
        %p726 = pneg %p309
        %p727 = pneg %p333
        %p728 = pneg %p330
        %p729 = pneg %p354
        %p730 = pneg %p351
        %p731 = pneg %p375
        %p732 = pneg %p372
        %p733 = pneg %p396
        %p734 = pneg %p393
        %p735 = pneg %p417
        %p736 = pneg %p414
        %p737 = pneg %p438
        %p738 = pneg %p435
        %p739 = pneg %p459
        %p740 = pneg %p456
        %p741 = pneg %p480
        %p742 = pneg %p477
        %p743 = pneg %p501
        %p744 = pneg %p498
        %p745 = pneg %p522
        %p746 = pneg %p519
        %p747 = pneg %p543
        %p748 = pneg %p540
        %p749 = pneg %p564
        %p750 = pneg %p561
        %p751 = pneg %p590
        %p752 = pneg %p587
        %s753 = sand.u32 %s577, 1
        %s754 = scalar_lea.sflag [#allocation3], %s753
        %s755 = sand.u32 %s577, 1
        %s756 = scalar_lea.vmem [#allocation2], %s755
        %p757 = scmp.lt.s32.totalorder %s39, 1
        %s758 = scalar_select %p757, %s39, 1
        %s759 = smul.addr %s758, 6
        %s760 = smul.addr %s759, 8
        %s761 = scalar_lea.vmem %s0, %s760
        %v762 = vld [vmem:[%s761] sm:$0xff]
        %v763 = vld [vmem:[%s761 + $0x8] sm:$0xff]
        %v764 = vld [vmem:[%s761 + $0x10] sm:$0xff]
        %v765 = vld [vmem:[%s761 + $0x18] sm:$0xff]
        %v766 = vld [vmem:[%s761 + $0x20] sm:$0xff]
        %v767 = vld [vmem:[%s761 + $0x28] sm:$0xff]
        %v768 = vld [vmem:[%s1] sm:$0xff]
        %v769 = vld [vmem:[%s1 + $0x8] sm:$0xff]
        %v770 = vld [vmem:[%s1 + $0x10] sm:$0xff]
        %v771 = vld [vmem:[%s1 + $0x18] sm:$0xff]
        %v772 = vld [vmem:[%s1 + $0x20] sm:$0xff]
        %v773 = vld [vmem:[%s1 + $0x28] sm:$0xff]
        %v774 = vld [vmem:[%s1 + $0x30] sm:$0xff]
        %v775 = vld [vmem:[%s1 + $0x38] sm:$0xff]
        %v776 = vld [vmem:[%s1 + $0x40] sm:$0xff]
        %v777 = vld [vmem:[%s1 + $0x48] sm:$0xff]
        %v778 = vld [vmem:[%s1 + $0x50] sm:$0xff]
        %v779 = vld [vmem:[%s1 + $0x58] sm:$0xff]
        %v780 = vld [vmem:[%s1 + $0x60] sm:$0xff]
        %v781 = vld [vmem:[%s1 + $0x68] sm:$0xff]
        %v782 = vld [vmem:[%s1 + $0x70] sm:$0xff]
        %v783 = vld [vmem:[%s1 + $0x78] sm:$0xff]
        %v784 = vld [vmem:[%s1 + $0x80] sm:$0xff]
        %v785 = vld [vmem:[%s1 + $0x88] sm:$0xff]
        %v786 = vld [vmem:[%s1 + $0x90] sm:$0xff]
        %v787 = vld [vmem:[%s1 + $0x98] sm:$0xff]
        %v788 = vld [vmem:[%s1 + $0xa0] sm:$0xff]
        %v789 = vld [vmem:[%s1 + $0xa8] sm:$0xff]
        %v790 = vld [vmem:[%s1 + $0xb0] sm:$0xff]
        %v791 = vld [vmem:[%s1 + $0xb8] sm:$0xff]
        %v792 = vld [vmem:[%s2] sm:$0xff]
        %v793 = vld [vmem:[%s2 + $0x8] sm:$0xff]
        %v794 = vld [vmem:[%s2 + $0x10] sm:$0xff]
        %vm795 = vcmask 523264
        %v797 = vsel %vm795, %v763, 0
        %v800 = vsel %vm795, %v765, 0
        %v803 = vsel %vm795, %v767, 0
        %805 = vmatprep.subr.mxu0 0.0
        %806 = vmatpush1.msra.mxu0 %v768
        %807 = vmatprep.subr.mxu0 0.0
        %808 = vmatpush1.msra.mxu0 %v769
        %809 = vmatprep.subr.mxu0 0.0
        %810 = vmatpush1.msra.mxu0 %v770
        %811 = vmatprep.subr.mxu0 0.0
        %812 = vmatpush1.msra.mxu0 %v771
        %813 = vmatprep.subr.mxu0 0.0
        %814 = vmatpush1.msra.mxu0 %v772
        %815 = vmatprep.subr.mxu0 0.0
        %816 = vmatpush1.msra.mxu0 %v773
        %817 = vmatprep.subr.mxu0 0.0
        %818 = vmatpush1.msra.mxu0 %v774
        %819 = vmatprep.subr.mxu0 0.0
        %820 = vmatpush1.msra.mxu0 %v775
        %821 = vmatprep.subr.mxu0 0.0
        %822 = vmatpush1.msra.mxu0 %v776
        %823 = vmatprep.subr.mxu0 0.0
        %824 = vmatpush1.msra.mxu0 %v777
        %825 = vmatprep.subr.mxu0 0.0
        %826 = vmatpush1.msra.mxu0 %v778
        %827 = vmatprep.subr.mxu0 0.0
        %828 = vmatpush1.msra.mxu0 %v779
        %829 = vmatprep.subr.mxu0 0.0
        %830 = vmatpush1.msra.mxu0 %v780
        %831 = vmatprep.subr.mxu0 0.0
        %832 = vmatpush1.msra.mxu0 %v781
        %833 = vmatprep.subr.mxu0 0.0
        %834 = vmatpush1.msra.mxu0 %v782
        %835 = vmatprep.subr.mxu0 0.0
        %836 = vmatpush1.msra.mxu0 %v783
        %837 = vmatprep.subr.mxu0 0.0
        %838 = vmatpush1.msra.mxu0 %v784
        %839 = vmatprep.subr.mxu0 0.0
        %840 = vmatpush1.msra.mxu0 %v785
        %841 = vmatprep.subr.mxu0 0.0
        %842 = vmatpush1.msra.mxu0 %v786
        %843 = vmatprep.subr.mxu0 0.0
        %844 = vmatpush1.msra.mxu0 %v787
        %845 = vmatprep.subr.mxu0 0.0
        %846 = vmatpush1.msra.mxu0 %v788
        %847 = vmatprep.subr.mxu0 0.0
        %848 = vmatpush1.msra.mxu0 %v789
        %849 = vmatprep.subr.mxu0 0.0
        %850 = vmatpush1.msra.mxu0 %v790
        %851 = vmatprep.subr.mxu0 0.0
        %852 = vmatpush1.msra.mxu0 %v791
        %853 = vmatprep.subr.mxu0 0.0
        %854 = vmatpush1.msra.mxu0 0.0
        %855 = vmatprep.subr.mxu0 0.0
        %856 = vmatpush1.msra.mxu0 0.0
        %857 = vmatprep.subr.mxu0 0.0
        %858 = vmatpush1.msra.mxu0 0.0
        %859 = vmatprep.subr.mxu0 0.0
        %860 = vmatpush1.msra.mxu0 0.0
        %861 = vmatprep.subr.mxu0 0.0
        %862 = vmatpush1.msra.mxu0 0.0
        %863 = vmatprep.subr.mxu0 0.0
        %864 = vmatpush1.msra.mxu0 0.0
        %865 = vmatprep.subr.mxu0 0.0
        %866 = vmatpush1.msra.mxu0 0.0
        %867 = vmatprep.subr.mxu0 0.0
        %868 = vmatpush1.msra.mxu0 0.0
        %869 = vmatprep.mubr.f32.mxu0 %v797
        %870 = vmatmul.mubr.f32.gmra.mrb[0].mxu0 %v762
        %v871 = vpop.f32.mrb[0].mxu0
        %v872 = vadd.f32 %v792, %v871
        %v873 = vpop.f32.mrb[0].mxu0
        %874 = vmatprep.mubr.f32.mxu0 %v800
        %875 = vmatmul.mubr.f32.gmra.mrb[0].mxu0 %v764
        %v876 = vpop.f32.mrb[0].mxu0
        %v877 = vadd.f32 %v793, %v876
        %v878 = vpop.f32.mrb[0].mxu0
        %879 = vmatprep.mubr.f32.mxu0 %v803
        %880 = vmatmul.mubr.f32.gmra.mrb[0].mxu0 %v766
        %v881 = vpop.f32.mrb[0].mxu0
        %v882 = vadd.f32 %v794, %v881
        %v883 = vpop.f32.mrb[0].mxu0
        %884 = vdwg.mxu0
        %v885 = vld [vmem:[%s3] sm:$0x1]
        %v886 = vld [vmem:[%s4] sm:$0x1]
        %v887 = vsel %vm795, %v872, 0.0
        %888 = vadd.xlane.f32.xlu0 %v887
        %v889 = vpop.xlane.xlu0 %888
        %v890 = vsel %vm795, %v877, 0.0
        %891 = vadd.xlane.f32.xlu0 %v890
        %v892 = vpop.xlane.xlu0 %891
        %v893 = vsel %vm795, %v882, 0.0
        %894 = vadd.xlane.f32.xlu0 %v893
        %v895 = vpop.xlane.xlu0 %894
        %v896 = vrcp.pop 64.0
        %v897 = vmul.f32 %v889, %v896
        %v898 = vmul.f32 %v892, %v896
        %v899 = vmul.f32 %v895, %v896
        %v900 = vsub.f32 %v872, %v897
        %v901 = vsub.f32 %v877, %v898
        %v902 = vsub.f32 %v882, %v899
        %v903 = vmul.f32 %v900, %v900
        %v904 = vmul.f32 %v901, %v901
        %v905 = vmul.f32 %v902, %v902
        %v906 = vsel %vm795, %v903, 0.0
        %907 = vadd.xlane.f32.xlu0 %v906
        %v908 = vpop.xlane.xlu0 %907
        %v909 = vsel %vm795, %v904, 0.0
        %910 = vadd.xlane.f32.xlu0 %v909
        %v911 = vpop.xlane.xlu0 %910
        %v912 = vsel %vm795, %v905, 0.0
        %913 = vadd.xlane.f32.xlu0 %v912
        %v914 = vpop.xlane.xlu0 %913
        %v915 = vmul.f32 %v908, %v896
        %v916 = vmul.f32 %v911, %v896
        %v917 = vmul.f32 %v914, %v896
        %v918 = vadd.f32 %v915, 1e-05
        %v919 = vadd.f32 %v916, 1e-05
        %v920 = vadd.f32 %v917, 1e-05
        %v921 = vrsqrt.pop %v918
        %v922 = vrsqrt.pop %v919
        %v923 = vrsqrt.pop %v920
        %v924 = vmul.f32 %v900, %v921
        %v925 = vmul.f32 %v901, %v922
        %v926 = vmul.f32 %v902, %v923
        %v928 = vlaneseq
        %v929 = vshrl.u32 %v928, 7
        %v930 = vsub.s32 0, %v929
        %v931 = vrot.slane %v885, %v930
        %v933 = vmul.f32 %v924, %v931
        %v934 = vmul.f32 %v925, %v931
        %v935 = vmul.f32 %v926, %v931
        %v937 = vlaneseq
        %v938 = vshrl.u32 %v937, 7
        %v939 = vsub.s32 0, %v938
        %v940 = vrot.slane %v886, %v939
        %v942 = vadd.f32 %v933, %v940
        %v943 = vadd.f32 %v934, %v940
        %v944 = vadd.f32 %v935, %v940
        %v945 = vlaneseq
        %v946 = vand.u32 %v945, 127
        %vm947 = vcmp.lt.s32.totalorder %v946, 17
        %v948 = vsel %vm947, 0.0, -1e+30
        %v949 = vld [vmem:[%s5] sm:$0x1]
        %v950 = vld [vmem:[%s6] sm:$0x1]
        %v951 = vsel %vm795, %v942, 0.0
        %952 = vadd.xlane.f32.xlu0 %v951
        %v953 = vpop.xlane.xlu0 %952
        %v954 = vsel %vm795, %v943, 0.0
        %955 = vadd.xlane.f32.xlu0 %v954
        %v956 = vpop.xlane.xlu0 %955
        %v957 = vsel %vm795, %v944, 0.0
        %958 = vadd.xlane.f32.xlu0 %v957
        %v959 = vpop.xlane.xlu0 %958
        %v960 = vmul.f32 %v953, %v896
        %v961 = vmul.f32 %v956, %v896
        %v962 = vmul.f32 %v959, %v896
        %v963 = vsub.f32 %v942, %v960
        %v964 = vsub.f32 %v943, %v961
        %v965 = vsub.f32 %v944, %v962
        %v966 = vmul.f32 %v963, %v963
        %v967 = vmul.f32 %v964, %v964
        %v968 = vmul.f32 %v965, %v965
        %v969 = vsel %vm795, %v966, 0.0
        %970 = vadd.xlane.f32.xlu0 %v969
        %v971 = vpop.xlane.xlu0 %970
        %v972 = vsel %vm795, %v967, 0.0
        %973 = vadd.xlane.f32.xlu0 %v972
        %v974 = vpop.xlane.xlu0 %973
        %v975 = vsel %vm795, %v968, 0.0
        %976 = vadd.xlane.f32.xlu0 %v975
        %v977 = vpop.xlane.xlu0 %976
        %v978 = vmul.f32 %v971, %v896
        %v979 = vmul.f32 %v974, %v896
        %v980 = vmul.f32 %v977, %v896
        %v981 = vadd.f32 %v978, 1e-05
        %v982 = vadd.f32 %v979, 1e-05
        %v983 = vadd.f32 %v980, 1e-05
        %v984 = vrsqrt.pop %v981
        %v985 = vrsqrt.pop %v982
        %v986 = vrsqrt.pop %v983
        %v987 = vmul.f32 %v963, %v984
        %v988 = vmul.f32 %v964, %v985
        %v989 = vmul.f32 %v965, %v986
        %v991 = vlaneseq
        %v992 = vshrl.u32 %v991, 7
        %v993 = vsub.s32 0, %v992
        %v994 = vrot.slane %v949, %v993
        %v996 = vmul.f32 %v987, %v994
        %v997 = vmul.f32 %v988, %v994
        %v998 = vmul.f32 %v989, %v994
        %v1000 = vlaneseq
        %v1001 = vshrl.u32 %v1000, 7
        %v1002 = vsub.s32 0, %v1001
        %v1003 = vrot.slane %v950, %v1002
        %v1005 = vadd.f32 %v996, %v1003
        %v1006 = vadd.f32 %v997, %v1003
        %v1007 = vadd.f32 %v998, %v1003
        %v1008 = vld [vmem:[%s7] sm:$0xff]
        %v1009 = vld [vmem:[%s7 + $0x8] sm:$0xff]
        %v1010 = vld [vmem:[%s7 + $0x10] sm:$0xff]
        %v1011 = vld [vmem:[%s7 + $0x18] sm:$0xff]
        %v1012 = vld [vmem:[%s7 + $0x20] sm:$0xff]
        %v1013 = vld [vmem:[%s7 + $0x28] sm:$0xff]
        %v1014 = vld [vmem:[%s7 + $0x30] sm:$0xff]
        %v1015 = vld [vmem:[%s7 + $0x38] sm:$0xff]
        %v1016 = vld [vmem:[%s8] sm:$0x1]
        %v1018 = vlaneseq
        %v1019 = vshrl.u32 %v1018, 7
        %v1020 = vsub.s32 0, %v1019
        %v1021 = vrot.slane %v1016, %v1020
        %v1024 = vsel %vm795, %v1005, 0
        %v1027 = vsel %vm795, %v1006, 0
        %v1030 = vsel %vm795, %v1007, 0
        %1032 = vmatprep.subr.mxu0 0.0
        %1033 = vmatpush1.msra.mxu0 %v1008
        %1034 = vmatprep.subr.mxu0 0.0
        %1035 = vmatpush1.msra.mxu0 %v1009
        %1036 = vmatprep.subr.mxu0 0.0
        %1037 = vmatpush1.msra.mxu0 %v1010
        %1038 = vmatprep.subr.mxu0 0.0
        %1039 = vmatpush1.msra.mxu0 %v1011
        %1040 = vmatprep.subr.mxu0 0.0
        %1041 = vmatpush1.msra.mxu0 %v1012
        %1042 = vmatprep.subr.mxu0 0.0
        %1043 = vmatpush1.msra.mxu0 %v1013
        %1044 = vmatprep.subr.mxu0 0.0
        %1045 = vmatpush1.msra.mxu0 %v1014
        %1046 = vmatprep.subr.mxu0 0.0
        %1047 = vmatpush1.msra.mxu0 %v1015
        %1048 = vmatprep.subr.mxu0 0.0
        %1049 = vmatpush1.msra.mxu0 0.0
        %1050 = vmatprep.subr.mxu0 0.0
        %1051 = vmatpush1.msra.mxu0 0.0
        %1052 = vmatprep.subr.mxu0 0.0
        %1053 = vmatpush1.msra.mxu0 0.0
        %1054 = vmatprep.subr.mxu0 0.0
        %1055 = vmatpush1.msra.mxu0 0.0
        %1056 = vmatprep.subr.mxu0 0.0
        %1057 = vmatpush1.msra.mxu0 0.0
        %1058 = vmatprep.subr.mxu0 0.0
        %1059 = vmatpush1.msra.mxu0 0.0
        %1060 = vmatprep.subr.mxu0 0.0
        %1061 = vmatpush1.msra.mxu0 0.0
        %1062 = vmatprep.subr.mxu0 0.0
        %1063 = vmatpush1.msra.mxu0 0.0
        %1064 = vmatprep.subr.mxu0 0.0
        %1065 = vmatpush1.msra.mxu0 0.0
        %1066 = vmatprep.subr.mxu0 0.0
        %1067 = vmatpush1.msra.mxu0 0.0
        %1068 = vmatprep.subr.mxu0 0.0
        %1069 = vmatpush1.msra.mxu0 0.0
        %1070 = vmatprep.subr.mxu0 0.0
        %1071 = vmatpush1.msra.mxu0 0.0
        %1072 = vmatprep.subr.mxu0 0.0
        %1073 = vmatpush1.msra.mxu0 0.0
        %1074 = vmatprep.subr.mxu0 0.0
        %1075 = vmatpush1.msra.mxu0 0.0
        %1076 = vmatprep.subr.mxu0 0.0
        %1077 = vmatpush1.msra.mxu0 0.0
        %1078 = vmatprep.subr.mxu0 0.0
        %1079 = vmatpush1.msra.mxu0 0.0
        %1080 = vmatprep.subr.mxu0 0.0
        %1081 = vmatpush1.msra.mxu0 0.0
        %1082 = vmatprep.subr.mxu0 0.0
        %1083 = vmatpush1.msra.mxu0 0.0
        %1084 = vmatprep.subr.mxu0 0.0
        %1085 = vmatpush1.msra.mxu0 0.0
        %1086 = vmatprep.subr.mxu0 0.0
        %1087 = vmatpush1.msra.mxu0 0.0
        %1088 = vmatprep.subr.mxu0 0.0
        %1089 = vmatpush1.msra.mxu0 0.0
        %1090 = vmatprep.subr.mxu0 0.0
        %1091 = vmatpush1.msra.mxu0 0.0
        %1092 = vmatprep.subr.mxu0 0.0
        %1093 = vmatpush1.msra.mxu0 0.0
        %1094 = vmatprep.subr.mxu0 0.0
        %1095 = vmatpush1.msra.mxu0 0.0
        %1096 = vmatprep.mubr.f32.mxu0 0.0
        %1097 = vmatmul.mubr.f32.gmra.mrb[0].mxu0 %v1024
        %v1098 = vpop.f32.mrb[0].mxu0
        %v1099 = vadd.f32 %v1021, %v1098
        %v1100 = vpop.f32.mrb[0].mxu0
        %1101 = vmatprep.mubr.f32.mxu0 0.0
        %1102 = vmatmul.mubr.f32.gmra.mrb[0].mxu0 %v1027
        %v1103 = vpop.f32.mrb[0].mxu0
        %v1104 = vadd.f32 %v1021, %v1103
        %v1105 = vpop.f32.mrb[0].mxu0
        %1106 = vmatprep.mubr.f32.mxu0 0.0
        %1107 = vmatmul.mubr.f32.gmra.mrb[0].mxu0 %v1030
        %v1108 = vpop.f32.mrb[0].mxu0
        %v1109 = vadd.f32 %v1021, %v1108
        %v1110 = vpop.f32.mrb[0].mxu0
        %1111 = vdwg.mxu0
        %v1112 = vld [vmem:[%s9] sm:$0xff]
        %v1113 = vld [vmem:[%s9 + $0x8] sm:$0xff]
        %v1114 = vld [vmem:[%s9 + $0x10] sm:$0xff]
        %v1115 = vld [vmem:[%s9 + $0x18] sm:$0xff]
        %v1116 = vld [vmem:[%s9 + $0x20] sm:$0xff]
        %v1117 = vld [vmem:[%s9 + $0x28] sm:$0xff]
        %v1118 = vld [vmem:[%s9 + $0x30] sm:$0xff]
        %v1119 = vld [vmem:[%s9 + $0x38] sm:$0xff]
        %v1120 = vld [vmem:[%s10] sm:$0x1]
        %v1122 = vlaneseq
        %v1123 = vshrl.u32 %v1122, 7
        %v1124 = vsub.s32 0, %v1123
        %v1125 = vrot.slane %v1120, %v1124
        %1127 = vmatprep.subr.mxu0 0.0
        %1128 = vmatpush1.msra.mxu0 %v1112
        %1129 = vmatprep.subr.mxu0 0.0
        %1130 = vmatpush1.msra.mxu0 %v1113
        %1131 = vmatprep.subr.mxu0 0.0
        %1132 = vmatpush1.msra.mxu0 %v1114
        %1133 = vmatprep.subr.mxu0 0.0
        %1134 = vmatpush1.msra.mxu0 %v1115
        %1135 = vmatprep.subr.mxu0 0.0
        %1136 = vmatpush1.msra.mxu0 %v1116
        %1137 = vmatprep.subr.mxu0 0.0
        %1138 = vmatpush1.msra.mxu0 %v1117
        %1139 = vmatprep.subr.mxu0 0.0
        %1140 = vmatpush1.msra.mxu0 %v1118
        %1141 = vmatprep.subr.mxu0 0.0
        %1142 = vmatpush1.msra.mxu0 %v1119
        %1143 = vmatprep.subr.mxu0 0.0
        %1144 = vmatpush1.msra.mxu0 0.0
        %1145 = vmatprep.subr.mxu0 0.0
        %1146 = vmatpush1.msra.mxu0 0.0
        %1147 = vmatprep.subr.mxu0 0.0
        %1148 = vmatpush1.msra.mxu0 0.0
        %1149 = vmatprep.subr.mxu0 0.0
        %1150 = vmatpush1.msra.mxu0 0.0
        %1151 = vmatprep.subr.mxu0 0.0
        %1152 = vmatpush1.msra.mxu0 0.0
        %1153 = vmatprep.subr.mxu0 0.0
        %1154 = vmatpush1.msra.mxu0 0.0
        %1155 = vmatprep.subr.mxu0 0.0
        %1156 = vmatpush1.msra.mxu0 0.0
        %1157 = vmatprep.subr.mxu0 0.0
        %1158 = vmatpush1.msra.mxu0 0.0
        %1159 = vmatprep.subr.mxu0 0.0
        %1160 = vmatpush1.msra.mxu0 0.0
        %1161 = vmatprep.subr.mxu0 0.0
        %1162 = vmatpush1.msra.mxu0 0.0
        %1163 = vmatprep.subr.mxu0 0.0
        %1164 = vmatpush1.msra.mxu0 0.0
        %1165 = vmatprep.subr.mxu0 0.0
        %1166 = vmatpush1.msra.mxu0 0.0
        %1167 = vmatprep.subr.mxu0 0.0
        %1168 = vmatpush1.msra.mxu0 0.0
        %1169 = vmatprep.subr.mxu0 0.0
        %1170 = vmatpush1.msra.mxu0 0.0
        %1171 = vmatprep.subr.mxu0 0.0
        %1172 = vmatpush1.msra.mxu0 0.0
        %1173 = vmatprep.subr.mxu0 0.0
        %1174 = vmatpush1.msra.mxu0 0.0
        %1175 = vmatprep.subr.mxu0 0.0
        %1176 = vmatpush1.msra.mxu0 0.0
        %1177 = vmatprep.subr.mxu0 0.0
        %1178 = vmatpush1.msra.mxu0 0.0
        %1179 = vmatprep.subr.mxu0 0.0
        %1180 = vmatpush1.msra.mxu0 0.0
        %1181 = vmatprep.subr.mxu0 0.0
        %1182 = vmatpush1.msra.mxu0 0.0
        %1183 = vmatprep.subr.mxu0 0.0
        %1184 = vmatpush1.msra.mxu0 0.0
        %1185 = vmatprep.subr.mxu0 0.0
        %1186 = vmatpush1.msra.mxu0 0.0
        %1187 = vmatprep.subr.mxu0 0.0
        %1188 = vmatpush1.msra.mxu0 0.0
        %1189 = vmatprep.subr.mxu0 0.0
        %1190 = vmatpush1.msra.mxu0 0.0
        %1191 = vmatprep.mubr.f32.mxu0 0.0
        %1192 = vmatmul.mubr.f32.gmra.mrb[0].mxu0 %v1024
        %v1193 = vpop.f32.mrb[0].mxu0
        %v1194 = vadd.f32 %v1125, %v1193
        %v1195 = vpop.f32.mrb[0].mxu0
        %1196 = vmatprep.mubr.f32.mxu0 0.0
        %1197 = vmatmul.mubr.f32.gmra.mrb[0].mxu0 %v1027
        %v1198 = vpop.f32.mrb[0].mxu0
        %v1199 = vadd.f32 %v1125, %v1198
        %v1200 = vpop.f32.mrb[0].mxu0
        %1201 = vmatprep.mubr.f32.mxu0 0.0
        %1202 = vmatmul.mubr.f32.gmra.mrb[0].mxu0 %v1030
        %v1203 = vpop.f32.mrb[0].mxu0
        %v1204 = vadd.f32 %v1125, %v1203
        %v1205 = vpop.f32.mrb[0].mxu0
        %1206 = vdwg.mxu0
        %v1207 = vld [vmem:[%s11] sm:$0xff]
        %v1208 = vld [vmem:[%s11 + $0x8] sm:$0xff]
        %v1209 = vld [vmem:[%s11 + $0x10] sm:$0xff]
        %v1210 = vld [vmem:[%s11 + $0x18] sm:$0xff]
        %v1211 = vld [vmem:[%s11 + $0x20] sm:$0xff]
        %v1212 = vld [vmem:[%s11 + $0x28] sm:$0xff]
        %v1213 = vld [vmem:[%s11 + $0x30] sm:$0xff]
        %v1214 = vld [vmem:[%s11 + $0x38] sm:$0xff]
        %v1215 = vld [vmem:[%s12] sm:$0x1]
        %v1217 = vlaneseq
        %v1218 = vshrl.u32 %v1217, 7
        %v1219 = vsub.s32 0, %v1218
        %v1220 = vrot.slane %v1215, %v1219
        %1222 = vmatprep.subr.mxu0 0.0
        %1223 = vmatpush1.msra.mxu0 %v1207
        %1224 = vmatprep.subr.mxu0 0.0
        %1225 = vmatpush1.msra.mxu0 %v1208
        %1226 = vmatprep.subr.mxu0 0.0
        %1227 = vmatpush1.msra.mxu0 %v1209
        %1228 = vmatprep.subr.mxu0 0.0
        %1229 = vmatpush1.msra.mxu0 %v1210
        %1230 = vmatprep.subr.mxu0 0.0
        %1231 = vmatpush1.msra.mxu0 %v1211
        %1232 = vmatprep.subr.mxu0 0.0
        %1233 = vmatpush1.msra.mxu0 %v1212
        %1234 = vmatprep.subr.mxu0 0.0
        %1235 = vmatpush1.msra.mxu0 %v1213
        %1236 = vmatprep.subr.mxu0 0.0
        %1237 = vmatpush1.msra.mxu0 %v1214
        %1238 = vmatprep.subr.mxu0 0.0
        %1239 = vmatpush1.msra.mxu0 0.0
        %1240 = vmatprep.subr.mxu0 0.0
        %1241 = vmatpush1.msra.mxu0 0.0
        %1242 = vmatprep.subr.mxu0 0.0
        %1243 = vmatpush1.msra.mxu0 0.0
        %1244 = vmatprep.subr.mxu0 0.0
        %1245 = vmatpush1.msra.mxu0 0.0
        %1246 = vmatprep.subr.mxu0 0.0
        %1247 = vmatpush1.msra.mxu0 0.0
        %1248 = vmatprep.subr.mxu0 0.0
        %1249 = vmatpush1.msra.mxu0 0.0
        %1250 = vmatprep.subr.mxu0 0.0
        %1251 = vmatpush1.msra.mxu0 0.0
        %1252 = vmatprep.subr.mxu0 0.0
        %1253 = vmatpush1.msra.mxu0 0.0
        %1254 = vmatprep.subr.mxu0 0.0
        %1255 = vmatpush1.msra.mxu0 0.0
        %1256 = vmatprep.subr.mxu0 0.0
        %1257 = vmatpush1.msra.mxu0 0.0
        %1258 = vmatprep.subr.mxu0 0.0
        %1259 = vmatpush1.msra.mxu0 0.0
        %1260 = vmatprep.subr.mxu0 0.0
        %1261 = vmatpush1.msra.mxu0 0.0
        %1262 = vmatprep.subr.mxu0 0.0
        %1263 = vmatpush1.msra.mxu0 0.0
        %1264 = vmatprep.subr.mxu0 0.0
        %1265 = vmatpush1.msra.mxu0 0.0
        %1266 = vmatprep.subr.mxu0 0.0
        %1267 = vmatpush1.msra.mxu0 0.0
        %1268 = vmatprep.subr.mxu0 0.0
        %1269 = vmatpush1.msra.mxu0 0.0
        %1270 = vmatprep.subr.mxu0 0.0
        %1271 = vmatpush1.msra.mxu0 0.0
        %1272 = vmatprep.subr.mxu0 0.0
        %1273 = vmatpush1.msra.mxu0 0.0
        %1274 = vmatprep.subr.mxu0 0.0
        %1275 = vmatpush1.msra.mxu0 0.0
        %1276 = vmatprep.subr.mxu0 0.0
        %1277 = vmatpush1.msra.mxu0 0.0
        %1278 = vmatprep.subr.mxu0 0.0
        %1279 = vmatpush1.msra.mxu0 0.0
        %1280 = vmatprep.subr.mxu0 0.0
        %1281 = vmatpush1.msra.mxu0 0.0
        %1282 = vmatprep.subr.mxu0 0.0
        %1283 = vmatpush1.msra.mxu0 0.0
        %1284 = vmatprep.subr.mxu0 0.0
        %1285 = vmatpush1.msra.mxu0 0.0
        %1286 = vmatprep.mubr.f32.mxu0 0.0
        %1287 = vmatmul.mubr.f32.gmra.mrb[0].mxu0 %v1024
        %v1288 = vpop.f32.mrb[0].mxu0
        %v1289 = vadd.f32 %v1220, %v1288
        %v1290 = vpop.f32.mrb[0].mxu0
        %1291 = vmatprep.mubr.f32.mxu0 0.0
        %1292 = vmatmul.mubr.f32.gmra.mrb[0].mxu0 %v1027
        %v1293 = vpop.f32.mrb[0].mxu0
        %v1294 = vadd.f32 %v1220, %v1293
        %v1295 = vpop.f32.mrb[0].mxu0
        %1296 = vmatprep.mubr.f32.mxu0 0.0
        %1297 = vmatmul.mubr.f32.gmra.mrb[0].mxu0 %v1030
        %v1298 = vpop.f32.mrb[0].mxu0
        %v1299 = vadd.f32 %v1220, %v1298
        %v1300 = vpop.f32.mrb[0].mxu0
        %1301 = vdwg.mxu0
        %vm1302 = vcmask 130048
        %v1304 = vsel %vm1302, %v1099, 0
        %v1307 = vsel %vm1302, %v1104, 0
        %v1310 = vsel %vm1302, %v1109, 0
        %v1313 = vsel %vm1302, %v1194, 0
        %v1316 = vsel %vm1302, %v1199, 0
        %v1319 = vsel %vm1302, %v1204, 0
        %1321 = vmatprep.subr.mxu0 0.0
        %1322 = vmatpush1.xpose.msra.mxu0 %v1313
        %1323 = vmatprep.subr.mxu0 0.0
        %1324 = vmatpush1.xpose.msra.mxu0 %v1316
        %1325 = vmatprep.subr.mxu0 0.0
        %1326 = vmatpush1.xpose.msra.mxu0 %v1319
        %1327 = vmatprep.subr.mxu0 0.0
        %1328 = vmatpush1.xpose.msra.mxu0 0.0
        %1329 = vmatprep.subr.mxu0 0.0
        %1330 = vmatpush1.xpose.msra.mxu0 0.0
        %1331 = vmatprep.subr.mxu0 0.0
        %1332 = vmatpush1.xpose.msra.mxu0 0.0
        %1333 = vmatprep.subr.mxu0 0.0
        %1334 = vmatpush1.xpose.msra.mxu0 0.0
        %1335 = vmatprep.subr.mxu0 0.0
        %1336 = vmatpush1.xpose.msra.mxu0 0.0
        %1337 = vmatprep.subr.mxu0 0.0
        %1338 = vmatpush1.xpose.msra.mxu0 0.0
        %1339 = vmatprep.subr.mxu0 0.0
        %1340 = vmatpush1.xpose.msra.mxu0 0.0
        %1341 = vmatprep.subr.mxu0 0.0
        %1342 = vmatpush1.xpose.msra.mxu0 0.0
        %1343 = vmatprep.subr.mxu0 0.0
        %1344 = vmatpush1.xpose.msra.mxu0 0.0
        %1345 = vmatprep.subr.mxu0 0.0
        %1346 = vmatpush1.xpose.msra.mxu0 0.0
        %1347 = vmatprep.subr.mxu0 0.0
        %1348 = vmatpush1.xpose.msra.mxu0 0.0
        %1349 = vmatprep.subr.mxu0 0.0
        %1350 = vmatpush1.xpose.msra.mxu0 0.0
        %1351 = vmatprep.subr.mxu0 0.0
        %1352 = vmatpush1.xpose.msra.mxu0 0.0
        %1353 = vmatprep.subr.mxu0 0.0
        %1354 = vmatpush1.xpose.msra.mxu0 0.0
        %1355 = vmatprep.subr.mxu0 0.0
        %1356 = vmatpush1.xpose.msra.mxu0 0.0
        %1357 = vmatprep.subr.mxu0 0.0
        %1358 = vmatpush1.xpose.msra.mxu0 0.0
        %1359 = vmatprep.subr.mxu0 0.0
        %1360 = vmatpush1.xpose.msra.mxu0 0.0
        %1361 = vmatprep.subr.mxu0 0.0
        %1362 = vmatpush1.xpose.msra.mxu0 0.0
        %1363 = vmatprep.subr.mxu0 0.0
        %1364 = vmatpush1.xpose.msra.mxu0 0.0
        %1365 = vmatprep.subr.mxu0 0.0
        %1366 = vmatpush1.xpose.msra.mxu0 0.0
        %1367 = vmatprep.subr.mxu0 0.0
        %1368 = vmatpush1.xpose.msra.mxu0 0.0
        %1369 = vmatprep.subr.mxu0 0.0
        %1370 = vmatpush1.xpose.msra.mxu0 0.0
        %1371 = vmatprep.subr.mxu0 0.0
        %1372 = vmatpush1.xpose.msra.mxu0 0.0
        %1373 = vmatprep.subr.mxu0 0.0
        %1374 = vmatpush1.xpose.msra.mxu0 0.0
        %1375 = vmatprep.subr.mxu0 0.0
        %1376 = vmatpush1.xpose.msra.mxu0 0.0
        %1377 = vmatprep.subr.mxu0 0.0
        %1378 = vmatpush1.xpose.msra.mxu0 0.0
        %1379 = vmatprep.subr.mxu0 0.0
        %1380 = vmatpush1.xpose.msra.mxu0 0.0
        %1381 = vmatprep.subr.mxu0 0.0
        %1382 = vmatpush1.xpose.msra.mxu0 0.0
        %1383 = vmatprep.subr.mxu0 0.0
        %1384 = vmatpush1.xpose.msra.mxu0 0.0
        %1385 = vmatprep.mubr.f32.mxu0 0.0
        %1386 = vmatmul.mubr.f32.gmra.mrb[0].mxu0 %v1304
        %v1387 = vpop.f32.mrb[0].mxu0
        %v1388 = vadd.f32 %v948, %v1387
        %v1389 = vpop.f32.mrb[0].mxu0
        %1390 = vmatprep.mubr.f32.mxu0 0.0
        %1391 = vmatmul.mubr.f32.gmra.mrb[0].mxu0 %v1307
        %v1392 = vpop.f32.mrb[0].mxu0
        %v1393 = vadd.f32 %v948, %v1392
        %v1394 = vpop.f32.mrb[0].mxu0
        %1395 = vmatprep.mubr.f32.mxu0 0.0
        %1396 = vmatmul.mubr.f32.gmra.mrb[0].mxu0 %v1310
        %v1397 = vpop.f32.mrb[0].mxu0
        %v1398 = vadd.f32 %v948, %v1397
        %v1399 = vpop.f32.mrb[0].mxu0
        %1400 = vdwg.mxu0
        %vm1401 = vcmask 195584
        %v1402 = vsel %vm1401, %v1388, -inf
        %1403 = vmax.xlane.f32.xlu0 %v1402
        %v1404 = vpop.xlane.xlu0 %1403
        %v1405 = vsel %vm1401, %v1393, -inf
        %1406 = vmax.xlane.f32.xlu0 %v1405
        %v1407 = vpop.xlane.xlu0 %1406
        %v1408 = vsel %vm1401, %v1398, -inf
        %1409 = vmax.xlane.f32.xlu0 %v1408
        %v1410 = vpop.xlane.xlu0 %1409
        %v1411 = vsub.f32 %v1388, %v1404
        %v1412 = vsub.f32 %v1393, %v1407
        %v1413 = vsub.f32 %v1398, %v1410
        %v1414 = vmul.f32 %v1411, 1.442695
        %v1415 = vpow.pop %v1414
        %v1416 = vmul.f32 %v1412, 1.442695
        %v1417 = vpow.pop %v1416
        %v1418 = vmul.f32 %v1413, 1.442695
        %v1419 = vpow.pop %v1418
        %v1420 = vsel %vm1401, %v1415, 0.0
        %1421 = vadd.xlane.f32.xlu0 %v1420
        %v1422 = vpop.xlane.xlu0 %1421
        %v1423 = vsel %vm1401, %v1417, 0.0
        %1424 = vadd.xlane.f32.xlu0 %v1423
        %v1425 = vpop.xlane.xlu0 %1424
        %v1426 = vsel %vm1401, %v1419, 0.0
        %1427 = vadd.xlane.f32.xlu0 %v1426
        %v1428 = vpop.xlane.xlu0 %1427
        %v1429 = vrcp.pop %v1422
        %v1430 = vrcp.pop %v1425
        %v1431 = vrcp.pop %v1428
        %v1432 = vmul.f32 %v1415, %v1429
        %v1433 = vmul.f32 %v1417, %v1430
        %v1434 = vmul.f32 %v1419, %v1431
        %v1436 = vsel %vm1401, %v1432, 0
        %v1439 = vsel %vm1401, %v1433, 0
        %v1442 = vsel %vm1401, %v1434, 0
        %1444 = vmatprep.subr.mxu0 0.0
        %1445 = vmatpush1.msra.mxu0 %v1289
        %1446 = vmatprep.subr.mxu0 0.0
        %1447 = vmatpush1.msra.mxu0 %v1294
        %1448 = vmatprep.subr.mxu0 0.0
        %1449 = vmatpush1.msra.mxu0 %v1299
        %1450 = vmatprep.subr.mxu0 0.0
        %1451 = vmatpush1.msra.mxu0 0.0
        %1452 = vmatprep.subr.mxu0 0.0
        %1453 = vmatpush1.msra.mxu0 0.0
        %1454 = vmatprep.subr.mxu0 0.0
        %1455 = vmatpush1.msra.mxu0 0.0
        %1456 = vmatprep.subr.mxu0 0.0
        %1457 = vmatpush1.msra.mxu0 0.0
        %1458 = vmatprep.subr.mxu0 0.0
        %1459 = vmatpush1.msra.mxu0 0.0
        %1460 = vmatprep.subr.mxu0 0.0
        %1461 = vmatpush1.msra.mxu0 0.0
        %1462 = vmatprep.subr.mxu0 0.0
        %1463 = vmatpush1.msra.mxu0 0.0
        %1464 = vmatprep.subr.mxu0 0.0
        %1465 = vmatpush1.msra.mxu0 0.0
        %1466 = vmatprep.subr.mxu0 0.0
        %1467 = vmatpush1.msra.mxu0 0.0
        %1468 = vmatprep.subr.mxu0 0.0
        %1469 = vmatpush1.msra.mxu0 0.0
        %1470 = vmatprep.subr.mxu0 0.0
        %1471 = vmatpush1.msra.mxu0 0.0
        %1472 = vmatprep.subr.mxu0 0.0
        %1473 = vmatpush1.msra.mxu0 0.0
        %1474 = vmatprep.subr.mxu0 0.0
        %1475 = vmatpush1.msra.mxu0 0.0
        %1476 = vmatprep.subr.mxu0 0.0
        %1477 = vmatpush1.msra.mxu0 0.0
        %1478 = vmatprep.subr.mxu0 0.0
        %1479 = vmatpush1.msra.mxu0 0.0
        %1480 = vmatprep.subr.mxu0 0.0
        %1481 = vmatpush1.msra.mxu0 0.0
        %1482 = vmatprep.subr.mxu0 0.0
        %1483 = vmatpush1.msra.mxu0 0.0
        %1484 = vmatprep.subr.mxu0 0.0
        %1485 = vmatpush1.msra.mxu0 0.0
        %1486 = vmatprep.subr.mxu0 0.0
        %1487 = vmatpush1.msra.mxu0 0.0
        %1488 = vmatprep.subr.mxu0 0.0
        %1489 = vmatpush1.msra.mxu0 0.0
        %1490 = vmatprep.subr.mxu0 0.0
        %1491 = vmatpush1.msra.mxu0 0.0
        %1492 = vmatprep.subr.mxu0 0.0
        %1493 = vmatpush1.msra.mxu0 0.0
        %1494 = vmatprep.subr.mxu0 0.0
        %1495 = vmatpush1.msra.mxu0 0.0
        %1496 = vmatprep.subr.mxu0 0.0
        %1497 = vmatpush1.msra.mxu0 0.0
        %1498 = vmatprep.subr.mxu0 0.0
        %1499 = vmatpush1.msra.mxu0 0.0
        %1500 = vmatprep.subr.mxu0 0.0
        %1501 = vmatpush1.msra.mxu0 0.0
        %1502 = vmatprep.subr.mxu0 0.0
        %1503 = vmatpush1.msra.mxu0 0.0
        %1504 = vmatprep.subr.mxu0 0.0
        %1505 = vmatpush1.msra.mxu0 0.0
        %1506 = vmatprep.subr.mxu0 0.0
        %1507 = vmatpush1.msra.mxu0 0.0
        %1508 = vmatprep.mubr.f32.mxu0 0.0
        %1509 = vmatmul.mubr.f32.gmra.mrb[0].mxu0 %v1436
        %v1510 = vpop.f32.mrb[0].mxu0
        %v1511 = vadd.f32 0.0, %v1510
        %v1512 = vpop.f32.mrb[0].mxu0
        %1513 = vmatprep.mubr.f32.mxu0 0.0
        %1514 = vmatmul.mubr.f32.gmra.mrb[0].mxu0 %v1439
        %v1515 = vpop.f32.mrb[0].mxu0
        %v1516 = vadd.f32 0.0, %v1515
        %v1517 = vpop.f32.mrb[0].mxu0
        %1518 = vmatprep.mubr.f32.mxu0 0.0
        %1519 = vmatmul.mubr.f32.gmra.mrb[0].mxu0 %v1442
        %v1520 = vpop.f32.mrb[0].mxu0
        %v1521 = vadd.f32 0.0, %v1520
        %v1522 = vpop.f32.mrb[0].mxu0
        %1523 = vdwg.mxu0
        %v1524 = vld [vmem:[%s13] sm:$0xff]
        %v1525 = vld [vmem:[%s13 + $0x8] sm:$0xff]
        %s1526 = scalar_lea.vmem %s7, 64
        %v1527 = vld [vmem:[%s1526] sm:$0xff]
        %v1528 = vld [vmem:[%s1526 + $0x8] sm:$0xff]
        %v1529 = vld [vmem:[%s1526 + $0x10] sm:$0xff]
        %v1530 = vld [vmem:[%s1526 + $0x18] sm:$0xff]
        %v1531 = vld [vmem:[%s1526 + $0x20] sm:$0xff]
        %v1532 = vld [vmem:[%s1526 + $0x28] sm:$0xff]
        %v1533 = vld [vmem:[%s1526 + $0x30] sm:$0xff]
        %v1534 = vld [vmem:[%s1526 + $0x38] sm:$0xff]
        %s1535 = scalar_lea.vmem %s8, 1
        %v1536 = vld [vmem:[%s1535] sm:$0x1]
        %v1538 = vlaneseq
        %v1539 = vshrl.u32 %v1538, 7
        %v1540 = vsub.s32 0, %v1539
        %v1541 = vrot.slane %v1536, %v1540
        %1543 = vmatprep.subr.mxu0 0.0
        %1544 = vmatpush1.msra.mxu0 %v1527
        %1545 = vmatprep.subr.mxu0 0.0
        %1546 = vmatpush1.msra.mxu0 %v1528
        %1547 = vmatprep.subr.mxu0 0.0
        %1548 = vmatpush1.msra.mxu0 %v1529
        %1549 = vmatprep.subr.mxu0 0.0
        %1550 = vmatpush1.msra.mxu0 %v1530
        %1551 = vmatprep.subr.mxu0 0.0
        %1552 = vmatpush1.msra.mxu0 %v1531
        %1553 = vmatprep.subr.mxu0 0.0
        %1554 = vmatpush1.msra.mxu0 %v1532
        %1555 = vmatprep.subr.mxu0 0.0
        %1556 = vmatpush1.msra.mxu0 %v1533
        %1557 = vmatprep.subr.mxu0 0.0
        %1558 = vmatpush1.msra.mxu0 %v1534
        %1559 = vmatprep.subr.mxu0 0.0
        %1560 = vmatpush1.msra.mxu0 0.0
        %1561 = vmatprep.subr.mxu0 0.0
        %1562 = vmatpush1.msra.mxu0 0.0
        %1563 = vmatprep.subr.mxu0 0.0
        %1564 = vmatpush1.msra.mxu0 0.0
        %1565 = vmatprep.subr.mxu0 0.0
        %1566 = vmatpush1.msra.mxu0 0.0
        %1567 = vmatprep.subr.mxu0 0.0
        %1568 = vmatpush1.msra.mxu0 0.0
        %1569 = vmatprep.subr.mxu0 0.0
        %1570 = vmatpush1.msra.mxu0 0.0
        %1571 = vmatprep.subr.mxu0 0.0
        %1572 = vmatpush1.msra.mxu0 0.0
        %1573 = vmatprep.subr.mxu0 0.0
        %1574 = vmatpush1.msra.mxu0 0.0
        %1575 = vmatprep.subr.mxu0 0.0
        %1576 = vmatpush1.msra.mxu0 0.0
        %1577 = vmatprep.subr.mxu0 0.0
        %1578 = vmatpush1.msra.mxu0 0.0
        %1579 = vmatprep.subr.mxu0 0.0
        %1580 = vmatpush1.msra.mxu0 0.0
        %1581 = vmatprep.subr.mxu0 0.0
        %1582 = vmatpush1.msra.mxu0 0.0
        %1583 = vmatprep.subr.mxu0 0.0
        %1584 = vmatpush1.msra.mxu0 0.0
        %1585 = vmatprep.subr.mxu0 0.0
        %1586 = vmatpush1.msra.mxu0 0.0
        %1587 = vmatprep.subr.mxu0 0.0
        %1588 = vmatpush1.msra.mxu0 0.0
        %1589 = vmatprep.subr.mxu0 0.0
        %1590 = vmatpush1.msra.mxu0 0.0
        %1591 = vmatprep.subr.mxu0 0.0
        %1592 = vmatpush1.msra.mxu0 0.0
        %1593 = vmatprep.subr.mxu0 0.0
        %1594 = vmatpush1.msra.mxu0 0.0
        %1595 = vmatprep.subr.mxu0 0.0
        %1596 = vmatpush1.msra.mxu0 0.0
        %1597 = vmatprep.subr.mxu0 0.0
        %1598 = vmatpush1.msra.mxu0 0.0
        %1599 = vmatprep.subr.mxu0 0.0
        %1600 = vmatpush1.msra.mxu0 0.0
        %1601 = vmatprep.subr.mxu0 0.0
        %1602 = vmatpush1.msra.mxu0 0.0
        %1603 = vmatprep.subr.mxu0 0.0
        %1604 = vmatpush1.msra.mxu0 0.0
        %1605 = vmatprep.subr.mxu0 0.0
        %1606 = vmatpush1.msra.mxu0 0.0
        %1607 = vmatprep.mubr.f32.mxu0 0.0
        %1608 = vmatmul.mubr.f32.gmra.mrb[0].mxu0 %v1024
        %v1609 = vpop.f32.mrb[0].mxu0
        %v1610 = vadd.f32 %v1541, %v1609
        %v1611 = vpop.f32.mrb[0].mxu0
        %1612 = vmatprep.mubr.f32.mxu0 0.0
        %1613 = vmatmul.mubr.f32.gmra.mrb[0].mxu0 %v1027
        %v1614 = vpop.f32.mrb[0].mxu0
        %v1615 = vadd.f32 %v1541, %v1614
        %v1616 = vpop.f32.mrb[0].mxu0
        %1617 = vmatprep.mubr.f32.mxu0 0.0
        %1618 = vmatmul.mubr.f32.gmra.mrb[0].mxu0 %v1030
        %v1619 = vpop.f32.mrb[0].mxu0
        %v1620 = vadd.f32 %v1541, %v1619
        %v1621 = vpop.f32.mrb[0].mxu0
        %1622 = vdwg.mxu0
        %s1623 = scalar_lea.vmem %s9, 64
        %v1624 = vld [vmem:[%s1623] sm:$0xff]
        %v1625 = vld [vmem:[%s1623 + $0x8] sm:$0xff]
        %v1626 = vld [vmem:[%s1623 + $0x10] sm:$0xff]
        %v1627 = vld [vmem:[%s1623 + $0x18] sm:$0xff]
        %v1628 = vld [vmem:[%s1623 + $0x20] sm:$0xff]
        %v1629 = vld [vmem:[%s1623 + $0x28] sm:$0xff]
        %v1630 = vld [vmem:[%s1623 + $0x30] sm:$0xff]
        %v1631 = vld [vmem:[%s1623 + $0x38] sm:$0xff]
        %s1632 = scalar_lea.vmem %s10, 1
        %v1633 = vld [vmem:[%s1632] sm:$0x1]
        %v1635 = vlaneseq
        %v1636 = vshrl.u32 %v1635, 7
        %v1637 = vsub.s32 0, %v1636
        %v1638 = vrot.slane %v1633, %v1637
        %1640 = vmatprep.subr.mxu0 0.0
        %1641 = vmatpush1.msra.mxu0 %v1624
        %1642 = vmatprep.subr.mxu0 0.0
        %1643 = vmatpush1.msra.mxu0 %v1625
        %1644 = vmatprep.subr.mxu0 0.0
        %1645 = vmatpush1.msra.mxu0 %v1626
        %1646 = vmatprep.subr.mxu0 0.0
        %1647 = vmatpush1.msra.mxu0 %v1627
        %1648 = vmatprep.subr.mxu0 0.0
        %1649 = vmatpush1.msra.mxu0 %v1628
        %1650 = vmatprep.subr.mxu0 0.0
        %1651 = vmatpush1.msra.mxu0 %v1629
        %1652 = vmatprep.subr.mxu0 0.0
        %1653 = vmatpush1.msra.mxu0 %v1630
        %1654 = vmatprep.subr.mxu0 0.0
        %1655 = vmatpush1.msra.mxu0 %v1631
        %1656 = vmatprep.subr.mxu0 0.0
        %1657 = vmatpush1.msra.mxu0 0.0
        %1658 = vmatprep.subr.mxu0 0.0
        %1659 = vmatpush1.msra.mxu0 0.0
        %1660 = vmatprep.subr.mxu0 0.0
        %1661 = vmatpush1.msra.mxu0 0.0
        %1662 = vmatprep.subr.mxu0 0.0
        %1663 = vmatpush1.msra.mxu0 0.0
        %1664 = vmatprep.subr.mxu0 0.0
        %1665 = vmatpush1.msra.mxu0 0.0
        %1666 = vmatprep.subr.mxu0 0.0
        %1667 = vmatpush1.msra.mxu0 0.0
        %1668 = vmatprep.subr.mxu0 0.0
        %1669 = vmatpush1.msra.mxu0 0.0
        %1670 = vmatprep.subr.mxu0 0.0
        %1671 = vmatpush1.msra.mxu0 0.0
        %1672 = vmatprep.subr.mxu0 0.0
        %1673 = vmatpush1.msra.mxu0 0.0
        %1674 = vmatprep.subr.mxu0 0.0
        %1675 = vmatpush1.msra.mxu0 0.0
        %1676 = vmatprep.subr.mxu0 0.0
        %1677 = vmatpush1.msra.mxu0 0.0
        %1678 = vmatprep.subr.mxu0 0.0
        %1679 = vmatpush1.msra.mxu0 0.0
        %1680 = vmatprep.subr.mxu0 0.0
        %1681 = vmatpush1.msra.mxu0 0.0
        %1682 = vmatprep.subr.mxu0 0.0
        %1683 = vmatpush1.msra.mxu0 0.0
        %1684 = vmatprep.subr.mxu0 0.0
        %1685 = vmatpush1.msra.mxu0 0.0
        %1686 = vmatprep.subr.mxu0 0.0
        %1687 = vmatpush1.msra.mxu0 0.0
        %1688 = vmatprep.subr.mxu0 0.0
        %1689 = vmatpush1.msra.mxu0 0.0
        %1690 = vmatprep.subr.mxu0 0.0
        %1691 = vmatpush1.msra.mxu0 0.0
        %1692 = vmatprep.subr.mxu0 0.0
        %1693 = vmatpush1.msra.mxu0 0.0
        %1694 = vmatprep.subr.mxu0 0.0
        %1695 = vmatpush1.msra.mxu0 0.0
        %1696 = vmatprep.subr.mxu0 0.0
        %1697 = vmatpush1.msra.mxu0 0.0
        %1698 = vmatprep.subr.mxu0 0.0
        %1699 = vmatpush1.msra.mxu0 0.0
        %1700 = vmatprep.subr.mxu0 0.0
        %1701 = vmatpush1.msra.mxu0 0.0
        %1702 = vmatprep.subr.mxu0 0.0
        %1703 = vmatpush1.msra.mxu0 0.0
        %1704 = vmatprep.mubr.f32.mxu0 0.0
        %1705 = vmatmul.mubr.f32.gmra.mrb[0].mxu0 %v1024
        %v1706 = vpop.f32.mrb[0].mxu0
        %v1707 = vadd.f32 %v1638, %v1706
        %v1708 = vpop.f32.mrb[0].mxu0
        %1709 = vmatprep.mubr.f32.mxu0 0.0
        %1710 = vmatmul.mubr.f32.gmra.mrb[0].mxu0 %v1027
        %v1711 = vpop.f32.mrb[0].mxu0
        %v1712 = vadd.f32 %v1638, %v1711
        %v1713 = vpop.f32.mrb[0].mxu0
        %1714 = vmatprep.mubr.f32.mxu0 0.0
        %1715 = vmatmul.mubr.f32.gmra.mrb[0].mxu0 %v1030
        %v1716 = vpop.f32.mrb[0].mxu0
        %v1717 = vadd.f32 %v1638, %v1716
        %v1718 = vpop.f32.mrb[0].mxu0
        %1719 = vdwg.mxu0
        %s1720 = scalar_lea.vmem %s11, 64
        %v1721 = vld [vmem:[%s1720] sm:$0xff]
        %v1722 = vld [vmem:[%s1720 + $0x8] sm:$0xff]
        %v1723 = vld [vmem:[%s1720 + $0x10] sm:$0xff]
        %v1724 = vld [vmem:[%s1720 + $0x18] sm:$0xff]
        %v1725 = vld [vmem:[%s1720 + $0x20] sm:$0xff]
        %v1726 = vld [vmem:[%s1720 + $0x28] sm:$0xff]
        %v1727 = vld [vmem:[%s1720 + $0x30] sm:$0xff]
        %v1728 = vld [vmem:[%s1720 + $0x38] sm:$0xff]
        %s1729 = scalar_lea.vmem %s12, 1
        %v1730 = vld [vmem:[%s1729] sm:$0x1]
        %v1732 = vlaneseq
        %v1733 = vshrl.u32 %v1732, 7
        %v1734 = vsub.s32 0, %v1733
        %v1735 = vrot.slane %v1730, %v1734
        %1737 = vmatprep.subr.mxu0 0.0
        %1738 = vmatpush1.msra.mxu0 %v1721
        %1739 = vmatprep.subr.mxu0 0.0
        %1740 = vmatpush1.msra.mxu0 %v1722
        %1741 = vmatprep.subr.mxu0 0.0
        %1742 = vmatpush1.msra.mxu0 %v1723
        %1743 = vmatprep.subr.mxu0 0.0
        %1744 = vmatpush1.msra.mxu0 %v1724
        %1745 = vmatprep.subr.mxu0 0.0
        %1746 = vmatpush1.msra.mxu0 %v1725
        %1747 = vmatprep.subr.mxu0 0.0
        %1748 = vmatpush1.msra.mxu0 %v1726
        %1749 = vmatprep.subr.mxu0 0.0
        %1750 = vmatpush1.msra.mxu0 %v1727
        %1751 = vmatprep.subr.mxu0 0.0
        %1752 = vmatpush1.msra.mxu0 %v1728
        %1753 = vmatprep.subr.mxu0 0.0
        %1754 = vmatpush1.msra.mxu0 0.0
        %1755 = vmatprep.subr.mxu0 0.0
        %1756 = vmatpush1.msra.mxu0 0.0
        %1757 = vmatprep.subr.mxu0 0.0
        %1758 = vmatpush1.msra.mxu0 0.0
        %1759 = vmatprep.subr.mxu0 0.0
        %1760 = vmatpush1.msra.mxu0 0.0
        %1761 = vmatprep.subr.mxu0 0.0
        %1762 = vmatpush1.msra.mxu0 0.0
        %1763 = vmatprep.subr.mxu0 0.0
        %1764 = vmatpush1.msra.mxu0 0.0
        %1765 = vmatprep.subr.mxu0 0.0
        %1766 = vmatpush1.msra.mxu0 0.0
        %1767 = vmatprep.subr.mxu0 0.0
        %1768 = vmatpush1.msra.mxu0 0.0
        %1769 = vmatprep.subr.mxu0 0.0
        %1770 = vmatpush1.msra.mxu0 0.0
        %1771 = vmatprep.subr.mxu0 0.0
        %1772 = vmatpush1.msra.mxu0 0.0
        %1773 = vmatprep.subr.mxu0 0.0
        %1774 = vmatpush1.msra.mxu0 0.0
        %1775 = vmatprep.subr.mxu0 0.0
        %1776 = vmatpush1.msra.mxu0 0.0
        %1777 = vmatprep.subr.mxu0 0.0
        %1778 = vmatpush1.msra.mxu0 0.0
        %1779 = vmatprep.subr.mxu0 0.0
        %1780 = vmatpush1.msra.mxu0 0.0
        %1781 = vmatprep.subr.mxu0 0.0
        %1782 = vmatpush1.msra.mxu0 0.0
        %1783 = vmatprep.subr.mxu0 0.0
        %1784 = vmatpush1.msra.mxu0 0.0
        %1785 = vmatprep.subr.mxu0 0.0
        %1786 = vmatpush1.msra.mxu0 0.0
        %1787 = vmatprep.subr.mxu0 0.0
        %1788 = vmatpush1.msra.mxu0 0.0
        %1789 = vmatprep.subr.mxu0 0.0
        %1790 = vmatpush1.msra.mxu0 0.0
        %1791 = vmatprep.subr.mxu0 0.0
        %1792 = vmatpush1.msra.mxu0 0.0
        %1793 = vmatprep.subr.mxu0 0.0
        %1794 = vmatpush1.msra.mxu0 0.0
        %1795 = vmatprep.subr.mxu0 0.0
        %1796 = vmatpush1.msra.mxu0 0.0
        %1797 = vmatprep.subr.mxu0 0.0
        %1798 = vmatpush1.msra.mxu0 0.0
        %1799 = vmatprep.subr.mxu0 0.0
        %1800 = vmatpush1.msra.mxu0 0.0
        %1801 = vmatprep.mubr.f32.mxu0 0.0
        %1802 = vmatmul.mubr.f32.gmra.mrb[0].mxu0 %v1024
        %v1803 = vpop.f32.mrb[0].mxu0
        %v1804 = vadd.f32 %v1735, %v1803
        %v1805 = vpop.f32.mrb[0].mxu0
        %1806 = vmatprep.mubr.f32.mxu0 0.0
        %1807 = vmatmul.mubr.f32.gmra.mrb[0].mxu0 %v1027
        %v1808 = vpop.f32.mrb[0].mxu0
        %v1809 = vadd.f32 %v1735, %v1808
        %v1810 = vpop.f32.mrb[0].mxu0
        %1811 = vmatprep.mubr.f32.mxu0 0.0
        %1812 = vmatmul.mubr.f32.gmra.mrb[0].mxu0 %v1030
        %v1813 = vpop.f32.mrb[0].mxu0
        %v1814 = vadd.f32 %v1735, %v1813
        %v1815 = vpop.f32.mrb[0].mxu0
        %1816 = vdwg.mxu0
        %v1818 = vsel %vm1302, %v1610, 0
        %v1821 = vsel %vm1302, %v1615, 0
        %v1824 = vsel %vm1302, %v1620, 0
        %v1827 = vsel %vm1302, %v1707, 0
        %v1830 = vsel %vm1302, %v1712, 0
        %v1833 = vsel %vm1302, %v1717, 0
        %1835 = vmatprep.subr.mxu0 0.0
        %1836 = vmatpush1.xpose.msra.mxu0 %v1827
        %1837 = vmatprep.subr.mxu0 0.0
        %1838 = vmatpush1.xpose.msra.mxu0 %v1830
        %1839 = vmatprep.subr.mxu0 0.0
        %1840 = vmatpush1.xpose.msra.mxu0 %v1833
        %1841 = vmatprep.subr.mxu0 0.0
        %1842 = vmatpush1.xpose.msra.mxu0 0.0
        %1843 = vmatprep.subr.mxu0 0.0
        %1844 = vmatpush1.xpose.msra.mxu0 0.0
        %1845 = vmatprep.subr.mxu0 0.0
        %1846 = vmatpush1.xpose.msra.mxu0 0.0
        %1847 = vmatprep.subr.mxu0 0.0
        %1848 = vmatpush1.xpose.msra.mxu0 0.0
        %1849 = vmatprep.subr.mxu0 0.0
        %1850 = vmatpush1.xpose.msra.mxu0 0.0
        %1851 = vmatprep.subr.mxu0 0.0
        %1852 = vmatpush1.xpose.msra.mxu0 0.0
        %1853 = vmatprep.subr.mxu0 0.0
        %1854 = vmatpush1.xpose.msra.mxu0 0.0
        %1855 = vmatprep.subr.mxu0 0.0
        %1856 = vmatpush1.xpose.msra.mxu0 0.0
        %1857 = vmatprep.subr.mxu0 0.0
        %1858 = vmatpush1.xpose.msra.mxu0 0.0
        %1859 = vmatprep.subr.mxu0 0.0
        %1860 = vmatpush1.xpose.msra.mxu0 0.0
        %1861 = vmatprep.subr.mxu0 0.0
        %1862 = vmatpush1.xpose.msra.mxu0 0.0
        %1863 = vmatprep.subr.mxu0 0.0
        %1864 = vmatpush1.xpose.msra.mxu0 0.0
        %1865 = vmatprep.subr.mxu0 0.0
        %1866 = vmatpush1.xpose.msra.mxu0 0.0
        %1867 = vmatprep.subr.mxu0 0.0
        %1868 = vmatpush1.xpose.msra.mxu0 0.0
        %1869 = vmatprep.subr.mxu0 0.0
        %1870 = vmatpush1.xpose.msra.mxu0 0.0
        %1871 = vmatprep.subr.mxu0 0.0
        %1872 = vmatpush1.xpose.msra.mxu0 0.0
        %1873 = vmatprep.subr.mxu0 0.0
        %1874 = vmatpush1.xpose.msra.mxu0 0.0
        %1875 = vmatprep.subr.mxu0 0.0
        %1876 = vmatpush1.xpose.msra.mxu0 0.0
        %1877 = vmatprep.subr.mxu0 0.0
        %1878 = vmatpush1.xpose.msra.mxu0 0.0
        %1879 = vmatprep.subr.mxu0 0.0
        %1880 = vmatpush1.xpose.msra.mxu0 0.0
        %1881 = vmatprep.subr.mxu0 0.0
        %1882 = vmatpush1.xpose.msra.mxu0 0.0
        %1883 = vmatprep.subr.mxu0 0.0
        %1884 = vmatpush1.xpose.msra.mxu0 0.0
        %1885 = vmatprep.subr.mxu0 0.0
        %1886 = vmatpush1.xpose.msra.mxu0 0.0
        %1887 = vmatprep.subr.mxu0 0.0
        %1888 = vmatpush1.xpose.msra.mxu0 0.0
        %1889 = vmatprep.subr.mxu0 0.0
        %1890 = vmatpush1.xpose.msra.mxu0 0.0
        %1891 = vmatprep.subr.mxu0 0.0
        %1892 = vmatpush1.xpose.msra.mxu0 0.0
        %1893 = vmatprep.subr.mxu0 0.0
        %1894 = vmatpush1.xpose.msra.mxu0 0.0
        %1895 = vmatprep.subr.mxu0 0.0
        %1896 = vmatpush1.xpose.msra.mxu0 0.0
        %1897 = vmatprep.subr.mxu0 0.0
        %1898 = vmatpush1.xpose.msra.mxu0 0.0
        %1899 = vmatprep.mubr.f32.mxu0 0.0
        %1900 = vmatmul.mubr.f32.gmra.mrb[0].mxu0 %v1818
        %v1901 = vpop.f32.mrb[0].mxu0
        %v1902 = vadd.f32 %v948, %v1901
        %v1903 = vpop.f32.mrb[0].mxu0
        %1904 = vmatprep.mubr.f32.mxu0 0.0
        %1905 = vmatmul.mubr.f32.gmra.mrb[0].mxu0 %v1821
        %v1906 = vpop.f32.mrb[0].mxu0
        %v1907 = vadd.f32 %v948, %v1906
        %v1908 = vpop.f32.mrb[0].mxu0
        %1909 = vmatprep.mubr.f32.mxu0 0.0
        %1910 = vmatmul.mubr.f32.gmra.mrb[0].mxu0 %v1824
        %v1911 = vpop.f32.mrb[0].mxu0
        %v1912 = vadd.f32 %v948, %v1911
        %v1913 = vpop.f32.mrb[0].mxu0
        %1914 = vdwg.mxu0
        %v1915 = vsel %vm1401, %v1902, -inf
        %1916 = vmax.xlane.f32.xlu0 %v1915
        %v1917 = vpop.xlane.xlu0 %1916
        %v1918 = vsel %vm1401, %v1907, -inf
        %1919 = vmax.xlane.f32.xlu0 %v1918
        %v1920 = vpop.xlane.xlu0 %1919
        %v1921 = vsel %vm1401, %v1912, -inf
        %1922 = vmax.xlane.f32.xlu0 %v1921
        %v1923 = vpop.xlane.xlu0 %1922
        %v1924 = vsub.f32 %v1902, %v1917
        %v1925 = vsub.f32 %v1907, %v1920
        %v1926 = vsub.f32 %v1912, %v1923
        %v1927 = vmul.f32 %v1924, 1.442695
        %v1928 = vpow.pop %v1927
        %v1929 = vmul.f32 %v1925, 1.442695
        %v1930 = vpow.pop %v1929
        %v1931 = vmul.f32 %v1926, 1.442695
        %v1932 = vpow.pop %v1931
        %v1933 = vsel %vm1401, %v1928, 0.0
        %1934 = vadd.xlane.f32.xlu0 %v1933
        %v1935 = vpop.xlane.xlu0 %1934
        %v1936 = vsel %vm1401, %v1930, 0.0
        %1937 = vadd.xlane.f32.xlu0 %v1936
        %v1938 = vpop.xlane.xlu0 %1937
        %v1939 = vsel %vm1401, %v1932, 0.0
        %1940 = vadd.xlane.f32.xlu0 %v1939
        %v1941 = vpop.xlane.xlu0 %1940
        %v1942 = vrcp.pop %v1935
        %v1943 = vrcp.pop %v1938
        %v1944 = vrcp.pop %v1941
        %v1945 = vmul.f32 %v1928, %v1942
        %v1946 = vmul.f32 %v1930, %v1943
        %v1947 = vmul.f32 %v1932, %v1944
        %v1949 = vsel %vm1401, %v1945, 0
        %v1952 = vsel %vm1401, %v1946, 0
        %v1955 = vsel %vm1401, %v1947, 0
        %1957 = vmatprep.subr.mxu0 0.0
        %1958 = vmatpush1.msra.mxu0 %v1804
        %1959 = vmatprep.subr.mxu0 0.0
        %1960 = vmatpush1.msra.mxu0 %v1809
        %1961 = vmatprep.subr.mxu0 0.0
        %1962 = vmatpush1.msra.mxu0 %v1814
        %1963 = vmatprep.subr.mxu0 0.0
        %1964 = vmatpush1.msra.mxu0 0.0
        %1965 = vmatprep.subr.mxu0 0.0
        %1966 = vmatpush1.msra.mxu0 0.0
        %1967 = vmatprep.subr.mxu0 0.0
        %1968 = vmatpush1.msra.mxu0 0.0
        %1969 = vmatprep.subr.mxu0 0.0
        %1970 = vmatpush1.msra.mxu0 0.0
        %1971 = vmatprep.subr.mxu0 0.0
        %1972 = vmatpush1.msra.mxu0 0.0
        %1973 = vmatprep.subr.mxu0 0.0
        %1974 = vmatpush1.msra.mxu0 0.0
        %1975 = vmatprep.subr.mxu0 0.0
        %1976 = vmatpush1.msra.mxu0 0.0
        %1977 = vmatprep.subr.mxu0 0.0
        %1978 = vmatpush1.msra.mxu0 0.0
        %1979 = vmatprep.subr.mxu0 0.0
        %1980 = vmatpush1.msra.mxu0 0.0
        %1981 = vmatprep.subr.mxu0 0.0
        %1982 = vmatpush1.msra.mxu0 0.0
        %1983 = vmatprep.subr.mxu0 0.0
        %1984 = vmatpush1.msra.mxu0 0.0
        %1985 = vmatprep.subr.mxu0 0.0
        %1986 = vmatpush1.msra.mxu0 0.0
        %1987 = vmatprep.subr.mxu0 0.0
        %1988 = vmatpush1.msra.mxu0 0.0
        %1989 = vmatprep.subr.mxu0 0.0
        %1990 = vmatpush1.msra.mxu0 0.0
        %1991 = vmatprep.subr.mxu0 0.0
        %1992 = vmatpush1.msra.mxu0 0.0
        %1993 = vmatprep.subr.mxu0 0.0
        %1994 = vmatpush1.msra.mxu0 0.0
        %1995 = vmatprep.subr.mxu0 0.0
        %1996 = vmatpush1.msra.mxu0 0.0
        %1997 = vmatprep.subr.mxu0 0.0
        %1998 = vmatpush1.msra.mxu0 0.0
        %1999 = vmatprep.subr.mxu0 0.0
        %2000 = vmatpush1.msra.mxu0 0.0
        %2001 = vmatprep.subr.mxu0 0.0
        %2002 = vmatpush1.msra.mxu0 0.0
        %2003 = vmatprep.subr.mxu0 0.0
        %2004 = vmatpush1.msra.mxu0 0.0
        %2005 = vmatprep.subr.mxu0 0.0
        %2006 = vmatpush1.msra.mxu0 0.0
        %2007 = vmatprep.subr.mxu0 0.0
        %2008 = vmatpush1.msra.mxu0 0.0
        %2009 = vmatprep.subr.mxu0 0.0
        %2010 = vmatpush1.msra.mxu0 0.0
        %2011 = vmatprep.subr.mxu0 0.0
        %2012 = vmatpush1.msra.mxu0 0.0
        %2013 = vmatprep.subr.mxu0 0.0
        %2014 = vmatpush1.msra.mxu0 0.0
        %2015 = vmatprep.subr.mxu0 0.0
        %2016 = vmatpush1.msra.mxu0 0.0
        %2017 = vmatprep.subr.mxu0 0.0
        %2018 = vmatpush1.msra.mxu0 0.0
        %2019 = vmatprep.subr.mxu0 0.0
        %2020 = vmatpush1.msra.mxu0 0.0
        %2021 = vmatprep.mubr.f32.mxu0 0.0
        %2022 = vmatmul.mubr.f32.gmra.mrb[0].mxu0 %v1949
        %v2023 = vpop.f32.mrb[0].mxu0
        %v2024 = vadd.f32 0.0, %v2023
        %v2025 = vpop.f32.mrb[0].mxu0
        %2026 = vmatprep.mubr.f32.mxu0 0.0
        %2027 = vmatmul.mubr.f32.gmra.mrb[0].mxu0 %v1952
        %v2028 = vpop.f32.mrb[0].mxu0
        %v2029 = vadd.f32 0.0, %v2028
        %v2030 = vpop.f32.mrb[0].mxu0
        %2031 = vmatprep.mubr.f32.mxu0 0.0
        %2032 = vmatmul.mubr.f32.gmra.mrb[0].mxu0 %v1955
        %v2033 = vpop.f32.mrb[0].mxu0
        %v2034 = vadd.f32 0.0, %v2033
        %v2035 = vpop.f32.mrb[0].mxu0
        %2036 = vdwg.mxu0
        %s2037 = scalar_lea.vmem %s13, 16
        %v2038 = vld [vmem:[%s2037] sm:$0xff]
        %v2039 = vld [vmem:[%s2037 + $0x8] sm:$0xff]
        %v2041 = vsel %vm1302, %v2024, 0
        %v2044 = vsel %vm1302, %v2029, 0
        %v2047 = vsel %vm1302, %v2034, 0
        %2049 = vmatprep.subr.mxu0 0.0
        %2050 = vmatpush1.msra.mxu0 %v2038
        %2051 = vmatprep.subr.mxu0 0.0
        %2052 = vmatpush1.msra.mxu0 %v2039
        %2053 = vmatprep.subr.mxu0 0.0
        %2054 = vmatpush1.msra.mxu0 0.0
        %2055 = vmatprep.subr.mxu0 0.0
        %2056 = vmatpush1.msra.mxu0 0.0
        %2057 = vmatprep.subr.mxu0 0.0
        %2058 = vmatpush1.msra.mxu0 0.0
        %2059 = vmatprep.subr.mxu0 0.0
        %2060 = vmatpush1.msra.mxu0 0.0
        %2061 = vmatprep.subr.mxu0 0.0
        %2062 = vmatpush1.msra.mxu0 0.0
        %2063 = vmatprep.subr.mxu0 0.0
        %2064 = vmatpush1.msra.mxu0 0.0
        %2065 = vmatprep.subr.mxu0 0.0
        %2066 = vmatpush1.msra.mxu0 0.0
        %2067 = vmatprep.subr.mxu0 0.0
        %2068 = vmatpush1.msra.mxu0 0.0
        %2069 = vmatprep.subr.mxu0 0.0
        %2070 = vmatpush1.msra.mxu0 0.0
        %2071 = vmatprep.subr.mxu0 0.0
        %2072 = vmatpush1.msra.mxu0 0.0
        %2073 = vmatprep.subr.mxu0 0.0
        %2074 = vmatpush1.msra.mxu0 0.0
        %2075 = vmatprep.subr.mxu0 0.0
        %2076 = vmatpush1.msra.mxu0 0.0
        %2077 = vmatprep.subr.mxu0 0.0
        %2078 = vmatpush1.msra.mxu0 0.0
        %2079 = vmatprep.subr.mxu0 0.0
        %2080 = vmatpush1.msra.mxu0 0.0
        %2081 = vmatprep.subr.mxu0 0.0
        %2082 = vmatpush1.msra.mxu0 0.0
        %2083 = vmatprep.subr.mxu0 0.0
        %2084 = vmatpush1.msra.mxu0 0.0
        %2085 = vmatprep.subr.mxu0 0.0
        %2086 = vmatpush1.msra.mxu0 0.0
        %2087 = vmatprep.subr.mxu0 0.0
        %2088 = vmatpush1.msra.mxu0 0.0
        %2089 = vmatprep.subr.mxu0 0.0
        %2090 = vmatpush1.msra.mxu0 0.0
        %2091 = vmatprep.subr.mxu0 0.0
        %2092 = vmatpush1.msra.mxu0 0.0
        %2093 = vmatprep.subr.mxu0 0.0
        %2094 = vmatpush1.msra.mxu0 0.0
        %2095 = vmatprep.subr.mxu0 0.0
        %2096 = vmatpush1.msra.mxu0 0.0
        %2097 = vmatprep.subr.mxu0 0.0
        %2098 = vmatpush1.msra.mxu0 0.0
        %2099 = vmatprep.subr.mxu0 0.0
        %2100 = vmatpush1.msra.mxu0 0.0
        %2101 = vmatprep.subr.mxu0 0.0
        %2102 = vmatpush1.msra.mxu0 0.0
        %2103 = vmatprep.subr.mxu0 0.0
        %2104 = vmatpush1.msra.mxu0 0.0
        %2105 = vmatprep.subr.mxu0 0.0
        %2106 = vmatpush1.msra.mxu0 0.0
        %2107 = vmatprep.subr.mxu0 0.0
        %2108 = vmatpush1.msra.mxu0 0.0
        %2109 = vmatprep.subr.mxu0 0.0
        %2110 = vmatpush1.msra.mxu0 0.0
        %2111 = vmatprep.subr.mxu0 0.0
        %2112 = vmatpush1.msra.mxu0 0.0
        %2113 = vmatprep.mubr.f32.mxu0 0.0
        %2114 = vmatmul.mubr.f32.gmra.mrb[0].mxu0 %v2041
        %v2115 = vpop.f32.mrb[0].mxu0
        %v2116 = vadd.f32 0.0, %v2115
        %v2117 = vpop.f32.mrb[0].mxu0
        %2118 = vmatprep.mubr.f32.mxu0 0.0
        %2119 = vmatmul.mubr.f32.gmra.mrb[0].mxu0 %v2044
        %v2120 = vpop.f32.mrb[0].mxu0
        %v2121 = vadd.f32 0.0, %v2120
        %v2122 = vpop.f32.mrb[0].mxu0
        %2123 = vmatprep.mubr.f32.mxu0 0.0
        %2124 = vmatmul.mubr.f32.gmra.mrb[0].mxu0 %v2047
        %v2125 = vpop.f32.mrb[0].mxu0
        %v2126 = vadd.f32 0.0, %v2125
        %v2127 = vpop.f32.mrb[0].mxu0
        %2128 = vdwg.mxu0
        %v2130 = vsel %vm1302, %v1511, 0
        %v2133 = vsel %vm1302, %v1516, 0
        %v2136 = vsel %vm1302, %v1521, 0
        %2138 = vmatprep.subr.mxu0 0.0
        %2139 = vmatpush1.msra.mxu0 %v1524
        %2140 = vmatprep.subr.mxu0 0.0
        %2141 = vmatpush1.msra.mxu0 %v1525
        %2142 = vmatprep.subr.mxu0 0.0
        %2143 = vmatpush1.msra.mxu0 0.0
        %2144 = vmatprep.subr.mxu0 0.0
        %2145 = vmatpush1.msra.mxu0 0.0
        %2146 = vmatprep.subr.mxu0 0.0
        %2147 = vmatpush1.msra.mxu0 0.0
        %2148 = vmatprep.subr.mxu0 0.0
        %2149 = vmatpush1.msra.mxu0 0.0
        %2150 = vmatprep.subr.mxu0 0.0
        %2151 = vmatpush1.msra.mxu0 0.0
        %2152 = vmatprep.subr.mxu0 0.0
        %2153 = vmatpush1.msra.mxu0 0.0
        %2154 = vmatprep.subr.mxu0 0.0
        %2155 = vmatpush1.msra.mxu0 0.0
        %2156 = vmatprep.subr.mxu0 0.0
        %2157 = vmatpush1.msra.mxu0 0.0
        %2158 = vmatprep.subr.mxu0 0.0
        %2159 = vmatpush1.msra.mxu0 0.0
        %2160 = vmatprep.subr.mxu0 0.0
        %2161 = vmatpush1.msra.mxu0 0.0
        %2162 = vmatprep.subr.mxu0 0.0
        %2163 = vmatpush1.msra.mxu0 0.0
        %2164 = vmatprep.subr.mxu0 0.0
        %2165 = vmatpush1.msra.mxu0 0.0
        %2166 = vmatprep.subr.mxu0 0.0
        %2167 = vmatpush1.msra.mxu0 0.0
        %2168 = vmatprep.subr.mxu0 0.0
        %2169 = vmatpush1.msra.mxu0 0.0
        %2170 = vmatprep.subr.mxu0 0.0
        %2171 = vmatpush1.msra.mxu0 0.0
        %2172 = vmatprep.subr.mxu0 0.0
        %2173 = vmatpush1.msra.mxu0 0.0
        %2174 = vmatprep.subr.mxu0 0.0
        %2175 = vmatpush1.msra.mxu0 0.0
        %2176 = vmatprep.subr.mxu0 0.0
        %2177 = vmatpush1.msra.mxu0 0.0
        %2178 = vmatprep.subr.mxu0 0.0
        %2179 = vmatpush1.msra.mxu0 0.0
        %2180 = vmatprep.subr.mxu0 0.0
        %2181 = vmatpush1.msra.mxu0 0.0
        %2182 = vmatprep.subr.mxu0 0.0
        %2183 = vmatpush1.msra.mxu0 0.0
        %2184 = vmatprep.subr.mxu0 0.0
        %2185 = vmatpush1.msra.mxu0 0.0
        %2186 = vmatprep.subr.mxu0 0.0
        %2187 = vmatpush1.msra.mxu0 0.0
        %2188 = vmatprep.subr.mxu0 0.0
        %2189 = vmatpush1.msra.mxu0 0.0
        %2190 = vmatprep.subr.mxu0 0.0
        %2191 = vmatpush1.msra.mxu0 0.0
        %2192 = vmatprep.subr.mxu0 0.0
        %2193 = vmatpush1.msra.mxu0 0.0
        %2194 = vmatprep.subr.mxu0 0.0
        %2195 = vmatpush1.msra.mxu0 0.0
        %2196 = vmatprep.subr.mxu0 0.0
        %2197 = vmatpush1.msra.mxu0 0.0
        %2198 = vmatprep.subr.mxu0 0.0
        %2199 = vmatpush1.msra.mxu0 0.0
        %2200 = vmatprep.subr.mxu0 0.0
        %2201 = vmatpush1.msra.mxu0 0.0
        %2202 = vmatprep.mubr.f32.mxu0 0.0
        %2203 = vmatmul.mubr.f32.gmra.mrb[0].mxu0 %v2130
        %v2204 = vpop.f32.mrb[0].mxu0
        %v2205 = vadd.f32 %v2116, %v2204
        %v2206 = vpop.f32.mrb[0].mxu0
        %2207 = vmatprep.mubr.f32.mxu0 0.0
        %2208 = vmatmul.mubr.f32.gmra.mrb[0].mxu0 %v2133
        %v2209 = vpop.f32.mrb[0].mxu0
        %v2210 = vadd.f32 %v2121, %v2209
        %v2211 = vpop.f32.mrb[0].mxu0
        %2212 = vmatprep.mubr.f32.mxu0 0.0
        %2213 = vmatmul.mubr.f32.gmra.mrb[0].mxu0 %v2136
        %v2214 = vpop.f32.mrb[0].mxu0
        %v2215 = vadd.f32 %v2126, %v2214
        %v2216 = vpop.f32.mrb[0].mxu0
        %2217 = vdwg.mxu0
        %s2218 = scalar_lea.vmem %s7, 128
        %v2219 = vld [vmem:[%s2218] sm:$0xff]
        %v2220 = vld [vmem:[%s2218 + $0x8] sm:$0xff]
        %v2221 = vld [vmem:[%s2218 + $0x10] sm:$0xff]
        %v2222 = vld [vmem:[%s2218 + $0x18] sm:$0xff]
        %v2223 = vld [vmem:[%s2218 + $0x20] sm:$0xff]
        %v2224 = vld [vmem:[%s2218 + $0x28] sm:$0xff]
        %v2225 = vld [vmem:[%s2218 + $0x30] sm:$0xff]
        %v2226 = vld [vmem:[%s2218 + $0x38] sm:$0xff]
        %s2227 = scalar_lea.vmem %s8, 2
        %v2228 = vld [vmem:[%s2227] sm:$0x1]
        %v2230 = vlaneseq
        %v2231 = vshrl.u32 %v2230, 7
        %v2232 = vsub.s32 0, %v2231
        %v2233 = vrot.slane %v2228, %v2232
        %2235 = vmatprep.subr.mxu0 0.0
        %2236 = vmatpush1.msra.mxu0 %v2219
        %2237 = vmatprep.subr.mxu0 0.0
        %2238 = vmatpush1.msra.mxu0 %v2220
        %2239 = vmatprep.subr.mxu0 0.0
        %2240 = vmatpush1.msra.mxu0 %v2221
        %2241 = vmatprep.subr.mxu0 0.0
        %2242 = vmatpush1.msra.mxu0 %v2222
        %2243 = vmatprep.subr.mxu0 0.0
        %2244 = vmatpush1.msra.mxu0 %v2223
        %2245 = vmatprep.subr.mxu0 0.0
        %2246 = vmatpush1.msra.mxu0 %v2224
        %2247 = vmatprep.subr.mxu0 0.0
        %2248 = vmatpush1.msra.mxu0 %v2225
        %2249 = vmatprep.subr.mxu0 0.0
        %2250 = vmatpush1.msra.mxu0 %v2226
        %2251 = vmatprep.subr.mxu0 0.0
        %2252 = vmatpush1.msra.mxu0 0.0
        %2253 = vmatprep.subr.mxu0 0.0
        %2254 = vmatpush1.msra.mxu0 0.0
        %2255 = vmatprep.subr.mxu0 0.0
        %2256 = vmatpush1.msra.mxu0 0.0
        %2257 = vmatprep.subr.mxu0 0.0
        %2258 = vmatpush1.msra.mxu0 0.0
        %2259 = vmatprep.subr.mxu0 0.0
        %2260 = vmatpush1.msra.mxu0 0.0
        %2261 = vmatprep.subr.mxu0 0.0
        %2262 = vmatpush1.msra.mxu0 0.0
        %2263 = vmatprep.subr.mxu0 0.0
        %2264 = vmatpush1.msra.mxu0 0.0
        %2265 = vmatprep.subr.mxu0 0.0
        %2266 = vmatpush1.msra.mxu0 0.0
        %2267 = vmatprep.subr.mxu0 0.0
        %2268 = vmatpush1.msra.mxu0 0.0
        %2269 = vmatprep.subr.mxu0 0.0
        %2270 = vmatpush1.msra.mxu0 0.0
        %2271 = vmatprep.subr.mxu0 0.0
        %2272 = vmatpush1.msra.mxu0 0.0
        %2273 = vmatprep.subr.mxu0 0.0
        %2274 = vmatpush1.msra.mxu0 0.0
        %2275 = vmatprep.subr.mxu0 0.0
        %2276 = vmatpush1.msra.mxu0 0.0
        %2277 = vmatprep.subr.mxu0 0.0
        %2278 = vmatpush1.msra.mxu0 0.0
        %2279 = vmatprep.subr.mxu0 0.0
        %2280 = vmatpush1.msra.mxu0 0.0
        %2281 = vmatprep.subr.mxu0 0.0
        %2282 = vmatpush1.msra.mxu0 0.0
        %2283 = vmatprep.subr.mxu0 0.0
        %2284 = vmatpush1.msra.mxu0 0.0
        %2285 = vmatprep.subr.mxu0 0.0
        %2286 = vmatpush1.msra.mxu0 0.0
        %2287 = vmatprep.subr.mxu0 0.0
        %2288 = vmatpush1.msra.mxu0 0.0
        %2289 = vmatprep.subr.mxu0 0.0
        %2290 = vmatpush1.msra.mxu0 0.0
        %2291 = vmatprep.subr.mxu0 0.0
        %2292 = vmatpush1.msra.mxu0 0.0
        %2293 = vmatprep.subr.mxu0 0.0
        %2294 = vmatpush1.msra.mxu0 0.0
        %2295 = vmatprep.subr.mxu0 0.0
        %2296 = vmatpush1.msra.mxu0 0.0
        %2297 = vmatprep.subr.mxu0 0.0
        %2298 = vmatpush1.msra.mxu0 0.0
        %2299 = vmatprep.mubr.f32.mxu0 0.0
        %2300 = vmatmul.mubr.f32.gmra.mrb[0].mxu0 %v1024
        %v2301 = vpop.f32.mrb[0].mxu0
        %v2302 = vadd.f32 %v2233, %v2301
        %v2303 = vpop.f32.mrb[0].mxu0
        %2304 = vmatprep.mubr.f32.mxu0 0.0
        %2305 = vmatmul.mubr.f32.gmra.mrb[0].mxu0 %v1027
        %v2306 = vpop.f32.mrb[0].mxu0
        %v2307 = vadd.f32 %v2233, %v2306
        %v2308 = vpop.f32.mrb[0].mxu0
        %2309 = vmatprep.mubr.f32.mxu0 0.0
        %2310 = vmatmul.mubr.f32.gmra.mrb[0].mxu0 %v1030
        %v2311 = vpop.f32.mrb[0].mxu0
        %v2312 = vadd.f32 %v2233, %v2311
        %v2313 = vpop.f32.mrb[0].mxu0
        %2314 = vdwg.mxu0
        %s2315 = scalar_lea.vmem %s9, 128
        %v2316 = vld [vmem:[%s2315] sm:$0xff]
        %v2317 = vld [vmem:[%s2315 + $0x8] sm:$0xff]
        %v2318 = vld [vmem:[%s2315 + $0x10] sm:$0xff]
        %v2319 = vld [vmem:[%s2315 + $0x18] sm:$0xff]
        %v2320 = vld [vmem:[%s2315 + $0x20] sm:$0xff]
        %v2321 = vld [vmem:[%s2315 + $0x28] sm:$0xff]
        %v2322 = vld [vmem:[%s2315 + $0x30] sm:$0xff]
        %v2323 = vld [vmem:[%s2315 + $0x38] sm:$0xff]
        %s2324 = scalar_lea.vmem %s10, 2
        %v2325 = vld [vmem:[%s2324] sm:$0x1]
        %v2327 = vlaneseq
        %v2328 = vshrl.u32 %v2327, 7
        %v2329 = vsub.s32 0, %v2328
        %v2330 = vrot.slane %v2325, %v2329
        %2332 = vmatprep.subr.mxu0 0.0
        %2333 = vmatpush1.msra.mxu0 %v2316
        %2334 = vmatprep.subr.mxu0 0.0
        %2335 = vmatpush1.msra.mxu0 %v2317
        %2336 = vmatprep.subr.mxu0 0.0
        %2337 = vmatpush1.msra.mxu0 %v2318
        %2338 = vmatprep.subr.mxu0 0.0
        %2339 = vmatpush1.msra.mxu0 %v2319
        %2340 = vmatprep.subr.mxu0 0.0
        %2341 = vmatpush1.msra.mxu0 %v2320
        %2342 = vmatprep.subr.mxu0 0.0
        %2343 = vmatpush1.msra.mxu0 %v2321
        %2344 = vmatprep.subr.mxu0 0.0
        %2345 = vmatpush1.msra.mxu0 %v2322
        %2346 = vmatprep.subr.mxu0 0.0
        %2347 = vmatpush1.msra.mxu0 %v2323
        %2348 = vmatprep.subr.mxu0 0.0
        %2349 = vmatpush1.msra.mxu0 0.0
        %2350 = vmatprep.subr.mxu0 0.0
        %2351 = vmatpush1.msra.mxu0 0.0
        %2352 = vmatprep.subr.mxu0 0.0
        %2353 = vmatpush1.msra.mxu0 0.0
        %2354 = vmatprep.subr.mxu0 0.0
        %2355 = vmatpush1.msra.mxu0 0.0
        %2356 = vmatprep.subr.mxu0 0.0
        %2357 = vmatpush1.msra.mxu0 0.0
        %2358 = vmatprep.subr.mxu0 0.0
        %2359 = vmatpush1.msra.mxu0 0.0
        %2360 = vmatprep.subr.mxu0 0.0
        %2361 = vmatpush1.msra.mxu0 0.0
        %2362 = vmatprep.subr.mxu0 0.0
        %2363 = vmatpush1.msra.mxu0 0.0
        %2364 = vmatprep.subr.mxu0 0.0
        %2365 = vmatpush1.msra.mxu0 0.0
        %2366 = vmatprep.subr.mxu0 0.0
        %2367 = vmatpush1.msra.mxu0 0.0
        %2368 = vmatprep.subr.mxu0 0.0
        %2369 = vmatpush1.msra.mxu0 0.0
        %2370 = vmatprep.subr.mxu0 0.0
        %2371 = vmatpush1.msra.mxu0 0.0
        %2372 = vmatprep.subr.mxu0 0.0
        %2373 = vmatpush1.msra.mxu0 0.0
        %2374 = vmatprep.subr.mxu0 0.0
        %2375 = vmatpush1.msra.mxu0 0.0
        %2376 = vmatprep.subr.mxu0 0.0
        %2377 = vmatpush1.msra.mxu0 0.0
        %2378 = vmatprep.subr.mxu0 0.0
        %2379 = vmatpush1.msra.mxu0 0.0
        %2380 = vmatprep.subr.mxu0 0.0
        %2381 = vmatpush1.msra.mxu0 0.0
        %2382 = vmatprep.subr.mxu0 0.0
        %2383 = vmatpush1.msra.mxu0 0.0
        %2384 = vmatprep.subr.mxu0 0.0
        %2385 = vmatpush1.msra.mxu0 0.0
        %2386 = vmatprep.subr.mxu0 0.0
        %2387 = vmatpush1.msra.mxu0 0.0
        %2388 = vmatprep.subr.mxu0 0.0
        %2389 = vmatpush1.msra.mxu0 0.0
        %2390 = vmatprep.subr.mxu0 0.0
        %2391 = vmatpush1.msra.mxu0 0.0
        %2392 = vmatprep.subr.mxu0 0.0
        %2393 = vmatpush1.msra.mxu0 0.0
        %2394 = vmatprep.subr.mxu0 0.0
        %2395 = vmatpush1.msra.mxu0 0.0
        %2396 = vmatprep.mubr.f32.mxu0 0.0
        %2397 = vmatmul.mubr.f32.gmra.mrb[0].mxu0 %v1024
        %v2398 = vpop.f32.mrb[0].mxu0
        %v2399 = vadd.f32 %v2330, %v2398
        %v2400 = vpop.f32.mrb[0].mxu0
        %2401 = vmatprep.mubr.f32.mxu0 0.0
        %2402 = vmatmul.mubr.f32.gmra.mrb[0].mxu0 %v1027
        %v2403 = vpop.f32.mrb[0].mxu0
        %v2404 = vadd.f32 %v2330, %v2403
        %v2405 = vpop.f32.mrb[0].mxu0
        %2406 = vmatprep.mubr.f32.mxu0 0.0
        %2407 = vmatmul.mubr.f32.gmra.mrb[0].mxu0 %v1030
        %v2408 = vpop.f32.mrb[0].mxu0
        %v2409 = vadd.f32 %v2330, %v2408
        %v2410 = vpop.f32.mrb[0].mxu0
        %2411 = vdwg.mxu0
        %s2412 = scalar_lea.vmem %s11, 128
        %v2413 = vld [vmem:[%s2412] sm:$0xff]
        %v2414 = vld [vmem:[%s2412 + $0x8] sm:$0xff]
        %v2415 = vld [vmem:[%s2412 + $0x10] sm:$0xff]
        %v2416 = vld [vmem:[%s2412 + $0x18] sm:$0xff]
        %v2417 = vld [vmem:[%s2412 + $0x20] sm:$0xff]
        %v2418 = vld [vmem:[%s2412 + $0x28] sm:$0xff]
        %v2419 = vld [vmem:[%s2412 + $0x30] sm:$0xff]
        %v2420 = vld [vmem:[%s2412 + $0x38] sm:$0xff]
        %s2421 = scalar_lea.vmem %s12, 2
        %v2422 = vld [vmem:[%s2421] sm:$0x1]
        %v2424 = vlaneseq
        %v2425 = vshrl.u32 %v2424, 7
        %v2426 = vsub.s32 0, %v2425
        %v2427 = vrot.slane %v2422, %v2426
        %2429 = vmatprep.subr.mxu0 0.0
        %2430 = vmatpush1.msra.mxu0 %v2413
        %2431 = vmatprep.subr.mxu0 0.0
        %2432 = vmatpush1.msra.mxu0 %v2414
        %2433 = vmatprep.subr.mxu0 0.0
        %2434 = vmatpush1.msra.mxu0 %v2415
        %2435 = vmatprep.subr.mxu0 0.0
        %2436 = vmatpush1.msra.mxu0 %v2416
        %2437 = vmatprep.subr.mxu0 0.0
        %2438 = vmatpush1.msra.mxu0 %v2417
        %2439 = vmatprep.subr.mxu0 0.0
        %2440 = vmatpush1.msra.mxu0 %v2418
        %2441 = vmatprep.subr.mxu0 0.0
        %2442 = vmatpush1.msra.mxu0 %v2419
        %2443 = vmatprep.subr.mxu0 0.0
        %2444 = vmatpush1.msra.mxu0 %v2420
        %2445 = vmatprep.subr.mxu0 0.0
        %2446 = vmatpush1.msra.mxu0 0.0
        %2447 = vmatprep.subr.mxu0 0.0
        %2448 = vmatpush1.msra.mxu0 0.0
        %2449 = vmatprep.subr.mxu0 0.0
        %2450 = vmatpush1.msra.mxu0 0.0
        %2451 = vmatprep.subr.mxu0 0.0
        %2452 = vmatpush1.msra.mxu0 0.0
        %2453 = vmatprep.subr.mxu0 0.0
        %2454 = vmatpush1.msra.mxu0 0.0
        %2455 = vmatprep.subr.mxu0 0.0
        %2456 = vmatpush1.msra.mxu0 0.0
        %2457 = vmatprep.subr.mxu0 0.0
        %2458 = vmatpush1.msra.mxu0 0.0
        %2459 = vmatprep.subr.mxu0 0.0
        %2460 = vmatpush1.msra.mxu0 0.0
        %2461 = vmatprep.subr.mxu0 0.0
        %2462 = vmatpush1.msra.mxu0 0.0
        %2463 = vmatprep.subr.mxu0 0.0
        %2464 = vmatpush1.msra.mxu0 0.0
        %2465 = vmatprep.subr.mxu0 0.0
        %2466 = vmatpush1.msra.mxu0 0.0
        %2467 = vmatprep.subr.mxu0 0.0
        %2468 = vmatpush1.msra.mxu0 0.0
        %2469 = vmatprep.subr.mxu0 0.0
        %2470 = vmatpush1.msra.mxu0 0.0
        %2471 = vmatprep.subr.mxu0 0.0
        %2472 = vmatpush1.msra.mxu0 0.0
        %2473 = vmatprep.subr.mxu0 0.0
        %2474 = vmatpush1.msra.mxu0 0.0
        %2475 = vmatprep.subr.mxu0 0.0
        %2476 = vmatpush1.msra.mxu0 0.0
        %2477 = vmatprep.subr.mxu0 0.0
        %2478 = vmatpush1.msra.mxu0 0.0
        %2479 = vmatprep.subr.mxu0 0.0
        %2480 = vmatpush1.msra.mxu0 0.0
        %2481 = vmatprep.subr.mxu0 0.0
        %2482 = vmatpush1.msra.mxu0 0.0
        %2483 = vmatprep.subr.mxu0 0.0
        %2484 = vmatpush1.msra.mxu0 0.0
        %2485 = vmatprep.subr.mxu0 0.0
        %2486 = vmatpush1.msra.mxu0 0.0
        %2487 = vmatprep.subr.mxu0 0.0
        %2488 = vmatpush1.msra.mxu0 0.0
        %2489 = vmatprep.subr.mxu0 0.0
        %2490 = vmatpush1.msra.mxu0 0.0
        %2491 = vmatprep.subr.mxu0 0.0
        %2492 = vmatpush1.msra.mxu0 0.0
        %2493 = vmatprep.mubr.f32.mxu0 0.0
        %2494 = vmatmul.mubr.f32.gmra.mrb[0].mxu0 %v1024
        %v2495 = vpop.f32.mrb[0].mxu0
        %v2496 = vadd.f32 %v2427, %v2495
        %v2497 = vpop.f32.mrb[0].mxu0
        %2498 = vmatprep.mubr.f32.mxu0 0.0
        %2499 = vmatmul.mubr.f32.gmra.mrb[0].mxu0 %v1027
        %v2500 = vpop.f32.mrb[0].mxu0
        %v2501 = vadd.f32 %v2427, %v2500
        %v2502 = vpop.f32.mrb[0].mxu0
        %2503 = vmatprep.mubr.f32.mxu0 0.0
        %2504 = vmatmul.mubr.f32.gmra.mrb[0].mxu0 %v1030
        %v2505 = vpop.f32.mrb[0].mxu0
        %v2506 = vadd.f32 %v2427, %v2505
        %v2507 = vpop.f32.mrb[0].mxu0
        %2508 = vdwg.mxu0
        %v2510 = vsel %vm1302, %v2302, 0
        %v2513 = vsel %vm1302, %v2307, 0
        %v2516 = vsel %vm1302, %v2312, 0
        %v2519 = vsel %vm1302, %v2399, 0
        %v2522 = vsel %vm1302, %v2404, 0
        %v2525 = vsel %vm1302, %v2409, 0
        %2527 = vmatprep.subr.mxu0 0.0
        %2528 = vmatpush1.xpose.msra.mxu0 %v2519
        %2529 = vmatprep.subr.mxu0 0.0
        %2530 = vmatpush1.xpose.msra.mxu0 %v2522
        %2531 = vmatprep.subr.mxu0 0.0
        %2532 = vmatpush1.xpose.msra.mxu0 %v2525
        %2533 = vmatprep.subr.mxu0 0.0
        %2534 = vmatpush1.xpose.msra.mxu0 0.0
        %2535 = vmatprep.subr.mxu0 0.0
        %2536 = vmatpush1.xpose.msra.mxu0 0.0
        %2537 = vmatprep.subr.mxu0 0.0
        %2538 = vmatpush1.xpose.msra.mxu0 0.0
        %2539 = vmatprep.subr.mxu0 0.0
        %2540 = vmatpush1.xpose.msra.mxu0 0.0
        %2541 = vmatprep.subr.mxu0 0.0
        %2542 = vmatpush1.xpose.msra.mxu0 0.0
        %2543 = vmatprep.subr.mxu0 0.0
        %2544 = vmatpush1.xpose.msra.mxu0 0.0
        %2545 = vmatprep.subr.mxu0 0.0
        %2546 = vmatpush1.xpose.msra.mxu0 0.0
        %2547 = vmatprep.subr.mxu0 0.0
        %2548 = vmatpush1.xpose.msra.mxu0 0.0
        %2549 = vmatprep.subr.mxu0 0.0
        %2550 = vmatpush1.xpose.msra.mxu0 0.0
        %2551 = vmatprep.subr.mxu0 0.0
        %2552 = vmatpush1.xpose.msra.mxu0 0.0
        %2553 = vmatprep.subr.mxu0 0.0
        %2554 = vmatpush1.xpose.msra.mxu0 0.0
        %2555 = vmatprep.subr.mxu0 0.0
        %2556 = vmatpush1.xpose.msra.mxu0 0.0
        %2557 = vmatprep.subr.mxu0 0.0
        %2558 = vmatpush1.xpose.msra.mxu0 0.0
        %2559 = vmatprep.subr.mxu0 0.0
        %2560 = vmatpush1.xpose.msra.mxu0 0.0
        %2561 = vmatprep.subr.mxu0 0.0
        %2562 = vmatpush1.xpose.msra.mxu0 0.0
        %2563 = vmatprep.subr.mxu0 0.0
        %2564 = vmatpush1.xpose.msra.mxu0 0.0
        %2565 = vmatprep.subr.mxu0 0.0
        %2566 = vmatpush1.xpose.msra.mxu0 0.0
        %2567 = vmatprep.subr.mxu0 0.0
        %2568 = vmatpush1.xpose.msra.mxu0 0.0
        %2569 = vmatprep.subr.mxu0 0.0
        %2570 = vmatpush1.xpose.msra.mxu0 0.0
        %2571 = vmatprep.subr.mxu0 0.0
        %2572 = vmatpush1.xpose.msra.mxu0 0.0
        %2573 = vmatprep.subr.mxu0 0.0
        %2574 = vmatpush1.xpose.msra.mxu0 0.0
        %2575 = vmatprep.subr.mxu0 0.0
        %2576 = vmatpush1.xpose.msra.mxu0 0.0
        %2577 = vmatprep.subr.mxu0 0.0
        %2578 = vmatpush1.xpose.msra.mxu0 0.0
        %2579 = vmatprep.subr.mxu0 0.0
        %2580 = vmatpush1.xpose.msra.mxu0 0.0
        %2581 = vmatprep.subr.mxu0 0.0
        %2582 = vmatpush1.xpose.msra.mxu0 0.0
        %2583 = vmatprep.subr.mxu0 0.0
        %2584 = vmatpush1.xpose.msra.mxu0 0.0
        %2585 = vmatprep.subr.mxu0 0.0
        %2586 = vmatpush1.xpose.msra.mxu0 0.0
        %2587 = vmatprep.subr.mxu0 0.0
        %2588 = vmatpush1.xpose.msra.mxu0 0.0
        %2589 = vmatprep.subr.mxu0 0.0
        %2590 = vmatpush1.xpose.msra.mxu0 0.0
        %2591 = vmatprep.mubr.f32.mxu0 0.0
        %2592 = vmatmul.mubr.f32.gmra.mrb[0].mxu0 %v2510
        %v2593 = vpop.f32.mrb[0].mxu0
        %v2594 = vadd.f32 %v948, %v2593
        %v2595 = vpop.f32.mrb[0].mxu0
        %2596 = vmatprep.mubr.f32.mxu0 0.0
        %2597 = vmatmul.mubr.f32.gmra.mrb[0].mxu0 %v2513
        %v2598 = vpop.f32.mrb[0].mxu0
        %v2599 = vadd.f32 %v948, %v2598
        %v2600 = vpop.f32.mrb[0].mxu0
        %2601 = vmatprep.mubr.f32.mxu0 0.0
        %2602 = vmatmul.mubr.f32.gmra.mrb[0].mxu0 %v2516
        %v2603 = vpop.f32.mrb[0].mxu0
        %v2604 = vadd.f32 %v948, %v2603
        %v2605 = vpop.f32.mrb[0].mxu0
        %2606 = vdwg.mxu0
        %v2607 = vsel %vm1401, %v2594, -inf
        %2608 = vmax.xlane.f32.xlu0 %v2607
        %v2609 = vpop.xlane.xlu0 %2608
        %v2610 = vsel %vm1401, %v2599, -inf
        %2611 = vmax.xlane.f32.xlu0 %v2610
        %v2612 = vpop.xlane.xlu0 %2611
        %v2613 = vsel %vm1401, %v2604, -inf
        %2614 = vmax.xlane.f32.xlu0 %v2613
        %v2615 = vpop.xlane.xlu0 %2614
        %v2616 = vsub.f32 %v2594, %v2609
        %v2617 = vsub.f32 %v2599, %v2612
        %v2618 = vsub.f32 %v2604, %v2615
        %v2619 = vmul.f32 %v2616, 1.442695
        %v2620 = vpow.pop %v2619
        %v2621 = vmul.f32 %v2617, 1.442695
        %v2622 = vpow.pop %v2621
        %v2623 = vmul.f32 %v2618, 1.442695
        %v2624 = vpow.pop %v2623
        %v2625 = vsel %vm1401, %v2620, 0.0
        %2626 = vadd.xlane.f32.xlu0 %v2625
        %v2627 = vpop.xlane.xlu0 %2626
        %v2628 = vsel %vm1401, %v2622, 0.0
        %2629 = vadd.xlane.f32.xlu0 %v2628
        %v2630 = vpop.xlane.xlu0 %2629
        %v2631 = vsel %vm1401, %v2624, 0.0
        %2632 = vadd.xlane.f32.xlu0 %v2631
        %v2633 = vpop.xlane.xlu0 %2632
        %v2634 = vrcp.pop %v2627
        %v2635 = vrcp.pop %v2630
        %v2636 = vrcp.pop %v2633
        %v2637 = vmul.f32 %v2620, %v2634
        %v2638 = vmul.f32 %v2622, %v2635
        %v2639 = vmul.f32 %v2624, %v2636
        %v2641 = vsel %vm1401, %v2637, 0
        %v2644 = vsel %vm1401, %v2638, 0
        %v2647 = vsel %vm1401, %v2639, 0
        %2649 = vmatprep.subr.mxu0 0.0
        %2650 = vmatpush1.msra.mxu0 %v2496
        %2651 = vmatprep.subr.mxu0 0.0
        %2652 = vmatpush1.msra.mxu0 %v2501
        %2653 = vmatprep.subr.mxu0 0.0
        %2654 = vmatpush1.msra.mxu0 %v2506
        %2655 = vmatprep.subr.mxu0 0.0
        %2656 = vmatpush1.msra.mxu0 0.0
        %2657 = vmatprep.subr.mxu0 0.0
        %2658 = vmatpush1.msra.mxu0 0.0
        %2659 = vmatprep.subr.mxu0 0.0
        %2660 = vmatpush1.msra.mxu0 0.0
        %2661 = vmatprep.subr.mxu0 0.0
        %2662 = vmatpush1.msra.mxu0 0.0
        %2663 = vmatprep.subr.mxu0 0.0
        %2664 = vmatpush1.msra.mxu0 0.0
        %2665 = vmatprep.subr.mxu0 0.0
        %2666 = vmatpush1.msra.mxu0 0.0
        %2667 = vmatprep.subr.mxu0 0.0
        %2668 = vmatpush1.msra.mxu0 0.0
        %2669 = vmatprep.subr.mxu0 0.0
        %2670 = vmatpush1.msra.mxu0 0.0
        %2671 = vmatprep.subr.mxu0 0.0
        %2672 = vmatpush1.msra.mxu0 0.0
        %2673 = vmatprep.subr.mxu0 0.0
        %2674 = vmatpush1.msra.mxu0 0.0
        %2675 = vmatprep.subr.mxu0 0.0
        %2676 = vmatpush1.msra.mxu0 0.0
        %2677 = vmatprep.subr.mxu0 0.0
        %2678 = vmatpush1.msra.mxu0 0.0
        %2679 = vmatprep.subr.mxu0 0.0
        %2680 = vmatpush1.msra.mxu0 0.0
        %2681 = vmatprep.subr.mxu0 0.0
        %2682 = vmatpush1.msra.mxu0 0.0
        %2683 = vmatprep.subr.mxu0 0.0
        %2684 = vmatpush1.msra.mxu0 0.0
        %2685 = vmatprep.subr.mxu0 0.0
        %2686 = vmatpush1.msra.mxu0 0.0
        %2687 = vmatprep.subr.mxu0 0.0
        %2688 = vmatpush1.msra.mxu0 0.0
        %2689 = vmatprep.subr.mxu0 0.0
        %2690 = vmatpush1.msra.mxu0 0.0
        %2691 = vmatprep.subr.mxu0 0.0
        %2692 = vmatpush1.msra.mxu0 0.0
        %2693 = vmatprep.subr.mxu0 0.0
        %2694 = vmatpush1.msra.mxu0 0.0
        %2695 = vmatprep.subr.mxu0 0.0
        %2696 = vmatpush1.msra.mxu0 0.0
        %2697 = vmatprep.subr.mxu0 0.0
        %2698 = vmatpush1.msra.mxu0 0.0
        %2699 = vmatprep.subr.mxu0 0.0
        %2700 = vmatpush1.msra.mxu0 0.0
        %2701 = vmatprep.subr.mxu0 0.0
        %2702 = vmatpush1.msra.mxu0 0.0
        %2703 = vmatprep.subr.mxu0 0.0
        %2704 = vmatpush1.msra.mxu0 0.0
        %2705 = vmatprep.subr.mxu0 0.0
        %2706 = vmatpush1.msra.mxu0 0.0
        %2707 = vmatprep.subr.mxu0 0.0
        %2708 = vmatpush1.msra.mxu0 0.0
        %2709 = vmatprep.subr.mxu0 0.0
        %2710 = vmatpush1.msra.mxu0 0.0
        %2711 = vmatprep.subr.mxu0 0.0
        %2712 = vmatpush1.msra.mxu0 0.0
        %2713 = vmatprep.mubr.f32.mxu0 0.0
        %2714 = vmatmul.mubr.f32.gmra.mrb[0].mxu0 %v2641
        %v2715 = vpop.f32.mrb[0].mxu0
        %v2716 = vadd.f32 0.0, %v2715
        %v2717 = vpop.f32.mrb[0].mxu0
        %2718 = vmatprep.mubr.f32.mxu0 0.0
        %2719 = vmatmul.mubr.f32.gmra.mrb[0].mxu0 %v2644
        %v2720 = vpop.f32.mrb[0].mxu0
        %v2721 = vadd.f32 0.0, %v2720
        %v2722 = vpop.f32.mrb[0].mxu0
        %2723 = vmatprep.mubr.f32.mxu0 0.0
        %2724 = vmatmul.mubr.f32.gmra.mrb[0].mxu0 %v2647
        %v2725 = vpop.f32.mrb[0].mxu0
        %v2726 = vadd.f32 0.0, %v2725
        %v2727 = vpop.f32.mrb[0].mxu0
        %2728 = vdwg.mxu0
        %s2729 = scalar_lea.vmem %s13, 32
        %v2730 = vld [vmem:[%s2729] sm:$0xff]
        %v2731 = vld [vmem:[%s2729 + $0x8] sm:$0xff]
        %v2733 = vsel %vm1302, %v2716, 0
        %v2736 = vsel %vm1302, %v2721, 0
        %v2739 = vsel %vm1302, %v2726, 0
        %2741 = vmatprep.subr.mxu0 0.0
        %2742 = vmatpush1.msra.mxu0 %v2730
        %2743 = vmatprep.subr.mxu0 0.0
        %2744 = vmatpush1.msra.mxu0 %v2731
        %2745 = vmatprep.subr.mxu0 0.0
        %2746 = vmatpush1.msra.mxu0 0.0
        %2747 = vmatprep.subr.mxu0 0.0
        %2748 = vmatpush1.msra.mxu0 0.0
        %2749 = vmatprep.subr.mxu0 0.0
        %2750 = vmatpush1.msra.mxu0 0.0
        %2751 = vmatprep.subr.mxu0 0.0
        %2752 = vmatpush1.msra.mxu0 0.0
        %2753 = vmatprep.subr.mxu0 0.0
        %2754 = vmatpush1.msra.mxu0 0.0
        %2755 = vmatprep.subr.mxu0 0.0
        %2756 = vmatpush1.msra.mxu0 0.0
        %2757 = vmatprep.subr.mxu0 0.0
        %2758 = vmatpush1.msra.mxu0 0.0
        %2759 = vmatprep.subr.mxu0 0.0
        %2760 = vmatpush1.msra.mxu0 0.0
        %2761 = vmatprep.subr.mxu0 0.0
        %2762 = vmatpush1.msra.mxu0 0.0
        %2763 = vmatprep.subr.mxu0 0.0
        %2764 = vmatpush1.msra.mxu0 0.0
        %2765 = vmatprep.subr.mxu0 0.0
        %2766 = vmatpush1.msra.mxu0 0.0
        %2767 = vmatprep.subr.mxu0 0.0
        %2768 = vmatpush1.msra.mxu0 0.0
        %2769 = vmatprep.subr.mxu0 0.0
        %2770 = vmatpush1.msra.mxu0 0.0
        %2771 = vmatprep.subr.mxu0 0.0
        %2772 = vmatpush1.msra.mxu0 0.0
        %2773 = vmatprep.subr.mxu0 0.0
        %2774 = vmatpush1.msra.mxu0 0.0
        %2775 = vmatprep.subr.mxu0 0.0
        %2776 = vmatpush1.msra.mxu0 0.0
        %2777 = vmatprep.subr.mxu0 0.0
        %2778 = vmatpush1.msra.mxu0 0.0
        %2779 = vmatprep.subr.mxu0 0.0
        %2780 = vmatpush1.msra.mxu0 0.0
        %2781 = vmatprep.subr.mxu0 0.0
        %2782 = vmatpush1.msra.mxu0 0.0
        %2783 = vmatprep.subr.mxu0 0.0
        %2784 = vmatpush1.msra.mxu0 0.0
        %2785 = vmatprep.subr.mxu0 0.0
        %2786 = vmatpush1.msra.mxu0 0.0
        %2787 = vmatprep.subr.mxu0 0.0
        %2788 = vmatpush1.msra.mxu0 0.0
        %2789 = vmatprep.subr.mxu0 0.0
        %2790 = vmatpush1.msra.mxu0 0.0
        %2791 = vmatprep.subr.mxu0 0.0
        %2792 = vmatpush1.msra.mxu0 0.0
        %2793 = vmatprep.subr.mxu0 0.0
        %2794 = vmatpush1.msra.mxu0 0.0
        %2795 = vmatprep.subr.mxu0 0.0
        %2796 = vmatpush1.msra.mxu0 0.0
        %2797 = vmatprep.subr.mxu0 0.0
        %2798 = vmatpush1.msra.mxu0 0.0
        %2799 = vmatprep.subr.mxu0 0.0
        %2800 = vmatpush1.msra.mxu0 0.0
        %2801 = vmatprep.subr.mxu0 0.0
        %2802 = vmatpush1.msra.mxu0 0.0
        %2803 = vmatprep.subr.mxu0 0.0
        %2804 = vmatpush1.msra.mxu0 0.0
        %2805 = vmatprep.mubr.f32.mxu0 0.0
        %2806 = vmatmul.mubr.f32.gmra.mrb[0].mxu0 %v2733
        %v2807 = vpop.f32.mrb[0].mxu0
        %v2808 = vadd.f32 0.0, %v2807
        %v2809 = vpop.f32.mrb[0].mxu0
        %2810 = vmatprep.mubr.f32.mxu0 0.0
        %2811 = vmatmul.mubr.f32.gmra.mrb[0].mxu0 %v2736
        %v2812 = vpop.f32.mrb[0].mxu0
        %v2813 = vadd.f32 0.0, %v2812
        %v2814 = vpop.f32.mrb[0].mxu0
        %2815 = vmatprep.mubr.f32.mxu0 0.0
        %2816 = vmatmul.mubr.f32.gmra.mrb[0].mxu0 %v2739
        %v2817 = vpop.f32.mrb[0].mxu0
        %v2818 = vadd.f32 0.0, %v2817
        %v2819 = vpop.f32.mrb[0].mxu0
        %2820 = vdwg.mxu0
        %v2821 = vadd.f32 %v2205, %v2808
        %v2822 = vadd.f32 %v2210, %v2813
        %v2823 = vadd.f32 %v2215, %v2818
        %s2824 = scalar_lea.vmem %s7, 192
        %v2825 = vld [vmem:[%s2824] sm:$0xff]
        %v2826 = vld [vmem:[%s2824 + $0x8] sm:$0xff]
        %v2827 = vld [vmem:[%s2824 + $0x10] sm:$0xff]
        %v2828 = vld [vmem:[%s2824 + $0x18] sm:$0xff]
        %v2829 = vld [vmem:[%s2824 + $0x20] sm:$0xff]
        %v2830 = vld [vmem:[%s2824 + $0x28] sm:$0xff]
        %v2831 = vld [vmem:[%s2824 + $0x30] sm:$0xff]
        %v2832 = vld [vmem:[%s2824 + $0x38] sm:$0xff]
        %s2833 = scalar_lea.vmem %s8, 3
        %v2834 = vld [vmem:[%s2833] sm:$0x1]
        %v2836 = vlaneseq
        %v2837 = vshrl.u32 %v2836, 7
        %v2838 = vsub.s32 0, %v2837
        %v2839 = vrot.slane %v2834, %v2838
        %2841 = vmatprep.subr.mxu0 0.0
        %2842 = vmatpush1.msra.mxu0 %v2825
        %2843 = vmatprep.subr.mxu0 0.0
        %2844 = vmatpush1.msra.mxu0 %v2826
        %2845 = vmatprep.subr.mxu0 0.0
        %2846 = vmatpush1.msra.mxu0 %v2827
        %2847 = vmatprep.subr.mxu0 0.0
        %2848 = vmatpush1.msra.mxu0 %v2828
        %2849 = vmatprep.subr.mxu0 0.0
        %2850 = vmatpush1.msra.mxu0 %v2829
        %2851 = vmatprep.subr.mxu0 0.0
        %2852 = vmatpush1.msra.mxu0 %v2830
        %2853 = vmatprep.subr.mxu0 0.0
        %2854 = vmatpush1.msra.mxu0 %v2831
        %2855 = vmatprep.subr.mxu0 0.0
        %2856 = vmatpush1.msra.mxu0 %v2832
        %2857 = vmatprep.subr.mxu0 0.0
        %2858 = vmatpush1.msra.mxu0 0.0
        %2859 = vmatprep.subr.mxu0 0.0
        %2860 = vmatpush1.msra.mxu0 0.0
        %2861 = vmatprep.subr.mxu0 0.0
        %2862 = vmatpush1.msra.mxu0 0.0
        %2863 = vmatprep.subr.mxu0 0.0
        %2864 = vmatpush1.msra.mxu0 0.0
        %2865 = vmatprep.subr.mxu0 0.0
        %2866 = vmatpush1.msra.mxu0 0.0
        %2867 = vmatprep.subr.mxu0 0.0
        %2868 = vmatpush1.msra.mxu0 0.0
        %2869 = vmatprep.subr.mxu0 0.0
        %2870 = vmatpush1.msra.mxu0 0.0
        %2871 = vmatprep.subr.mxu0 0.0
        %2872 = vmatpush1.msra.mxu0 0.0
        %2873 = vmatprep.subr.mxu0 0.0
        %2874 = vmatpush1.msra.mxu0 0.0
        %2875 = vmatprep.subr.mxu0 0.0
        %2876 = vmatpush1.msra.mxu0 0.0
        %2877 = vmatprep.subr.mxu0 0.0
        %2878 = vmatpush1.msra.mxu0 0.0
        %2879 = vmatprep.subr.mxu0 0.0
        %2880 = vmatpush1.msra.mxu0 0.0
        %2881 = vmatprep.subr.mxu0 0.0
        %2882 = vmatpush1.msra.mxu0 0.0
        %2883 = vmatprep.subr.mxu0 0.0
        %2884 = vmatpush1.msra.mxu0 0.0
        %2885 = vmatprep.subr.mxu0 0.0
        %2886 = vmatpush1.msra.mxu0 0.0
        %2887 = vmatprep.subr.mxu0 0.0
        %2888 = vmatpush1.msra.mxu0 0.0
        %2889 = vmatprep.subr.mxu0 0.0
        %2890 = vmatpush1.msra.mxu0 0.0
        %2891 = vmatprep.subr.mxu0 0.0
        %2892 = vmatpush1.msra.mxu0 0.0
        %2893 = vmatprep.subr.mxu0 0.0
        %2894 = vmatpush1.msra.mxu0 0.0
        %2895 = vmatprep.subr.mxu0 0.0
        %2896 = vmatpush1.msra.mxu0 0.0
        %2897 = vmatprep.subr.mxu0 0.0
        %2898 = vmatpush1.msra.mxu0 0.0
        %2899 = vmatprep.subr.mxu0 0.0
        %2900 = vmatpush1.msra.mxu0 0.0
        %2901 = vmatprep.subr.mxu0 0.0
        %2902 = vmatpush1.msra.mxu0 0.0
        %2903 = vmatprep.subr.mxu0 0.0
        %2904 = vmatpush1.msra.mxu0 0.0
        %2905 = vmatprep.mubr.f32.mxu0 0.0
        %2906 = vmatmul.mubr.f32.gmra.mrb[0].mxu0 %v1024
        %v2907 = vpop.f32.mrb[0].mxu0
        %v2908 = vadd.f32 %v2839, %v2907
        %v2909 = vpop.f32.mrb[0].mxu0
        %2910 = vmatprep.mubr.f32.mxu0 0.0
        %2911 = vmatmul.mubr.f32.gmra.mrb[0].mxu0 %v1027
        %v2912 = vpop.f32.mrb[0].mxu0
        %v2913 = vadd.f32 %v2839, %v2912
        %v2914 = vpop.f32.mrb[0].mxu0
        %2915 = vmatprep.mubr.f32.mxu0 0.0
        %2916 = vmatmul.mubr.f32.gmra.mrb[0].mxu0 %v1030
        %v2917 = vpop.f32.mrb[0].mxu0
        %v2918 = vadd.f32 %v2839, %v2917
        %v2919 = vpop.f32.mrb[0].mxu0
        %2920 = vdwg.mxu0
        %s2921 = scalar_lea.vmem %s9, 192
        %v2922 = vld [vmem:[%s2921] sm:$0xff]
        %v2923 = vld [vmem:[%s2921 + $0x8] sm:$0xff]
        %v2924 = vld [vmem:[%s2921 + $0x10] sm:$0xff]
        %v2925 = vld [vmem:[%s2921 + $0x18] sm:$0xff]
        %v2926 = vld [vmem:[%s2921 + $0x20] sm:$0xff]
        %v2927 = vld [vmem:[%s2921 + $0x28] sm:$0xff]
        %v2928 = vld [vmem:[%s2921 + $0x30] sm:$0xff]
        %v2929 = vld [vmem:[%s2921 + $0x38] sm:$0xff]
        %s2930 = scalar_lea.vmem %s10, 3
        %v2931 = vld [vmem:[%s2930] sm:$0x1]
        %v2933 = vlaneseq
        %v2934 = vshrl.u32 %v2933, 7
        %v2935 = vsub.s32 0, %v2934
        %v2936 = vrot.slane %v2931, %v2935
        %2938 = vmatprep.subr.mxu0 0.0
        %2939 = vmatpush1.msra.mxu0 %v2922
        %2940 = vmatprep.subr.mxu0 0.0
        %2941 = vmatpush1.msra.mxu0 %v2923
        %2942 = vmatprep.subr.mxu0 0.0
        %2943 = vmatpush1.msra.mxu0 %v2924
        %2944 = vmatprep.subr.mxu0 0.0
        %2945 = vmatpush1.msra.mxu0 %v2925
        %2946 = vmatprep.subr.mxu0 0.0
        %2947 = vmatpush1.msra.mxu0 %v2926
        %2948 = vmatprep.subr.mxu0 0.0
        %2949 = vmatpush1.msra.mxu0 %v2927
        %2950 = vmatprep.subr.mxu0 0.0
        %2951 = vmatpush1.msra.mxu0 %v2928
        %2952 = vmatprep.subr.mxu0 0.0
        %2953 = vmatpush1.msra.mxu0 %v2929
        %2954 = vmatprep.subr.mxu0 0.0
        %2955 = vmatpush1.msra.mxu0 0.0
        %2956 = vmatprep.subr.mxu0 0.0
        %2957 = vmatpush1.msra.mxu0 0.0
        %2958 = vmatprep.subr.mxu0 0.0
        %2959 = vmatpush1.msra.mxu0 0.0
        %2960 = vmatprep.subr.mxu0 0.0
        %2961 = vmatpush1.msra.mxu0 0.0
        %2962 = vmatprep.subr.mxu0 0.0
        %2963 = vmatpush1.msra.mxu0 0.0
        %2964 = vmatprep.subr.mxu0 0.0
        %2965 = vmatpush1.msra.mxu0 0.0
        %2966 = vmatprep.subr.mxu0 0.0
        %2967 = vmatpush1.msra.mxu0 0.0
        %2968 = vmatprep.subr.mxu0 0.0
        %2969 = vmatpush1.msra.mxu0 0.0
        %2970 = vmatprep.subr.mxu0 0.0
        %2971 = vmatpush1.msra.mxu0 0.0
        %2972 = vmatprep.subr.mxu0 0.0
        %2973 = vmatpush1.msra.mxu0 0.0
        %2974 = vmatprep.subr.mxu0 0.0
        %2975 = vmatpush1.msra.mxu0 0.0
        %2976 = vmatprep.subr.mxu0 0.0
        %2977 = vmatpush1.msra.mxu0 0.0
        %2978 = vmatprep.subr.mxu0 0.0
        %2979 = vmatpush1.msra.mxu0 0.0
        %2980 = vmatprep.subr.mxu0 0.0
        %2981 = vmatpush1.msra.mxu0 0.0
        %2982 = vmatprep.subr.mxu0 0.0
        %2983 = vmatpush1.msra.mxu0 0.0
        %2984 = vmatprep.subr.mxu0 0.0
        %2985 = vmatpush1.msra.mxu0 0.0
        %2986 = vmatprep.subr.mxu0 0.0
        %2987 = vmatpush1.msra.mxu0 0.0
        %2988 = vmatprep.subr.mxu0 0.0
        %2989 = vmatpush1.msra.mxu0 0.0
        %2990 = vmatprep.subr.mxu0 0.0
        %2991 = vmatpush1.msra.mxu0 0.0
        %2992 = vmatprep.subr.mxu0 0.0
        %2993 = vmatpush1.msra.mxu0 0.0
        %2994 = vmatprep.subr.mxu0 0.0
        %2995 = vmatpush1.msra.mxu0 0.0
        %2996 = vmatprep.subr.mxu0 0.0
        %2997 = vmatpush1.msra.mxu0 0.0
        %2998 = vmatprep.subr.mxu0 0.0
        %2999 = vmatpush1.msra.mxu0 0.0
        %3000 = vmatprep.subr.mxu0 0.0
        %3001 = vmatpush1.msra.mxu0 0.0
        %3002 = vmatprep.mubr.f32.mxu0 0.0
        %3003 = vmatmul.mubr.f32.gmra.mrb[0].mxu0 %v1024
        %v3004 = vpop.f32.mrb[0].mxu0
        %v3005 = vadd.f32 %v2936, %v3004
        %v3006 = vpop.f32.mrb[0].mxu0
        %3007 = vmatprep.mubr.f32.mxu0 0.0
        %3008 = vmatmul.mubr.f32.gmra.mrb[0].mxu0 %v1027
        %v3009 = vpop.f32.mrb[0].mxu0
        %v3010 = vadd.f32 %v2936, %v3009
        %v3011 = vpop.f32.mrb[0].mxu0
        %3012 = vmatprep.mubr.f32.mxu0 0.0
        %3013 = vmatmul.mubr.f32.gmra.mrb[0].mxu0 %v1030
        %v3014 = vpop.f32.mrb[0].mxu0
        %v3015 = vadd.f32 %v2936, %v3014
        %v3016 = vpop.f32.mrb[0].mxu0
        %3017 = vdwg.mxu0
        %s3018 = scalar_lea.vmem %s11, 192
        %v3019 = vld [vmem:[%s3018] sm:$0xff]
        %v3020 = vld [vmem:[%s3018 + $0x8] sm:$0xff]
        %v3021 = vld [vmem:[%s3018 + $0x10] sm:$0xff]
        %v3022 = vld [vmem:[%s3018 + $0x18] sm:$0xff]
        %v3023 = vld [vmem:[%s3018 + $0x20] sm:$0xff]
        %v3024 = vld [vmem:[%s3018 + $0x28] sm:$0xff]
        %v3025 = vld [vmem:[%s3018 + $0x30] sm:$0xff]
        %v3026 = vld [vmem:[%s3018 + $0x38] sm:$0xff]
        %s3027 = scalar_lea.vmem %s12, 3
        %v3028 = vld [vmem:[%s3027] sm:$0x1]
        %v3030 = vlaneseq
        %v3031 = vshrl.u32 %v3030, 7
        %v3032 = vsub.s32 0, %v3031
        %v3033 = vrot.slane %v3028, %v3032
        %3035 = vmatprep.subr.mxu0 0.0
        %3036 = vmatpush1.msra.mxu0 %v3019
        %3037 = vmatprep.subr.mxu0 0.0
        %3038 = vmatpush1.msra.mxu0 %v3020
        %3039 = vmatprep.subr.mxu0 0.0
        %3040 = vmatpush1.msra.mxu0 %v3021
        %3041 = vmatprep.subr.mxu0 0.0
        %3042 = vmatpush1.msra.mxu0 %v3022
        %3043 = vmatprep.subr.mxu0 0.0
        %3044 = vmatpush1.msra.mxu0 %v3023
        %3045 = vmatprep.subr.mxu0 0.0
        %3046 = vmatpush1.msra.mxu0 %v3024
        %3047 = vmatprep.subr.mxu0 0.0
        %3048 = vmatpush1.msra.mxu0 %v3025
        %3049 = vmatprep.subr.mxu0 0.0
        %3050 = vmatpush1.msra.mxu0 %v3026
        %3051 = vmatprep.subr.mxu0 0.0
        %3052 = vmatpush1.msra.mxu0 0.0
        %3053 = vmatprep.subr.mxu0 0.0
        %3054 = vmatpush1.msra.mxu0 0.0
        %3055 = vmatprep.subr.mxu0 0.0
        %3056 = vmatpush1.msra.mxu0 0.0
        %3057 = vmatprep.subr.mxu0 0.0
        %3058 = vmatpush1.msra.mxu0 0.0
        %3059 = vmatprep.subr.mxu0 0.0
        %3060 = vmatpush1.msra.mxu0 0.0
        %3061 = vmatprep.subr.mxu0 0.0
        %3062 = vmatpush1.msra.mxu0 0.0
        %3063 = vmatprep.subr.mxu0 0.0
        %3064 = vmatpush1.msra.mxu0 0.0
        %3065 = vmatprep.subr.mxu0 0.0
        %3066 = vmatpush1.msra.mxu0 0.0
        %3067 = vmatprep.subr.mxu0 0.0
        %3068 = vmatpush1.msra.mxu0 0.0
        %3069 = vmatprep.subr.mxu0 0.0
        %3070 = vmatpush1.msra.mxu0 0.0
        %3071 = vmatprep.subr.mxu0 0.0
        %3072 = vmatpush1.msra.mxu0 0.0
        %3073 = vmatprep.subr.mxu0 0.0
        %3074 = vmatpush1.msra.mxu0 0.0
        %3075 = vmatprep.subr.mxu0 0.0
        %3076 = vmatpush1.msra.mxu0 0.0
        %3077 = vmatprep.subr.mxu0 0.0
        %3078 = vmatpush1.msra.mxu0 0.0
        %3079 = vmatprep.subr.mxu0 0.0
        %3080 = vmatpush1.msra.mxu0 0.0
        %3081 = vmatprep.subr.mxu0 0.0
        %3082 = vmatpush1.msra.mxu0 0.0
        %3083 = vmatprep.subr.mxu0 0.0
        %3084 = vmatpush1.msra.mxu0 0.0
        %3085 = vmatprep.subr.mxu0 0.0
        %3086 = vmatpush1.msra.mxu0 0.0
        %3087 = vmatprep.subr.mxu0 0.0
        %3088 = vmatpush1.msra.mxu0 0.0
        %3089 = vmatprep.subr.mxu0 0.0
        %3090 = vmatpush1.msra.mxu0 0.0
        %3091 = vmatprep.subr.mxu0 0.0
        %3092 = vmatpush1.msra.mxu0 0.0
        %3093 = vmatprep.subr.mxu0 0.0
        %3094 = vmatpush1.msra.mxu0 0.0
        %3095 = vmatprep.subr.mxu0 0.0
        %3096 = vmatpush1.msra.mxu0 0.0
        %3097 = vmatprep.subr.mxu0 0.0
        %3098 = vmatpush1.msra.mxu0 0.0
        %3099 = vmatprep.mubr.f32.mxu0 0.0
        %3100 = vmatmul.mubr.f32.gmra.mrb[0].mxu0 %v1024
        %v3101 = vpop.f32.mrb[0].mxu0
        %v3102 = vadd.f32 %v3033, %v3101
        %v3103 = vpop.f32.mrb[0].mxu0
        %3104 = vmatprep.mubr.f32.mxu0 0.0
        %3105 = vmatmul.mubr.f32.gmra.mrb[0].mxu0 %v1027
        %v3106 = vpop.f32.mrb[0].mxu0
        %v3107 = vadd.f32 %v3033, %v3106
        %v3108 = vpop.f32.mrb[0].mxu0
        %3109 = vmatprep.mubr.f32.mxu0 0.0
        %3110 = vmatmul.mubr.f32.gmra.mrb[0].mxu0 %v1030
        %v3111 = vpop.f32.mrb[0].mxu0
        %v3112 = vadd.f32 %v3033, %v3111
        %v3113 = vpop.f32.mrb[0].mxu0
        %3114 = vdwg.mxu0
        %v3116 = vsel %vm1302, %v2908, 0
        %v3119 = vsel %vm1302, %v2913, 0
        %v3122 = vsel %vm1302, %v2918, 0
        %v3125 = vsel %vm1302, %v3005, 0
        %v3128 = vsel %vm1302, %v3010, 0
        %v3131 = vsel %vm1302, %v3015, 0
        %3133 = vmatprep.subr.mxu0 0.0
        %3134 = vmatpush1.xpose.msra.mxu0 %v3125
        %3135 = vmatprep.subr.mxu0 0.0
        %3136 = vmatpush1.xpose.msra.mxu0 %v3128
        %3137 = vmatprep.subr.mxu0 0.0
        %3138 = vmatpush1.xpose.msra.mxu0 %v3131
        %3139 = vmatprep.subr.mxu0 0.0
        %3140 = vmatpush1.xpose.msra.mxu0 0.0
        %3141 = vmatprep.subr.mxu0 0.0
        %3142 = vmatpush1.xpose.msra.mxu0 0.0
        %3143 = vmatprep.subr.mxu0 0.0
        %3144 = vmatpush1.xpose.msra.mxu0 0.0
        %3145 = vmatprep.subr.mxu0 0.0
        %3146 = vmatpush1.xpose.msra.mxu0 0.0
        %3147 = vmatprep.subr.mxu0 0.0
        %3148 = vmatpush1.xpose.msra.mxu0 0.0
        %3149 = vmatprep.subr.mxu0 0.0
        %3150 = vmatpush1.xpose.msra.mxu0 0.0
        %3151 = vmatprep.subr.mxu0 0.0
        %3152 = vmatpush1.xpose.msra.mxu0 0.0
        %3153 = vmatprep.subr.mxu0 0.0
        %3154 = vmatpush1.xpose.msra.mxu0 0.0
        %3155 = vmatprep.subr.mxu0 0.0
        %3156 = vmatpush1.xpose.msra.mxu0 0.0
        %3157 = vmatprep.subr.mxu0 0.0
        %3158 = vmatpush1.xpose.msra.mxu0 0.0
        %3159 = vmatprep.subr.mxu0 0.0
        %3160 = vmatpush1.xpose.msra.mxu0 0.0
        %3161 = vmatprep.subr.mxu0 0.0
        %3162 = vmatpush1.xpose.msra.mxu0 0.0
        %3163 = vmatprep.subr.mxu0 0.0
        %3164 = vmatpush1.xpose.msra.mxu0 0.0
        %3165 = vmatprep.subr.mxu0 0.0
        %3166 = vmatpush1.xpose.msra.mxu0 0.0
        %3167 = vmatprep.subr.mxu0 0.0
        %3168 = vmatpush1.xpose.msra.mxu0 0.0
        %3169 = vmatprep.subr.mxu0 0.0
        %3170 = vmatpush1.xpose.msra.mxu0 0.0
        %3171 = vmatprep.subr.mxu0 0.0
        %3172 = vmatpush1.xpose.msra.mxu0 0.0
        %3173 = vmatprep.subr.mxu0 0.0
        %3174 = vmatpush1.xpose.msra.mxu0 0.0
        %3175 = vmatprep.subr.mxu0 0.0
        %3176 = vmatpush1.xpose.msra.mxu0 0.0
        %3177 = vmatprep.subr.mxu0 0.0
        %3178 = vmatpush1.xpose.msra.mxu0 0.0
        %3179 = vmatprep.subr.mxu0 0.0
        %3180 = vmatpush1.xpose.msra.mxu0 0.0
        %3181 = vmatprep.subr.mxu0 0.0
        %3182 = vmatpush1.xpose.msra.mxu0 0.0
        %3183 = vmatprep.subr.mxu0 0.0
        %3184 = vmatpush1.xpose.msra.mxu0 0.0
        %3185 = vmatprep.subr.mxu0 0.0
        %3186 = vmatpush1.xpose.msra.mxu0 0.0
        %3187 = vmatprep.subr.mxu0 0.0
        %3188 = vmatpush1.xpose.msra.mxu0 0.0
        %3189 = vmatprep.subr.mxu0 0.0
        %3190 = vmatpush1.xpose.msra.mxu0 0.0
        %3191 = vmatprep.subr.mxu0 0.0
        %3192 = vmatpush1.xpose.msra.mxu0 0.0
        %3193 = vmatprep.subr.mxu0 0.0
        %3194 = vmatpush1.xpose.msra.mxu0 0.0
        %3195 = vmatprep.subr.mxu0 0.0
        %3196 = vmatpush1.xpose.msra.mxu0 0.0
        %3197 = vmatprep.mubr.f32.mxu0 0.0
        %3198 = vmatmul.mubr.f32.gmra.mrb[0].mxu0 %v3116
        %v3199 = vpop.f32.mrb[0].mxu0
        %v3200 = vadd.f32 %v948, %v3199
        %v3201 = vpop.f32.mrb[0].mxu0
        %3202 = vmatprep.mubr.f32.mxu0 0.0
        %3203 = vmatmul.mubr.f32.gmra.mrb[0].mxu0 %v3119
        %v3204 = vpop.f32.mrb[0].mxu0
        %v3205 = vadd.f32 %v948, %v3204
        %v3206 = vpop.f32.mrb[0].mxu0
        %3207 = vmatprep.mubr.f32.mxu0 0.0
        %3208 = vmatmul.mubr.f32.gmra.mrb[0].mxu0 %v3122
        %v3209 = vpop.f32.mrb[0].mxu0
        %v3210 = vadd.f32 %v948, %v3209
        %v3211 = vpop.f32.mrb[0].mxu0
        %3212 = vdwg.mxu0
        %v3213 = vsel %vm1401, %v3200, -inf
        %3214 = vmax.xlane.f32.xlu0 %v3213
        %v3215 = vpop.xlane.xlu0 %3214
        %v3216 = vsel %vm1401, %v3205, -inf
        %3217 = vmax.xlane.f32.xlu0 %v3216
        %v3218 = vpop.xlane.xlu0 %3217
        %v3219 = vsel %vm1401, %v3210, -inf
        %3220 = vmax.xlane.f32.xlu0 %v3219
        %v3221 = vpop.xlane.xlu0 %3220
        %v3222 = vsub.f32 %v3200, %v3215
        %v3223 = vsub.f32 %v3205, %v3218
        %v3224 = vsub.f32 %v3210, %v3221
        %v3225 = vmul.f32 %v3222, 1.442695
        %v3226 = vpow.pop %v3225
        %v3227 = vmul.f32 %v3223, 1.442695
        %v3228 = vpow.pop %v3227
        %v3229 = vmul.f32 %v3224, 1.442695
        %v3230 = vpow.pop %v3229
        %v3231 = vsel %vm1401, %v3226, 0.0
        %3232 = vadd.xlane.f32.xlu0 %v3231
        %v3233 = vpop.xlane.xlu0 %3232
        %v3234 = vsel %vm1401, %v3228, 0.0
        %3235 = vadd.xlane.f32.xlu0 %v3234
        %v3236 = vpop.xlane.xlu0 %3235
        %v3237 = vsel %vm1401, %v3230, 0.0
        %3238 = vadd.xlane.f32.xlu0 %v3237
        %v3239 = vpop.xlane.xlu0 %3238
        %v3240 = vrcp.pop %v3233
        %v3241 = vrcp.pop %v3236
        %v3242 = vrcp.pop %v3239
        %v3243 = vmul.f32 %v3226, %v3240
        %v3244 = vmul.f32 %v3228, %v3241
        %v3245 = vmul.f32 %v3230, %v3242
        %v3247 = vsel %vm1401, %v3243, 0
        %v3250 = vsel %vm1401, %v3244, 0
        %v3253 = vsel %vm1401, %v3245, 0
        %3255 = vmatprep.subr.mxu0 0.0
        %3256 = vmatpush1.msra.mxu0 %v3102
        %3257 = vmatprep.subr.mxu0 0.0
        %3258 = vmatpush1.msra.mxu0 %v3107
        %3259 = vmatprep.subr.mxu0 0.0
        %3260 = vmatpush1.msra.mxu0 %v3112
        %3261 = vmatprep.subr.mxu0 0.0
        %3262 = vmatpush1.msra.mxu0 0.0
        %3263 = vmatprep.subr.mxu0 0.0
        %3264 = vmatpush1.msra.mxu0 0.0
        %3265 = vmatprep.subr.mxu0 0.0
        %3266 = vmatpush1.msra.mxu0 0.0
        %3267 = vmatprep.subr.mxu0 0.0
        %3268 = vmatpush1.msra.mxu0 0.0
        %3269 = vmatprep.subr.mxu0 0.0
        %3270 = vmatpush1.msra.mxu0 0.0
        %3271 = vmatprep.subr.mxu0 0.0
        %3272 = vmatpush1.msra.mxu0 0.0
        %3273 = vmatprep.subr.mxu0 0.0
        %3274 = vmatpush1.msra.mxu0 0.0
        %3275 = vmatprep.subr.mxu0 0.0
        %3276 = vmatpush1.msra.mxu0 0.0
        %3277 = vmatprep.subr.mxu0 0.0
        %3278 = vmatpush1.msra.mxu0 0.0
        %3279 = vmatprep.subr.mxu0 0.0
        %3280 = vmatpush1.msra.mxu0 0.0
        %3281 = vmatprep.subr.mxu0 0.0
        %3282 = vmatpush1.msra.mxu0 0.0
        %3283 = vmatprep.subr.mxu0 0.0
        %3284 = vmatpush1.msra.mxu0 0.0
        %3285 = vmatprep.subr.mxu0 0.0
        %3286 = vmatpush1.msra.mxu0 0.0
        %3287 = vmatprep.subr.mxu0 0.0
        %3288 = vmatpush1.msra.mxu0 0.0
        %3289 = vmatprep.subr.mxu0 0.0
        %3290 = vmatpush1.msra.mxu0 0.0
        %3291 = vmatprep.subr.mxu0 0.0
        %3292 = vmatpush1.msra.mxu0 0.0
        %3293 = vmatprep.subr.mxu0 0.0
        %3294 = vmatpush1.msra.mxu0 0.0
        %3295 = vmatprep.subr.mxu0 0.0
        %3296 = vmatpush1.msra.mxu0 0.0
        %3297 = vmatprep.subr.mxu0 0.0
        %3298 = vmatpush1.msra.mxu0 0.0
        %3299 = vmatprep.subr.mxu0 0.0
        %3300 = vmatpush1.msra.mxu0 0.0
        %3301 = vmatprep.subr.mxu0 0.0
        %3302 = vmatpush1.msra.mxu0 0.0
        %3303 = vmatprep.subr.mxu0 0.0
        %3304 = vmatpush1.msra.mxu0 0.0
        %3305 = vmatprep.subr.mxu0 0.0
        %3306 = vmatpush1.msra.mxu0 0.0
        %3307 = vmatprep.subr.mxu0 0.0
        %3308 = vmatpush1.msra.mxu0 0.0
        %3309 = vmatprep.subr.mxu0 0.0
        %3310 = vmatpush1.msra.mxu0 0.0
        %3311 = vmatprep.subr.mxu0 0.0
        %3312 = vmatpush1.msra.mxu0 0.0
        %3313 = vmatprep.subr.mxu0 0.0
        %3314 = vmatpush1.msra.mxu0 0.0
        %3315 = vmatprep.subr.mxu0 0.0
        %3316 = vmatpush1.msra.mxu0 0.0
        %3317 = vmatprep.subr.mxu0 0.0
        %3318 = vmatpush1.msra.mxu0 0.0
        %3319 = vmatprep.mubr.f32.mxu0 0.0
        %3320 = vmatmul.mubr.f32.gmra.mrb[0].mxu0 %v3247
        %v3321 = vpop.f32.mrb[0].mxu0
        %v3322 = vadd.f32 0.0, %v3321
        %v3323 = vpop.f32.mrb[0].mxu0
        %3324 = vmatprep.mubr.f32.mxu0 0.0
        %3325 = vmatmul.mubr.f32.gmra.mrb[0].mxu0 %v3250
        %v3326 = vpop.f32.mrb[0].mxu0
        %v3327 = vadd.f32 0.0, %v3326
        %v3328 = vpop.f32.mrb[0].mxu0
        %3329 = vmatprep.mubr.f32.mxu0 0.0
        %3330 = vmatmul.mubr.f32.gmra.mrb[0].mxu0 %v3253
        %v3331 = vpop.f32.mrb[0].mxu0
        %v3332 = vadd.f32 0.0, %v3331
        %v3333 = vpop.f32.mrb[0].mxu0
        %3334 = vdwg.mxu0
        %s3335 = scalar_lea.vmem %s13, 48
        %v3336 = vld [vmem:[%s3335] sm:$0xff]
        %v3337 = vld [vmem:[%s3335 + $0x8] sm:$0xff]
        %v3339 = vsel %vm1302, %v3322, 0
        %v3342 = vsel %vm1302, %v3327, 0
        %v3345 = vsel %vm1302, %v3332, 0
        %3347 = vmatprep.subr.mxu0 0.0
        %3348 = vmatpush1.msra.mxu0 %v3336
        %3349 = vmatprep.subr.mxu0 0.0
        %3350 = vmatpush1.msra.mxu0 %v3337
        %3351 = vmatprep.subr.mxu0 0.0
        %3352 = vmatpush1.msra.mxu0 0.0
        %3353 = vmatprep.subr.mxu0 0.0
        %3354 = vmatpush1.msra.mxu0 0.0
        %3355 = vmatprep.subr.mxu0 0.0
        %3356 = vmatpush1.msra.mxu0 0.0
        %3357 = vmatprep.subr.mxu0 0.0
        %3358 = vmatpush1.msra.mxu0 0.0
        %3359 = vmatprep.subr.mxu0 0.0
        %3360 = vmatpush1.msra.mxu0 0.0
        %3361 = vmatprep.subr.mxu0 0.0
        %3362 = vmatpush1.msra.mxu0 0.0
        %3363 = vmatprep.subr.mxu0 0.0
        %3364 = vmatpush1.msra.mxu0 0.0
        %3365 = vmatprep.subr.mxu0 0.0
        %3366 = vmatpush1.msra.mxu0 0.0
        %3367 = vmatprep.subr.mxu0 0.0
        %3368 = vmatpush1.msra.mxu0 0.0
        %3369 = vmatprep.subr.mxu0 0.0
        %3370 = vmatpush1.msra.mxu0 0.0
        %3371 = vmatprep.subr.mxu0 0.0
        %3372 = vmatpush1.msra.mxu0 0.0
        %3373 = vmatprep.subr.mxu0 0.0
        %3374 = vmatpush1.msra.mxu0 0.0
        %3375 = vmatprep.subr.mxu0 0.0
        %3376 = vmatpush1.msra.mxu0 0.0
        %3377 = vmatprep.subr.mxu0 0.0
        %3378 = vmatpush1.msra.mxu0 0.0
        %3379 = vmatprep.subr.mxu0 0.0
        %3380 = vmatpush1.msra.mxu0 0.0
        %3381 = vmatprep.subr.mxu0 0.0
        %3382 = vmatpush1.msra.mxu0 0.0
        %3383 = vmatprep.subr.mxu0 0.0
        %3384 = vmatpush1.msra.mxu0 0.0
        %3385 = vmatprep.subr.mxu0 0.0
        %3386 = vmatpush1.msra.mxu0 0.0
        %3387 = vmatprep.subr.mxu0 0.0
        %3388 = vmatpush1.msra.mxu0 0.0
        %3389 = vmatprep.subr.mxu0 0.0
        %3390 = vmatpush1.msra.mxu0 0.0
        %3391 = vmatprep.subr.mxu0 0.0
        %3392 = vmatpush1.msra.mxu0 0.0
        %3393 = vmatprep.subr.mxu0 0.0
        %3394 = vmatpush1.msra.mxu0 0.0
        %3395 = vmatprep.subr.mxu0 0.0
        %3396 = vmatpush1.msra.mxu0 0.0
        %3397 = vmatprep.subr.mxu0 0.0
        %3398 = vmatpush1.msra.mxu0 0.0
        %3399 = vmatprep.subr.mxu0 0.0
        %3400 = vmatpush1.msra.mxu0 0.0
        %3401 = vmatprep.subr.mxu0 0.0
        %3402 = vmatpush1.msra.mxu0 0.0
        %3403 = vmatprep.subr.mxu0 0.0
        %3404 = vmatpush1.msra.mxu0 0.0
        %3405 = vmatprep.subr.mxu0 0.0
        %3406 = vmatpush1.msra.mxu0 0.0
        %3407 = vmatprep.subr.mxu0 0.0
        %3408 = vmatpush1.msra.mxu0 0.0
        %3409 = vmatprep.subr.mxu0 0.0
        %3410 = vmatpush1.msra.mxu0 0.0
        %3411 = vmatprep.mubr.f32.mxu0 0.0
        %3412 = vmatmul.mubr.f32.gmra.mrb[0].mxu0 %v3339
        %v3413 = vpop.f32.mrb[0].mxu0
        %v3414 = vadd.f32 0.0, %v3413
        %v3415 = vpop.f32.mrb[0].mxu0
        %3416 = vmatprep.mubr.f32.mxu0 0.0
        %3417 = vmatmul.mubr.f32.gmra.mrb[0].mxu0 %v3342
        %v3418 = vpop.f32.mrb[0].mxu0
        %v3419 = vadd.f32 0.0, %v3418
        %v3420 = vpop.f32.mrb[0].mxu0
        %3421 = vmatprep.mubr.f32.mxu0 0.0
        %3422 = vmatmul.mubr.f32.gmra.mrb[0].mxu0 %v3345
        %v3423 = vpop.f32.mrb[0].mxu0
        %v3424 = vadd.f32 0.0, %v3423
        %v3425 = vpop.f32.mrb[0].mxu0
        %3426 = vdwg.mxu0
        %v3427 = vadd.f32 %v2821, %v3414
        %v3428 = vadd.f32 %v2822, %v3419
        %v3429 = vadd.f32 %v2823, %v3424
        %v3430 = vadd.f32 %v942, %v3427
        %v3431 = vadd.f32 %v943, %v3428
        %v3432 = vadd.f32 %v944, %v3429
        %v3433 = vld [vmem:[%s14] sm:$0x1]
        %v3435 = vlaneseq
        %v3436 = vshrl.u32 %v3435, 7
        %v3437 = vsub.s32 0, %v3436
        %v3438 = vrot.slane %v3433, %v3437
        %v3440 = vadd.f32 %v3430, %v3438
        %v3441 = vadd.f32 %v3431, %v3438
        %v3442 = vadd.f32 %v3432, %v3438
        %v3443 = vld [vmem:[%s15] sm:$0x1]
        %v3444 = vld [vmem:[%s16] sm:$0x1]
        %v3445 = vsel %vm795, %v3440, 0.0
        %3446 = vadd.xlane.f32.xlu0 %v3445
        %v3447 = vpop.xlane.xlu0 %3446
        %v3448 = vsel %vm795, %v3441, 0.0
        %3449 = vadd.xlane.f32.xlu0 %v3448
        %v3450 = vpop.xlane.xlu0 %3449
        %v3451 = vsel %vm795, %v3442, 0.0
        %3452 = vadd.xlane.f32.xlu0 %v3451
        %v3453 = vpop.xlane.xlu0 %3452
        %v3454 = vmul.f32 %v3447, %v896
        %v3455 = vmul.f32 %v3450, %v896
        %v3456 = vmul.f32 %v3453, %v896
        %v3457 = vsub.f32 %v3440, %v3454
        %v3458 = vsub.f32 %v3441, %v3455
        %v3459 = vsub.f32 %v3442, %v3456
        %v3460 = vmul.f32 %v3457, %v3457
        %v3461 = vmul.f32 %v3458, %v3458
        %v3462 = vmul.f32 %v3459, %v3459
        %v3463 = vsel %vm795, %v3460, 0.0
        %3464 = vadd.xlane.f32.xlu0 %v3463
        %v3465 = vpop.xlane.xlu0 %3464
        %v3466 = vsel %vm795, %v3461, 0.0
        %3467 = vadd.xlane.f32.xlu0 %v3466
        %v3468 = vpop.xlane.xlu0 %3467
        %v3469 = vsel %vm795, %v3462, 0.0
        %3470 = vadd.xlane.f32.xlu0 %v3469
        %v3471 = vpop.xlane.xlu0 %3470
        %v3472 = vmul.f32 %v3465, %v896
        %v3473 = vmul.f32 %v3468, %v896
        %v3474 = vmul.f32 %v3471, %v896
        %v3475 = vadd.f32 %v3472, 1e-05
        %v3476 = vadd.f32 %v3473, 1e-05
        %v3477 = vadd.f32 %v3474, 1e-05
        %v3478 = vrsqrt.pop %v3475
        %v3479 = vrsqrt.pop %v3476
        %v3480 = vrsqrt.pop %v3477
        %v3481 = vmul.f32 %v3457, %v3478
        %v3482 = vmul.f32 %v3458, %v3479
        %v3483 = vmul.f32 %v3459, %v3480
        %v3485 = vlaneseq
        %v3486 = vshrl.u32 %v3485, 7
        %v3487 = vsub.s32 0, %v3486
        %v3488 = vrot.slane %v3443, %v3487
        %v3490 = vmul.f32 %v3481, %v3488
        %v3491 = vmul.f32 %v3482, %v3488
        %v3492 = vmul.f32 %v3483, %v3488
        %v3494 = vlaneseq
        %v3495 = vshrl.u32 %v3494, 7
        %v3496 = vsub.s32 0, %v3495
        %v3497 = vrot.slane %v3444, %v3496
        %v3499 = vadd.f32 %v3490, %v3497
        %v3500 = vadd.f32 %v3491, %v3497
        %v3501 = vadd.f32 %v3492, %v3497
        %v3502 = vld [vmem:[%s17] sm:$0xff]
        %v3503 = vld [vmem:[%s17 + $0x8] sm:$0xff]
        %v3504 = vld [vmem:[%s17 + $0x10] sm:$0xff]
        %v3505 = vld [vmem:[%s17 + $0x18] sm:$0xff]
        %v3506 = vld [vmem:[%s17 + $0x20] sm:$0xff]
        %v3507 = vld [vmem:[%s17 + $0x28] sm:$0xff]
        %v3508 = vld [vmem:[%s17 + $0x30] sm:$0xff]
        %v3509 = vld [vmem:[%s17 + $0x38] sm:$0xff]
        %v3510 = vld [vmem:[%s17 + $0x40] sm:$0xff]
        %v3511 = vld [vmem:[%s17 + $0x48] sm:$0xff]
        %v3512 = vld [vmem:[%s17 + $0x50] sm:$0xff]
        %v3513 = vld [vmem:[%s17 + $0x58] sm:$0xff]
        %v3514 = vld [vmem:[%s17 + $0x60] sm:$0xff]
        %v3515 = vld [vmem:[%s17 + $0x68] sm:$0xff]
        %v3516 = vld [vmem:[%s17 + $0x70] sm:$0xff]
        %v3517 = vld [vmem:[%s17 + $0x78] sm:$0xff]
        %v3518 = vld [vmem:[%s18] sm:$0x3]
        %v3520 = vlaneseq
        %v3521 = vshrl.u32 %v3520, 7
        %v3522 = vsub.s32 0, %v3521
        %v3523 = vrot.slane %v3518, %v3522
        %v3524 = vlaneseq
        %v3525 = vshrl.u32 %v3524, 7
        %v3526 = vsub.s32 1, %v3525
        %v3527 = vrot.slane %v3518, %v3526
        %v3531 = vsel %vm795, %v3499, 0
        %v3534 = vsel %vm795, %v3500, 0
        %v3537 = vsel %vm795, %v3501, 0
        %3539 = vmatprep.subr.mxu0 %v3503
        %3540 = vmatpush1.msra.mxu0 %v3502
        %3541 = vmatprep.subr.mxu0 %v3505
        %3542 = vmatpush1.msra.mxu0 %v3504
        %3543 = vmatprep.subr.mxu0 %v3507
        %3544 = vmatpush1.msra.mxu0 %v3506
        %3545 = vmatprep.subr.mxu0 %v3509
        %3546 = vmatpush1.msra.mxu0 %v3508
        %3547 = vmatprep.subr.mxu0 %v3511
        %3548 = vmatpush1.msra.mxu0 %v3510
        %3549 = vmatprep.subr.mxu0 %v3513
        %3550 = vmatpush1.msra.mxu0 %v3512
        %3551 = vmatprep.subr.mxu0 %v3515
        %3552 = vmatpush1.msra.mxu0 %v3514
        %3553 = vmatprep.subr.mxu0 %v3517
        %3554 = vmatpush1.msra.mxu0 %v3516
        %3555 = vmatprep.subr.mxu0 0.0
        %3556 = vmatpush1.msra.mxu0 0.0
        %3557 = vmatprep.subr.mxu0 0.0
        %3558 = vmatpush1.msra.mxu0 0.0
        %3559 = vmatprep.subr.mxu0 0.0
        %3560 = vmatpush1.msra.mxu0 0.0
        %3561 = vmatprep.subr.mxu0 0.0
        %3562 = vmatpush1.msra.mxu0 0.0
        %3563 = vmatprep.subr.mxu0 0.0
        %3564 = vmatpush1.msra.mxu0 0.0
        %3565 = vmatprep.subr.mxu0 0.0
        %3566 = vmatpush1.msra.mxu0 0.0
        %3567 = vmatprep.subr.mxu0 0.0
        %3568 = vmatpush1.msra.mxu0 0.0
        %3569 = vmatprep.subr.mxu0 0.0
        %3570 = vmatpush1.msra.mxu0 0.0
        %3571 = vmatprep.subr.mxu0 0.0
        %3572 = vmatpush1.msra.mxu0 0.0
        %3573 = vmatprep.subr.mxu0 0.0
        %3574 = vmatpush1.msra.mxu0 0.0
        %3575 = vmatprep.subr.mxu0 0.0
        %3576 = vmatpush1.msra.mxu0 0.0
        %3577 = vmatprep.subr.mxu0 0.0
        %3578 = vmatpush1.msra.mxu0 0.0
        %3579 = vmatprep.subr.mxu0 0.0
        %3580 = vmatpush1.msra.mxu0 0.0
        %3581 = vmatprep.subr.mxu0 0.0
        %3582 = vmatpush1.msra.mxu0 0.0
        %3583 = vmatprep.subr.mxu0 0.0
        %3584 = vmatpush1.msra.mxu0 0.0
        %3585 = vmatprep.subr.mxu0 0.0
        %3586 = vmatpush1.msra.mxu0 0.0
        %3587 = vmatprep.subr.mxu0 0.0
        %3588 = vmatpush1.msra.mxu0 0.0
        %3589 = vmatprep.subr.mxu0 0.0
        %3590 = vmatpush1.msra.mxu0 0.0
        %3591 = vmatprep.subr.mxu0 0.0
        %3592 = vmatpush1.msra.mxu0 0.0
        %3593 = vmatprep.subr.mxu0 0.0
        %3594 = vmatpush1.msra.mxu0 0.0
        %3595 = vmatprep.subr.mxu0 0.0
        %3596 = vmatpush1.msra.mxu0 0.0
        %3597 = vmatprep.subr.mxu0 0.0
        %3598 = vmatpush1.msra.mxu0 0.0
        %3599 = vmatprep.subr.mxu0 0.0
        %3600 = vmatpush1.msra.mxu0 0.0
        %3601 = vmatprep.subr.mxu0 0.0
        %3602 = vmatpush1.msra.mxu0 0.0
        %3603 = vmatprep.mubr.f32.mxu0 0.0
        %3604 = vmatmul.mubr.f32.gmra.mrb[0].mxu0 %v3531
        %v3605 = vpop.f32.mrb[0].mxu0
        %v3606 = vadd.f32 %v3523, %v3605
        %v3607 = vpop.f32.mrb[0].mxu0
        %v3608 = vadd.f32 %v3527, %v3607
        %3609 = vmatprep.mubr.f32.mxu0 0.0
        %3610 = vmatmul.mubr.f32.gmra.mrb[0].mxu0 %v3534
        %v3611 = vpop.f32.mrb[0].mxu0
        %v3612 = vadd.f32 %v3523, %v3611
        %v3613 = vpop.f32.mrb[0].mxu0
        %v3614 = vadd.f32 %v3527, %v3613
        %3615 = vmatprep.mubr.f32.mxu0 0.0
        %3616 = vmatmul.mubr.f32.gmra.mrb[0].mxu0 %v3537
        %v3617 = vpop.f32.mrb[0].mxu0
        %v3618 = vadd.f32 %v3523, %v3617
        %v3619 = vpop.f32.mrb[0].mxu0
        %v3620 = vadd.f32 %v3527, %v3619
        %3621 = vdwg.mxu0
        %v3622 = vmul.f32 %v3606, 0.5
        %v3623 = vmul.f32 %v3608, 0.5
        %v3624 = vmul.f32 %v3612, 0.5
        %v3625 = vmul.f32 %v3614, 0.5
        %v3626 = vmul.f32 %v3618, 0.5
        %v3627 = vmul.f32 %v3620, 0.5
        %v3628 = vmul.f32 %v3606, 0.70710677
        %v3629 = vmul.f32 %v3608, 0.70710677
        %v3630 = vmul.f32 %v3612, 0.70710677
        %v3631 = vmul.f32 %v3614, 0.70710677
        %v3632 = vmul.f32 %v3618, 0.70710677
        %v3633 = vmul.f32 %v3620, 0.70710677
        %v3634 = vand.u32 2147483647, %v3628
        %v3635 = vand.u32 2147483647, %v3629
        %v3636 = vand.u32 2147483647, %v3630
        %v3637 = vand.u32 2147483647, %v3631
        %v3638 = vand.u32 2147483647, %v3632
        %v3639 = vand.u32 2147483647, %v3633
        %v3640 = vmul.f32 %v3634, 0.3275911
        %v3641 = vmul.f32 %v3635, 0.3275911
        %v3642 = vmul.f32 %v3636, 0.3275911
        %v3643 = vmul.f32 %v3637, 0.3275911
        %v3644 = vmul.f32 %v3638, 0.3275911
        %v3645 = vmul.f32 %v3639, 0.3275911
        %v3646 = vadd.f32 %v3640, 1.0
        %v3647 = vadd.f32 %v3641, 1.0
        %v3648 = vadd.f32 %v3642, 1.0
        %v3649 = vadd.f32 %v3643, 1.0
        %v3650 = vadd.f32 %v3644, 1.0
        %v3651 = vadd.f32 %v3645, 1.0
        %v3652 = vrcp.pop %v3646
        %v3653 = vmul.f32 1.0, %v3652
        %v3654 = vrcp.pop %v3647
        %v3655 = vmul.f32 1.0, %v3654
        %v3656 = vrcp.pop %v3648
        %v3657 = vmul.f32 1.0, %v3656
        %v3658 = vrcp.pop %v3649
        %v3659 = vmul.f32 1.0, %v3658
        %v3660 = vrcp.pop %v3650
        %v3661 = vmul.f32 1.0, %v3660
        %v3662 = vrcp.pop %v3651
        %v3663 = vmul.f32 1.0, %v3662
        %v3664 = vmul.f32 %v3653, 1.0614054
        %v3665 = vmul.f32 %v3655, 1.0614054
        %v3666 = vmul.f32 %v3657, 1.0614054
        %v3667 = vmul.f32 %v3659, 1.0614054
        %v3668 = vmul.f32 %v3661, 1.0614054
        %v3669 = vmul.f32 %v3663, 1.0614054
        %v3670 = vadd.f32 %v3664, -1.4531521
        %v3671 = vadd.f32 %v3665, -1.4531521
        %v3672 = vadd.f32 %v3666, -1.4531521
        %v3673 = vadd.f32 %v3667, -1.4531521
        %v3674 = vadd.f32 %v3668, -1.4531521
        %v3675 = vadd.f32 %v3669, -1.4531521
        %v3676 = vmul.f32 %v3670, %v3653
        %v3677 = vmul.f32 %v3671, %v3655
        %v3678 = vmul.f32 %v3672, %v3657
        %v3679 = vmul.f32 %v3673, %v3659
        %v3680 = vmul.f32 %v3674, %v3661
        %v3681 = vmul.f32 %v3675, %v3663
        %v3682 = vadd.f32 %v3676, 1.4214138
        %v3683 = vadd.f32 %v3677, 1.4214138
        %v3684 = vadd.f32 %v3678, 1.4214138
        %v3685 = vadd.f32 %v3679, 1.4214138
        %v3686 = vadd.f32 %v3680, 1.4214138
        %v3687 = vadd.f32 %v3681, 1.4214138
        %v3688 = vmul.f32 %v3682, %v3653
        %v3689 = vmul.f32 %v3683, %v3655
        %v3690 = vmul.f32 %v3684, %v3657
        %v3691 = vmul.f32 %v3685, %v3659
        %v3692 = vmul.f32 %v3686, %v3661
        %v3693 = vmul.f32 %v3687, %v3663
        %v3694 = vadd.f32 %v3688, -0.28449672
        %v3695 = vadd.f32 %v3689, -0.28449672
        %v3696 = vadd.f32 %v3690, -0.28449672
        %v3697 = vadd.f32 %v3691, -0.28449672
        %v3698 = vadd.f32 %v3692, -0.28449672
        %v3699 = vadd.f32 %v3693, -0.28449672
        %v3700 = vmul.f32 %v3694, %v3653
        %v3701 = vmul.f32 %v3695, %v3655
        %v3702 = vmul.f32 %v3696, %v3657
        %v3703 = vmul.f32 %v3697, %v3659
        %v3704 = vmul.f32 %v3698, %v3661
        %v3705 = vmul.f32 %v3699, %v3663
        %v3706 = vadd.f32 %v3700, 0.2548296
        %v3707 = vadd.f32 %v3701, 0.2548296
        %v3708 = vadd.f32 %v3702, 0.2548296
        %v3709 = vadd.f32 %v3703, 0.2548296
        %v3710 = vadd.f32 %v3704, 0.2548296
        %v3711 = vadd.f32 %v3705, 0.2548296
        %v3712 = vmul.f32 %v3706, %v3653
        %v3713 = vmul.f32 %v3707, %v3655
        %v3714 = vmul.f32 %v3708, %v3657
        %v3715 = vmul.f32 %v3709, %v3659
        %v3716 = vmul.f32 %v3710, %v3661
        %v3717 = vmul.f32 %v3711, %v3663
        %v3718 = vsub.f32 0.0, %v3634
        %v3719 = vsub.f32 0.0, %v3635
        %v3720 = vsub.f32 0.0, %v3636
        %v3721 = vsub.f32 0.0, %v3637
        %v3722 = vsub.f32 0.0, %v3638
        %v3723 = vsub.f32 0.0, %v3639
        %v3724 = vmul.f32 %v3718, %v3634
        %v3725 = vmul.f32 %v3719, %v3635
        %v3726 = vmul.f32 %v3720, %v3636
        %v3727 = vmul.f32 %v3721, %v3637
        %v3728 = vmul.f32 %v3722, %v3638
        %v3729 = vmul.f32 %v3723, %v3639
        %v3730 = vmul.f32 %v3724, 1.442695
        %v3731 = vpow.pop %v3730
        %v3732 = vmul.f32 %v3725, 1.442695
        %v3733 = vpow.pop %v3732
        %v3734 = vmul.f32 %v3726, 1.442695
        %v3735 = vpow.pop %v3734
        %v3736 = vmul.f32 %v3727, 1.442695
        %v3737 = vpow.pop %v3736
        %v3738 = vmul.f32 %v3728, 1.442695
        %v3739 = vpow.pop %v3738
        %v3740 = vmul.f32 %v3729, 1.442695
        %v3741 = vpow.pop %v3740
        %v3742 = vmul.f32 %v3712, %v3731
        %v3743 = vmul.f32 %v3713, %v3733
        %v3744 = vmul.f32 %v3714, %v3735
        %v3745 = vmul.f32 %v3715, %v3737
        %v3746 = vmul.f32 %v3716, %v3739
        %v3747 = vmul.f32 %v3717, %v3741
        %v3748 = vsub.f32 1.0, %v3742
        %v3749 = vsub.f32 1.0, %v3743
        %v3750 = vsub.f32 1.0, %v3744
        %v3751 = vsub.f32 1.0, %v3745
        %v3752 = vsub.f32 1.0, %v3746
        %v3753 = vsub.f32 1.0, %v3747
        %vm3754 = vcmp.ge.f32.partialorder %v3628, 0.0
        %vm3755 = vcmp.ge.f32.partialorder %v3629, 0.0
        %vm3756 = vcmp.ge.f32.partialorder %v3630, 0.0
        %vm3757 = vcmp.ge.f32.partialorder %v3631, 0.0
        %vm3758 = vcmp.ge.f32.partialorder %v3632, 0.0
        %vm3759 = vcmp.ge.f32.partialorder %v3633, 0.0
        %v3760 = vsub.f32 0.0, %v3748
        %v3761 = vsub.f32 0.0, %v3749
        %v3762 = vsub.f32 0.0, %v3750
        %v3763 = vsub.f32 0.0, %v3751
        %v3764 = vsub.f32 0.0, %v3752
        %v3765 = vsub.f32 0.0, %v3753
        %v3766 = vsel %vm3754, %v3748, %v3760
        %v3767 = vsel %vm3755, %v3749, %v3761
        %v3768 = vsel %vm3756, %v3750, %v3762
        %v3769 = vsel %vm3757, %v3751, %v3763
        %v3770 = vsel %vm3758, %v3752, %v3764
        %v3771 = vsel %vm3759, %v3753, %v3765
        %v3772 = vadd.f32 %v3766, 1.0
        %v3773 = vadd.f32 %v3767, 1.0
        %v3774 = vadd.f32 %v3768, 1.0
        %v3775 = vadd.f32 %v3769, 1.0
        %v3776 = vadd.f32 %v3770, 1.0
        %v3777 = vadd.f32 %v3771, 1.0
        %v3778 = vmul.f32 %v3622, %v3772
        %v3779 = vmul.f32 %v3623, %v3773
        %v3780 = vmul.f32 %v3624, %v3774
        %v3781 = vmul.f32 %v3625, %v3775
        %v3782 = vmul.f32 %v3626, %v3776
        %v3783 = vmul.f32 %v3627, %v3777
        %v3784 = vld [vmem:[%s19] sm:$0xff]
        %v3785 = vld [vmem:[%s19 + $0x8] sm:$0xff]
        %v3786 = vld [vmem:[%s19 + $0x10] sm:$0xff]
        %v3787 = vld [vmem:[%s19 + $0x18] sm:$0xff]
        %v3788 = vld [vmem:[%s19 + $0x20] sm:$0xff]
        %v3789 = vld [vmem:[%s19 + $0x28] sm:$0xff]
        %v3790 = vld [vmem:[%s19 + $0x30] sm:$0xff]
        %v3791 = vld [vmem:[%s19 + $0x38] sm:$0xff]
        %v3792 = vld [vmem:[%s19 + $0x40] sm:$0xff]
        %v3793 = vld [vmem:[%s19 + $0x48] sm:$0xff]
        %v3794 = vld [vmem:[%s19 + $0x50] sm:$0xff]
        %v3795 = vld [vmem:[%s19 + $0x58] sm:$0xff]
        %v3796 = vld [vmem:[%s19 + $0x60] sm:$0xff]
        %v3797 = vld [vmem:[%s19 + $0x68] sm:$0xff]
        %v3798 = vld [vmem:[%s19 + $0x70] sm:$0xff]
        %v3799 = vld [vmem:[%s19 + $0x78] sm:$0xff]
        %v3800 = vld [vmem:[%s19 + $0x80] sm:$0xff]
        %v3801 = vld [vmem:[%s19 + $0x88] sm:$0xff]
        %v3802 = vld [vmem:[%s19 + $0x90] sm:$0xff]
        %v3803 = vld [vmem:[%s19 + $0x98] sm:$0xff]
        %v3804 = vld [vmem:[%s19 + $0xa0] sm:$0xff]
        %v3805 = vld [vmem:[%s19 + $0xa8] sm:$0xff]
        %v3806 = vld [vmem:[%s19 + $0xb0] sm:$0xff]
        %v3807 = vld [vmem:[%s19 + $0xb8] sm:$0xff]
        %v3808 = vld [vmem:[%s19 + $0xc0] sm:$0xff]
        %v3809 = vld [vmem:[%s19 + $0xc8] sm:$0xff]
        %v3810 = vld [vmem:[%s19 + $0xd0] sm:$0xff]
        %v3811 = vld [vmem:[%s19 + $0xd8] sm:$0xff]
        %v3812 = vld [vmem:[%s19 + $0xe0] sm:$0xff]
        %v3813 = vld [vmem:[%s19 + $0xe8] sm:$0xff]
        %v3814 = vld [vmem:[%s19 + $0xf0] sm:$0xff]
        %v3815 = vld [vmem:[%s19 + $0xf8] sm:$0xff]
        %3816 = vmatprep.subr.mxu0 0.0
        %3817 = vmatpush1.msra.mxu0 %v3784
        %3818 = vmatprep.subr.mxu0 0.0
        %3819 = vmatpush1.msra.mxu0 %v3785
        %3820 = vmatprep.subr.mxu0 0.0
        %3821 = vmatpush1.msra.mxu0 %v3786
        %3822 = vmatprep.subr.mxu0 0.0
        %3823 = vmatpush1.msra.mxu0 %v3787
        %3824 = vmatprep.subr.mxu0 0.0
        %3825 = vmatpush1.msra.mxu0 %v3788
        %3826 = vmatprep.subr.mxu0 0.0
        %3827 = vmatpush1.msra.mxu0 %v3789
        %3828 = vmatprep.subr.mxu0 0.0
        %3829 = vmatpush1.msra.mxu0 %v3790
        %3830 = vmatprep.subr.mxu0 0.0
        %3831 = vmatpush1.msra.mxu0 %v3791
        %3832 = vmatprep.subr.mxu0 0.0
        %3833 = vmatpush1.msra.mxu0 %v3792
        %3834 = vmatprep.subr.mxu0 0.0
        %3835 = vmatpush1.msra.mxu0 %v3793
        %3836 = vmatprep.subr.mxu0 0.0
        %3837 = vmatpush1.msra.mxu0 %v3794
        %3838 = vmatprep.subr.mxu0 0.0
        %3839 = vmatpush1.msra.mxu0 %v3795
        %3840 = vmatprep.subr.mxu0 0.0
        %3841 = vmatpush1.msra.mxu0 %v3796
        %3842 = vmatprep.subr.mxu0 0.0
        %3843 = vmatpush1.msra.mxu0 %v3797
        %3844 = vmatprep.subr.mxu0 0.0
        %3845 = vmatpush1.msra.mxu0 %v3798
        %3846 = vmatprep.subr.mxu0 0.0
        %3847 = vmatpush1.msra.mxu0 %v3799
        %3848 = vmatprep.subr.mxu0 0.0
        %3849 = vmatpush1.msra.mxu0 %v3800
        %3850 = vmatprep.subr.mxu0 0.0
        %3851 = vmatpush1.msra.mxu0 %v3801
        %3852 = vmatprep.subr.mxu0 0.0
        %3853 = vmatpush1.msra.mxu0 %v3802
        %3854 = vmatprep.subr.mxu0 0.0
        %3855 = vmatpush1.msra.mxu0 %v3803
        %3856 = vmatprep.subr.mxu0 0.0
        %3857 = vmatpush1.msra.mxu0 %v3804
        %3858 = vmatprep.subr.mxu0 0.0
        %3859 = vmatpush1.msra.mxu0 %v3805
        %3860 = vmatprep.subr.mxu0 0.0
        %3861 = vmatpush1.msra.mxu0 %v3806
        %3862 = vmatprep.subr.mxu0 0.0
        %3863 = vmatpush1.msra.mxu0 %v3807
        %3864 = vmatprep.subr.mxu0 0.0
        %3865 = vmatpush1.msra.mxu0 %v3808
        %3866 = vmatprep.subr.mxu0 0.0
        %3867 = vmatpush1.msra.mxu0 %v3809
        %3868 = vmatprep.subr.mxu0 0.0
        %3869 = vmatpush1.msra.mxu0 %v3810
        %3870 = vmatprep.subr.mxu0 0.0
        %3871 = vmatpush1.msra.mxu0 %v3811
        %3872 = vmatprep.subr.mxu0 0.0
        %3873 = vmatpush1.msra.mxu0 %v3812
        %3874 = vmatprep.subr.mxu0 0.0
        %3875 = vmatpush1.msra.mxu0 %v3813
        %3876 = vmatprep.subr.mxu0 0.0
        %3877 = vmatpush1.msra.mxu0 %v3814
        %3878 = vmatprep.subr.mxu0 0.0
        %3879 = vmatpush1.msra.mxu0 %v3815
        %3880 = vmatprep.mubr.f32.mxu0 %v3779
        %3881 = vmatmul.mubr.f32.gmra.mrb[0].mxu0 %v3778
        %v3882 = vpop.f32.mrb[0].mxu0
        %v3883 = vadd.f32 0.0, %v3882
        %v3884 = vpop.f32.mrb[0].mxu0
        %3885 = vmatprep.mubr.f32.mxu0 %v3781
        %3886 = vmatmul.mubr.f32.gmra.mrb[0].mxu0 %v3780
        %v3887 = vpop.f32.mrb[0].mxu0
        %v3888 = vadd.f32 0.0, %v3887
        %v3889 = vpop.f32.mrb[0].mxu0
        %3890 = vmatprep.mubr.f32.mxu0 %v3783
        %3891 = vmatmul.mubr.f32.gmra.mrb[0].mxu0 %v3782
        %v3892 = vpop.f32.mrb[0].mxu0
        %v3893 = vadd.f32 0.0, %v3892
        %v3894 = vpop.f32.mrb[0].mxu0
        %3895 = vdwg.mxu0
        %v3896 = vadd.f32 %v3440, %v3883
        %v3897 = vadd.f32 %v3441, %v3888
        %v3898 = vadd.f32 %v3442, %v3893
        %v3899 = vld [vmem:[%s20] sm:$0x1]
        %v3901 = vlaneseq
        %v3902 = vshrl.u32 %v3901, 7
        %v3903 = vsub.s32 0, %v3902
        %v3904 = vrot.slane %v3899, %v3903
        %v3906 = vadd.f32 %v3896, %v3904
        %v3907 = vadd.f32 %v3897, %v3904
        %v3908 = vadd.f32 %v3898, %v3904
        %s3909 = scalar_lea.vmem %s5, 1
        %v3910 = vld [vmem:[%s3909] sm:$0x1]
        %s3911 = scalar_lea.vmem %s6, 1
        %v3912 = vld [vmem:[%s3911] sm:$0x1]
        %v3913 = vsel %vm795, %v3906, 0.0
        %3914 = vadd.xlane.f32.xlu0 %v3913
        %v3915 = vpop.xlane.xlu0 %3914
        %v3916 = vsel %vm795, %v3907, 0.0
        %3917 = vadd.xlane.f32.xlu0 %v3916
        %v3918 = vpop.xlane.xlu0 %3917
        %v3919 = vsel %vm795, %v3908, 0.0
        %3920 = vadd.xlane.f32.xlu0 %v3919
        %v3921 = vpop.xlane.xlu0 %3920
        %v3922 = vmul.f32 %v3915, %v896
        %v3923 = vmul.f32 %v3918, %v896
        %v3924 = vmul.f32 %v3921, %v896
        %v3925 = vsub.f32 %v3906, %v3922
        %v3926 = vsub.f32 %v3907, %v3923
        %v3927 = vsub.f32 %v3908, %v3924
        %v3928 = vmul.f32 %v3925, %v3925
        %v3929 = vmul.f32 %v3926, %v3926
        %v3930 = vmul.f32 %v3927, %v3927
        %v3931 = vsel %vm795, %v3928, 0.0
        %3932 = vadd.xlane.f32.xlu0 %v3931
        %v3933 = vpop.xlane.xlu0 %3932
        %v3934 = vsel %vm795, %v3929, 0.0
        %3935 = vadd.xlane.f32.xlu0 %v3934
        %v3936 = vpop.xlane.xlu0 %3935
        %v3937 = vsel %vm795, %v3930, 0.0
        %3938 = vadd.xlane.f32.xlu0 %v3937
        %v3939 = vpop.xlane.xlu0 %3938
        %v3940 = vmul.f32 %v3933, %v896
        %v3941 = vmul.f32 %v3936, %v896
        %v3942 = vmul.f32 %v3939, %v896
        %v3943 = vadd.f32 %v3940, 1e-05
        %v3944 = vadd.f32 %v3941, 1e-05
        %v3945 = vadd.f32 %v3942, 1e-05
        %v3946 = vrsqrt.pop %v3943
        %v3947 = vrsqrt.pop %v3944
        %v3948 = vrsqrt.pop %v3945
        %v3949 = vmul.f32 %v3925, %v3946
        %v3950 = vmul.f32 %v3926, %v3947
        %v3951 = vmul.f32 %v3927, %v3948
        %v3953 = vlaneseq
        %v3954 = vshrl.u32 %v3953, 7
        %v3955 = vsub.s32 0, %v3954
        %v3956 = vrot.slane %v3910, %v3955
        %v3958 = vmul.f32 %v3949, %v3956
        %v3959 = vmul.f32 %v3950, %v3956
        %v3960 = vmul.f32 %v3951, %v3956
        %v3962 = vlaneseq
        %v3963 = vshrl.u32 %v3962, 7
        %v3964 = vsub.s32 0, %v3963
        %v3965 = vrot.slane %v3912, %v3964
        %v3967 = vadd.f32 %v3958, %v3965
        %v3968 = vadd.f32 %v3959, %v3965
        %v3969 = vadd.f32 %v3960, %v3965
        %s3970 = scalar_lea.vmem %s7, 256
        %v3971 = vld [vmem:[%s3970] sm:$0xff]
        %v3972 = vld [vmem:[%s3970 + $0x8] sm:$0xff]
        %v3973 = vld [vmem:[%s3970 + $0x10] sm:$0xff]
        %v3974 = vld [vmem:[%s3970 + $0x18] sm:$0xff]
        %v3975 = vld [vmem:[%s3970 + $0x20] sm:$0xff]
        %v3976 = vld [vmem:[%s3970 + $0x28] sm:$0xff]
        %v3977 = vld [vmem:[%s3970 + $0x30] sm:$0xff]
        %v3978 = vld [vmem:[%s3970 + $0x38] sm:$0xff]
        %s3979 = scalar_lea.vmem %s8, 4
        %v3980 = vld [vmem:[%s3979] sm:$0x1]
        %v3982 = vlaneseq
        %v3983 = vshrl.u32 %v3982, 7
        %v3984 = vsub.s32 0, %v3983
        %v3985 = vrot.slane %v3980, %v3984
        %v3988 = vsel %vm795, %v3967, 0
        %v3991 = vsel %vm795, %v3968, 0
        %v3994 = vsel %vm795, %v3969, 0
        %3996 = vmatprep.subr.mxu0 0.0
        %3997 = vmatpush1.msra.mxu0 %v3971
        %3998 = vmatprep.subr.mxu0 0.0
        %3999 = vmatpush1.msra.mxu0 %v3972
        %4000 = vmatprep.subr.mxu0 0.0
        %4001 = vmatpush1.msra.mxu0 %v3973
        %4002 = vmatprep.subr.mxu0 0.0
        %4003 = vmatpush1.msra.mxu0 %v3974
        %4004 = vmatprep.subr.mxu0 0.0
        %4005 = vmatpush1.msra.mxu0 %v3975
        %4006 = vmatprep.subr.mxu0 0.0
        %4007 = vmatpush1.msra.mxu0 %v3976
        %4008 = vmatprep.subr.mxu0 0.0
        %4009 = vmatpush1.msra.mxu0 %v3977
        %4010 = vmatprep.subr.mxu0 0.0
        %4011 = vmatpush1.msra.mxu0 %v3978
        %4012 = vmatprep.subr.mxu0 0.0
        %4013 = vmatpush1.msra.mxu0 0.0
        %4014 = vmatprep.subr.mxu0 0.0
        %4015 = vmatpush1.msra.mxu0 0.0
        %4016 = vmatprep.subr.mxu0 0.0
        %4017 = vmatpush1.msra.mxu0 0.0
        %4018 = vmatprep.subr.mxu0 0.0
        %4019 = vmatpush1.msra.mxu0 0.0
        %4020 = vmatprep.subr.mxu0 0.0
        %4021 = vmatpush1.msra.mxu0 0.0
        %4022 = vmatprep.subr.mxu0 0.0
        %4023 = vmatpush1.msra.mxu0 0.0
        %4024 = vmatprep.subr.mxu0 0.0
        %4025 = vmatpush1.msra.mxu0 0.0
        %4026 = vmatprep.subr.mxu0 0.0
        %4027 = vmatpush1.msra.mxu0 0.0
        %4028 = vmatprep.subr.mxu0 0.0
        %4029 = vmatpush1.msra.mxu0 0.0
        %4030 = vmatprep.subr.mxu0 0.0
        %4031 = vmatpush1.msra.mxu0 0.0
        %4032 = vmatprep.subr.mxu0 0.0
        %4033 = vmatpush1.msra.mxu0 0.0
        %4034 = vmatprep.subr.mxu0 0.0
        %4035 = vmatpush1.msra.mxu0 0.0
        %4036 = vmatprep.subr.mxu0 0.0
        %4037 = vmatpush1.msra.mxu0 0.0
        %4038 = vmatprep.subr.mxu0 0.0
        %4039 = vmatpush1.msra.mxu0 0.0
        %4040 = vmatprep.subr.mxu0 0.0
        %4041 = vmatpush1.msra.mxu0 0.0
        %4042 = vmatprep.subr.mxu0 0.0
        %4043 = vmatpush1.msra.mxu0 0.0
        %4044 = vmatprep.subr.mxu0 0.0
        %4045 = vmatpush1.msra.mxu0 0.0
        %4046 = vmatprep.subr.mxu0 0.0
        %4047 = vmatpush1.msra.mxu0 0.0
        %4048 = vmatprep.subr.mxu0 0.0
        %4049 = vmatpush1.msra.mxu0 0.0
        %4050 = vmatprep.subr.mxu0 0.0
        %4051 = vmatpush1.msra.mxu0 0.0
        %4052 = vmatprep.subr.mxu0 0.0
        %4053 = vmatpush1.msra.mxu0 0.0
        %4054 = vmatprep.subr.mxu0 0.0
        %4055 = vmatpush1.msra.mxu0 0.0
        %4056 = vmatprep.subr.mxu0 0.0
        %4057 = vmatpush1.msra.mxu0 0.0
        %4058 = vmatprep.subr.mxu0 0.0
        %4059 = vmatpush1.msra.mxu0 0.0
        %4060 = vmatprep.mubr.f32.mxu0 0.0
        %4061 = vmatmul.mubr.f32.gmra.mrb[0].mxu0 %v3988
        %v4062 = vpop.f32.mrb[0].mxu0
        %v4063 = vadd.f32 %v3985, %v4062
        %v4064 = vpop.f32.mrb[0].mxu0
        %4065 = vmatprep.mubr.f32.mxu0 0.0
        %4066 = vmatmul.mubr.f32.gmra.mrb[0].mxu0 %v3991
        %v4067 = vpop.f32.mrb[0].mxu0
        %v4068 = vadd.f32 %v3985, %v4067
        %v4069 = vpop.f32.mrb[0].mxu0
        %4070 = vmatprep.mubr.f32.mxu0 0.0
        %4071 = vmatmul.mubr.f32.gmra.mrb[0].mxu0 %v3994
        %v4072 = vpop.f32.mrb[0].mxu0
        %v4073 = vadd.f32 %v3985, %v4072
        %v4074 = vpop.f32.mrb[0].mxu0
        %4075 = vdwg.mxu0
        %s4076 = scalar_lea.vmem %s9, 256
        %v4077 = vld [vmem:[%s4076] sm:$0xff]
        %v4078 = vld [vmem:[%s4076 + $0x8] sm:$0xff]
        %v4079 = vld [vmem:[%s4076 + $0x10] sm:$0xff]
        %v4080 = vld [vmem:[%s4076 + $0x18] sm:$0xff]
        %v4081 = vld [vmem:[%s4076 + $0x20] sm:$0xff]
        %v4082 = vld [vmem:[%s4076 + $0x28] sm:$0xff]
        %v4083 = vld [vmem:[%s4076 + $0x30] sm:$0xff]
        %v4084 = vld [vmem:[%s4076 + $0x38] sm:$0xff]
        %s4085 = scalar_lea.vmem %s10, 4
        %v4086 = vld [vmem:[%s4085] sm:$0x1]
        %v4088 = vlaneseq
        %v4089 = vshrl.u32 %v4088, 7
        %v4090 = vsub.s32 0, %v4089
        %v4091 = vrot.slane %v4086, %v4090
        %4093 = vmatprep.subr.mxu0 0.0
        %4094 = vmatpush1.msra.mxu0 %v4077
        %4095 = vmatprep.subr.mxu0 0.0
        %4096 = vmatpush1.msra.mxu0 %v4078
        %4097 = vmatprep.subr.mxu0 0.0
        %4098 = vmatpush1.msra.mxu0 %v4079
        %4099 = vmatprep.subr.mxu0 0.0
        %4100 = vmatpush1.msra.mxu0 %v4080
        %4101 = vmatprep.subr.mxu0 0.0
        %4102 = vmatpush1.msra.mxu0 %v4081
        %4103 = vmatprep.subr.mxu0 0.0
        %4104 = vmatpush1.msra.mxu0 %v4082
        %4105 = vmatprep.subr.mxu0 0.0
        %4106 = vmatpush1.msra.mxu0 %v4083
        %4107 = vmatprep.subr.mxu0 0.0
        %4108 = vmatpush1.msra.mxu0 %v4084
        %4109 = vmatprep.subr.mxu0 0.0
        %4110 = vmatpush1.msra.mxu0 0.0
        %4111 = vmatprep.subr.mxu0 0.0
        %4112 = vmatpush1.msra.mxu0 0.0
        %4113 = vmatprep.subr.mxu0 0.0
        %4114 = vmatpush1.msra.mxu0 0.0
        %4115 = vmatprep.subr.mxu0 0.0
        %4116 = vmatpush1.msra.mxu0 0.0
        %4117 = vmatprep.subr.mxu0 0.0
        %4118 = vmatpush1.msra.mxu0 0.0
        %4119 = vmatprep.subr.mxu0 0.0
        %4120 = vmatpush1.msra.mxu0 0.0
        %4121 = vmatprep.subr.mxu0 0.0
        %4122 = vmatpush1.msra.mxu0 0.0
        %4123 = vmatprep.subr.mxu0 0.0
        %4124 = vmatpush1.msra.mxu0 0.0
        %4125 = vmatprep.subr.mxu0 0.0
        %4126 = vmatpush1.msra.mxu0 0.0
        %4127 = vmatprep.subr.mxu0 0.0
        %4128 = vmatpush1.msra.mxu0 0.0
        %4129 = vmatprep.subr.mxu0 0.0
        %4130 = vmatpush1.msra.mxu0 0.0
        %4131 = vmatprep.subr.mxu0 0.0
        %4132 = vmatpush1.msra.mxu0 0.0
        %4133 = vmatprep.subr.mxu0 0.0
        %4134 = vmatpush1.msra.mxu0 0.0
        %4135 = vmatprep.subr.mxu0 0.0
        %4136 = vmatpush1.msra.mxu0 0.0
        %4137 = vmatprep.subr.mxu0 0.0
        %4138 = vmatpush1.msra.mxu0 0.0
        %4139 = vmatprep.subr.mxu0 0.0
        %4140 = vmatpush1.msra.mxu0 0.0
        %4141 = vmatprep.subr.mxu0 0.0
        %4142 = vmatpush1.msra.mxu0 0.0
        %4143 = vmatprep.subr.mxu0 0.0
        %4144 = vmatpush1.msra.mxu0 0.0
        %4145 = vmatprep.subr.mxu0 0.0
        %4146 = vmatpush1.msra.mxu0 0.0
        %4147 = vmatprep.subr.mxu0 0.0
        %4148 = vmatpush1.msra.mxu0 0.0
        %4149 = vmatprep.subr.mxu0 0.0
        %4150 = vmatpush1.msra.mxu0 0.0
        %4151 = vmatprep.subr.mxu0 0.0
        %4152 = vmatpush1.msra.mxu0 0.0
        %4153 = vmatprep.subr.mxu0 0.0
        %4154 = vmatpush1.msra.mxu0 0.0
        %4155 = vmatprep.subr.mxu0 0.0
        %4156 = vmatpush1.msra.mxu0 0.0
        %4157 = vmatprep.mubr.f32.mxu0 0.0
        %4158 = vmatmul.mubr.f32.gmra.mrb[0].mxu0 %v3988
        %v4159 = vpop.f32.mrb[0].mxu0
        %v4160 = vadd.f32 %v4091, %v4159
        %v4161 = vpop.f32.mrb[0].mxu0
        %4162 = vmatprep.mubr.f32.mxu0 0.0
        %4163 = vmatmul.mubr.f32.gmra.mrb[0].mxu0 %v3991
        %v4164 = vpop.f32.mrb[0].mxu0
        %v4165 = vadd.f32 %v4091, %v4164
        %v4166 = vpop.f32.mrb[0].mxu0
        %4167 = vmatprep.mubr.f32.mxu0 0.0
        %4168 = vmatmul.mubr.f32.gmra.mrb[0].mxu0 %v3994
        %v4169 = vpop.f32.mrb[0].mxu0
        %v4170 = vadd.f32 %v4091, %v4169
        %v4171 = vpop.f32.mrb[0].mxu0
        %4172 = vdwg.mxu0
        %s4173 = scalar_lea.vmem %s11, 256
        %v4174 = vld [vmem:[%s4173] sm:$0xff]
        %v4175 = vld [vmem:[%s4173 + $0x8] sm:$0xff]
        %v4176 = vld [vmem:[%s4173 + $0x10] sm:$0xff]
        %v4177 = vld [vmem:[%s4173 + $0x18] sm:$0xff]
        %v4178 = vld [vmem:[%s4173 + $0x20] sm:$0xff]
        %v4179 = vld [vmem:[%s4173 + $0x28] sm:$0xff]
        %v4180 = vld [vmem:[%s4173 + $0x30] sm:$0xff]
        %v4181 = vld [vmem:[%s4173 + $0x38] sm:$0xff]
        %s4182 = scalar_lea.vmem %s12, 4
        %v4183 = vld [vmem:[%s4182] sm:$0x1]
        %v4185 = vlaneseq
        %v4186 = vshrl.u32 %v4185, 7
        %v4187 = vsub.s32 0, %v4186
        %v4188 = vrot.slane %v4183, %v4187
        %4190 = vmatprep.subr.mxu0 0.0
        %4191 = vmatpush1.msra.mxu0 %v4174
        %4192 = vmatprep.subr.mxu0 0.0
        %4193 = vmatpush1.msra.mxu0 %v4175
        %4194 = vmatprep.subr.mxu0 0.0
        %4195 = vmatpush1.msra.mxu0 %v4176
        %4196 = vmatprep.subr.mxu0 0.0
        %4197 = vmatpush1.msra.mxu0 %v4177
        %4198 = vmatprep.subr.mxu0 0.0
        %4199 = vmatpush1.msra.mxu0 %v4178
        %4200 = vmatprep.subr.mxu0 0.0
        %4201 = vmatpush1.msra.mxu0 %v4179
        %4202 = vmatprep.subr.mxu0 0.0
        %4203 = vmatpush1.msra.mxu0 %v4180
        %4204 = vmatprep.subr.mxu0 0.0
        %4205 = vmatpush1.msra.mxu0 %v4181
        %4206 = vmatprep.subr.mxu0 0.0
        %4207 = vmatpush1.msra.mxu0 0.0
        %4208 = vmatprep.subr.mxu0 0.0
        %4209 = vmatpush1.msra.mxu0 0.0
        %4210 = vmatprep.subr.mxu0 0.0
        %4211 = vmatpush1.msra.mxu0 0.0
        %4212 = vmatprep.subr.mxu0 0.0
        %4213 = vmatpush1.msra.mxu0 0.0
        %4214 = vmatprep.subr.mxu0 0.0
        %4215 = vmatpush1.msra.mxu0 0.0
        %4216 = vmatprep.subr.mxu0 0.0
        %4217 = vmatpush1.msra.mxu0 0.0
        %4218 = vmatprep.subr.mxu0 0.0
        %4219 = vmatpush1.msra.mxu0 0.0
        %4220 = vmatprep.subr.mxu0 0.0
        %4221 = vmatpush1.msra.mxu0 0.0
        %4222 = vmatprep.subr.mxu0 0.0
        %4223 = vmatpush1.msra.mxu0 0.0
        %4224 = vmatprep.subr.mxu0 0.0
        %4225 = vmatpush1.msra.mxu0 0.0
        %4226 = vmatprep.subr.mxu0 0.0
        %4227 = vmatpush1.msra.mxu0 0.0
        %4228 = vmatprep.subr.mxu0 0.0
        %4229 = vmatpush1.msra.mxu0 0.0
        %4230 = vmatprep.subr.mxu0 0.0
        %4231 = vmatpush1.msra.mxu0 0.0
        %4232 = vmatprep.subr.mxu0 0.0
        %4233 = vmatpush1.msra.mxu0 0.0
        %4234 = vmatprep.subr.mxu0 0.0
        %4235 = vmatpush1.msra.mxu0 0.0
        %4236 = vmatprep.subr.mxu0 0.0
        %4237 = vmatpush1.msra.mxu0 0.0
        %4238 = vmatprep.subr.mxu0 0.0
        %4239 = vmatpush1.msra.mxu0 0.0
        %4240 = vmatprep.subr.mxu0 0.0
        %4241 = vmatpush1.msra.mxu0 0.0
        %4242 = vmatprep.subr.mxu0 0.0
        %4243 = vmatpush1.msra.mxu0 0.0
        %4244 = vmatprep.subr.mxu0 0.0
        %4245 = vmatpush1.msra.mxu0 0.0
        %4246 = vmatprep.subr.mxu0 0.0
        %4247 = vmatpush1.msra.mxu0 0.0
        %4248 = vmatprep.subr.mxu0 0.0
        %4249 = vmatpush1.msra.mxu0 0.0
        %4250 = vmatprep.subr.mxu0 0.0
        %4251 = vmatpush1.msra.mxu0 0.0
        %4252 = vmatprep.subr.mxu0 0.0
        %4253 = vmatpush1.msra.mxu0 0.0
        %4254 = vmatprep.mubr.f32.mxu0 0.0
        %4255 = vmatmul.mubr.f32.gmra.mrb[0].mxu0 %v3988
        %v4256 = vpop.f32.mrb[0].mxu0
        %v4257 = vadd.f32 %v4188, %v4256
        %v4258 = vpop.f32.mrb[0].mxu0
        %4259 = vmatprep.mubr.f32.mxu0 0.0
        %4260 = vmatmul.mubr.f32.gmra.mrb[0].mxu0 %v3991
        %v4261 = vpop.f32.mrb[0].mxu0
        %v4262 = vadd.f32 %v4188, %v4261
        %v4263 = vpop.f32.mrb[0].mxu0
        %4264 = vmatprep.mubr.f32.mxu0 0.0
        %4265 = vmatmul.mubr.f32.gmra.mrb[0].mxu0 %v3994
        %v4266 = vpop.f32.mrb[0].mxu0
        %v4267 = vadd.f32 %v4188, %v4266
        %v4268 = vpop.f32.mrb[0].mxu0
        %4269 = vdwg.mxu0
        %v4271 = vsel %vm1302, %v4063, 0
        %v4274 = vsel %vm1302, %v4068, 0
        %v4277 = vsel %vm1302, %v4073, 0
        %v4280 = vsel %vm1302, %v4160, 0
        %v4283 = vsel %vm1302, %v4165, 0
        %v4286 = vsel %vm1302, %v4170, 0
        %4288 = vmatprep.subr.mxu0 0.0
        %4289 = vmatpush1.xpose.msra.mxu0 %v4280
        %4290 = vmatprep.subr.mxu0 0.0
        %4291 = vmatpush1.xpose.msra.mxu0 %v4283
        %4292 = vmatprep.subr.mxu0 0.0
        %4293 = vmatpush1.xpose.msra.mxu0 %v4286
        %4294 = vmatprep.subr.mxu0 0.0
        %4295 = vmatpush1.xpose.msra.mxu0 0.0
        %4296 = vmatprep.subr.mxu0 0.0
        %4297 = vmatpush1.xpose.msra.mxu0 0.0
        %4298 = vmatprep.subr.mxu0 0.0
        %4299 = vmatpush1.xpose.msra.mxu0 0.0
        %4300 = vmatprep.subr.mxu0 0.0
        %4301 = vmatpush1.xpose.msra.mxu0 0.0
        %4302 = vmatprep.subr.mxu0 0.0
        %4303 = vmatpush1.xpose.msra.mxu0 0.0
        %4304 = vmatprep.subr.mxu0 0.0
        %4305 = vmatpush1.xpose.msra.mxu0 0.0
        %4306 = vmatprep.subr.mxu0 0.0
        %4307 = vmatpush1.xpose.msra.mxu0 0.0
        %4308 = vmatprep.subr.mxu0 0.0
        %4309 = vmatpush1.xpose.msra.mxu0 0.0
        %4310 = vmatprep.subr.mxu0 0.0
        %4311 = vmatpush1.xpose.msra.mxu0 0.0
        %4312 = vmatprep.subr.mxu0 0.0
        %4313 = vmatpush1.xpose.msra.mxu0 0.0
        %4314 = vmatprep.subr.mxu0 0.0
        %4315 = vmatpush1.xpose.msra.mxu0 0.0
        %4316 = vmatprep.subr.mxu0 0.0
        %4317 = vmatpush1.xpose.msra.mxu0 0.0
        %4318 = vmatprep.subr.mxu0 0.0
        %4319 = vmatpush1.xpose.msra.mxu0 0.0
        %4320 = vmatprep.subr.mxu0 0.0
        %4321 = vmatpush1.xpose.msra.mxu0 0.0
        %4322 = vmatprep.subr.mxu0 0.0
        %4323 = vmatpush1.xpose.msra.mxu0 0.0
        %4324 = vmatprep.subr.mxu0 0.0
        %4325 = vmatpush1.xpose.msra.mxu0 0.0
        %4326 = vmatprep.subr.mxu0 0.0
        %4327 = vmatpush1.xpose.msra.mxu0 0.0
        %4328 = vmatprep.subr.mxu0 0.0
        %4329 = vmatpush1.xpose.msra.mxu0 0.0
        %4330 = vmatprep.subr.mxu0 0.0
        %4331 = vmatpush1.xpose.msra.mxu0 0.0
        %4332 = vmatprep.subr.mxu0 0.0
        %4333 = vmatpush1.xpose.msra.mxu0 0.0
        %4334 = vmatprep.subr.mxu0 0.0
        %4335 = vmatpush1.xpose.msra.mxu0 0.0
        %4336 = vmatprep.subr.mxu0 0.0
        %4337 = vmatpush1.xpose.msra.mxu0 0.0
        %4338 = vmatprep.subr.mxu0 0.0
        %4339 = vmatpush1.xpose.msra.mxu0 0.0
        %4340 = vmatprep.subr.mxu0 0.0
        %4341 = vmatpush1.xpose.msra.mxu0 0.0
        %4342 = vmatprep.subr.mxu0 0.0
        %4343 = vmatpush1.xpose.msra.mxu0 0.0
        %4344 = vmatprep.subr.mxu0 0.0
        %4345 = vmatpush1.xpose.msra.mxu0 0.0
        %4346 = vmatprep.subr.mxu0 0.0
        %4347 = vmatpush1.xpose.msra.mxu0 0.0
        %4348 = vmatprep.subr.mxu0 0.0
        %4349 = vmatpush1.xpose.msra.mxu0 0.0
        %4350 = vmatprep.subr.mxu0 0.0
        %4351 = vmatpush1.xpose.msra.mxu0 0.0
        %4352 = vmatprep.mubr.f32.mxu0 0.0
        %4353 = vmatmul.mubr.f32.gmra.mrb[0].mxu0 %v4271
        %v4354 = vpop.f32.mrb[0].mxu0
        %v4355 = vadd.f32 %v948, %v4354
        %v4356 = vpop.f32.mrb[0].mxu0
        %4357 = vmatprep.mubr.f32.mxu0 0.0
        %4358 = vmatmul.mubr.f32.gmra.mrb[0].mxu0 %v4274
        %v4359 = vpop.f32.mrb[0].mxu0
        %v4360 = vadd.f32 %v948, %v4359
        %v4361 = vpop.f32.mrb[0].mxu0
        %4362 = vmatprep.mubr.f32.mxu0 0.0
        %4363 = vmatmul.mubr.f32.gmra.mrb[0].mxu0 %v4277
        %v4364 = vpop.f32.mrb[0].mxu0
        %v4365 = vadd.f32 %v948, %v4364
        %v4366 = vpop.f32.mrb[0].mxu0
        %4367 = vdwg.mxu0
        %v4368 = vsel %vm1401, %v4355, -inf
        %4369 = vmax.xlane.f32.xlu0 %v4368
        %v4370 = vpop.xlane.xlu0 %4369
        %v4371 = vsel %vm1401, %v4360, -inf
        %4372 = vmax.xlane.f32.xlu0 %v4371
        %v4373 = vpop.xlane.xlu0 %4372
        %v4374 = vsel %vm1401, %v4365, -inf
        %4375 = vmax.xlane.f32.xlu0 %v4374
        %v4376 = vpop.xlane.xlu0 %4375
        %v4377 = vsub.f32 %v4355, %v4370
        %v4378 = vsub.f32 %v4360, %v4373
        %v4379 = vsub.f32 %v4365, %v4376
        %v4380 = vmul.f32 %v4377, 1.442695
        %v4381 = vpow.pop %v4380
        %v4382 = vmul.f32 %v4378, 1.442695
        %v4383 = vpow.pop %v4382
        %v4384 = vmul.f32 %v4379, 1.442695
        %v4385 = vpow.pop %v4384
        %v4386 = vsel %vm1401, %v4381, 0.0
        %4387 = vadd.xlane.f32.xlu0 %v4386
        %v4388 = vpop.xlane.xlu0 %4387
        %v4389 = vsel %vm1401, %v4383, 0.0
        %4390 = vadd.xlane.f32.xlu0 %v4389
        %v4391 = vpop.xlane.xlu0 %4390
        %v4392 = vsel %vm1401, %v4385, 0.0
        %4393 = vadd.xlane.f32.xlu0 %v4392
        %v4394 = vpop.xlane.xlu0 %4393
        %v4395 = vrcp.pop %v4388
        %v4396 = vrcp.pop %v4391
        %v4397 = vrcp.pop %v4394
        %v4398 = vmul.f32 %v4381, %v4395
        %v4399 = vmul.f32 %v4383, %v4396
        %v4400 = vmul.f32 %v4385, %v4397
        %v4402 = vsel %vm1401, %v4398, 0
        %v4405 = vsel %vm1401, %v4399, 0
        %v4408 = vsel %vm1401, %v4400, 0
        %4410 = vmatprep.subr.mxu0 0.0
        %4411 = vmatpush1.msra.mxu0 %v4257
        %4412 = vmatprep.subr.mxu0 0.0
        %4413 = vmatpush1.msra.mxu0 %v4262
        %4414 = vmatprep.subr.mxu0 0.0
        %4415 = vmatpush1.msra.mxu0 %v4267
        %4416 = vmatprep.subr.mxu0 0.0
        %4417 = vmatpush1.msra.mxu0 0.0
        %4418 = vmatprep.subr.mxu0 0.0
        %4419 = vmatpush1.msra.mxu0 0.0
        %4420 = vmatprep.subr.mxu0 0.0
        %4421 = vmatpush1.msra.mxu0 0.0
        %4422 = vmatprep.subr.mxu0 0.0
        %4423 = vmatpush1.msra.mxu0 0.0
        %4424 = vmatprep.subr.mxu0 0.0
        %4425 = vmatpush1.msra.mxu0 0.0
        %4426 = vmatprep.subr.mxu0 0.0
        %4427 = vmatpush1.msra.mxu0 0.0
        %4428 = vmatprep.subr.mxu0 0.0
        %4429 = vmatpush1.msra.mxu0 0.0
        %4430 = vmatprep.subr.mxu0 0.0
        %4431 = vmatpush1.msra.mxu0 0.0
        %4432 = vmatprep.subr.mxu0 0.0
        %4433 = vmatpush1.msra.mxu0 0.0
        %4434 = vmatprep.subr.mxu0 0.0
        %4435 = vmatpush1.msra.mxu0 0.0
        %4436 = vmatprep.subr.mxu0 0.0
        %4437 = vmatpush1.msra.mxu0 0.0
        %4438 = vmatprep.subr.mxu0 0.0
        %4439 = vmatpush1.msra.mxu0 0.0
        %4440 = vmatprep.subr.mxu0 0.0
        %4441 = vmatpush1.msra.mxu0 0.0
        %4442 = vmatprep.subr.mxu0 0.0
        %4443 = vmatpush1.msra.mxu0 0.0
        %4444 = vmatprep.subr.mxu0 0.0
        %4445 = vmatpush1.msra.mxu0 0.0
        %4446 = vmatprep.subr.mxu0 0.0
        %4447 = vmatpush1.msra.mxu0 0.0
        %4448 = vmatprep.subr.mxu0 0.0
        %4449 = vmatpush1.msra.mxu0 0.0
        %4450 = vmatprep.subr.mxu0 0.0
        %4451 = vmatpush1.msra.mxu0 0.0
        %4452 = vmatprep.subr.mxu0 0.0
        %4453 = vmatpush1.msra.mxu0 0.0
        %4454 = vmatprep.subr.mxu0 0.0
        %4455 = vmatpush1.msra.mxu0 0.0
        %4456 = vmatprep.subr.mxu0 0.0
        %4457 = vmatpush1.msra.mxu0 0.0
        %4458 = vmatprep.subr.mxu0 0.0
        %4459 = vmatpush1.msra.mxu0 0.0
        %4460 = vmatprep.subr.mxu0 0.0
        %4461 = vmatpush1.msra.mxu0 0.0
        %4462 = vmatprep.subr.mxu0 0.0
        %4463 = vmatpush1.msra.mxu0 0.0
        %4464 = vmatprep.subr.mxu0 0.0
        %4465 = vmatpush1.msra.mxu0 0.0
        %4466 = vmatprep.subr.mxu0 0.0
        %4467 = vmatpush1.msra.mxu0 0.0
        %4468 = vmatprep.subr.mxu0 0.0
        %4469 = vmatpush1.msra.mxu0 0.0
        %4470 = vmatprep.subr.mxu0 0.0
        %4471 = vmatpush1.msra.mxu0 0.0
        %4472 = vmatprep.subr.mxu0 0.0
        %4473 = vmatpush1.msra.mxu0 0.0
        %4474 = vmatprep.mubr.f32.mxu0 0.0
        %4475 = vmatmul.mubr.f32.gmra.mrb[0].mxu0 %v4402
        %v4476 = vpop.f32.mrb[0].mxu0
        %v4477 = vadd.f32 0.0, %v4476
        %v4478 = vpop.f32.mrb[0].mxu0
        %4479 = vmatprep.mubr.f32.mxu0 0.0
        %4480 = vmatmul.mubr.f32.gmra.mrb[0].mxu0 %v4405
        %v4481 = vpop.f32.mrb[0].mxu0
        %v4482 = vadd.f32 0.0, %v4481
        %v4483 = vpop.f32.mrb[0].mxu0
        %4484 = vmatprep.mubr.f32.mxu0 0.0
        %4485 = vmatmul.mubr.f32.gmra.mrb[0].mxu0 %v4408
        %v4486 = vpop.f32.mrb[0].mxu0
        %v4487 = vadd.f32 0.0, %v4486
        %v4488 = vpop.f32.mrb[0].mxu0
        %4489 = vdwg.mxu0
        %s4490 = scalar_lea.vmem %s13, 64
        %v4491 = vld [vmem:[%s4490] sm:$0xff]
        %v4492 = vld [vmem:[%s4490 + $0x8] sm:$0xff]
        %s4493 = scalar_lea.vmem %s7, 320
        %v4494 = vld [vmem:[%s4493] sm:$0xff]
        %v4495 = vld [vmem:[%s4493 + $0x8] sm:$0xff]
        %v4496 = vld [vmem:[%s4493 + $0x10] sm:$0xff]
        %v4497 = vld [vmem:[%s4493 + $0x18] sm:$0xff]
        %v4498 = vld [vmem:[%s4493 + $0x20] sm:$0xff]
        %v4499 = vld [vmem:[%s4493 + $0x28] sm:$0xff]
        %v4500 = vld [vmem:[%s4493 + $0x30] sm:$0xff]
        %v4501 = vld [vmem:[%s4493 + $0x38] sm:$0xff]
        %s4502 = scalar_lea.vmem %s8, 5
        %v4503 = vld [vmem:[%s4502] sm:$0x1]
        %v4505 = vlaneseq
        %v4506 = vshrl.u32 %v4505, 7
        %v4507 = vsub.s32 0, %v4506
        %v4508 = vrot.slane %v4503, %v4507
        %4510 = vmatprep.subr.mxu0 0.0
        %4511 = vmatpush1.msra.mxu0 %v4494
        %4512 = vmatprep.subr.mxu0 0.0
        %4513 = vmatpush1.msra.mxu0 %v4495
        %4514 = vmatprep.subr.mxu0 0.0
        %4515 = vmatpush1.msra.mxu0 %v4496
        %4516 = vmatprep.subr.mxu0 0.0
        %4517 = vmatpush1.msra.mxu0 %v4497
        %4518 = vmatprep.subr.mxu0 0.0
        %4519 = vmatpush1.msra.mxu0 %v4498
        %4520 = vmatprep.subr.mxu0 0.0
        %4521 = vmatpush1.msra.mxu0 %v4499
        %4522 = vmatprep.subr.mxu0 0.0
        %4523 = vmatpush1.msra.mxu0 %v4500
        %4524 = vmatprep.subr.mxu0 0.0
        %4525 = vmatpush1.msra.mxu0 %v4501
        %4526 = vmatprep.subr.mxu0 0.0
        %4527 = vmatpush1.msra.mxu0 0.0
        %4528 = vmatprep.subr.mxu0 0.0
        %4529 = vmatpush1.msra.mxu0 0.0
        %4530 = vmatprep.subr.mxu0 0.0
        %4531 = vmatpush1.msra.mxu0 0.0
        %4532 = vmatprep.subr.mxu0 0.0
        %4533 = vmatpush1.msra.mxu0 0.0
        %4534 = vmatprep.subr.mxu0 0.0
        %4535 = vmatpush1.msra.mxu0 0.0
        %4536 = vmatprep.subr.mxu0 0.0
        %4537 = vmatpush1.msra.mxu0 0.0
        %4538 = vmatprep.subr.mxu0 0.0
        %4539 = vmatpush1.msra.mxu0 0.0
        %4540 = vmatprep.subr.mxu0 0.0
        %4541 = vmatpush1.msra.mxu0 0.0
        %4542 = vmatprep.subr.mxu0 0.0
        %4543 = vmatpush1.msra.mxu0 0.0
        %4544 = vmatprep.subr.mxu0 0.0
        %4545 = vmatpush1.msra.mxu0 0.0
        %4546 = vmatprep.subr.mxu0 0.0
        %4547 = vmatpush1.msra.mxu0 0.0
        %4548 = vmatprep.subr.mxu0 0.0
        %4549 = vmatpush1.msra.mxu0 0.0
        %4550 = vmatprep.subr.mxu0 0.0
        %4551 = vmatpush1.msra.mxu0 0.0
        %4552 = vmatprep.subr.mxu0 0.0
        %4553 = vmatpush1.msra.mxu0 0.0
        %4554 = vmatprep.subr.mxu0 0.0
        %4555 = vmatpush1.msra.mxu0 0.0
        %4556 = vmatprep.subr.mxu0 0.0
        %4557 = vmatpush1.msra.mxu0 0.0
        %4558 = vmatprep.subr.mxu0 0.0
        %4559 = vmatpush1.msra.mxu0 0.0
        %4560 = vmatprep.subr.mxu0 0.0
        %4561 = vmatpush1.msra.mxu0 0.0
        %4562 = vmatprep.subr.mxu0 0.0
        %4563 = vmatpush1.msra.mxu0 0.0
        %4564 = vmatprep.subr.mxu0 0.0
        %4565 = vmatpush1.msra.mxu0 0.0
        %4566 = vmatprep.subr.mxu0 0.0
        %4567 = vmatpush1.msra.mxu0 0.0
        %4568 = vmatprep.subr.mxu0 0.0
        %4569 = vmatpush1.msra.mxu0 0.0
        %4570 = vmatprep.subr.mxu0 0.0
        %4571 = vmatpush1.msra.mxu0 0.0
        %4572 = vmatprep.subr.mxu0 0.0
        %4573 = vmatpush1.msra.mxu0 0.0
        %4574 = vmatprep.mubr.f32.mxu0 0.0
        %4575 = vmatmul.mubr.f32.gmra.mrb[0].mxu0 %v3988
        %v4576 = vpop.f32.mrb[0].mxu0
        %v4577 = vadd.f32 %v4508, %v4576
        %v4578 = vpop.f32.mrb[0].mxu0
        %4579 = vmatprep.mubr.f32.mxu0 0.0
        %4580 = vmatmul.mubr.f32.gmra.mrb[0].mxu0 %v3991
        %v4581 = vpop.f32.mrb[0].mxu0
        %v4582 = vadd.f32 %v4508, %v4581
        %v4583 = vpop.f32.mrb[0].mxu0
        %4584 = vmatprep.mubr.f32.mxu0 0.0
        %4585 = vmatmul.mubr.f32.gmra.mrb[0].mxu0 %v3994
        %v4586 = vpop.f32.mrb[0].mxu0
        %v4587 = vadd.f32 %v4508, %v4586
        %v4588 = vpop.f32.mrb[0].mxu0
        %4589 = vdwg.mxu0
        %s4590 = scalar_lea.vmem %s9, 320
        %v4591 = vld [vmem:[%s4590] sm:$0xff]
        %v4592 = vld [vmem:[%s4590 + $0x8] sm:$0xff]
        %v4593 = vld [vmem:[%s4590 + $0x10] sm:$0xff]
        %v4594 = vld [vmem:[%s4590 + $0x18] sm:$0xff]
        %v4595 = vld [vmem:[%s4590 + $0x20] sm:$0xff]
        %v4596 = vld [vmem:[%s4590 + $0x28] sm:$0xff]
        %v4597 = vld [vmem:[%s4590 + $0x30] sm:$0xff]
        %v4598 = vld [vmem:[%s4590 + $0x38] sm:$0xff]
        %s4599 = scalar_lea.vmem %s10, 5
        %v4600 = vld [vmem:[%s4599] sm:$0x1]
        %v4602 = vlaneseq
        %v4603 = vshrl.u32 %v4602, 7
        %v4604 = vsub.s32 0, %v4603
        %v4605 = vrot.slane %v4600, %v4604
        %4607 = vmatprep.subr.mxu0 0.0
        %4608 = vmatpush1.msra.mxu0 %v4591
        %4609 = vmatprep.subr.mxu0 0.0
        %4610 = vmatpush1.msra.mxu0 %v4592
        %4611 = vmatprep.subr.mxu0 0.0
        %4612 = vmatpush1.msra.mxu0 %v4593
        %4613 = vmatprep.subr.mxu0 0.0
        %4614 = vmatpush1.msra.mxu0 %v4594
        %4615 = vmatprep.subr.mxu0 0.0
        %4616 = vmatpush1.msra.mxu0 %v4595
        %4617 = vmatprep.subr.mxu0 0.0
        %4618 = vmatpush1.msra.mxu0 %v4596
        %4619 = vmatprep.subr.mxu0 0.0
        %4620 = vmatpush1.msra.mxu0 %v4597
        %4621 = vmatprep.subr.mxu0 0.0
        %4622 = vmatpush1.msra.mxu0 %v4598
        %4623 = vmatprep.subr.mxu0 0.0
        %4624 = vmatpush1.msra.mxu0 0.0
        %4625 = vmatprep.subr.mxu0 0.0
        %4626 = vmatpush1.msra.mxu0 0.0
        %4627 = vmatprep.subr.mxu0 0.0
        %4628 = vmatpush1.msra.mxu0 0.0
        %4629 = vmatprep.subr.mxu0 0.0
        %4630 = vmatpush1.msra.mxu0 0.0
        %4631 = vmatprep.subr.mxu0 0.0
        %4632 = vmatpush1.msra.mxu0 0.0
        %4633 = vmatprep.subr.mxu0 0.0
        %4634 = vmatpush1.msra.mxu0 0.0
        %4635 = vmatprep.subr.mxu0 0.0
        %4636 = vmatpush1.msra.mxu0 0.0
        %4637 = vmatprep.subr.mxu0 0.0
        %4638 = vmatpush1.msra.mxu0 0.0
        %4639 = vmatprep.subr.mxu0 0.0
        %4640 = vmatpush1.msra.mxu0 0.0
        %4641 = vmatprep.subr.mxu0 0.0
        %4642 = vmatpush1.msra.mxu0 0.0
        %4643 = vmatprep.subr.mxu0 0.0
        %4644 = vmatpush1.msra.mxu0 0.0
        %4645 = vmatprep.subr.mxu0 0.0
        %4646 = vmatpush1.msra.mxu0 0.0
        %4647 = vmatprep.subr.mxu0 0.0
        %4648 = vmatpush1.msra.mxu0 0.0
        %4649 = vmatprep.subr.mxu0 0.0
        %4650 = vmatpush1.msra.mxu0 0.0
        %4651 = vmatprep.subr.mxu0 0.0
        %4652 = vmatpush1.msra.mxu0 0.0
        %4653 = vmatprep.subr.mxu0 0.0
        %4654 = vmatpush1.msra.mxu0 0.0
        %4655 = vmatprep.subr.mxu0 0.0
        %4656 = vmatpush1.msra.mxu0 0.0
        %4657 = vmatprep.subr.mxu0 0.0
        %4658 = vmatpush1.msra.mxu0 0.0
        %4659 = vmatprep.subr.mxu0 0.0
        %4660 = vmatpush1.msra.mxu0 0.0
        %4661 = vmatprep.subr.mxu0 0.0
        %4662 = vmatpush1.msra.mxu0 0.0
        %4663 = vmatprep.subr.mxu0 0.0
        %4664 = vmatpush1.msra.mxu0 0.0
        %4665 = vmatprep.subr.mxu0 0.0
        %4666 = vmatpush1.msra.mxu0 0.0
        %4667 = vmatprep.subr.mxu0 0.0
        %4668 = vmatpush1.msra.mxu0 0.0
        %4669 = vmatprep.subr.mxu0 0.0
        %4670 = vmatpush1.msra.mxu0 0.0
        %4671 = vmatprep.mubr.f32.mxu0 0.0
        %4672 = vmatmul.mubr.f32.gmra.mrb[0].mxu0 %v3988
        %v4673 = vpop.f32.mrb[0].mxu0
        %v4674 = vadd.f32 %v4605, %v4673
        %v4675 = vpop.f32.mrb[0].mxu0
        %4676 = vmatprep.mubr.f32.mxu0 0.0
        %4677 = vmatmul.mubr.f32.gmra.mrb[0].mxu0 %v3991
        %v4678 = vpop.f32.mrb[0].mxu0
        %v4679 = vadd.f32 %v4605, %v4678
        %v4680 = vpop.f32.mrb[0].mxu0
        %4681 = vmatprep.mubr.f32.mxu0 0.0
        %4682 = vmatmul.mubr.f32.gmra.mrb[0].mxu0 %v3994
        %v4683 = vpop.f32.mrb[0].mxu0
        %v4684 = vadd.f32 %v4605, %v4683
        %v4685 = vpop.f32.mrb[0].mxu0
        %4686 = vdwg.mxu0
        %s4687 = scalar_lea.vmem %s11, 320
        %v4688 = vld [vmem:[%s4687] sm:$0xff]
        %v4689 = vld [vmem:[%s4687 + $0x8] sm:$0xff]
        %v4690 = vld [vmem:[%s4687 + $0x10] sm:$0xff]
        %v4691 = vld [vmem:[%s4687 + $0x18] sm:$0xff]
        %v4692 = vld [vmem:[%s4687 + $0x20] sm:$0xff]
        %v4693 = vld [vmem:[%s4687 + $0x28] sm:$0xff]
        %v4694 = vld [vmem:[%s4687 + $0x30] sm:$0xff]
        %v4695 = vld [vmem:[%s4687 + $0x38] sm:$0xff]
        %s4696 = scalar_lea.vmem %s12, 5
        %v4697 = vld [vmem:[%s4696] sm:$0x1]
        %v4699 = vlaneseq
        %v4700 = vshrl.u32 %v4699, 7
        %v4701 = vsub.s32 0, %v4700
        %v4702 = vrot.slane %v4697, %v4701
        %4704 = vmatprep.subr.mxu0 0.0
        %4705 = vmatpush1.msra.mxu0 %v4688
        %4706 = vmatprep.subr.mxu0 0.0
        %4707 = vmatpush1.msra.mxu0 %v4689
        %4708 = vmatprep.subr.mxu0 0.0
        %4709 = vmatpush1.msra.mxu0 %v4690
        %4710 = vmatprep.subr.mxu0 0.0
        %4711 = vmatpush1.msra.mxu0 %v4691
        %4712 = vmatprep.subr.mxu0 0.0
        %4713 = vmatpush1.msra.mxu0 %v4692
        %4714 = vmatprep.subr.mxu0 0.0
        %4715 = vmatpush1.msra.mxu0 %v4693
        %4716 = vmatprep.subr.mxu0 0.0
        %4717 = vmatpush1.msra.mxu0 %v4694
        %4718 = vmatprep.subr.mxu0 0.0
        %4719 = vmatpush1.msra.mxu0 %v4695
        %4720 = vmatprep.subr.mxu0 0.0
        %4721 = vmatpush1.msra.mxu0 0.0
        %4722 = vmatprep.subr.mxu0 0.0
        %4723 = vmatpush1.msra.mxu0 0.0
        %4724 = vmatprep.subr.mxu0 0.0
        %4725 = vmatpush1.msra.mxu0 0.0
        %4726 = vmatprep.subr.mxu0 0.0
        %4727 = vmatpush1.msra.mxu0 0.0
        %4728 = vmatprep.subr.mxu0 0.0
        %4729 = vmatpush1.msra.mxu0 0.0
        %4730 = vmatprep.subr.mxu0 0.0
        %4731 = vmatpush1.msra.mxu0 0.0
        %4732 = vmatprep.subr.mxu0 0.0
        %4733 = vmatpush1.msra.mxu0 0.0
        %4734 = vmatprep.subr.mxu0 0.0
        %4735 = vmatpush1.msra.mxu0 0.0
        %4736 = vmatprep.subr.mxu0 0.0
        %4737 = vmatpush1.msra.mxu0 0.0
        %4738 = vmatprep.subr.mxu0 0.0
        %4739 = vmatpush1.msra.mxu0 0.0
        %4740 = vmatprep.subr.mxu0 0.0
        %4741 = vmatpush1.msra.mxu0 0.0
        %4742 = vmatprep.subr.mxu0 0.0
        %4743 = vmatpush1.msra.mxu0 0.0
        %4744 = vmatprep.subr.mxu0 0.0
        %4745 = vmatpush1.msra.mxu0 0.0
        %4746 = vmatprep.subr.mxu0 0.0
        %4747 = vmatpush1.msra.mxu0 0.0
        %4748 = vmatprep.subr.mxu0 0.0
        %4749 = vmatpush1.msra.mxu0 0.0
        %4750 = vmatprep.subr.mxu0 0.0
        %4751 = vmatpush1.msra.mxu0 0.0
        %4752 = vmatprep.subr.mxu0 0.0
        %4753 = vmatpush1.msra.mxu0 0.0
        %4754 = vmatprep.subr.mxu0 0.0
        %4755 = vmatpush1.msra.mxu0 0.0
        %4756 = vmatprep.subr.mxu0 0.0
        %4757 = vmatpush1.msra.mxu0 0.0
        %4758 = vmatprep.subr.mxu0 0.0
        %4759 = vmatpush1.msra.mxu0 0.0
        %4760 = vmatprep.subr.mxu0 0.0
        %4761 = vmatpush1.msra.mxu0 0.0
        %4762 = vmatprep.subr.mxu0 0.0
        %4763 = vmatpush1.msra.mxu0 0.0
        %4764 = vmatprep.subr.mxu0 0.0
        %4765 = vmatpush1.msra.mxu0 0.0
        %4766 = vmatprep.subr.mxu0 0.0
        %4767 = vmatpush1.msra.mxu0 0.0
        %4768 = vmatprep.mubr.f32.mxu0 0.0
        %4769 = vmatmul.mubr.f32.gmra.mrb[0].mxu0 %v3988
        %v4770 = vpop.f32.mrb[0].mxu0
        %v4771 = vadd.f32 %v4702, %v4770
        %v4772 = vpop.f32.mrb[0].mxu0
        %4773 = vmatprep.mubr.f32.mxu0 0.0
        %4774 = vmatmul.mubr.f32.gmra.mrb[0].mxu0 %v3991
        %v4775 = vpop.f32.mrb[0].mxu0
        %v4776 = vadd.f32 %v4702, %v4775
        %v4777 = vpop.f32.mrb[0].mxu0
        %4778 = vmatprep.mubr.f32.mxu0 0.0
        %4779 = vmatmul.mubr.f32.gmra.mrb[0].mxu0 %v3994
        %v4780 = vpop.f32.mrb[0].mxu0
        %v4781 = vadd.f32 %v4702, %v4780
        %v4782 = vpop.f32.mrb[0].mxu0
        %4783 = vdwg.mxu0
        %v4785 = vsel %vm1302, %v4577, 0
        %v4788 = vsel %vm1302, %v4582, 0
        %v4791 = vsel %vm1302, %v4587, 0
        %v4794 = vsel %vm1302, %v4674, 0
        %v4797 = vsel %vm1302, %v4679, 0
        %v4800 = vsel %vm1302, %v4684, 0
        %4802 = vmatprep.subr.mxu0 0.0
        %4803 = vmatpush1.xpose.msra.mxu0 %v4794
        %4804 = vmatprep.subr.mxu0 0.0
        %4805 = vmatpush1.xpose.msra.mxu0 %v4797
        %4806 = vmatprep.subr.mxu0 0.0
        %4807 = vmatpush1.xpose.msra.mxu0 %v4800
        %4808 = vmatprep.subr.mxu0 0.0
        %4809 = vmatpush1.xpose.msra.mxu0 0.0
        %4810 = vmatprep.subr.mxu0 0.0
        %4811 = vmatpush1.xpose.msra.mxu0 0.0
        %4812 = vmatprep.subr.mxu0 0.0
        %4813 = vmatpush1.xpose.msra.mxu0 0.0
        %4814 = vmatprep.subr.mxu0 0.0
        %4815 = vmatpush1.xpose.msra.mxu0 0.0
        %4816 = vmatprep.subr.mxu0 0.0
        %4817 = vmatpush1.xpose.msra.mxu0 0.0
        %4818 = vmatprep.subr.mxu0 0.0
        %4819 = vmatpush1.xpose.msra.mxu0 0.0
        %4820 = vmatprep.subr.mxu0 0.0
        %4821 = vmatpush1.xpose.msra.mxu0 0.0
        %4822 = vmatprep.subr.mxu0 0.0
        %4823 = vmatpush1.xpose.msra.mxu0 0.0
        %4824 = vmatprep.subr.mxu0 0.0
        %4825 = vmatpush1.xpose.msra.mxu0 0.0
        %4826 = vmatprep.subr.mxu0 0.0
        %4827 = vmatpush1.xpose.msra.mxu0 0.0
        %4828 = vmatprep.subr.mxu0 0.0
        %4829 = vmatpush1.xpose.msra.mxu0 0.0
        %4830 = vmatprep.subr.mxu0 0.0
        %4831 = vmatpush1.xpose.msra.mxu0 0.0
        %4832 = vmatprep.subr.mxu0 0.0
        %4833 = vmatpush1.xpose.msra.mxu0 0.0
        %4834 = vmatprep.subr.mxu0 0.0
        %4835 = vmatpush1.xpose.msra.mxu0 0.0
        %4836 = vmatprep.subr.mxu0 0.0
        %4837 = vmatpush1.xpose.msra.mxu0 0.0
        %4838 = vmatprep.subr.mxu0 0.0
        %4839 = vmatpush1.xpose.msra.mxu0 0.0
        %4840 = vmatprep.subr.mxu0 0.0
        %4841 = vmatpush1.xpose.msra.mxu0 0.0
        %4842 = vmatprep.subr.mxu0 0.0
        %4843 = vmatpush1.xpose.msra.mxu0 0.0
        %4844 = vmatprep.subr.mxu0 0.0
        %4845 = vmatpush1.xpose.msra.mxu0 0.0
        %4846 = vmatprep.subr.mxu0 0.0
        %4847 = vmatpush1.xpose.msra.mxu0 0.0
        %4848 = vmatprep.subr.mxu0 0.0
        %4849 = vmatpush1.xpose.msra.mxu0 0.0
        %4850 = vmatprep.subr.mxu0 0.0
        %4851 = vmatpush1.xpose.msra.mxu0 0.0
        %4852 = vmatprep.subr.mxu0 0.0
        %4853 = vmatpush1.xpose.msra.mxu0 0.0
        %4854 = vmatprep.subr.mxu0 0.0
        %4855 = vmatpush1.xpose.msra.mxu0 0.0
        %4856 = vmatprep.subr.mxu0 0.0
        %4857 = vmatpush1.xpose.msra.mxu0 0.0
        %4858 = vmatprep.subr.mxu0 0.0
        %4859 = vmatpush1.xpose.msra.mxu0 0.0
        %4860 = vmatprep.subr.mxu0 0.0
        %4861 = vmatpush1.xpose.msra.mxu0 0.0
        %4862 = vmatprep.subr.mxu0 0.0
        %4863 = vmatpush1.xpose.msra.mxu0 0.0
        %4864 = vmatprep.subr.mxu0 0.0
        %4865 = vmatpush1.xpose.msra.mxu0 0.0
        %4866 = vmatprep.mubr.f32.mxu0 0.0
        %4867 = vmatmul.mubr.f32.gmra.mrb[0].mxu0 %v4785
        %v4868 = vpop.f32.mrb[0].mxu0
        %v4869 = vadd.f32 %v948, %v4868
        %v4870 = vpop.f32.mrb[0].mxu0
        %4871 = vmatprep.mubr.f32.mxu0 0.0
        %4872 = vmatmul.mubr.f32.gmra.mrb[0].mxu0 %v4788
        %v4873 = vpop.f32.mrb[0].mxu0
        %v4874 = vadd.f32 %v948, %v4873
        %v4875 = vpop.f32.mrb[0].mxu0
        %4876 = vmatprep.mubr.f32.mxu0 0.0
        %4877 = vmatmul.mubr.f32.gmra.mrb[0].mxu0 %v4791
        %v4878 = vpop.f32.mrb[0].mxu0
        %v4879 = vadd.f32 %v948, %v4878
        %v4880 = vpop.f32.mrb[0].mxu0
        %4881 = vdwg.mxu0
        %v4882 = vsel %vm1401, %v4869, -inf
        %4883 = vmax.xlane.f32.xlu0 %v4882
        %v4884 = vpop.xlane.xlu0 %4883
        %v4885 = vsel %vm1401, %v4874, -inf
        %4886 = vmax.xlane.f32.xlu0 %v4885
        %v4887 = vpop.xlane.xlu0 %4886
        %v4888 = vsel %vm1401, %v4879, -inf
        %4889 = vmax.xlane.f32.xlu0 %v4888
        %v4890 = vpop.xlane.xlu0 %4889
        %v4891 = vsub.f32 %v4869, %v4884
        %v4892 = vsub.f32 %v4874, %v4887
        %v4893 = vsub.f32 %v4879, %v4890
        %v4894 = vmul.f32 %v4891, 1.442695
        %v4895 = vpow.pop %v4894
        %v4896 = vmul.f32 %v4892, 1.442695
        %v4897 = vpow.pop %v4896
        %v4898 = vmul.f32 %v4893, 1.442695
        %v4899 = vpow.pop %v4898
        %v4900 = vsel %vm1401, %v4895, 0.0
        %4901 = vadd.xlane.f32.xlu0 %v4900
        %v4902 = vpop.xlane.xlu0 %4901
        %v4903 = vsel %vm1401, %v4897, 0.0
        %4904 = vadd.xlane.f32.xlu0 %v4903
        %v4905 = vpop.xlane.xlu0 %4904
        %v4906 = vsel %vm1401, %v4899, 0.0
        %4907 = vadd.xlane.f32.xlu0 %v4906
        %v4908 = vpop.xlane.xlu0 %4907
        %v4909 = vrcp.pop %v4902
        %v4910 = vrcp.pop %v4905
        %v4911 = vrcp.pop %v4908
        %v4912 = vmul.f32 %v4895, %v4909
        %v4913 = vmul.f32 %v4897, %v4910
        %v4914 = vmul.f32 %v4899, %v4911
        %v4916 = vsel %vm1401, %v4912, 0
        %v4919 = vsel %vm1401, %v4913, 0
        %v4922 = vsel %vm1401, %v4914, 0
        %4924 = vmatprep.subr.mxu0 0.0
        %4925 = vmatpush1.msra.mxu0 %v4771
        %4926 = vmatprep.subr.mxu0 0.0
        %4927 = vmatpush1.msra.mxu0 %v4776
        %4928 = vmatprep.subr.mxu0 0.0
        %4929 = vmatpush1.msra.mxu0 %v4781
        %4930 = vmatprep.subr.mxu0 0.0
        %4931 = vmatpush1.msra.mxu0 0.0
        %4932 = vmatprep.subr.mxu0 0.0
        %4933 = vmatpush1.msra.mxu0 0.0
        %4934 = vmatprep.subr.mxu0 0.0
        %4935 = vmatpush1.msra.mxu0 0.0
        %4936 = vmatprep.subr.mxu0 0.0
        %4937 = vmatpush1.msra.mxu0 0.0
        %4938 = vmatprep.subr.mxu0 0.0
        %4939 = vmatpush1.msra.mxu0 0.0
        %4940 = vmatprep.subr.mxu0 0.0
        %4941 = vmatpush1.msra.mxu0 0.0
        %4942 = vmatprep.subr.mxu0 0.0
        %4943 = vmatpush1.msra.mxu0 0.0
        %4944 = vmatprep.subr.mxu0 0.0
        %4945 = vmatpush1.msra.mxu0 0.0
        %4946 = vmatprep.subr.mxu0 0.0
        %4947 = vmatpush1.msra.mxu0 0.0
        %4948 = vmatprep.subr.mxu0 0.0
        %4949 = vmatpush1.msra.mxu0 0.0
        %4950 = vmatprep.subr.mxu0 0.0
        %4951 = vmatpush1.msra.mxu0 0.0
        %4952 = vmatprep.subr.mxu0 0.0
        %4953 = vmatpush1.msra.mxu0 0.0
        %4954 = vmatprep.subr.mxu0 0.0
        %4955 = vmatpush1.msra.mxu0 0.0
        %4956 = vmatprep.subr.mxu0 0.0
        %4957 = vmatpush1.msra.mxu0 0.0
        %4958 = vmatprep.subr.mxu0 0.0
        %4959 = vmatpush1.msra.mxu0 0.0
        %4960 = vmatprep.subr.mxu0 0.0
        %4961 = vmatpush1.msra.mxu0 0.0
        %4962 = vmatprep.subr.mxu0 0.0
        %4963 = vmatpush1.msra.mxu0 0.0
        %4964 = vmatprep.subr.mxu0 0.0
        %4965 = vmatpush1.msra.mxu0 0.0
        %4966 = vmatprep.subr.mxu0 0.0
        %4967 = vmatpush1.msra.mxu0 0.0
        %4968 = vmatprep.subr.mxu0 0.0
        %4969 = vmatpush1.msra.mxu0 0.0
        %4970 = vmatprep.subr.mxu0 0.0
        %4971 = vmatpush1.msra.mxu0 0.0
        %4972 = vmatprep.subr.mxu0 0.0
        %4973 = vmatpush1.msra.mxu0 0.0
        %4974 = vmatprep.subr.mxu0 0.0
        %4975 = vmatpush1.msra.mxu0 0.0
        %4976 = vmatprep.subr.mxu0 0.0
        %4977 = vmatpush1.msra.mxu0 0.0
        %4978 = vmatprep.subr.mxu0 0.0
        %4979 = vmatpush1.msra.mxu0 0.0
        %4980 = vmatprep.subr.mxu0 0.0
        %4981 = vmatpush1.msra.mxu0 0.0
        %4982 = vmatprep.subr.mxu0 0.0
        %4983 = vmatpush1.msra.mxu0 0.0
        %4984 = vmatprep.subr.mxu0 0.0
        %4985 = vmatpush1.msra.mxu0 0.0
        %4986 = vmatprep.subr.mxu0 0.0
        %4987 = vmatpush1.msra.mxu0 0.0
        %4988 = vmatprep.mubr.f32.mxu0 0.0
        %4989 = vmatmul.mubr.f32.gmra.mrb[0].mxu0 %v4916
        %v4990 = vpop.f32.mrb[0].mxu0
        %v4991 = vadd.f32 0.0, %v4990
        %v4992 = vpop.f32.mrb[0].mxu0
        %4993 = vmatprep.mubr.f32.mxu0 0.0
        %4994 = vmatmul.mubr.f32.gmra.mrb[0].mxu0 %v4919
        %v4995 = vpop.f32.mrb[0].mxu0
        %v4996 = vadd.f32 0.0, %v4995
        %v4997 = vpop.f32.mrb[0].mxu0
        %4998 = vmatprep.mubr.f32.mxu0 0.0
        %4999 = vmatmul.mubr.f32.gmra.mrb[0].mxu0 %v4922
        %v5000 = vpop.f32.mrb[0].mxu0
        %v5001 = vadd.f32 0.0, %v5000
        %v5002 = vpop.f32.mrb[0].mxu0
        %5003 = vdwg.mxu0
        %s5004 = scalar_lea.vmem %s13, 80
        %v5005 = vld [vmem:[%s5004] sm:$0xff]
        %v5006 = vld [vmem:[%s5004 + $0x8] sm:$0xff]
        %v5008 = vsel %vm1302, %v4991, 0
        %v5011 = vsel %vm1302, %v4996, 0
        %v5014 = vsel %vm1302, %v5001, 0
        %5016 = vmatprep.subr.mxu0 0.0
        %5017 = vmatpush1.msra.mxu0 %v5005
        %5018 = vmatprep.subr.mxu0 0.0
        %5019 = vmatpush1.msra.mxu0 %v5006
        %5020 = vmatprep.subr.mxu0 0.0
        %5021 = vmatpush1.msra.mxu0 0.0
        %5022 = vmatprep.subr.mxu0 0.0
        %5023 = vmatpush1.msra.mxu0 0.0
        %5024 = vmatprep.subr.mxu0 0.0
        %5025 = vmatpush1.msra.mxu0 0.0
        %5026 = vmatprep.subr.mxu0 0.0
        %5027 = vmatpush1.msra.mxu0 0.0
        %5028 = vmatprep.subr.mxu0 0.0
        %5029 = vmatpush1.msra.mxu0 0.0
        %5030 = vmatprep.subr.mxu0 0.0
        %5031 = vmatpush1.msra.mxu0 0.0
        %5032 = vmatprep.subr.mxu0 0.0
        %5033 = vmatpush1.msra.mxu0 0.0
        %5034 = vmatprep.subr.mxu0 0.0
        %5035 = vmatpush1.msra.mxu0 0.0
        %5036 = vmatprep.subr.mxu0 0.0
        %5037 = vmatpush1.msra.mxu0 0.0
        %5038 = vmatprep.subr.mxu0 0.0
        %5039 = vmatpush1.msra.mxu0 0.0
        %5040 = vmatprep.subr.mxu0 0.0
        %5041 = vmatpush1.msra.mxu0 0.0
        %5042 = vmatprep.subr.mxu0 0.0
        %5043 = vmatpush1.msra.mxu0 0.0
        %5044 = vmatprep.subr.mxu0 0.0
        %5045 = vmatpush1.msra.mxu0 0.0
        %5046 = vmatprep.subr.mxu0 0.0
        %5047 = vmatpush1.msra.mxu0 0.0
        %5048 = vmatprep.subr.mxu0 0.0
        %5049 = vmatpush1.msra.mxu0 0.0
        %5050 = vmatprep.subr.mxu0 0.0
        %5051 = vmatpush1.msra.mxu0 0.0
        %5052 = vmatprep.subr.mxu0 0.0
        %5053 = vmatpush1.msra.mxu0 0.0
        %5054 = vmatprep.subr.mxu0 0.0
        %5055 = vmatpush1.msra.mxu0 0.0
        %5056 = vmatprep.subr.mxu0 0.0
        %5057 = vmatpush1.msra.mxu0 0.0
        %5058 = vmatprep.subr.mxu0 0.0
        %5059 = vmatpush1.msra.mxu0 0.0
        %5060 = vmatprep.subr.mxu0 0.0
        %5061 = vmatpush1.msra.mxu0 0.0
        %5062 = vmatprep.subr.mxu0 0.0
        %5063 = vmatpush1.msra.mxu0 0.0
        %5064 = vmatprep.subr.mxu0 0.0
        %5065 = vmatpush1.msra.mxu0 0.0
        %5066 = vmatprep.subr.mxu0 0.0
        %5067 = vmatpush1.msra.mxu0 0.0
        %5068 = vmatprep.subr.mxu0 0.0
        %5069 = vmatpush1.msra.mxu0 0.0
        %5070 = vmatprep.subr.mxu0 0.0
        %5071 = vmatpush1.msra.mxu0 0.0
        %5072 = vmatprep.subr.mxu0 0.0
        %5073 = vmatpush1.msra.mxu0 0.0
        %5074 = vmatprep.subr.mxu0 0.0
        %5075 = vmatpush1.msra.mxu0 0.0
        %5076 = vmatprep.subr.mxu0 0.0
        %5077 = vmatpush1.msra.mxu0 0.0
        %5078 = vmatprep.subr.mxu0 0.0
        %5079 = vmatpush1.msra.mxu0 0.0
        %5080 = vmatprep.mubr.f32.mxu0 0.0
        %5081 = vmatmul.mubr.f32.gmra.mrb[0].mxu0 %v5008
        %v5082 = vpop.f32.mrb[0].mxu0
        %v5083 = vadd.f32 0.0, %v5082
        %v5084 = vpop.f32.mrb[0].mxu0
        %5085 = vmatprep.mubr.f32.mxu0 0.0
        %5086 = vmatmul.mubr.f32.gmra.mrb[0].mxu0 %v5011
        %v5087 = vpop.f32.mrb[0].mxu0
        %v5088 = vadd.f32 0.0, %v5087
        %v5089 = vpop.f32.mrb[0].mxu0
        %5090 = vmatprep.mubr.f32.mxu0 0.0
        %5091 = vmatmul.mubr.f32.gmra.mrb[0].mxu0 %v5014
        %v5092 = vpop.f32.mrb[0].mxu0
        %v5093 = vadd.f32 0.0, %v5092
        %v5094 = vpop.f32.mrb[0].mxu0
        %5095 = vdwg.mxu0
        %v5097 = vsel %vm1302, %v4477, 0
        %v5100 = vsel %vm1302, %v4482, 0
        %v5103 = vsel %vm1302, %v4487, 0
        %5105 = vmatprep.subr.mxu0 0.0
        %5106 = vmatpush1.msra.mxu0 %v4491
        %5107 = vmatprep.subr.mxu0 0.0
        %5108 = vmatpush1.msra.mxu0 %v4492
        %5109 = vmatprep.subr.mxu0 0.0
        %5110 = vmatpush1.msra.mxu0 0.0
        %5111 = vmatprep.subr.mxu0 0.0
        %5112 = vmatpush1.msra.mxu0 0.0
        %5113 = vmatprep.subr.mxu0 0.0
        %5114 = vmatpush1.msra.mxu0 0.0
        %5115 = vmatprep.subr.mxu0 0.0
        %5116 = vmatpush1.msra.mxu0 0.0
        %5117 = vmatprep.subr.mxu0 0.0
        %5118 = vmatpush1.msra.mxu0 0.0
        %5119 = vmatprep.subr.mxu0 0.0
        %5120 = vmatpush1.msra.mxu0 0.0
        %5121 = vmatprep.subr.mxu0 0.0
        %5122 = vmatpush1.msra.mxu0 0.0
        %5123 = vmatprep.subr.mxu0 0.0
        %5124 = vmatpush1.msra.mxu0 0.0
        %5125 = vmatprep.subr.mxu0 0.0
        %5126 = vmatpush1.msra.mxu0 0.0
        %5127 = vmatprep.subr.mxu0 0.0
        %5128 = vmatpush1.msra.mxu0 0.0
        %5129 = vmatprep.subr.mxu0 0.0
        %5130 = vmatpush1.msra.mxu0 0.0
        %5131 = vmatprep.subr.mxu0 0.0
        %5132 = vmatpush1.msra.mxu0 0.0
        %5133 = vmatprep.subr.mxu0 0.0
        %5134 = vmatpush1.msra.mxu0 0.0
        %5135 = vmatprep.subr.mxu0 0.0
        %5136 = vmatpush1.msra.mxu0 0.0
        %5137 = vmatprep.subr.mxu0 0.0
        %5138 = vmatpush1.msra.mxu0 0.0
        %5139 = vmatprep.subr.mxu0 0.0
        %5140 = vmatpush1.msra.mxu0 0.0
        %5141 = vmatprep.subr.mxu0 0.0
        %5142 = vmatpush1.msra.mxu0 0.0
        %5143 = vmatprep.subr.mxu0 0.0
        %5144 = vmatpush1.msra.mxu0 0.0
        %5145 = vmatprep.subr.mxu0 0.0
        %5146 = vmatpush1.msra.mxu0 0.0
        %5147 = vmatprep.subr.mxu0 0.0
        %5148 = vmatpush1.msra.mxu0 0.0
        %5149 = vmatprep.subr.mxu0 0.0
        %5150 = vmatpush1.msra.mxu0 0.0
        %5151 = vmatprep.subr.mxu0 0.0
        %5152 = vmatpush1.msra.mxu0 0.0
        %5153 = vmatprep.subr.mxu0 0.0
        %5154 = vmatpush1.msra.mxu0 0.0
        %5155 = vmatprep.subr.mxu0 0.0
        %5156 = vmatpush1.msra.mxu0 0.0
        %5157 = vmatprep.subr.mxu0 0.0
        %5158 = vmatpush1.msra.mxu0 0.0
        %5159 = vmatprep.subr.mxu0 0.0
        %5160 = vmatpush1.msra.mxu0 0.0
        %5161 = vmatprep.subr.mxu0 0.0
        %5162 = vmatpush1.msra.mxu0 0.0
        %5163 = vmatprep.subr.mxu0 0.0
        %5164 = vmatpush1.msra.mxu0 0.0
        %5165 = vmatprep.subr.mxu0 0.0
        %5166 = vmatpush1.msra.mxu0 0.0
        %5167 = vmatprep.subr.mxu0 0.0
        %5168 = vmatpush1.msra.mxu0 0.0
        %5169 = vmatprep.mubr.f32.mxu0 0.0
        %5170 = vmatmul.mubr.f32.gmra.mrb[0].mxu0 %v5097
        %v5171 = vpop.f32.mrb[0].mxu0
        %v5172 = vadd.f32 %v5083, %v5171
        %v5173 = vpop.f32.mrb[0].mxu0
        %5174 = vmatprep.mubr.f32.mxu0 0.0
        %5175 = vmatmul.mubr.f32.gmra.mrb[0].mxu0 %v5100
        %v5176 = vpop.f32.mrb[0].mxu0
        %v5177 = vadd.f32 %v5088, %v5176
        %v5178 = vpop.f32.mrb[0].mxu0
        %5179 = vmatprep.mubr.f32.mxu0 0.0
        %5180 = vmatmul.mubr.f32.gmra.mrb[0].mxu0 %v5103
        %v5181 = vpop.f32.mrb[0].mxu0
        %v5182 = vadd.f32 %v5093, %v5181
        %v5183 = vpop.f32.mrb[0].mxu0
        %5184 = vdwg.mxu0
        %s5185 = scalar_lea.vmem %s7, 384
        %v5186 = vld [vmem:[%s5185] sm:$0xff]
        %v5187 = vld [vmem:[%s5185 + $0x8] sm:$0xff]
        %v5188 = vld [vmem:[%s5185 + $0x10] sm:$0xff]
        %v5189 = vld [vmem:[%s5185 + $0x18] sm:$0xff]
        %v5190 = vld [vmem:[%s5185 + $0x20] sm:$0xff]
        %v5191 = vld [vmem:[%s5185 + $0x28] sm:$0xff]
        %v5192 = vld [vmem:[%s5185 + $0x30] sm:$0xff]
        %v5193 = vld [vmem:[%s5185 + $0x38] sm:$0xff]
        %s5194 = scalar_lea.vmem %s8, 6
        %v5195 = vld [vmem:[%s5194] sm:$0x1]
        %v5197 = vlaneseq
        %v5198 = vshrl.u32 %v5197, 7
        %v5199 = vsub.s32 0, %v5198
        %v5200 = vrot.slane %v5195, %v5199
        %5202 = vmatprep.subr.mxu0 0.0
        %5203 = vmatpush1.msra.mxu0 %v5186
        %5204 = vmatprep.subr.mxu0 0.0
        %5205 = vmatpush1.msra.mxu0 %v5187
        %5206 = vmatprep.subr.mxu0 0.0
        %5207 = vmatpush1.msra.mxu0 %v5188
        %5208 = vmatprep.subr.mxu0 0.0
        %5209 = vmatpush1.msra.mxu0 %v5189
        %5210 = vmatprep.subr.mxu0 0.0
        %5211 = vmatpush1.msra.mxu0 %v5190
        %5212 = vmatprep.subr.mxu0 0.0
        %5213 = vmatpush1.msra.mxu0 %v5191
        %5214 = vmatprep.subr.mxu0 0.0
        %5215 = vmatpush1.msra.mxu0 %v5192
        %5216 = vmatprep.subr.mxu0 0.0
        %5217 = vmatpush1.msra.mxu0 %v5193
        %5218 = vmatprep.subr.mxu0 0.0
        %5219 = vmatpush1.msra.mxu0 0.0
        %5220 = vmatprep.subr.mxu0 0.0
        %5221 = vmatpush1.msra.mxu0 0.0
        %5222 = vmatprep.subr.mxu0 0.0
        %5223 = vmatpush1.msra.mxu0 0.0
        %5224 = vmatprep.subr.mxu0 0.0
        %5225 = vmatpush1.msra.mxu0 0.0
        %5226 = vmatprep.subr.mxu0 0.0
        %5227 = vmatpush1.msra.mxu0 0.0
        %5228 = vmatprep.subr.mxu0 0.0
        %5229 = vmatpush1.msra.mxu0 0.0
        %5230 = vmatprep.subr.mxu0 0.0
        %5231 = vmatpush1.msra.mxu0 0.0
        %5232 = vmatprep.subr.mxu0 0.0
        %5233 = vmatpush1.msra.mxu0 0.0
        %5234 = vmatprep.subr.mxu0 0.0
        %5235 = vmatpush1.msra.mxu0 0.0
        %5236 = vmatprep.subr.mxu0 0.0
        %5237 = vmatpush1.msra.mxu0 0.0
        %5238 = vmatprep.subr.mxu0 0.0
        %5239 = vmatpush1.msra.mxu0 0.0
        %5240 = vmatprep.subr.mxu0 0.0
        %5241 = vmatpush1.msra.mxu0 0.0
        %5242 = vmatprep.subr.mxu0 0.0
        %5243 = vmatpush1.msra.mxu0 0.0
        %5244 = vmatprep.subr.mxu0 0.0
        %5245 = vmatpush1.msra.mxu0 0.0
        %5246 = vmatprep.subr.mxu0 0.0
        %5247 = vmatpush1.msra.mxu0 0.0
        %5248 = vmatprep.subr.mxu0 0.0
        %5249 = vmatpush1.msra.mxu0 0.0
        %5250 = vmatprep.subr.mxu0 0.0
        %5251 = vmatpush1.msra.mxu0 0.0
        %5252 = vmatprep.subr.mxu0 0.0
        %5253 = vmatpush1.msra.mxu0 0.0
        %5254 = vmatprep.subr.mxu0 0.0
        %5255 = vmatpush1.msra.mxu0 0.0
        %5256 = vmatprep.subr.mxu0 0.0
        %5257 = vmatpush1.msra.mxu0 0.0
        %5258 = vmatprep.subr.mxu0 0.0
        %5259 = vmatpush1.msra.mxu0 0.0
        %5260 = vmatprep.subr.mxu0 0.0
        %5261 = vmatpush1.msra.mxu0 0.0
        %5262 = vmatprep.subr.mxu0 0.0
        %5263 = vmatpush1.msra.mxu0 0.0
        %5264 = vmatprep.subr.mxu0 0.0
        %5265 = vmatpush1.msra.mxu0 0.0
        %5266 = vmatprep.mubr.f32.mxu0 0.0
        %5267 = vmatmul.mubr.f32.gmra.mrb[0].mxu0 %v3988
        %v5268 = vpop.f32.mrb[0].mxu0
        %v5269 = vadd.f32 %v5200, %v5268
        %v5270 = vpop.f32.mrb[0].mxu0
        %5271 = vmatprep.mubr.f32.mxu0 0.0
        %5272 = vmatmul.mubr.f32.gmra.mrb[0].mxu0 %v3991
        %v5273 = vpop.f32.mrb[0].mxu0
        %v5274 = vadd.f32 %v5200, %v5273
        %v5275 = vpop.f32.mrb[0].mxu0
        %5276 = vmatprep.mubr.f32.mxu0 0.0
        %5277 = vmatmul.mubr.f32.gmra.mrb[0].mxu0 %v3994
        %v5278 = vpop.f32.mrb[0].mxu0
        %v5279 = vadd.f32 %v5200, %v5278
        %v5280 = vpop.f32.mrb[0].mxu0
        %5281 = vdwg.mxu0
        %s5282 = scalar_lea.vmem %s9, 384
        %v5283 = vld [vmem:[%s5282] sm:$0xff]
        %v5284 = vld [vmem:[%s5282 + $0x8] sm:$0xff]
        %v5285 = vld [vmem:[%s5282 + $0x10] sm:$0xff]
        %v5286 = vld [vmem:[%s5282 + $0x18] sm:$0xff]
        %v5287 = vld [vmem:[%s5282 + $0x20] sm:$0xff]
        %v5288 = vld [vmem:[%s5282 + $0x28] sm:$0xff]
        %v5289 = vld [vmem:[%s5282 + $0x30] sm:$0xff]
        %v5290 = vld [vmem:[%s5282 + $0x38] sm:$0xff]
        %s5291 = scalar_lea.vmem %s10, 6
        %v5292 = vld [vmem:[%s5291] sm:$0x1]
        %v5294 = vlaneseq
        %v5295 = vshrl.u32 %v5294, 7
        %v5296 = vsub.s32 0, %v5295
        %v5297 = vrot.slane %v5292, %v5296
        %5299 = vmatprep.subr.mxu0 0.0
        %5300 = vmatpush1.msra.mxu0 %v5283
        %5301 = vmatprep.subr.mxu0 0.0
        %5302 = vmatpush1.msra.mxu0 %v5284
        %5303 = vmatprep.subr.mxu0 0.0
        %5304 = vmatpush1.msra.mxu0 %v5285
        %5305 = vmatprep.subr.mxu0 0.0
        %5306 = vmatpush1.msra.mxu0 %v5286
        %5307 = vmatprep.subr.mxu0 0.0
        %5308 = vmatpush1.msra.mxu0 %v5287
        %5309 = vmatprep.subr.mxu0 0.0
        %5310 = vmatpush1.msra.mxu0 %v5288
        %5311 = vmatprep.subr.mxu0 0.0
        %5312 = vmatpush1.msra.mxu0 %v5289
        %5313 = vmatprep.subr.mxu0 0.0
        %5314 = vmatpush1.msra.mxu0 %v5290
        %5315 = vmatprep.subr.mxu0 0.0
        %5316 = vmatpush1.msra.mxu0 0.0
        %5317 = vmatprep.subr.mxu0 0.0
        %5318 = vmatpush1.msra.mxu0 0.0
        %5319 = vmatprep.subr.mxu0 0.0
        %5320 = vmatpush1.msra.mxu0 0.0
        %5321 = vmatprep.subr.mxu0 0.0
        %5322 = vmatpush1.msra.mxu0 0.0
        %5323 = vmatprep.subr.mxu0 0.0
        %5324 = vmatpush1.msra.mxu0 0.0
        %5325 = vmatprep.subr.mxu0 0.0
        %5326 = vmatpush1.msra.mxu0 0.0
        %5327 = vmatprep.subr.mxu0 0.0
        %5328 = vmatpush1.msra.mxu0 0.0
        %5329 = vmatprep.subr.mxu0 0.0
        %5330 = vmatpush1.msra.mxu0 0.0
        %5331 = vmatprep.subr.mxu0 0.0
        %5332 = vmatpush1.msra.mxu0 0.0
        %5333 = vmatprep.subr.mxu0 0.0
        %5334 = vmatpush1.msra.mxu0 0.0
        %5335 = vmatprep.subr.mxu0 0.0
        %5336 = vmatpush1.msra.mxu0 0.0
        %5337 = vmatprep.subr.mxu0 0.0
        %5338 = vmatpush1.msra.mxu0 0.0
        %5339 = vmatprep.subr.mxu0 0.0
        %5340 = vmatpush1.msra.mxu0 0.0
        %5341 = vmatprep.subr.mxu0 0.0
        %5342 = vmatpush1.msra.mxu0 0.0
        %5343 = vmatprep.subr.mxu0 0.0
        %5344 = vmatpush1.msra.mxu0 0.0
        %5345 = vmatprep.subr.mxu0 0.0
        %5346 = vmatpush1.msra.mxu0 0.0
        %5347 = vmatprep.subr.mxu0 0.0
        %5348 = vmatpush1.msra.mxu0 0.0
        %5349 = vmatprep.subr.mxu0 0.0
        %5350 = vmatpush1.msra.mxu0 0.0
        %5351 = vmatprep.subr.mxu0 0.0
        %5352 = vmatpush1.msra.mxu0 0.0
        %5353 = vmatprep.subr.mxu0 0.0
        %5354 = vmatpush1.msra.mxu0 0.0
        %5355 = vmatprep.subr.mxu0 0.0
        %5356 = vmatpush1.msra.mxu0 0.0
        %5357 = vmatprep.subr.mxu0 0.0
        %5358 = vmatpush1.msra.mxu0 0.0
        %5359 = vmatprep.subr.mxu0 0.0
        %5360 = vmatpush1.msra.mxu0 0.0
        %5361 = vmatprep.subr.mxu0 0.0
        %5362 = vmatpush1.msra.mxu0 0.0
        %5363 = vmatprep.mubr.f32.mxu0 0.0
        %5364 = vmatmul.mubr.f32.gmra.mrb[0].mxu0 %v3988
        %v5365 = vpop.f32.mrb[0].mxu0
        %v5366 = vadd.f32 %v5297, %v5365
        %v5367 = vpop.f32.mrb[0].mxu0
        %5368 = vmatprep.mubr.f32.mxu0 0.0
        %5369 = vmatmul.mubr.f32.gmra.mrb[0].mxu0 %v3991
        %v5370 = vpop.f32.mrb[0].mxu0
        %v5371 = vadd.f32 %v5297, %v5370
        %v5372 = vpop.f32.mrb[0].mxu0
        %5373 = vmatprep.mubr.f32.mxu0 0.0
        %5374 = vmatmul.mubr.f32.gmra.mrb[0].mxu0 %v3994
        %v5375 = vpop.f32.mrb[0].mxu0
        %v5376 = vadd.f32 %v5297, %v5375
        %v5377 = vpop.f32.mrb[0].mxu0
        %5378 = vdwg.mxu0
        %s5379 = scalar_lea.vmem %s11, 384
        %v5380 = vld [vmem:[%s5379] sm:$0xff]
        %v5381 = vld [vmem:[%s5379 + $0x8] sm:$0xff]
        %v5382 = vld [vmem:[%s5379 + $0x10] sm:$0xff]
        %v5383 = vld [vmem:[%s5379 + $0x18] sm:$0xff]
        %v5384 = vld [vmem:[%s5379 + $0x20] sm:$0xff]
        %v5385 = vld [vmem:[%s5379 + $0x28] sm:$0xff]
        %v5386 = vld [vmem:[%s5379 + $0x30] sm:$0xff]
        %v5387 = vld [vmem:[%s5379 + $0x38] sm:$0xff]
        %s5388 = scalar_lea.vmem %s12, 6
        %v5389 = vld [vmem:[%s5388] sm:$0x1]
        %v5391 = vlaneseq
        %v5392 = vshrl.u32 %v5391, 7
        %v5393 = vsub.s32 0, %v5392
        %v5394 = vrot.slane %v5389, %v5393
        %5396 = vmatprep.subr.mxu0 0.0
        %5397 = vmatpush1.msra.mxu0 %v5380
        %5398 = vmatprep.subr.mxu0 0.0
        %5399 = vmatpush1.msra.mxu0 %v5381
        %5400 = vmatprep.subr.mxu0 0.0
        %5401 = vmatpush1.msra.mxu0 %v5382
        %5402 = vmatprep.subr.mxu0 0.0
        %5403 = vmatpush1.msra.mxu0 %v5383
        %5404 = vmatprep.subr.mxu0 0.0
        %5405 = vmatpush1.msra.mxu0 %v5384
        %5406 = vmatprep.subr.mxu0 0.0
        %5407 = vmatpush1.msra.mxu0 %v5385
        %5408 = vmatprep.subr.mxu0 0.0
        %5409 = vmatpush1.msra.mxu0 %v5386
        %5410 = vmatprep.subr.mxu0 0.0
        %5411 = vmatpush1.msra.mxu0 %v5387
        %5412 = vmatprep.subr.mxu0 0.0
        %5413 = vmatpush1.msra.mxu0 0.0
        %5414 = vmatprep.subr.mxu0 0.0
        %5415 = vmatpush1.msra.mxu0 0.0
        %5416 = vmatprep.subr.mxu0 0.0
        %5417 = vmatpush1.msra.mxu0 0.0
        %5418 = vmatprep.subr.mxu0 0.0
        %5419 = vmatpush1.msra.mxu0 0.0
        %5420 = vmatprep.subr.mxu0 0.0
        %5421 = vmatpush1.msra.mxu0 0.0
        %5422 = vmatprep.subr.mxu0 0.0
        %5423 = vmatpush1.msra.mxu0 0.0
        %5424 = vmatprep.subr.mxu0 0.0
        %5425 = vmatpush1.msra.mxu0 0.0
        %5426 = vmatprep.subr.mxu0 0.0
        %5427 = vmatpush1.msra.mxu0 0.0
        %5428 = vmatprep.subr.mxu0 0.0
        %5429 = vmatpush1.msra.mxu0 0.0
        %5430 = vmatprep.subr.mxu0 0.0
        %5431 = vmatpush1.msra.mxu0 0.0
        %5432 = vmatprep.subr.mxu0 0.0
        %5433 = vmatpush1.msra.mxu0 0.0
        %5434 = vmatprep.subr.mxu0 0.0
        %5435 = vmatpush1.msra.mxu0 0.0
        %5436 = vmatprep.subr.mxu0 0.0
        %5437 = vmatpush1.msra.mxu0 0.0
        %5438 = vmatprep.subr.mxu0 0.0
        %5439 = vmatpush1.msra.mxu0 0.0
        %5440 = vmatprep.subr.mxu0 0.0
        %5441 = vmatpush1.msra.mxu0 0.0
        %5442 = vmatprep.subr.mxu0 0.0
        %5443 = vmatpush1.msra.mxu0 0.0
        %5444 = vmatprep.subr.mxu0 0.0
        %5445 = vmatpush1.msra.mxu0 0.0
        %5446 = vmatprep.subr.mxu0 0.0
        %5447 = vmatpush1.msra.mxu0 0.0
        %5448 = vmatprep.subr.mxu0 0.0
        %5449 = vmatpush1.msra.mxu0 0.0
        %5450 = vmatprep.subr.mxu0 0.0
        %5451 = vmatpush1.msra.mxu0 0.0
        %5452 = vmatprep.subr.mxu0 0.0
        %5453 = vmatpush1.msra.mxu0 0.0
        %5454 = vmatprep.subr.mxu0 0.0
        %5455 = vmatpush1.msra.mxu0 0.0
        %5456 = vmatprep.subr.mxu0 0.0
        %5457 = vmatpush1.msra.mxu0 0.0
        %5458 = vmatprep.subr.mxu0 0.0
        %5459 = vmatpush1.msra.mxu0 0.0
        %5460 = vmatprep.mubr.f32.mxu0 0.0
        %5461 = vmatmul.mubr.f32.gmra.mrb[0].mxu0 %v3988
        %v5462 = vpop.f32.mrb[0].mxu0
        %v5463 = vadd.f32 %v5394, %v5462
        %v5464 = vpop.f32.mrb[0].mxu0
        %5465 = vmatprep.mubr.f32.mxu0 0.0
        %5466 = vmatmul.mubr.f32.gmra.mrb[0].mxu0 %v3991
        %v5467 = vpop.f32.mrb[0].mxu0
        %v5468 = vadd.f32 %v5394, %v5467
        %v5469 = vpop.f32.mrb[0].mxu0
        %5470 = vmatprep.mubr.f32.mxu0 0.0
        %5471 = vmatmul.mubr.f32.gmra.mrb[0].mxu0 %v3994
        %v5472 = vpop.f32.mrb[0].mxu0
        %v5473 = vadd.f32 %v5394, %v5472
        %v5474 = vpop.f32.mrb[0].mxu0
        %5475 = vdwg.mxu0
        %v5477 = vsel %vm1302, %v5269, 0
        %v5480 = vsel %vm1302, %v5274, 0
        %v5483 = vsel %vm1302, %v5279, 0
        %v5486 = vsel %vm1302, %v5366, 0
        %v5489 = vsel %vm1302, %v5371, 0
        %v5492 = vsel %vm1302, %v5376, 0
        %5494 = vmatprep.subr.mxu0 0.0
        %5495 = vmatpush1.xpose.msra.mxu0 %v5486
        %5496 = vmatprep.subr.mxu0 0.0
        %5497 = vmatpush1.xpose.msra.mxu0 %v5489
        %5498 = vmatprep.subr.mxu0 0.0
        %5499 = vmatpush1.xpose.msra.mxu0 %v5492
        %5500 = vmatprep.subr.mxu0 0.0
        %5501 = vmatpush1.xpose.msra.mxu0 0.0
        %5502 = vmatprep.subr.mxu0 0.0
        %5503 = vmatpush1.xpose.msra.mxu0 0.0
        %5504 = vmatprep.subr.mxu0 0.0
        %5505 = vmatpush1.xpose.msra.mxu0 0.0
        %5506 = vmatprep.subr.mxu0 0.0
        %5507 = vmatpush1.xpose.msra.mxu0 0.0
        %5508 = vmatprep.subr.mxu0 0.0
        %5509 = vmatpush1.xpose.msra.mxu0 0.0
        %5510 = vmatprep.subr.mxu0 0.0
        %5511 = vmatpush1.xpose.msra.mxu0 0.0
        %5512 = vmatprep.subr.mxu0 0.0
        %5513 = vmatpush1.xpose.msra.mxu0 0.0
        %5514 = vmatprep.subr.mxu0 0.0
        %5515 = vmatpush1.xpose.msra.mxu0 0.0
        %5516 = vmatprep.subr.mxu0 0.0
        %5517 = vmatpush1.xpose.msra.mxu0 0.0
        %5518 = vmatprep.subr.mxu0 0.0
        %5519 = vmatpush1.xpose.msra.mxu0 0.0
        %5520 = vmatprep.subr.mxu0 0.0
        %5521 = vmatpush1.xpose.msra.mxu0 0.0
        %5522 = vmatprep.subr.mxu0 0.0
        %5523 = vmatpush1.xpose.msra.mxu0 0.0
        %5524 = vmatprep.subr.mxu0 0.0
        %5525 = vmatpush1.xpose.msra.mxu0 0.0
        %5526 = vmatprep.subr.mxu0 0.0
        %5527 = vmatpush1.xpose.msra.mxu0 0.0
        %5528 = vmatprep.subr.mxu0 0.0
        %5529 = vmatpush1.xpose.msra.mxu0 0.0
        %5530 = vmatprep.subr.mxu0 0.0
        %5531 = vmatpush1.xpose.msra.mxu0 0.0
        %5532 = vmatprep.subr.mxu0 0.0
        %5533 = vmatpush1.xpose.msra.mxu0 0.0
        %5534 = vmatprep.subr.mxu0 0.0
        %5535 = vmatpush1.xpose.msra.mxu0 0.0
        %5536 = vmatprep.subr.mxu0 0.0
        %5537 = vmatpush1.xpose.msra.mxu0 0.0
        %5538 = vmatprep.subr.mxu0 0.0
        %5539 = vmatpush1.xpose.msra.mxu0 0.0
        %5540 = vmatprep.subr.mxu0 0.0
        %5541 = vmatpush1.xpose.msra.mxu0 0.0
        %5542 = vmatprep.subr.mxu0 0.0
        %5543 = vmatpush1.xpose.msra.mxu0 0.0
        %5544 = vmatprep.subr.mxu0 0.0
        %5545 = vmatpush1.xpose.msra.mxu0 0.0
        %5546 = vmatprep.subr.mxu0 0.0
        %5547 = vmatpush1.xpose.msra.mxu0 0.0
        %5548 = vmatprep.subr.mxu0 0.0
        %5549 = vmatpush1.xpose.msra.mxu0 0.0
        %5550 = vmatprep.subr.mxu0 0.0
        %5551 = vmatpush1.xpose.msra.mxu0 0.0
        %5552 = vmatprep.subr.mxu0 0.0
        %5553 = vmatpush1.xpose.msra.mxu0 0.0
        %5554 = vmatprep.subr.mxu0 0.0
        %5555 = vmatpush1.xpose.msra.mxu0 0.0
        %5556 = vmatprep.subr.mxu0 0.0
        %5557 = vmatpush1.xpose.msra.mxu0 0.0
        %5558 = vmatprep.mubr.f32.mxu0 0.0
        %5559 = vmatmul.mubr.f32.gmra.mrb[0].mxu0 %v5477
        %v5560 = vpop.f32.mrb[0].mxu0
        %v5561 = vadd.f32 %v948, %v5560
        %v5562 = vpop.f32.mrb[0].mxu0
        %5563 = vmatprep.mubr.f32.mxu0 0.0
        %5564 = vmatmul.mubr.f32.gmra.mrb[0].mxu0 %v5480
        %v5565 = vpop.f32.mrb[0].mxu0
        %v5566 = vadd.f32 %v948, %v5565
        %v5567 = vpop.f32.mrb[0].mxu0
        %5568 = vmatprep.mubr.f32.mxu0 0.0
        %5569 = vmatmul.mubr.f32.gmra.mrb[0].mxu0 %v5483
        %v5570 = vpop.f32.mrb[0].mxu0
        %v5571 = vadd.f32 %v948, %v5570
        %v5572 = vpop.f32.mrb[0].mxu0
        %5573 = vdwg.mxu0
        %v5574 = vsel %vm1401, %v5561, -inf
        %5575 = vmax.xlane.f32.xlu0 %v5574
        %v5576 = vpop.xlane.xlu0 %5575
        %v5577 = vsel %vm1401, %v5566, -inf
        %5578 = vmax.xlane.f32.xlu0 %v5577
        %v5579 = vpop.xlane.xlu0 %5578
        %v5580 = vsel %vm1401, %v5571, -inf
        %5581 = vmax.xlane.f32.xlu0 %v5580
        %v5582 = vpop.xlane.xlu0 %5581
        %v5583 = vsub.f32 %v5561, %v5576
        %v5584 = vsub.f32 %v5566, %v5579
        %v5585 = vsub.f32 %v5571, %v5582
        %v5586 = vmul.f32 %v5583, 1.442695
        %v5587 = vpow.pop %v5586
        %v5588 = vmul.f32 %v5584, 1.442695
        %v5589 = vpow.pop %v5588
        %v5590 = vmul.f32 %v5585, 1.442695
        %v5591 = vpow.pop %v5590
        %v5592 = vsel %vm1401, %v5587, 0.0
        %5593 = vadd.xlane.f32.xlu0 %v5592
        %v5594 = vpop.xlane.xlu0 %5593
        %v5595 = vsel %vm1401, %v5589, 0.0
        %5596 = vadd.xlane.f32.xlu0 %v5595
        %v5597 = vpop.xlane.xlu0 %5596
        %v5598 = vsel %vm1401, %v5591, 0.0
        %5599 = vadd.xlane.f32.xlu0 %v5598
        %v5600 = vpop.xlane.xlu0 %5599
        %v5601 = vrcp.pop %v5594
        %v5602 = vrcp.pop %v5597
        %v5603 = vrcp.pop %v5600
        %v5604 = vmul.f32 %v5587, %v5601
        %v5605 = vmul.f32 %v5589, %v5602
        %v5606 = vmul.f32 %v5591, %v5603
        %v5608 = vsel %vm1401, %v5604, 0
        %v5611 = vsel %vm1401, %v5605, 0
        %v5614 = vsel %vm1401, %v5606, 0
        %5616 = vmatprep.subr.mxu0 0.0
        %5617 = vmatpush1.msra.mxu0 %v5463
        %5618 = vmatprep.subr.mxu0 0.0
        %5619 = vmatpush1.msra.mxu0 %v5468
        %5620 = vmatprep.subr.mxu0 0.0
        %5621 = vmatpush1.msra.mxu0 %v5473
        %5622 = vmatprep.subr.mxu0 0.0
        %5623 = vmatpush1.msra.mxu0 0.0
        %5624 = vmatprep.subr.mxu0 0.0
        %5625 = vmatpush1.msra.mxu0 0.0
        %5626 = vmatprep.subr.mxu0 0.0
        %5627 = vmatpush1.msra.mxu0 0.0
        %5628 = vmatprep.subr.mxu0 0.0
        %5629 = vmatpush1.msra.mxu0 0.0
        %5630 = vmatprep.subr.mxu0 0.0
        %5631 = vmatpush1.msra.mxu0 0.0
        %5632 = vmatprep.subr.mxu0 0.0
        %5633 = vmatpush1.msra.mxu0 0.0
        %5634 = vmatprep.subr.mxu0 0.0
        %5635 = vmatpush1.msra.mxu0 0.0
        %5636 = vmatprep.subr.mxu0 0.0
        %5637 = vmatpush1.msra.mxu0 0.0
        %5638 = vmatprep.subr.mxu0 0.0
        %5639 = vmatpush1.msra.mxu0 0.0
        %5640 = vmatprep.subr.mxu0 0.0
        %5641 = vmatpush1.msra.mxu0 0.0
        %5642 = vmatprep.subr.mxu0 0.0
        %5643 = vmatpush1.msra.mxu0 0.0
        %5644 = vmatprep.subr.mxu0 0.0
        %5645 = vmatpush1.msra.mxu0 0.0
        %5646 = vmatprep.subr.mxu0 0.0
        %5647 = vmatpush1.msra.mxu0 0.0
        %5648 = vmatprep.subr.mxu0 0.0
        %5649 = vmatpush1.msra.mxu0 0.0
        %5650 = vmatprep.subr.mxu0 0.0
        %5651 = vmatpush1.msra.mxu0 0.0
        %5652 = vmatprep.subr.mxu0 0.0
        %5653 = vmatpush1.msra.mxu0 0.0
        %5654 = vmatprep.subr.mxu0 0.0
        %5655 = vmatpush1.msra.mxu0 0.0
        %5656 = vmatprep.subr.mxu0 0.0
        %5657 = vmatpush1.msra.mxu0 0.0
        %5658 = vmatprep.subr.mxu0 0.0
        %5659 = vmatpush1.msra.mxu0 0.0
        %5660 = vmatprep.subr.mxu0 0.0
        %5661 = vmatpush1.msra.mxu0 0.0
        %5662 = vmatprep.subr.mxu0 0.0
        %5663 = vmatpush1.msra.mxu0 0.0
        %5664 = vmatprep.subr.mxu0 0.0
        %5665 = vmatpush1.msra.mxu0 0.0
        %5666 = vmatprep.subr.mxu0 0.0
        %5667 = vmatpush1.msra.mxu0 0.0
        %5668 = vmatprep.subr.mxu0 0.0
        %5669 = vmatpush1.msra.mxu0 0.0
        %5670 = vmatprep.subr.mxu0 0.0
        %5671 = vmatpush1.msra.mxu0 0.0
        %5672 = vmatprep.subr.mxu0 0.0
        %5673 = vmatpush1.msra.mxu0 0.0
        %5674 = vmatprep.subr.mxu0 0.0
        %5675 = vmatpush1.msra.mxu0 0.0
        %5676 = vmatprep.subr.mxu0 0.0
        %5677 = vmatpush1.msra.mxu0 0.0
        %5678 = vmatprep.subr.mxu0 0.0
        %5679 = vmatpush1.msra.mxu0 0.0
        %5680 = vmatprep.mubr.f32.mxu0 0.0
        %5681 = vmatmul.mubr.f32.gmra.mrb[0].mxu0 %v5608
        %v5682 = vpop.f32.mrb[0].mxu0
        %v5683 = vadd.f32 0.0, %v5682
        %v5684 = vpop.f32.mrb[0].mxu0
        %5685 = vmatprep.mubr.f32.mxu0 0.0
        %5686 = vmatmul.mubr.f32.gmra.mrb[0].mxu0 %v5611
        %v5687 = vpop.f32.mrb[0].mxu0
        %v5688 = vadd.f32 0.0, %v5687
        %v5689 = vpop.f32.mrb[0].mxu0
        %5690 = vmatprep.mubr.f32.mxu0 0.0
        %5691 = vmatmul.mubr.f32.gmra.mrb[0].mxu0 %v5614
        %v5692 = vpop.f32.mrb[0].mxu0
        %v5693 = vadd.f32 0.0, %v5692
        %v5694 = vpop.f32.mrb[0].mxu0
        %5695 = vdwg.mxu0
        %s5696 = scalar_lea.vmem %s13, 96
        %v5697 = vld [vmem:[%s5696] sm:$0xff]
        %v5698 = vld [vmem:[%s5696 + $0x8] sm:$0xff]
        %v5700 = vsel %vm1302, %v5683, 0
        %v5703 = vsel %vm1302, %v5688, 0
        %v5706 = vsel %vm1302, %v5693, 0
        %5708 = vmatprep.subr.mxu0 0.0
        %5709 = vmatpush1.msra.mxu0 %v5697
        %5710 = vmatprep.subr.mxu0 0.0
        %5711 = vmatpush1.msra.mxu0 %v5698
        %5712 = vmatprep.subr.mxu0 0.0
        %5713 = vmatpush1.msra.mxu0 0.0
        %5714 = vmatprep.subr.mxu0 0.0
        %5715 = vmatpush1.msra.mxu0 0.0
        %5716 = vmatprep.subr.mxu0 0.0
        %5717 = vmatpush1.msra.mxu0 0.0
        %5718 = vmatprep.subr.mxu0 0.0
        %5719 = vmatpush1.msra.mxu0 0.0
        %5720 = vmatprep.subr.mxu0 0.0
        %5721 = vmatpush1.msra.mxu0 0.0
        %5722 = vmatprep.subr.mxu0 0.0
        %5723 = vmatpush1.msra.mxu0 0.0
        %5724 = vmatprep.subr.mxu0 0.0
        %5725 = vmatpush1.msra.mxu0 0.0
        %5726 = vmatprep.subr.mxu0 0.0
        %5727 = vmatpush1.msra.mxu0 0.0
        %5728 = vmatprep.subr.mxu0 0.0
        %5729 = vmatpush1.msra.mxu0 0.0
        %5730 = vmatprep.subr.mxu0 0.0
        %5731 = vmatpush1.msra.mxu0 0.0
        %5732 = vmatprep.subr.mxu0 0.0
        %5733 = vmatpush1.msra.mxu0 0.0
        %5734 = vmatprep.subr.mxu0 0.0
        %5735 = vmatpush1.msra.mxu0 0.0
        %5736 = vmatprep.subr.mxu0 0.0
        %5737 = vmatpush1.msra.mxu0 0.0
        %5738 = vmatprep.subr.mxu0 0.0
        %5739 = vmatpush1.msra.mxu0 0.0
        %5740 = vmatprep.subr.mxu0 0.0
        %5741 = vmatpush1.msra.mxu0 0.0
        %5742 = vmatprep.subr.mxu0 0.0
        %5743 = vmatpush1.msra.mxu0 0.0
        %5744 = vmatprep.subr.mxu0 0.0
        %5745 = vmatpush1.msra.mxu0 0.0
        %5746 = vmatprep.subr.mxu0 0.0
        %5747 = vmatpush1.msra.mxu0 0.0
        %5748 = vmatprep.subr.mxu0 0.0
        %5749 = vmatpush1.msra.mxu0 0.0
        %5750 = vmatprep.subr.mxu0 0.0
        %5751 = vmatpush1.msra.mxu0 0.0
        %5752 = vmatprep.subr.mxu0 0.0
        %5753 = vmatpush1.msra.mxu0 0.0
        %5754 = vmatprep.subr.mxu0 0.0
        %5755 = vmatpush1.msra.mxu0 0.0
        %5756 = vmatprep.subr.mxu0 0.0
        %5757 = vmatpush1.msra.mxu0 0.0
        %5758 = vmatprep.subr.mxu0 0.0
        %5759 = vmatpush1.msra.mxu0 0.0
        %5760 = vmatprep.subr.mxu0 0.0
        %5761 = vmatpush1.msra.mxu0 0.0
        %5762 = vmatprep.subr.mxu0 0.0
        %5763 = vmatpush1.msra.mxu0 0.0
        %5764 = vmatprep.subr.mxu0 0.0
        %5765 = vmatpush1.msra.mxu0 0.0
        %5766 = vmatprep.subr.mxu0 0.0
        %5767 = vmatpush1.msra.mxu0 0.0
        %5768 = vmatprep.subr.mxu0 0.0
        %5769 = vmatpush1.msra.mxu0 0.0
        %5770 = vmatprep.subr.mxu0 0.0
        %5771 = vmatpush1.msra.mxu0 0.0
        %5772 = vmatprep.mubr.f32.mxu0 0.0
        %5773 = vmatmul.mubr.f32.gmra.mrb[0].mxu0 %v5700
        %v5774 = vpop.f32.mrb[0].mxu0
        %v5775 = vadd.f32 0.0, %v5774
        %v5776 = vpop.f32.mrb[0].mxu0
        %5777 = vmatprep.mubr.f32.mxu0 0.0
        %5778 = vmatmul.mubr.f32.gmra.mrb[0].mxu0 %v5703
        %v5779 = vpop.f32.mrb[0].mxu0
        %v5780 = vadd.f32 0.0, %v5779
        %v5781 = vpop.f32.mrb[0].mxu0
        %5782 = vmatprep.mubr.f32.mxu0 0.0
        %5783 = vmatmul.mubr.f32.gmra.mrb[0].mxu0 %v5706
        %v5784 = vpop.f32.mrb[0].mxu0
        %v5785 = vadd.f32 0.0, %v5784
        %v5786 = vpop.f32.mrb[0].mxu0
        %5787 = vdwg.mxu0
        %v5788 = vadd.f32 %v5172, %v5775
        %v5789 = vadd.f32 %v5177, %v5780
        %v5790 = vadd.f32 %v5182, %v5785
        %s5791 = scalar_lea.vmem %s7, 448
        %v5792 = vld [vmem:[%s5791] sm:$0xff]
        %v5793 = vld [vmem:[%s5791 + $0x8] sm:$0xff]
        %v5794 = vld [vmem:[%s5791 + $0x10] sm:$0xff]
        %v5795 = vld [vmem:[%s5791 + $0x18] sm:$0xff]
        %v5796 = vld [vmem:[%s5791 + $0x20] sm:$0xff]
        %v5797 = vld [vmem:[%s5791 + $0x28] sm:$0xff]
        %v5798 = vld [vmem:[%s5791 + $0x30] sm:$0xff]
        %v5799 = vld [vmem:[%s5791 + $0x38] sm:$0xff]
        %s5800 = scalar_lea.vmem %s8, 7
        %v5801 = vld [vmem:[%s5800] sm:$0x1]
        %v5803 = vlaneseq
        %v5804 = vshrl.u32 %v5803, 7
        %v5805 = vsub.s32 0, %v5804
        %v5806 = vrot.slane %v5801, %v5805
        %5808 = vmatprep.subr.mxu0 0.0
        %5809 = vmatpush1.msra.mxu0 %v5792
        %5810 = vmatprep.subr.mxu0 0.0
        %5811 = vmatpush1.msra.mxu0 %v5793
        %5812 = vmatprep.subr.mxu0 0.0
        %5813 = vmatpush1.msra.mxu0 %v5794
        %5814 = vmatprep.subr.mxu0 0.0
        %5815 = vmatpush1.msra.mxu0 %v5795
        %5816 = vmatprep.subr.mxu0 0.0
        %5817 = vmatpush1.msra.mxu0 %v5796
        %5818 = vmatprep.subr.mxu0 0.0
        %5819 = vmatpush1.msra.mxu0 %v5797
        %5820 = vmatprep.subr.mxu0 0.0
        %5821 = vmatpush1.msra.mxu0 %v5798
        %5822 = vmatprep.subr.mxu0 0.0
        %5823 = vmatpush1.msra.mxu0 %v5799
        %5824 = vmatprep.subr.mxu0 0.0
        %5825 = vmatpush1.msra.mxu0 0.0
        %5826 = vmatprep.subr.mxu0 0.0
        %5827 = vmatpush1.msra.mxu0 0.0
        %5828 = vmatprep.subr.mxu0 0.0
        %5829 = vmatpush1.msra.mxu0 0.0
        %5830 = vmatprep.subr.mxu0 0.0
        %5831 = vmatpush1.msra.mxu0 0.0
        %5832 = vmatprep.subr.mxu0 0.0
        %5833 = vmatpush1.msra.mxu0 0.0
        %5834 = vmatprep.subr.mxu0 0.0
        %5835 = vmatpush1.msra.mxu0 0.0
        %5836 = vmatprep.subr.mxu0 0.0
        %5837 = vmatpush1.msra.mxu0 0.0
        %5838 = vmatprep.subr.mxu0 0.0
        %5839 = vmatpush1.msra.mxu0 0.0
        %5840 = vmatprep.subr.mxu0 0.0
        %5841 = vmatpush1.msra.mxu0 0.0
        %5842 = vmatprep.subr.mxu0 0.0
        %5843 = vmatpush1.msra.mxu0 0.0
        %5844 = vmatprep.subr.mxu0 0.0
        %5845 = vmatpush1.msra.mxu0 0.0
        %5846 = vmatprep.subr.mxu0 0.0
        %5847 = vmatpush1.msra.mxu0 0.0
        %5848 = vmatprep.subr.mxu0 0.0
        %5849 = vmatpush1.msra.mxu0 0.0
        %5850 = vmatprep.subr.mxu0 0.0
        %5851 = vmatpush1.msra.mxu0 0.0
        %5852 = vmatprep.subr.mxu0 0.0
        %5853 = vmatpush1.msra.mxu0 0.0
        %5854 = vmatprep.subr.mxu0 0.0
        %5855 = vmatpush1.msra.mxu0 0.0
        %5856 = vmatprep.subr.mxu0 0.0
        %5857 = vmatpush1.msra.mxu0 0.0
        %5858 = vmatprep.subr.mxu0 0.0
        %5859 = vmatpush1.msra.mxu0 0.0
        %5860 = vmatprep.subr.mxu0 0.0
        %5861 = vmatpush1.msra.mxu0 0.0
        %5862 = vmatprep.subr.mxu0 0.0
        %5863 = vmatpush1.msra.mxu0 0.0
        %5864 = vmatprep.subr.mxu0 0.0
        %5865 = vmatpush1.msra.mxu0 0.0
        %5866 = vmatprep.subr.mxu0 0.0
        %5867 = vmatpush1.msra.mxu0 0.0
        %5868 = vmatprep.subr.mxu0 0.0
        %5869 = vmatpush1.msra.mxu0 0.0
        %5870 = vmatprep.subr.mxu0 0.0
        %5871 = vmatpush1.msra.mxu0 0.0
        %5872 = vmatprep.mubr.f32.mxu0 0.0
        %5873 = vmatmul.mubr.f32.gmra.mrb[0].mxu0 %v3988
        %v5874 = vpop.f32.mrb[0].mxu0
        %v5875 = vadd.f32 %v5806, %v5874
        %v5876 = vpop.f32.mrb[0].mxu0
        %5877 = vmatprep.mubr.f32.mxu0 0.0
        %5878 = vmatmul.mubr.f32.gmra.mrb[0].mxu0 %v3991
        %v5879 = vpop.f32.mrb[0].mxu0
        %v5880 = vadd.f32 %v5806, %v5879
        %v5881 = vpop.f32.mrb[0].mxu0
        %5882 = vmatprep.mubr.f32.mxu0 0.0
        %5883 = vmatmul.mubr.f32.gmra.mrb[0].mxu0 %v3994
        %v5884 = vpop.f32.mrb[0].mxu0
        %v5885 = vadd.f32 %v5806, %v5884
        %v5886 = vpop.f32.mrb[0].mxu0
        %5887 = vdwg.mxu0
        %s5888 = scalar_lea.vmem %s9, 448
        %v5889 = vld [vmem:[%s5888] sm:$0xff]
        %v5890 = vld [vmem:[%s5888 + $0x8] sm:$0xff]
        %v5891 = vld [vmem:[%s5888 + $0x10] sm:$0xff]
        %v5892 = vld [vmem:[%s5888 + $0x18] sm:$0xff]
        %v5893 = vld [vmem:[%s5888 + $0x20] sm:$0xff]
        %v5894 = vld [vmem:[%s5888 + $0x28] sm:$0xff]
        %v5895 = vld [vmem:[%s5888 + $0x30] sm:$0xff]
        %v5896 = vld [vmem:[%s5888 + $0x38] sm:$0xff]
        %s5897 = scalar_lea.vmem %s10, 7
        %v5898 = vld [vmem:[%s5897] sm:$0x1]
        %v5900 = vlaneseq
        %v5901 = vshrl.u32 %v5900, 7
        %v5902 = vsub.s32 0, %v5901
        %v5903 = vrot.slane %v5898, %v5902
        %5905 = vmatprep.subr.mxu0 0.0
        %5906 = vmatpush1.msra.mxu0 %v5889
        %5907 = vmatprep.subr.mxu0 0.0
        %5908 = vmatpush1.msra.mxu0 %v5890
        %5909 = vmatprep.subr.mxu0 0.0
        %5910 = vmatpush1.msra.mxu0 %v5891
        %5911 = vmatprep.subr.mxu0 0.0
        %5912 = vmatpush1.msra.mxu0 %v5892
        %5913 = vmatprep.subr.mxu0 0.0
        %5914 = vmatpush1.msra.mxu0 %v5893
        %5915 = vmatprep.subr.mxu0 0.0
        %5916 = vmatpush1.msra.mxu0 %v5894
        %5917 = vmatprep.subr.mxu0 0.0
        %5918 = vmatpush1.msra.mxu0 %v5895
        %5919 = vmatprep.subr.mxu0 0.0
        %5920 = vmatpush1.msra.mxu0 %v5896
        %5921 = vmatprep.subr.mxu0 0.0
        %5922 = vmatpush1.msra.mxu0 0.0
        %5923 = vmatprep.subr.mxu0 0.0
        %5924 = vmatpush1.msra.mxu0 0.0
        %5925 = vmatprep.subr.mxu0 0.0
        %5926 = vmatpush1.msra.mxu0 0.0
        %5927 = vmatprep.subr.mxu0 0.0
        %5928 = vmatpush1.msra.mxu0 0.0
        %5929 = vmatprep.subr.mxu0 0.0
        %5930 = vmatpush1.msra.mxu0 0.0
        %5931 = vmatprep.subr.mxu0 0.0
        %5932 = vmatpush1.msra.mxu0 0.0
        %5933 = vmatprep.subr.mxu0 0.0
        %5934 = vmatpush1.msra.mxu0 0.0
        %5935 = vmatprep.subr.mxu0 0.0
        %5936 = vmatpush1.msra.mxu0 0.0
        %5937 = vmatprep.subr.mxu0 0.0
        %5938 = vmatpush1.msra.mxu0 0.0
        %5939 = vmatprep.subr.mxu0 0.0
        %5940 = vmatpush1.msra.mxu0 0.0
        %5941 = vmatprep.subr.mxu0 0.0
        %5942 = vmatpush1.msra.mxu0 0.0
        %5943 = vmatprep.subr.mxu0 0.0
        %5944 = vmatpush1.msra.mxu0 0.0
        %5945 = vmatprep.subr.mxu0 0.0
        %5946 = vmatpush1.msra.mxu0 0.0
        %5947 = vmatprep.subr.mxu0 0.0
        %5948 = vmatpush1.msra.mxu0 0.0
        %5949 = vmatprep.subr.mxu0 0.0
        %5950 = vmatpush1.msra.mxu0 0.0
        %5951 = vmatprep.subr.mxu0 0.0
        %5952 = vmatpush1.msra.mxu0 0.0
        %5953 = vmatprep.subr.mxu0 0.0
        %5954 = vmatpush1.msra.mxu0 0.0
        %5955 = vmatprep.subr.mxu0 0.0
        %5956 = vmatpush1.msra.mxu0 0.0
        %5957 = vmatprep.subr.mxu0 0.0
        %5958 = vmatpush1.msra.mxu0 0.0
        %5959 = vmatprep.subr.mxu0 0.0
        %5960 = vmatpush1.msra.mxu0 0.0
        %5961 = vmatprep.subr.mxu0 0.0
        %5962 = vmatpush1.msra.mxu0 0.0
        %5963 = vmatprep.subr.mxu0 0.0
        %5964 = vmatpush1.msra.mxu0 0.0
        %5965 = vmatprep.subr.mxu0 0.0
        %5966 = vmatpush1.msra.mxu0 0.0
        %5967 = vmatprep.subr.mxu0 0.0
        %5968 = vmatpush1.msra.mxu0 0.0
        %5969 = vmatprep.mubr.f32.mxu0 0.0
        %5970 = vmatmul.mubr.f32.gmra.mrb[0].mxu0 %v3988
        %v5971 = vpop.f32.mrb[0].mxu0
        %v5972 = vadd.f32 %v5903, %v5971
        %v5973 = vpop.f32.mrb[0].mxu0
        %5974 = vmatprep.mubr.f32.mxu0 0.0
        %5975 = vmatmul.mubr.f32.gmra.mrb[0].mxu0 %v3991
        %v5976 = vpop.f32.mrb[0].mxu0
        %v5977 = vadd.f32 %v5903, %v5976
        %v5978 = vpop.f32.mrb[0].mxu0
        %5979 = vmatprep.mubr.f32.mxu0 0.0
        %5980 = vmatmul.mubr.f32.gmra.mrb[0].mxu0 %v3994
        %v5981 = vpop.f32.mrb[0].mxu0
        %v5982 = vadd.f32 %v5903, %v5981
        %v5983 = vpop.f32.mrb[0].mxu0
        %5984 = vdwg.mxu0
        %s5985 = scalar_lea.vmem %s11, 448
        %v5986 = vld [vmem:[%s5985] sm:$0xff]
        %v5987 = vld [vmem:[%s5985 + $0x8] sm:$0xff]
        %v5988 = vld [vmem:[%s5985 + $0x10] sm:$0xff]
        %v5989 = vld [vmem:[%s5985 + $0x18] sm:$0xff]
        %v5990 = vld [vmem:[%s5985 + $0x20] sm:$0xff]
        %v5991 = vld [vmem:[%s5985 + $0x28] sm:$0xff]
        %v5992 = vld [vmem:[%s5985 + $0x30] sm:$0xff]
        %v5993 = vld [vmem:[%s5985 + $0x38] sm:$0xff]
        %s5994 = scalar_lea.vmem %s12, 7
        %v5995 = vld [vmem:[%s5994] sm:$0x1]
        %v5997 = vlaneseq
        %v5998 = vshrl.u32 %v5997, 7
        %v5999 = vsub.s32 0, %v5998
        %v6000 = vrot.slane %v5995, %v5999
        %6002 = vmatprep.subr.mxu0 0.0
        %6003 = vmatpush1.msra.mxu0 %v5986
        %6004 = vmatprep.subr.mxu0 0.0
        %6005 = vmatpush1.msra.mxu0 %v5987
        %6006 = vmatprep.subr.mxu0 0.0
        %6007 = vmatpush1.msra.mxu0 %v5988
        %6008 = vmatprep.subr.mxu0 0.0
        %6009 = vmatpush1.msra.mxu0 %v5989
        %6010 = vmatprep.subr.mxu0 0.0
        %6011 = vmatpush1.msra.mxu0 %v5990
        %6012 = vmatprep.subr.mxu0 0.0
        %6013 = vmatpush1.msra.mxu0 %v5991
        %6014 = vmatprep.subr.mxu0 0.0
        %6015 = vmatpush1.msra.mxu0 %v5992
        %6016 = vmatprep.subr.mxu0 0.0
        %6017 = vmatpush1.msra.mxu0 %v5993
        %6018 = vmatprep.subr.mxu0 0.0
        %6019 = vmatpush1.msra.mxu0 0.0
        %6020 = vmatprep.subr.mxu0 0.0
        %6021 = vmatpush1.msra.mxu0 0.0
        %6022 = vmatprep.subr.mxu0 0.0
        %6023 = vmatpush1.msra.mxu0 0.0
        %6024 = vmatprep.subr.mxu0 0.0
        %6025 = vmatpush1.msra.mxu0 0.0
        %6026 = vmatprep.subr.mxu0 0.0
        %6027 = vmatpush1.msra.mxu0 0.0
        %6028 = vmatprep.subr.mxu0 0.0
        %6029 = vmatpush1.msra.mxu0 0.0
        %6030 = vmatprep.subr.mxu0 0.0
        %6031 = vmatpush1.msra.mxu0 0.0
        %6032 = vmatprep.subr.mxu0 0.0
        %6033 = vmatpush1.msra.mxu0 0.0
        %6034 = vmatprep.subr.mxu0 0.0
        %6035 = vmatpush1.msra.mxu0 0.0
        %6036 = vmatprep.subr.mxu0 0.0
        %6037 = vmatpush1.msra.mxu0 0.0
        %6038 = vmatprep.subr.mxu0 0.0
        %6039 = vmatpush1.msra.mxu0 0.0
        %6040 = vmatprep.subr.mxu0 0.0
        %6041 = vmatpush1.msra.mxu0 0.0
        %6042 = vmatprep.subr.mxu0 0.0
        %6043 = vmatpush1.msra.mxu0 0.0
        %6044 = vmatprep.subr.mxu0 0.0
        %6045 = vmatpush1.msra.mxu0 0.0
        %6046 = vmatprep.subr.mxu0 0.0
        %6047 = vmatpush1.msra.mxu0 0.0
        %6048 = vmatprep.subr.mxu0 0.0
        %6049 = vmatpush1.msra.mxu0 0.0
        %6050 = vmatprep.subr.mxu0 0.0
        %6051 = vmatpush1.msra.mxu0 0.0
        %6052 = vmatprep.subr.mxu0 0.0
        %6053 = vmatpush1.msra.mxu0 0.0
        %6054 = vmatprep.subr.mxu0 0.0
        %6055 = vmatpush1.msra.mxu0 0.0
        %6056 = vmatprep.subr.mxu0 0.0
        %6057 = vmatpush1.msra.mxu0 0.0
        %6058 = vmatprep.subr.mxu0 0.0
        %6059 = vmatpush1.msra.mxu0 0.0
        %6060 = vmatprep.subr.mxu0 0.0
        %6061 = vmatpush1.msra.mxu0 0.0
        %6062 = vmatprep.subr.mxu0 0.0
        %6063 = vmatpush1.msra.mxu0 0.0
        %6064 = vmatprep.subr.mxu0 0.0
        %6065 = vmatpush1.msra.mxu0 0.0
        %6066 = vmatprep.mubr.f32.mxu0 0.0
        %6067 = vmatmul.mubr.f32.gmra.mrb[0].mxu0 %v3988
        %v6068 = vpop.f32.mrb[0].mxu0
        %v6069 = vadd.f32 %v6000, %v6068
        %v6070 = vpop.f32.mrb[0].mxu0
        %6071 = vmatprep.mubr.f32.mxu0 0.0
        %6072 = vmatmul.mubr.f32.gmra.mrb[0].mxu0 %v3991
        %v6073 = vpop.f32.mrb[0].mxu0
        %v6074 = vadd.f32 %v6000, %v6073
        %v6075 = vpop.f32.mrb[0].mxu0
        %6076 = vmatprep.mubr.f32.mxu0 0.0
        %6077 = vmatmul.mubr.f32.gmra.mrb[0].mxu0 %v3994
        %v6078 = vpop.f32.mrb[0].mxu0
        %v6079 = vadd.f32 %v6000, %v6078
        %v6080 = vpop.f32.mrb[0].mxu0
        %6081 = vdwg.mxu0
        %v6083 = vsel %vm1302, %v5875, 0
        %v6086 = vsel %vm1302, %v5880, 0
        %v6089 = vsel %vm1302, %v5885, 0
        %v6092 = vsel %vm1302, %v5972, 0
        %v6095 = vsel %vm1302, %v5977, 0
        %v6098 = vsel %vm1302, %v5982, 0
        %6100 = vmatprep.subr.mxu0 0.0
        %6101 = vmatpush1.xpose.msra.mxu0 %v6092
        %6102 = vmatprep.subr.mxu0 0.0
        %6103 = vmatpush1.xpose.msra.mxu0 %v6095
        %6104 = vmatprep.subr.mxu0 0.0
        %6105 = vmatpush1.xpose.msra.mxu0 %v6098
        %6106 = vmatprep.subr.mxu0 0.0
        %6107 = vmatpush1.xpose.msra.mxu0 0.0
        %6108 = vmatprep.subr.mxu0 0.0
        %6109 = vmatpush1.xpose.msra.mxu0 0.0
        %6110 = vmatprep.subr.mxu0 0.0
        %6111 = vmatpush1.xpose.msra.mxu0 0.0
        %6112 = vmatprep.subr.mxu0 0.0
        %6113 = vmatpush1.xpose.msra.mxu0 0.0
        %6114 = vmatprep.subr.mxu0 0.0
        %6115 = vmatpush1.xpose.msra.mxu0 0.0
        %6116 = vmatprep.subr.mxu0 0.0
        %6117 = vmatpush1.xpose.msra.mxu0 0.0
        %6118 = vmatprep.subr.mxu0 0.0
        %6119 = vmatpush1.xpose.msra.mxu0 0.0
        %6120 = vmatprep.subr.mxu0 0.0
        %6121 = vmatpush1.xpose.msra.mxu0 0.0
        %6122 = vmatprep.subr.mxu0 0.0
        %6123 = vmatpush1.xpose.msra.mxu0 0.0
        %6124 = vmatprep.subr.mxu0 0.0
        %6125 = vmatpush1.xpose.msra.mxu0 0.0
        %6126 = vmatprep.subr.mxu0 0.0
        %6127 = vmatpush1.xpose.msra.mxu0 0.0
        %6128 = vmatprep.subr.mxu0 0.0
        %6129 = vmatpush1.xpose.msra.mxu0 0.0
        %6130 = vmatprep.subr.mxu0 0.0
        %6131 = vmatpush1.xpose.msra.mxu0 0.0
        %6132 = vmatprep.subr.mxu0 0.0
        %6133 = vmatpush1.xpose.msra.mxu0 0.0
        %6134 = vmatprep.subr.mxu0 0.0
        %6135 = vmatpush1.xpose.msra.mxu0 0.0
        %6136 = vmatprep.subr.mxu0 0.0
        %6137 = vmatpush1.xpose.msra.mxu0 0.0
        %6138 = vmatprep.subr.mxu0 0.0
        %6139 = vmatpush1.xpose.msra.mxu0 0.0
        %6140 = vmatprep.subr.mxu0 0.0
        %6141 = vmatpush1.xpose.msra.mxu0 0.0
        %6142 = vmatprep.subr.mxu0 0.0
        %6143 = vmatpush1.xpose.msra.mxu0 0.0
        %6144 = vmatprep.subr.mxu0 0.0
        %6145 = vmatpush1.xpose.msra.mxu0 0.0
        %6146 = vmatprep.subr.mxu0 0.0
        %6147 = vmatpush1.xpose.msra.mxu0 0.0
        %6148 = vmatprep.subr.mxu0 0.0
        %6149 = vmatpush1.xpose.msra.mxu0 0.0
        %6150 = vmatprep.subr.mxu0 0.0
        %6151 = vmatpush1.xpose.msra.mxu0 0.0
        %6152 = vmatprep.subr.mxu0 0.0
        %6153 = vmatpush1.xpose.msra.mxu0 0.0
        %6154 = vmatprep.subr.mxu0 0.0
        %6155 = vmatpush1.xpose.msra.mxu0 0.0
        %6156 = vmatprep.subr.mxu0 0.0
        %6157 = vmatpush1.xpose.msra.mxu0 0.0
        %6158 = vmatprep.subr.mxu0 0.0
        %6159 = vmatpush1.xpose.msra.mxu0 0.0
        %6160 = vmatprep.subr.mxu0 0.0
        %6161 = vmatpush1.xpose.msra.mxu0 0.0
        %6162 = vmatprep.subr.mxu0 0.0
        %6163 = vmatpush1.xpose.msra.mxu0 0.0
        %6164 = vmatprep.mubr.f32.mxu0 0.0
        %6165 = vmatmul.mubr.f32.gmra.mrb[0].mxu0 %v6083
        %v6166 = vpop.f32.mrb[0].mxu0
        %v6167 = vadd.f32 %v948, %v6166
        %v6168 = vpop.f32.mrb[0].mxu0
        %6169 = vmatprep.mubr.f32.mxu0 0.0
        %6170 = vmatmul.mubr.f32.gmra.mrb[0].mxu0 %v6086
        %v6171 = vpop.f32.mrb[0].mxu0
        %v6172 = vadd.f32 %v948, %v6171
        %v6173 = vpop.f32.mrb[0].mxu0
        %6174 = vmatprep.mubr.f32.mxu0 0.0
        %6175 = vmatmul.mubr.f32.gmra.mrb[0].mxu0 %v6089
        %v6176 = vpop.f32.mrb[0].mxu0
        %v6177 = vadd.f32 %v948, %v6176
        %v6178 = vpop.f32.mrb[0].mxu0
        %6179 = vdwg.mxu0
        %v6180 = vsel %vm1401, %v6167, -inf
        %6181 = vmax.xlane.f32.xlu0 %v6180
        %v6182 = vpop.xlane.xlu0 %6181
        %v6183 = vsel %vm1401, %v6172, -inf
        %6184 = vmax.xlane.f32.xlu0 %v6183
        %v6185 = vpop.xlane.xlu0 %6184
        %v6186 = vsel %vm1401, %v6177, -inf
        %6187 = vmax.xlane.f32.xlu0 %v6186
        %v6188 = vpop.xlane.xlu0 %6187
        %v6189 = vsub.f32 %v6167, %v6182
        %v6190 = vsub.f32 %v6172, %v6185
        %v6191 = vsub.f32 %v6177, %v6188
        %v6192 = vmul.f32 %v6189, 1.442695
        %v6193 = vpow.pop %v6192
        %v6194 = vmul.f32 %v6190, 1.442695
        %v6195 = vpow.pop %v6194
        %v6196 = vmul.f32 %v6191, 1.442695
        %v6197 = vpow.pop %v6196
        %v6198 = vsel %vm1401, %v6193, 0.0
        %6199 = vadd.xlane.f32.xlu0 %v6198
        %v6200 = vpop.xlane.xlu0 %6199
        %v6201 = vsel %vm1401, %v6195, 0.0
        %6202 = vadd.xlane.f32.xlu0 %v6201
        %v6203 = vpop.xlane.xlu0 %6202
        %v6204 = vsel %vm1401, %v6197, 0.0
        %6205 = vadd.xlane.f32.xlu0 %v6204
        %v6206 = vpop.xlane.xlu0 %6205
        %v6207 = vrcp.pop %v6200
        %v6208 = vrcp.pop %v6203
        %v6209 = vrcp.pop %v6206
        %v6210 = vmul.f32 %v6193, %v6207
        %v6211 = vmul.f32 %v6195, %v6208
        %v6212 = vmul.f32 %v6197, %v6209
        %v6214 = vsel %vm1401, %v6210, 0
        %v6217 = vsel %vm1401, %v6211, 0
        %v6220 = vsel %vm1401, %v6212, 0
        %6222 = vmatprep.subr.mxu0 0.0
        %6223 = vmatpush1.msra.mxu0 %v6069
        %6224 = vmatprep.subr.mxu0 0.0
        %6225 = vmatpush1.msra.mxu0 %v6074
        %6226 = vmatprep.subr.mxu0 0.0
        %6227 = vmatpush1.msra.mxu0 %v6079
        %6228 = vmatprep.subr.mxu0 0.0
        %6229 = vmatpush1.msra.mxu0 0.0
        %6230 = vmatprep.subr.mxu0 0.0
        %6231 = vmatpush1.msra.mxu0 0.0
        %6232 = vmatprep.subr.mxu0 0.0
        %6233 = vmatpush1.msra.mxu0 0.0
        %6234 = vmatprep.subr.mxu0 0.0
        %6235 = vmatpush1.msra.mxu0 0.0
        %6236 = vmatprep.subr.mxu0 0.0
        %6237 = vmatpush1.msra.mxu0 0.0
        %6238 = vmatprep.subr.mxu0 0.0
        %6239 = vmatpush1.msra.mxu0 0.0
        %6240 = vmatprep.subr.mxu0 0.0
        %6241 = vmatpush1.msra.mxu0 0.0
        %6242 = vmatprep.subr.mxu0 0.0
        %6243 = vmatpush1.msra.mxu0 0.0
        %6244 = vmatprep.subr.mxu0 0.0
        %6245 = vmatpush1.msra.mxu0 0.0
        %6246 = vmatprep.subr.mxu0 0.0
        %6247 = vmatpush1.msra.mxu0 0.0
        %6248 = vmatprep.subr.mxu0 0.0
        %6249 = vmatpush1.msra.mxu0 0.0
        %6250 = vmatprep.subr.mxu0 0.0
        %6251 = vmatpush1.msra.mxu0 0.0
        %6252 = vmatprep.subr.mxu0 0.0
        %6253 = vmatpush1.msra.mxu0 0.0
        %6254 = vmatprep.subr.mxu0 0.0
        %6255 = vmatpush1.msra.mxu0 0.0
        %6256 = vmatprep.subr.mxu0 0.0
        %6257 = vmatpush1.msra.mxu0 0.0
        %6258 = vmatprep.subr.mxu0 0.0
        %6259 = vmatpush1.msra.mxu0 0.0
        %6260 = vmatprep.subr.mxu0 0.0
        %6261 = vmatpush1.msra.mxu0 0.0
        %6262 = vmatprep.subr.mxu0 0.0
        %6263 = vmatpush1.msra.mxu0 0.0
        %6264 = vmatprep.subr.mxu0 0.0
        %6265 = vmatpush1.msra.mxu0 0.0
        %6266 = vmatprep.subr.mxu0 0.0
        %6267 = vmatpush1.msra.mxu0 0.0
        %6268 = vmatprep.subr.mxu0 0.0
        %6269 = vmatpush1.msra.mxu0 0.0
        %6270 = vmatprep.subr.mxu0 0.0
        %6271 = vmatpush1.msra.mxu0 0.0
        %6272 = vmatprep.subr.mxu0 0.0
        %6273 = vmatpush1.msra.mxu0 0.0
        %6274 = vmatprep.subr.mxu0 0.0
        %6275 = vmatpush1.msra.mxu0 0.0
        %6276 = vmatprep.subr.mxu0 0.0
        %6277 = vmatpush1.msra.mxu0 0.0
        %6278 = vmatprep.subr.mxu0 0.0
        %6279 = vmatpush1.msra.mxu0 0.0
        %6280 = vmatprep.subr.mxu0 0.0
        %6281 = vmatpush1.msra.mxu0 0.0
        %6282 = vmatprep.subr.mxu0 0.0
        %6283 = vmatpush1.msra.mxu0 0.0
        %6284 = vmatprep.subr.mxu0 0.0
        %6285 = vmatpush1.msra.mxu0 0.0
        %6286 = vmatprep.mubr.f32.mxu0 0.0
        %6287 = vmatmul.mubr.f32.gmra.mrb[0].mxu0 %v6214
        %v6288 = vpop.f32.mrb[0].mxu0
        %v6289 = vadd.f32 0.0, %v6288
        %v6290 = vpop.f32.mrb[0].mxu0
        %6291 = vmatprep.mubr.f32.mxu0 0.0
        %6292 = vmatmul.mubr.f32.gmra.mrb[0].mxu0 %v6217
        %v6293 = vpop.f32.mrb[0].mxu0
        %v6294 = vadd.f32 0.0, %v6293
        %v6295 = vpop.f32.mrb[0].mxu0
        %6296 = vmatprep.mubr.f32.mxu0 0.0
        %6297 = vmatmul.mubr.f32.gmra.mrb[0].mxu0 %v6220
        %v6298 = vpop.f32.mrb[0].mxu0
        %v6299 = vadd.f32 0.0, %v6298
        %v6300 = vpop.f32.mrb[0].mxu0
        %6301 = vdwg.mxu0
        %s6302 = scalar_lea.vmem %s13, 112
        %v6303 = vld [vmem:[%s6302] sm:$0xff]
        %v6304 = vld [vmem:[%s6302 + $0x8] sm:$0xff]
        %v6306 = vsel %vm1302, %v6289, 0
        %v6309 = vsel %vm1302, %v6294, 0
        %v6312 = vsel %vm1302, %v6299, 0
        %6314 = vmatprep.subr.mxu0 0.0
        %6315 = vmatpush1.msra.mxu0 %v6303
        %6316 = vmatprep.subr.mxu0 0.0
        %6317 = vmatpush1.msra.mxu0 %v6304
        %6318 = vmatprep.subr.mxu0 0.0
        %6319 = vmatpush1.msra.mxu0 0.0
        %6320 = vmatprep.subr.mxu0 0.0
        %6321 = vmatpush1.msra.mxu0 0.0
        %6322 = vmatprep.subr.mxu0 0.0
        %6323 = vmatpush1.msra.mxu0 0.0
        %6324 = vmatprep.subr.mxu0 0.0
        %6325 = vmatpush1.msra.mxu0 0.0
        %6326 = vmatprep.subr.mxu0 0.0
        %6327 = vmatpush1.msra.mxu0 0.0
        %6328 = vmatprep.subr.mxu0 0.0
        %6329 = vmatpush1.msra.mxu0 0.0
        %6330 = vmatprep.subr.mxu0 0.0
        %6331 = vmatpush1.msra.mxu0 0.0
        %6332 = vmatprep.subr.mxu0 0.0
        %6333 = vmatpush1.msra.mxu0 0.0
        %6334 = vmatprep.subr.mxu0 0.0
        %6335 = vmatpush1.msra.mxu0 0.0
        %6336 = vmatprep.subr.mxu0 0.0
        %6337 = vmatpush1.msra.mxu0 0.0
        %6338 = vmatprep.subr.mxu0 0.0
        %6339 = vmatpush1.msra.mxu0 0.0
        %6340 = vmatprep.subr.mxu0 0.0
        %6341 = vmatpush1.msra.mxu0 0.0
        %6342 = vmatprep.subr.mxu0 0.0
        %6343 = vmatpush1.msra.mxu0 0.0
        %6344 = vmatprep.subr.mxu0 0.0
        %6345 = vmatpush1.msra.mxu0 0.0
        %6346 = vmatprep.subr.mxu0 0.0
        %6347 = vmatpush1.msra.mxu0 0.0
        %6348 = vmatprep.subr.mxu0 0.0
        %6349 = vmatpush1.msra.mxu0 0.0
        %6350 = vmatprep.subr.mxu0 0.0
        %6351 = vmatpush1.msra.mxu0 0.0
        %6352 = vmatprep.subr.mxu0 0.0
        %6353 = vmatpush1.msra.mxu0 0.0
        %6354 = vmatprep.subr.mxu0 0.0
        %6355 = vmatpush1.msra.mxu0 0.0
        %6356 = vmatprep.subr.mxu0 0.0
        %6357 = vmatpush1.msra.mxu0 0.0
        %6358 = vmatprep.subr.mxu0 0.0
        %6359 = vmatpush1.msra.mxu0 0.0
        %6360 = vmatprep.subr.mxu0 0.0
        %6361 = vmatpush1.msra.mxu0 0.0
        %6362 = vmatprep.subr.mxu0 0.0
        %6363 = vmatpush1.msra.mxu0 0.0
        %6364 = vmatprep.subr.mxu0 0.0
        %6365 = vmatpush1.msra.mxu0 0.0
        %6366 = vmatprep.subr.mxu0 0.0
        %6367 = vmatpush1.msra.mxu0 0.0
        %6368 = vmatprep.subr.mxu0 0.0
        %6369 = vmatpush1.msra.mxu0 0.0
        %6370 = vmatprep.subr.mxu0 0.0
        %6371 = vmatpush1.msra.mxu0 0.0
        %6372 = vmatprep.subr.mxu0 0.0
        %6373 = vmatpush1.msra.mxu0 0.0
        %6374 = vmatprep.subr.mxu0 0.0
        %6375 = vmatpush1.msra.mxu0 0.0
        %6376 = vmatprep.subr.mxu0 0.0
        %6377 = vmatpush1.msra.mxu0 0.0
        %6378 = vmatprep.mubr.f32.mxu0 0.0
        %6379 = vmatmul.mubr.f32.gmra.mrb[0].mxu0 %v6306
        %v6380 = vpop.f32.mrb[0].mxu0
        %v6381 = vadd.f32 0.0, %v6380
        %v6382 = vpop.f32.mrb[0].mxu0
        %6383 = vmatprep.mubr.f32.mxu0 0.0
        %6384 = vmatmul.mubr.f32.gmra.mrb[0].mxu0 %v6309
        %v6385 = vpop.f32.mrb[0].mxu0
        %v6386 = vadd.f32 0.0, %v6385
        %v6387 = vpop.f32.mrb[0].mxu0
        %6388 = vmatprep.mubr.f32.mxu0 0.0
        %6389 = vmatmul.mubr.f32.gmra.mrb[0].mxu0 %v6312
        %v6390 = vpop.f32.mrb[0].mxu0
        %v6391 = vadd.f32 0.0, %v6390
        %v6392 = vpop.f32.mrb[0].mxu0
        %6393 = vdwg.mxu0
        %v6394 = vadd.f32 %v5788, %v6381
        %v6395 = vadd.f32 %v5789, %v6386
        %v6396 = vadd.f32 %v5790, %v6391
        %v6397 = vadd.f32 %v3906, %v6394
        %v6398 = vadd.f32 %v3907, %v6395
        %v6399 = vadd.f32 %v3908, %v6396
        %s6400 = scalar_lea.vmem %s14, 1
        %v6401 = vld [vmem:[%s6400] sm:$0x1]
        %v6403 = vlaneseq
        %v6404 = vshrl.u32 %v6403, 7
        %v6405 = vsub.s32 0, %v6404
        %v6406 = vrot.slane %v6401, %v6405
        %v6408 = vadd.f32 %v6397, %v6406
        %v6409 = vadd.f32 %v6398, %v6406
        %v6410 = vadd.f32 %v6399, %v6406
        %s6411 = scalar_lea.vmem %s15, 1
        %v6412 = vld [vmem:[%s6411] sm:$0x1]
        %s6413 = scalar_lea.vmem %s16, 1
        %v6414 = vld [vmem:[%s6413] sm:$0x1]
        %v6415 = vsel %vm795, %v6408, 0.0
        %6416 = vadd.xlane.f32.xlu0 %v6415
        %v6417 = vpop.xlane.xlu0 %6416
        %v6418 = vsel %vm795, %v6409, 0.0
        %6419 = vadd.xlane.f32.xlu0 %v6418
        %v6420 = vpop.xlane.xlu0 %6419
        %v6421 = vsel %vm795, %v6410, 0.0
        %6422 = vadd.xlane.f32.xlu0 %v6421
        %v6423 = vpop.xlane.xlu0 %6422
        %v6424 = vmul.f32 %v6417, %v896
        %v6425 = vmul.f32 %v6420, %v896
        %v6426 = vmul.f32 %v6423, %v896
        %v6427 = vsub.f32 %v6408, %v6424
        %v6428 = vsub.f32 %v6409, %v6425
        %v6429 = vsub.f32 %v6410, %v6426
        %v6430 = vmul.f32 %v6427, %v6427
        %v6431 = vmul.f32 %v6428, %v6428
        %v6432 = vmul.f32 %v6429, %v6429
        %v6433 = vsel %vm795, %v6430, 0.0
        %6434 = vadd.xlane.f32.xlu0 %v6433
        %v6435 = vpop.xlane.xlu0 %6434
        %v6436 = vsel %vm795, %v6431, 0.0
        %6437 = vadd.xlane.f32.xlu0 %v6436
        %v6438 = vpop.xlane.xlu0 %6437
        %v6439 = vsel %vm795, %v6432, 0.0
        %6440 = vadd.xlane.f32.xlu0 %v6439
        %v6441 = vpop.xlane.xlu0 %6440
        %v6442 = vmul.f32 %v6435, %v896
        %v6443 = vmul.f32 %v6438, %v896
        %v6444 = vmul.f32 %v6441, %v896
        %v6445 = vadd.f32 %v6442, 1e-05
        %v6446 = vadd.f32 %v6443, 1e-05
        %v6447 = vadd.f32 %v6444, 1e-05
        %v6448 = vrsqrt.pop %v6445
        %v6449 = vrsqrt.pop %v6446
        %v6450 = vrsqrt.pop %v6447
        %v6451 = vmul.f32 %v6427, %v6448
        %v6452 = vmul.f32 %v6428, %v6449
        %v6453 = vmul.f32 %v6429, %v6450
        %v6455 = vlaneseq
        %v6456 = vshrl.u32 %v6455, 7
        %v6457 = vsub.s32 0, %v6456
        %v6458 = vrot.slane %v6412, %v6457
        %v6460 = vmul.f32 %v6451, %v6458
        %v6461 = vmul.f32 %v6452, %v6458
        %v6462 = vmul.f32 %v6453, %v6458
        %v6464 = vlaneseq
        %v6465 = vshrl.u32 %v6464, 7
        %v6466 = vsub.s32 0, %v6465
        %v6467 = vrot.slane %v6414, %v6466
        %v6469 = vadd.f32 %v6460, %v6467
        %v6470 = vadd.f32 %v6461, %v6467
        %v6471 = vadd.f32 %v6462, %v6467
        %s6472 = scalar_lea.vmem %s17, 128
        %v6473 = vld [vmem:[%s6472] sm:$0xff]
        %v6474 = vld [vmem:[%s6472 + $0x8] sm:$0xff]
        %v6475 = vld [vmem:[%s6472 + $0x10] sm:$0xff]
        %v6476 = vld [vmem:[%s6472 + $0x18] sm:$0xff]
        %v6477 = vld [vmem:[%s6472 + $0x20] sm:$0xff]
        %v6478 = vld [vmem:[%s6472 + $0x28] sm:$0xff]
        %v6479 = vld [vmem:[%s6472 + $0x30] sm:$0xff]
        %v6480 = vld [vmem:[%s6472 + $0x38] sm:$0xff]
        %v6481 = vld [vmem:[%s6472 + $0x40] sm:$0xff]
        %v6482 = vld [vmem:[%s6472 + $0x48] sm:$0xff]
        %v6483 = vld [vmem:[%s6472 + $0x50] sm:$0xff]
        %v6484 = vld [vmem:[%s6472 + $0x58] sm:$0xff]
        %v6485 = vld [vmem:[%s6472 + $0x60] sm:$0xff]
        %v6486 = vld [vmem:[%s6472 + $0x68] sm:$0xff]
        %v6487 = vld [vmem:[%s6472 + $0x70] sm:$0xff]
        %v6488 = vld [vmem:[%s6472 + $0x78] sm:$0xff]
        %s6489 = scalar_lea.vmem %s18, 2
        %v6490 = vld [vmem:[%s6489] sm:$0x3]
        %v6492 = vlaneseq
        %v6493 = vshrl.u32 %v6492, 7
        %v6494 = vsub.s32 0, %v6493
        %v6495 = vrot.slane %v6490, %v6494
        %v6496 = vlaneseq
        %v6497 = vshrl.u32 %v6496, 7
        %v6498 = vsub.s32 1, %v6497
        %v6499 = vrot.slane %v6490, %v6498
        %v6503 = vsel %vm795, %v6469, 0
        %v6506 = vsel %vm795, %v6470, 0
        %v6509 = vsel %vm795, %v6471, 0
        %6511 = vmatprep.subr.mxu0 %v6474
        %6512 = vmatpush1.msra.mxu0 %v6473
        %6513 = vmatprep.subr.mxu0 %v6476
        %6514 = vmatpush1.msra.mxu0 %v6475
        %6515 = vmatprep.subr.mxu0 %v6478
        %6516 = vmatpush1.msra.mxu0 %v6477
        %6517 = vmatprep.subr.mxu0 %v6480
        %6518 = vmatpush1.msra.mxu0 %v6479
        %6519 = vmatprep.subr.mxu0 %v6482
        %6520 = vmatpush1.msra.mxu0 %v6481
        %6521 = vmatprep.subr.mxu0 %v6484
        %6522 = vmatpush1.msra.mxu0 %v6483
        %6523 = vmatprep.subr.mxu0 %v6486
        %6524 = vmatpush1.msra.mxu0 %v6485
        %6525 = vmatprep.subr.mxu0 %v6488
        %6526 = vmatpush1.msra.mxu0 %v6487
        %6527 = vmatprep.subr.mxu0 0.0
        %6528 = vmatpush1.msra.mxu0 0.0
        %6529 = vmatprep.subr.mxu0 0.0
        %6530 = vmatpush1.msra.mxu0 0.0
        %6531 = vmatprep.subr.mxu0 0.0
        %6532 = vmatpush1.msra.mxu0 0.0
        %6533 = vmatprep.subr.mxu0 0.0
        %6534 = vmatpush1.msra.mxu0 0.0
        %6535 = vmatprep.subr.mxu0 0.0
        %6536 = vmatpush1.msra.mxu0 0.0
        %6537 = vmatprep.subr.mxu0 0.0
        %6538 = vmatpush1.msra.mxu0 0.0
        %6539 = vmatprep.subr.mxu0 0.0
        %6540 = vmatpush1.msra.mxu0 0.0
        %6541 = vmatprep.subr.mxu0 0.0
        %6542 = vmatpush1.msra.mxu0 0.0
        %6543 = vmatprep.subr.mxu0 0.0
        %6544 = vmatpush1.msra.mxu0 0.0
        %6545 = vmatprep.subr.mxu0 0.0
        %6546 = vmatpush1.msra.mxu0 0.0
        %6547 = vmatprep.subr.mxu0 0.0
        %6548 = vmatpush1.msra.mxu0 0.0
        %6549 = vmatprep.subr.mxu0 0.0
        %6550 = vmatpush1.msra.mxu0 0.0
        %6551 = vmatprep.subr.mxu0 0.0
        %6552 = vmatpush1.msra.mxu0 0.0
        %6553 = vmatprep.subr.mxu0 0.0
        %6554 = vmatpush1.msra.mxu0 0.0
        %6555 = vmatprep.subr.mxu0 0.0
        %6556 = vmatpush1.msra.mxu0 0.0
        %6557 = vmatprep.subr.mxu0 0.0
        %6558 = vmatpush1.msra.mxu0 0.0
        %6559 = vmatprep.subr.mxu0 0.0
        %6560 = vmatpush1.msra.mxu0 0.0
        %6561 = vmatprep.subr.mxu0 0.0
        %6562 = vmatpush1.msra.mxu0 0.0
        %6563 = vmatprep.subr.mxu0 0.0
        %6564 = vmatpush1.msra.mxu0 0.0
        %6565 = vmatprep.subr.mxu0 0.0
        %6566 = vmatpush1.msra.mxu0 0.0
        %6567 = vmatprep.subr.mxu0 0.0
        %6568 = vmatpush1.msra.mxu0 0.0
        %6569 = vmatprep.subr.mxu0 0.0
        %6570 = vmatpush1.msra.mxu0 0.0
        %6571 = vmatprep.subr.mxu0 0.0
        %6572 = vmatpush1.msra.mxu0 0.0
        %6573 = vmatprep.subr.mxu0 0.0
        %6574 = vmatpush1.msra.mxu0 0.0
        %6575 = vmatprep.mubr.f32.mxu0 0.0
        %6576 = vmatmul.mubr.f32.gmra.mrb[0].mxu0 %v6503
        %v6577 = vpop.f32.mrb[0].mxu0
        %v6578 = vadd.f32 %v6495, %v6577
        %v6579 = vpop.f32.mrb[0].mxu0
        %v6580 = vadd.f32 %v6499, %v6579
        %6581 = vmatprep.mubr.f32.mxu0 0.0
        %6582 = vmatmul.mubr.f32.gmra.mrb[0].mxu0 %v6506
        %v6583 = vpop.f32.mrb[0].mxu0
        %v6584 = vadd.f32 %v6495, %v6583
        %v6585 = vpop.f32.mrb[0].mxu0
        %v6586 = vadd.f32 %v6499, %v6585
        %6587 = vmatprep.mubr.f32.mxu0 0.0
        %6588 = vmatmul.mubr.f32.gmra.mrb[0].mxu0 %v6509
        %v6589 = vpop.f32.mrb[0].mxu0
        %v6590 = vadd.f32 %v6495, %v6589
        %v6591 = vpop.f32.mrb[0].mxu0
        %v6592 = vadd.f32 %v6499, %v6591
        %6593 = vdwg.mxu0
        %v6594 = vmul.f32 %v6578, 0.5
        %v6595 = vmul.f32 %v6580, 0.5
        %v6596 = vmul.f32 %v6584, 0.5
        %v6597 = vmul.f32 %v6586, 0.5
        %v6598 = vmul.f32 %v6590, 0.5
        %v6599 = vmul.f32 %v6592, 0.5
        %v6600 = vmul.f32 %v6578, 0.70710677
        %v6601 = vmul.f32 %v6580, 0.70710677
        %v6602 = vmul.f32 %v6584, 0.70710677
        %v6603 = vmul.f32 %v6586, 0.70710677
        %v6604 = vmul.f32 %v6590, 0.70710677
        %v6605 = vmul.f32 %v6592, 0.70710677
        %v6606 = vand.u32 2147483647, %v6600
        %v6607 = vand.u32 2147483647, %v6601
        %v6608 = vand.u32 2147483647, %v6602
        %v6609 = vand.u32 2147483647, %v6603
        %v6610 = vand.u32 2147483647, %v6604
        %v6611 = vand.u32 2147483647, %v6605
        %v6612 = vmul.f32 %v6606, 0.3275911
        %v6613 = vmul.f32 %v6607, 0.3275911
        %v6614 = vmul.f32 %v6608, 0.3275911
        %v6615 = vmul.f32 %v6609, 0.3275911
        %v6616 = vmul.f32 %v6610, 0.3275911
        %v6617 = vmul.f32 %v6611, 0.3275911
        %v6618 = vadd.f32 %v6612, 1.0
        %v6619 = vadd.f32 %v6613, 1.0
        %v6620 = vadd.f32 %v6614, 1.0
        %v6621 = vadd.f32 %v6615, 1.0
        %v6622 = vadd.f32 %v6616, 1.0
        %v6623 = vadd.f32 %v6617, 1.0
        %v6624 = vrcp.pop %v6618
        %v6625 = vmul.f32 1.0, %v6624
        %v6626 = vrcp.pop %v6619
        %v6627 = vmul.f32 1.0, %v6626
        %v6628 = vrcp.pop %v6620
        %v6629 = vmul.f32 1.0, %v6628
        %v6630 = vrcp.pop %v6621
        %v6631 = vmul.f32 1.0, %v6630
        %v6632 = vrcp.pop %v6622
        %v6633 = vmul.f32 1.0, %v6632
        %v6634 = vrcp.pop %v6623
        %v6635 = vmul.f32 1.0, %v6634
        %v6636 = vmul.f32 %v6625, 1.0614054
        %v6637 = vmul.f32 %v6627, 1.0614054
        %v6638 = vmul.f32 %v6629, 1.0614054
        %v6639 = vmul.f32 %v6631, 1.0614054
        %v6640 = vmul.f32 %v6633, 1.0614054
        %v6641 = vmul.f32 %v6635, 1.0614054
        %v6642 = vadd.f32 %v6636, -1.4531521
        %v6643 = vadd.f32 %v6637, -1.4531521
        %v6644 = vadd.f32 %v6638, -1.4531521
        %v6645 = vadd.f32 %v6639, -1.4531521
        %v6646 = vadd.f32 %v6640, -1.4531521
        %v6647 = vadd.f32 %v6641, -1.4531521
        %v6648 = vmul.f32 %v6642, %v6625
        %v6649 = vmul.f32 %v6643, %v6627
        %v6650 = vmul.f32 %v6644, %v6629
        %v6651 = vmul.f32 %v6645, %v6631
        %v6652 = vmul.f32 %v6646, %v6633
        %v6653 = vmul.f32 %v6647, %v6635
        %v6654 = vadd.f32 %v6648, 1.4214138
        %v6655 = vadd.f32 %v6649, 1.4214138
        %v6656 = vadd.f32 %v6650, 1.4214138
        %v6657 = vadd.f32 %v6651, 1.4214138
        %v6658 = vadd.f32 %v6652, 1.4214138
        %v6659 = vadd.f32 %v6653, 1.4214138
        %v6660 = vmul.f32 %v6654, %v6625
        %v6661 = vmul.f32 %v6655, %v6627
        %v6662 = vmul.f32 %v6656, %v6629
        %v6663 = vmul.f32 %v6657, %v6631
        %v6664 = vmul.f32 %v6658, %v6633
        %v6665 = vmul.f32 %v6659, %v6635
        %v6666 = vadd.f32 %v6660, -0.28449672
        %v6667 = vadd.f32 %v6661, -0.28449672
        %v6668 = vadd.f32 %v6662, -0.28449672
        %v6669 = vadd.f32 %v6663, -0.28449672
        %v6670 = vadd.f32 %v6664, -0.28449672
        %v6671 = vadd.f32 %v6665, -0.28449672
        %v6672 = vmul.f32 %v6666, %v6625
        %v6673 = vmul.f32 %v6667, %v6627
        %v6674 = vmul.f32 %v6668, %v6629
        %v6675 = vmul.f32 %v6669, %v6631
        %v6676 = vmul.f32 %v6670, %v6633
        %v6677 = vmul.f32 %v6671, %v6635
        %v6678 = vadd.f32 %v6672, 0.2548296
        %v6679 = vadd.f32 %v6673, 0.2548296
        %v6680 = vadd.f32 %v6674, 0.2548296
        %v6681 = vadd.f32 %v6675, 0.2548296
        %v6682 = vadd.f32 %v6676, 0.2548296
        %v6683 = vadd.f32 %v6677, 0.2548296
        %v6684 = vmul.f32 %v6678, %v6625
        %v6685 = vmul.f32 %v6679, %v6627
        %v6686 = vmul.f32 %v6680, %v6629
        %v6687 = vmul.f32 %v6681, %v6631
        %v6688 = vmul.f32 %v6682, %v6633
        %v6689 = vmul.f32 %v6683, %v6635
        %v6690 = vsub.f32 0.0, %v6606
        %v6691 = vsub.f32 0.0, %v6607
        %v6692 = vsub.f32 0.0, %v6608
        %v6693 = vsub.f32 0.0, %v6609
        %v6694 = vsub.f32 0.0, %v6610
        %v6695 = vsub.f32 0.0, %v6611
        %v6696 = vmul.f32 %v6690, %v6606
        %v6697 = vmul.f32 %v6691, %v6607
        %v6698 = vmul.f32 %v6692, %v6608
        %v6699 = vmul.f32 %v6693, %v6609
        %v6700 = vmul.f32 %v6694, %v6610
        %v6701 = vmul.f32 %v6695, %v6611
        %v6702 = vmul.f32 %v6696, 1.442695
        %v6703 = vpow.pop %v6702
        %v6704 = vmul.f32 %v6697, 1.442695
        %v6705 = vpow.pop %v6704
        %v6706 = vmul.f32 %v6698, 1.442695
        %v6707 = vpow.pop %v6706
        %v6708 = vmul.f32 %v6699, 1.442695
        %v6709 = vpow.pop %v6708
        %v6710 = vmul.f32 %v6700, 1.442695
        %v6711 = vpow.pop %v6710
        %v6712 = vmul.f32 %v6701, 1.442695
        %v6713 = vpow.pop %v6712
        %v6714 = vmul.f32 %v6684, %v6703
        %v6715 = vmul.f32 %v6685, %v6705
        %v6716 = vmul.f32 %v6686, %v6707
        %v6717 = vmul.f32 %v6687, %v6709
        %v6718 = vmul.f32 %v6688, %v6711
        %v6719 = vmul.f32 %v6689, %v6713
        %v6720 = vsub.f32 1.0, %v6714
        %v6721 = vsub.f32 1.0, %v6715
        %v6722 = vsub.f32 1.0, %v6716
        %v6723 = vsub.f32 1.0, %v6717
        %v6724 = vsub.f32 1.0, %v6718
        %v6725 = vsub.f32 1.0, %v6719
        %vm6726 = vcmp.ge.f32.partialorder %v6600, 0.0
        %vm6727 = vcmp.ge.f32.partialorder %v6601, 0.0
        %vm6728 = vcmp.ge.f32.partialorder %v6602, 0.0
        %vm6729 = vcmp.ge.f32.partialorder %v6603, 0.0
        %vm6730 = vcmp.ge.f32.partialorder %v6604, 0.0
        %vm6731 = vcmp.ge.f32.partialorder %v6605, 0.0
        %v6732 = vsub.f32 0.0, %v6720
        %v6733 = vsub.f32 0.0, %v6721
        %v6734 = vsub.f32 0.0, %v6722
        %v6735 = vsub.f32 0.0, %v6723
        %v6736 = vsub.f32 0.0, %v6724
        %v6737 = vsub.f32 0.0, %v6725
        %v6738 = vsel %vm6726, %v6720, %v6732
        %v6739 = vsel %vm6727, %v6721, %v6733
        %v6740 = vsel %vm6728, %v6722, %v6734
        %v6741 = vsel %vm6729, %v6723, %v6735
        %v6742 = vsel %vm6730, %v6724, %v6736
        %v6743 = vsel %vm6731, %v6725, %v6737
        %v6744 = vadd.f32 %v6738, 1.0
        %v6745 = vadd.f32 %v6739, 1.0
        %v6746 = vadd.f32 %v6740, 1.0
        %v6747 = vadd.f32 %v6741, 1.0
        %v6748 = vadd.f32 %v6742, 1.0
        %v6749 = vadd.f32 %v6743, 1.0
        %v6750 = vmul.f32 %v6594, %v6744
        %v6751 = vmul.f32 %v6595, %v6745
        %v6752 = vmul.f32 %v6596, %v6746
        %v6753 = vmul.f32 %v6597, %v6747
        %v6754 = vmul.f32 %v6598, %v6748
        %v6755 = vmul.f32 %v6599, %v6749
        %s6756 = scalar_lea.vmem %s19, 256
        %v6757 = vld [vmem:[%s6756] sm:$0xff]
        %v6758 = vld [vmem:[%s6756 + $0x8] sm:$0xff]
        %v6759 = vld [vmem:[%s6756 + $0x10] sm:$0xff]
        %v6760 = vld [vmem:[%s6756 + $0x18] sm:$0xff]
        %v6761 = vld [vmem:[%s6756 + $0x20] sm:$0xff]
        %v6762 = vld [vmem:[%s6756 + $0x28] sm:$0xff]
        %v6763 = vld [vmem:[%s6756 + $0x30] sm:$0xff]
        %v6764 = vld [vmem:[%s6756 + $0x38] sm:$0xff]
        %v6765 = vld [vmem:[%s6756 + $0x40] sm:$0xff]
        %v6766 = vld [vmem:[%s6756 + $0x48] sm:$0xff]
        %v6767 = vld [vmem:[%s6756 + $0x50] sm:$0xff]
        %v6768 = vld [vmem:[%s6756 + $0x58] sm:$0xff]
        %v6769 = vld [vmem:[%s6756 + $0x60] sm:$0xff]
        %v6770 = vld [vmem:[%s6756 + $0x68] sm:$0xff]
        %v6771 = vld [vmem:[%s6756 + $0x70] sm:$0xff]
        %v6772 = vld [vmem:[%s6756 + $0x78] sm:$0xff]
        %v6773 = vld [vmem:[%s6756 + $0x80] sm:$0xff]
        %v6774 = vld [vmem:[%s6756 + $0x88] sm:$0xff]
        %v6775 = vld [vmem:[%s6756 + $0x90] sm:$0xff]
        %v6776 = vld [vmem:[%s6756 + $0x98] sm:$0xff]
        %v6777 = vld [vmem:[%s6756 + $0xa0] sm:$0xff]
        %v6778 = vld [vmem:[%s6756 + $0xa8] sm:$0xff]
        %v6779 = vld [vmem:[%s6756 + $0xb0] sm:$0xff]
        %v6780 = vld [vmem:[%s6756 + $0xb8] sm:$0xff]
        %v6781 = vld [vmem:[%s6756 + $0xc0] sm:$0xff]
        %v6782 = vld [vmem:[%s6756 + $0xc8] sm:$0xff]
        %v6783 = vld [vmem:[%s6756 + $0xd0] sm:$0xff]
        %v6784 = vld [vmem:[%s6756 + $0xd8] sm:$0xff]
        %v6785 = vld [vmem:[%s6756 + $0xe0] sm:$0xff]
        %v6786 = vld [vmem:[%s6756 + $0xe8] sm:$0xff]
        %v6787 = vld [vmem:[%s6756 + $0xf0] sm:$0xff]
        %v6788 = vld [vmem:[%s6756 + $0xf8] sm:$0xff]
        %6789 = vmatprep.subr.mxu0 0.0
        %6790 = vmatpush1.msra.mxu0 %v6757
        %6791 = vmatprep.subr.mxu0 0.0
        %6792 = vmatpush1.msra.mxu0 %v6758
        %6793 = vmatprep.subr.mxu0 0.0
        %6794 = vmatpush1.msra.mxu0 %v6759
        %6795 = vmatprep.subr.mxu0 0.0
        %6796 = vmatpush1.msra.mxu0 %v6760
        %6797 = vmatprep.subr.mxu0 0.0
        %6798 = vmatpush1.msra.mxu0 %v6761
        %6799 = vmatprep.subr.mxu0 0.0
        %6800 = vmatpush1.msra.mxu0 %v6762
        %6801 = vmatprep.subr.mxu0 0.0
        %6802 = vmatpush1.msra.mxu0 %v6763
        %6803 = vmatprep.subr.mxu0 0.0
        %6804 = vmatpush1.msra.mxu0 %v6764
        %6805 = vmatprep.subr.mxu0 0.0
        %6806 = vmatpush1.msra.mxu0 %v6765
        %6807 = vmatprep.subr.mxu0 0.0
        %6808 = vmatpush1.msra.mxu0 %v6766
        %6809 = vmatprep.subr.mxu0 0.0
        %6810 = vmatpush1.msra.mxu0 %v6767
        %6811 = vmatprep.subr.mxu0 0.0
        %6812 = vmatpush1.msra.mxu0 %v6768
        %6813 = vmatprep.subr.mxu0 0.0
        %6814 = vmatpush1.msra.mxu0 %v6769
        %6815 = vmatprep.subr.mxu0 0.0
        %6816 = vmatpush1.msra.mxu0 %v6770
        %6817 = vmatprep.subr.mxu0 0.0
        %6818 = vmatpush1.msra.mxu0 %v6771
        %6819 = vmatprep.subr.mxu0 0.0
        %6820 = vmatpush1.msra.mxu0 %v6772
        %6821 = vmatprep.subr.mxu0 0.0
        %6822 = vmatpush1.msra.mxu0 %v6773
        %6823 = vmatprep.subr.mxu0 0.0
        %6824 = vmatpush1.msra.mxu0 %v6774
        %6825 = vmatprep.subr.mxu0 0.0
        %6826 = vmatpush1.msra.mxu0 %v6775
        %6827 = vmatprep.subr.mxu0 0.0
        %6828 = vmatpush1.msra.mxu0 %v6776
        %6829 = vmatprep.subr.mxu0 0.0
        %6830 = vmatpush1.msra.mxu0 %v6777
        %6831 = vmatprep.subr.mxu0 0.0
        %6832 = vmatpush1.msra.mxu0 %v6778
        %6833 = vmatprep.subr.mxu0 0.0
        %6834 = vmatpush1.msra.mxu0 %v6779
        %6835 = vmatprep.subr.mxu0 0.0
        %6836 = vmatpush1.msra.mxu0 %v6780
        %6837 = vmatprep.subr.mxu0 0.0
        %6838 = vmatpush1.msra.mxu0 %v6781
        %6839 = vmatprep.subr.mxu0 0.0
        %6840 = vmatpush1.msra.mxu0 %v6782
        %6841 = vmatprep.subr.mxu0 0.0
        %6842 = vmatpush1.msra.mxu0 %v6783
        %6843 = vmatprep.subr.mxu0 0.0
        %6844 = vmatpush1.msra.mxu0 %v6784
        %6845 = vmatprep.subr.mxu0 0.0
        %6846 = vmatpush1.msra.mxu0 %v6785
        %6847 = vmatprep.subr.mxu0 0.0
        %6848 = vmatpush1.msra.mxu0 %v6786
        %6849 = vmatprep.subr.mxu0 0.0
        %6850 = vmatpush1.msra.mxu0 %v6787
        %6851 = vmatprep.subr.mxu0 0.0
        %6852 = vmatpush1.msra.mxu0 %v6788
        %6853 = vmatprep.mubr.f32.mxu0 %v6751
        %6854 = vmatmul.mubr.f32.gmra.mrb[0].mxu0 %v6750
        %v6855 = vpop.f32.mrb[0].mxu0
        %v6856 = vadd.f32 0.0, %v6855
        %v6857 = vpop.f32.mrb[0].mxu0
        %6858 = vmatprep.mubr.f32.mxu0 %v6753
        %6859 = vmatmul.mubr.f32.gmra.mrb[0].mxu0 %v6752
        %v6860 = vpop.f32.mrb[0].mxu0
        %v6861 = vpop.f32.mrb[0].mxu0
        %6862 = vmatprep.mubr.f32.mxu0 %v6755
        %6863 = vmatmul.mubr.f32.gmra.mrb[0].mxu0 %v6754
        %v6864 = vpop.f32.mrb[0].mxu0
        %v6865 = vpop.f32.mrb[0].mxu0
        %6866 = vdwg.mxu0
        %v6867 = vadd.f32 %v6408, %v6856
        %s6868 = scalar_lea.vmem %s20, 1
        %v6869 = vld [vmem:[%s6868] sm:$0x1]
        %v6871 = vlaneseq
        %v6872 = vshrl.u32 %v6871, 7
        %v6873 = vsub.s32 0, %v6872
        %v6874 = vrot.slane %v6869, %v6873
        %v6876 = vadd.f32 %v6867, %v6874
        %v6877 = vld [vmem:[%s21] sm:$0x1]
        %v6878 = vld [vmem:[%s22] sm:$0x1]
        %vm6879 = vcmask 516096
        %v6880 = vsel %vm6879, %v6876, 0.0
        %6881 = vadd.xlane.f32.xlu0 %v6880
        %v6882 = vpop.xlane.xlu0 %6881
        %v6883 = vmul.f32 %v6882, %v896
        %v6884 = vsub.f32 %v6876, %v6883
        %v6885 = vmul.f32 %v6884, %v6884
        %v6886 = vsel %vm6879, %v6885, 0.0
        %6887 = vadd.xlane.f32.xlu0 %v6886
        %v6888 = vpop.xlane.xlu0 %6887
        %v6889 = vmul.f32 %v6888, %v896
        %v6890 = vadd.f32 %v6889, 1e-05
        %v6891 = vrsqrt.pop %v6890
        %v6892 = vmul.f32 %v6884, %v6891
        %v6893 = vmul.f32 %v6892, %v6877
        %v6894 = vadd.f32 %v6893, %v6878
        %v6895 = vld [vmem:[%s23] sm:$0xff]
        %v6896 = vld [vmem:[%s23 + $0x8] sm:$0xff]
        %v6897 = vld [vmem:[%s23 + $0x10] sm:$0xff]
        %v6898 = vld [vmem:[%s23 + $0x18] sm:$0xff]
        %v6899 = vld [vmem:[%s23 + $0x20] sm:$0xff]
        %v6900 = vld [vmem:[%s23 + $0x28] sm:$0xff]
        %v6901 = vld [vmem:[%s23 + $0x30] sm:$0xff]
        %v6902 = vld [vmem:[%s23 + $0x38] sm:$0xff]
        %v6904 = vsel %vm795, %v6894, 0
        %6906 = vmatprep.subr.mxu0 0.0
        %6907 = vmatpush1.msra.mxu0 %v6895
        %6908 = vmatprep.subr.mxu0 0.0
        %6909 = vmatpush1.msra.mxu0 %v6896
        %6910 = vmatprep.subr.mxu0 0.0
        %6911 = vmatpush1.msra.mxu0 %v6897
        %6912 = vmatprep.subr.mxu0 0.0
        %6913 = vmatpush1.msra.mxu0 %v6898
        %6914 = vmatprep.subr.mxu0 0.0
        %6915 = vmatpush1.msra.mxu0 %v6899
        %6916 = vmatprep.subr.mxu0 0.0
        %6917 = vmatpush1.msra.mxu0 %v6900
        %6918 = vmatprep.subr.mxu0 0.0
        %6919 = vmatpush1.msra.mxu0 %v6901
        %6920 = vmatprep.subr.mxu0 0.0
        %6921 = vmatpush1.msra.mxu0 %v6902
        %6922 = vmatprep.subr.mxu0 0.0
        %6923 = vmatpush1.msra.mxu0 0.0
        %6924 = vmatprep.subr.mxu0 0.0
        %6925 = vmatpush1.msra.mxu0 0.0
        %6926 = vmatprep.subr.mxu0 0.0
        %6927 = vmatpush1.msra.mxu0 0.0
        %6928 = vmatprep.subr.mxu0 0.0
        %6929 = vmatpush1.msra.mxu0 0.0
        %6930 = vmatprep.subr.mxu0 0.0
        %6931 = vmatpush1.msra.mxu0 0.0
        %6932 = vmatprep.subr.mxu0 0.0
        %6933 = vmatpush1.msra.mxu0 0.0
        %6934 = vmatprep.subr.mxu0 0.0
        %6935 = vmatpush1.msra.mxu0 0.0
        %6936 = vmatprep.subr.mxu0 0.0
        %6937 = vmatpush1.msra.mxu0 0.0
        %6938 = vmatprep.subr.mxu0 0.0
        %6939 = vmatpush1.msra.mxu0 0.0
        %6940 = vmatprep.subr.mxu0 0.0
        %6941 = vmatpush1.msra.mxu0 0.0
        %6942 = vmatprep.subr.mxu0 0.0
        %6943 = vmatpush1.msra.mxu0 0.0
        %6944 = vmatprep.subr.mxu0 0.0
        %6945 = vmatpush1.msra.mxu0 0.0
        %6946 = vmatprep.subr.mxu0 0.0
        %6947 = vmatpush1.msra.mxu0 0.0
        %6948 = vmatprep.subr.mxu0 0.0
        %6949 = vmatpush1.msra.mxu0 0.0
        %6950 = vmatprep.subr.mxu0 0.0
        %6951 = vmatpush1.msra.mxu0 0.0
        %6952 = vmatprep.subr.mxu0 0.0
        %6953 = vmatpush1.msra.mxu0 0.0
        %6954 = vmatprep.subr.mxu0 0.0
        %6955 = vmatpush1.msra.mxu0 0.0
        %6956 = vmatprep.subr.mxu0 0.0
        %6957 = vmatpush1.msra.mxu0 0.0
        %6958 = vmatprep.subr.mxu0 0.0
        %6959 = vmatpush1.msra.mxu0 0.0
        %6960 = vmatprep.subr.mxu0 0.0
        %6961 = vmatpush1.msra.mxu0 0.0
        %6962 = vmatprep.subr.mxu0 0.0
        %6963 = vmatpush1.msra.mxu0 0.0
        %6964 = vmatprep.subr.mxu0 0.0
        %6965 = vmatpush1.msra.mxu0 0.0
        %6966 = vmatprep.subr.mxu0 0.0
        %6967 = vmatpush1.msra.mxu0 0.0
        %6968 = vmatprep.subr.mxu0 0.0
        %6969 = vmatpush1.msra.mxu0 0.0
        %6970 = vmatprep.mubr.f32.mxu0 0.0
        %6971 = vmatmul.mubr.f32.gmra.mrb[0].mxu0 %v6904
        %v6972 = vpop.f32.mrb[0].mxu0
        %v6973 = vadd.f32 0.0, %v6972
        %v6974 = vpop.f32.mrb[0].mxu0
        %6975 = vdwg.mxu0
        %v6976 = vmul.f32 %v6973, %v6973
        %vm6977 = vcmask 253952
        %v6978 = vsel %vm6977, %v6976, 0.0
        %6979 = vadd.xlane.f32.xlu0 %v6978
        %v6980 = vpop.xlane.xlu0 %6979
        %v6981 = vrsqrt.pop %v6980
        %v6982 = vmul.f32 %v6973, %v6981
        %v6983 = vld [vmem:[%s24] sm:$0xff]
        %v6984 = vld [vmem:[%s24 + $0x8] sm:$0xff]
        %v6985 = vld [vmem:[%s24 + $0x10] sm:$0xff]
        %v6986 = vld [vmem:[%s24 + $0x18] sm:$0xff]
        %vm6987 = vcmask 261120
        %v6989 = vsel %vm6987, %v6982, 0
        %6991 = vmatprep.subr.mxu0 0.0
        %6992 = vmatpush1.msra.mxu0 %v6983
        %6993 = vmatprep.subr.mxu0 0.0
        %6994 = vmatpush1.msra.mxu0 %v6984
        %6995 = vmatprep.subr.mxu0 0.0
        %6996 = vmatpush1.msra.mxu0 %v6985
        %6997 = vmatprep.subr.mxu0 0.0
        %6998 = vmatpush1.msra.mxu0 %v6986
        %6999 = vmatprep.subr.mxu0 0.0
        %7000 = vmatpush1.msra.mxu0 0.0
        %7001 = vmatprep.subr.mxu0 0.0
        %7002 = vmatpush1.msra.mxu0 0.0
        %7003 = vmatprep.subr.mxu0 0.0
        %7004 = vmatpush1.msra.mxu0 0.0
        %7005 = vmatprep.subr.mxu0 0.0
        %7006 = vmatpush1.msra.mxu0 0.0
        %7007 = vmatprep.subr.mxu0 0.0
        %7008 = vmatpush1.msra.mxu0 0.0
        %7009 = vmatprep.subr.mxu0 0.0
        %7010 = vmatpush1.msra.mxu0 0.0
        %7011 = vmatprep.subr.mxu0 0.0
        %7012 = vmatpush1.msra.mxu0 0.0
        %7013 = vmatprep.subr.mxu0 0.0
        %7014 = vmatpush1.msra.mxu0 0.0
        %7015 = vmatprep.subr.mxu0 0.0
        %7016 = vmatpush1.msra.mxu0 0.0
        %7017 = vmatprep.subr.mxu0 0.0
        %7018 = vmatpush1.msra.mxu0 0.0
        %7019 = vmatprep.subr.mxu0 0.0
        %7020 = vmatpush1.msra.mxu0 0.0
        %7021 = vmatprep.subr.mxu0 0.0
        %7022 = vmatpush1.msra.mxu0 0.0
        %7023 = vmatprep.subr.mxu0 0.0
        %7024 = vmatpush1.msra.mxu0 0.0
        %7025 = vmatprep.subr.mxu0 0.0
        %7026 = vmatpush1.msra.mxu0 0.0
        %7027 = vmatprep.subr.mxu0 0.0
        %7028 = vmatpush1.msra.mxu0 0.0
        %7029 = vmatprep.subr.mxu0 0.0
        %7030 = vmatpush1.msra.mxu0 0.0
        %7031 = vmatprep.subr.mxu0 0.0
        %7032 = vmatpush1.msra.mxu0 0.0
        %7033 = vmatprep.subr.mxu0 0.0
        %7034 = vmatpush1.msra.mxu0 0.0
        %7035 = vmatprep.subr.mxu0 0.0
        %7036 = vmatpush1.msra.mxu0 0.0
        %7037 = vmatprep.subr.mxu0 0.0
        %7038 = vmatpush1.msra.mxu0 0.0
        %7039 = vmatprep.subr.mxu0 0.0
        %7040 = vmatpush1.msra.mxu0 0.0
        %7041 = vmatprep.subr.mxu0 0.0
        %7042 = vmatpush1.msra.mxu0 0.0
        %7043 = vmatprep.subr.mxu0 0.0
        %7044 = vmatpush1.msra.mxu0 0.0
        %7045 = vmatprep.subr.mxu0 0.0
        %7046 = vmatpush1.msra.mxu0 0.0
        %7047 = vmatprep.subr.mxu0 0.0
        %7048 = vmatpush1.msra.mxu0 0.0
        %7049 = vmatprep.subr.mxu0 0.0
        %7050 = vmatpush1.msra.mxu0 0.0
        %7051 = vmatprep.subr.mxu0 0.0
        %7052 = vmatpush1.msra.mxu0 0.0
        %7053 = vmatprep.subr.mxu0 0.0
        %7054 = vmatpush1.msra.mxu0 0.0
        %7055 = vmatprep.mubr.f32.mxu0 0.0
        %7056 = vmatmul.mubr.f32.gmra.mrb[0].mxu0 %v6989
        %v7057 = vpop.f32.mrb[0].mxu0
        %v7058 = vadd.f32 0.0, %v7057
        %v7059 = vpop.f32.mrb[0].mxu0
        %7060 = vdwg.mxu0
        %v7061 = vxor.u32 %v7058, 2147483648
        %v7062 = vmul.f32 %v7061, 1.442695
        %v7063 = vpow.pop %v7062
        %v7064 = vadd.f32 %v7063, 1.0
        %v7065 = vrcp.pop %v7064
        %v7066 = vmul.f32 1.0, %v7065
        %7067 = vst [vmem:[%s756] sm:$0x1] %v7066
        %s7068 = sand.u32 %s577, 1
        %s7069 = scalar_lea.sflag [#allocation3], %s7068
        %s7070 = sand.u32 %s577, 1
        %s7071 = scalar_lea.vmem [#allocation2], %s7070
        // Predicated region
        $region121: #{encode_image.1} parent=119 // pred_check
          %p7072 = pneg %p587
        $region122: #{encode_image.1} parent=119 // pred_check_branch
          %7074 = sbr.rel (%p7072) target = $region124
        $region123: #{encode_image.1} parent=119 // pred_region
          %s7076 = ssub.s32 16, 16
          %7077 = vsyncadd %s7069, %s7076
          %s7078 = smul.addr %s39, 16
          %s7079 = scalar_lea.hbm %s25, %s7078
          %s7081 = sshll.u32 %s7071, 4
          %s7082 = int_to_ptr.vmem [resolvable:$true] %s7081
          %7084 = dma.vmem_to_hbm [thread:$0]  %s7082, 16, %s7079, %s7069
        $region124: #{encode_image.1} parent=119 // pred_fallthru
          _
      $region120: #{encode_image.1} parent=5 // pred_fallthru
        _
      %p7085 = scmp.le.s32.totalorder 2, %s34
      // Predicated region
      $region125: #{encode_image.1} parent=5 // pred_check
        %p7086 = pneg %p7085
      $region126: #{encode_image.1} parent=5 // pred_check_branch
        %7088 = sbr.rel (%p7086) target = $region128
      $region127: #{encode_image.1} parent=5 // pred_region
        %s7089 = ssub.s32 %s34, 2
        // Predicated region
        $region129: #{encode_image.1} parent=127 // pred_check
          %p7090 = pneg %p593
        $region130: #{encode_image.1} parent=127 // pred_check_branch
          %7092 = sbr.rel (%p7090) target = $region132
        $region131: #{encode_image.1} parent=127 // pred_region
          %s7093 = sand.u32 %s578, 1
          %s7094 = scalar_lea.sflag [#allocation3], %s7093
          %s7095 = sand.u32 %s578, 1
          %s7096 = scalar_lea.vmem [#allocation2], %s7095
          %7097 = dma.done %s7094, 16
        $region132: #{encode_image.1} parent=127 // pred_fallthru
          _
      $region128: #{encode_image.1} parent=5 // pred_fallthru
        _
    $region6: #{encode_image.1} parent=1 // loop_footer
      %s38 = sadd.s32 1, %s34
    $region7: #{encode_image.1} parent=1 // loop_footer_branch
      %33 = sbr.rel target = $region3
    $region8: #{encode_image.1} parent=1 // loop_exit
      _
    %7098 = vsyncpa [#allocation3], 1
    %s7099 = scalar_lea.sflag [#allocation3], 1
    %7100 = vsyncpa %s7099, 1

</llo_original>
